<compile_context>
chip_gen: v7x
topology: tpu7x:2x2x1
jax: 0.10.0
libtpu: 0.0.40
codegen_flags: <defaults>
</compile_context>

<pallas_src>
import jax
import jax.numpy as jnp
from jax import lax
from jax.experimental import pallas as pl
from jax.experimental.pallas import tpu as pltpu

C = 896
GROUPS = 7
CPG = C // GROUPS            # 128 channels per group
H = 14
W = 14
W_WIDE = 16                  # W padded 14 -> 16 (sublane friendly row layout)
HW_WIDE = H * W_WIDE         # 224 rows; 196 of them are real pixels
N_VALID = float(H * W)       # BN population (N = 1)
EPS = 1e-5

PAD_TOP = 24                 # row of input pixel (0,0) inside padded scratch
PAD_ROWS = 272               # flattened zero-padded image (+slop), mult of 16
BAND = 240                   # per-ky aligned band height read from the scratch


# ----------------------------------------------------------------------------
# Kernel 1: fused [1x1 conv + BN + ReLU] -> [grouped 3x3 conv + BN + ReLU]
# One grid step per channel group (128 channels).
# ----------------------------------------------------------------------------
def _fused_group_kernel(x_ref, w1_ref, g1_ref, b1_ref, w2_ref, g2_ref, b2_ref,
                        o_ref, pad_ref):
    # x_ref   : (224, 896) bf16   wide-layout activation, row r = h*16 + w
    # w1_ref  : (896, 128) bf16   1x1 conv weights, columns of this group
    # g1/b1   : (1,1,128)  f32    BN1 affine params of this group
    # w2_ref  : (1,9,128,128) bf16  3x3 taps (t = ky*3+kx), layout [c_in, c_out]
    # g2/b2   : (1,1,128)  f32    BN2 affine params of this group
    # o_ref   : (224, 128) bf16   output slab (wide layout)
    # pad_ref : (272, 128) f32    scratch: padded image, pixel (h,w) at 24+h*16+w
    rows = lax.broadcasted_iota(jnp.int32, (HW_WIDE, 1), 0)
    valid = (rows & (W_WIDE - 1)) < W            # real-pixel rows
    inv_n = 1.0 / N_VALID

    # ---- 1x1 conv + BN (batch stats over 196 pixels) + ReLU ----
    y1 = jnp.dot(x_ref[...], w1_ref[...], preferred_element_type=jnp.float32)
    m1 = jnp.sum(jnp.where(valid, y1, 0.0), axis=0, keepdims=True) * inv_n
    d1 = y1 - m1
    v1 = jnp.sum(jnp.where(valid, d1 * d1, 0.0), axis=0, keepdims=True) * inv_n
    h1 = jnp.maximum(d1 * lax.rsqrt(v1 + EPS) * g1_ref[0] + b1_ref[0], 0.0)
    h1 = jnp.where(valid, h1, 0.0)               # junk cols double as zero padding

    # ---- materialize zero-padded image (aligned full-lane stores only) ----
    pad_ref[0:PAD_TOP, :] = jnp.zeros((PAD_TOP, CPG), jnp.float32)
    pad_ref[PAD_TOP:PAD_TOP + HW_WIDE, :] = h1
    pad_ref[PAD_TOP + HW_WIDE:PAD_ROWS, :] = jnp.zeros(
        (PAD_ROWS - PAD_TOP - HW_WIDE, CPG), jnp.float32)

    # ---- grouped 3x3 conv: 9 per-tap (224,128)@(128,128) matmuls ----
    # tap (ky,kx) input for output row r lives at scratch row ky*16 + 7 + kx + r.
    acc = jnp.zeros((HW_WIDE, CPG), jnp.float32)
    for ky in range(3):
        band = pad_ref[(ky * W_WIDE):(ky * W_WIDE) + BAND, :]   # aligned load
        for kx in range(3):
            slab = band[7 + kx:7 + kx + HW_WIDE, :].astype(jnp.bfloat16)
            acc = acc + jnp.dot(slab, w2_ref[0, ky * 3 + kx],
                                preferred_element_type=jnp.float32)

    # ---- BN2 (batch stats) + ReLU ----
    m2 = jnp.sum(jnp.where(valid, acc, 0.0), axis=0, keepdims=True) * inv_n
    d2 = acc - m2
    v2 = jnp.sum(jnp.where(valid, d2 * d2, 0.0), axis=0, keepdims=True) * inv_n
    h2 = jnp.maximum(d2 * lax.rsqrt(v2 + EPS) * g2_ref[0] + b2_ref[0], 0.0)
    o_ref[...] = jnp.where(valid, h2, 0.0).astype(o_ref.dtype)


def fused_conv1_gconv2(x_wide, w1_io, g1, b1, w2_g, g2, b2):
    return pl.pallas_call(
        _fused_group_kernel,
        out_shape=jax.ShapeDtypeStruct((HW_WIDE, C), jnp.bfloat16),
        grid=(GROUPS,),
        in_specs=[
            pl.BlockSpec((HW_WIDE, C), lambda g: (0, 0)),          # stays in VMEM
            pl.BlockSpec((C, CPG), lambda g: (0, g)),
            pl.BlockSpec((1, 1, CPG), lambda g: (g, 0, 0)),
            pl.BlockSpec((1, 1, CPG), lambda g: (g, 0, 0)),
            pl.BlockSpec((1, 9, CPG, CPG), lambda g: (g, 0, 0, 0)),
            pl.BlockSpec((1, 1, CPG), lambda g: (g, 0, 0)),
            pl.BlockSpec((1, 1, CPG), lambda g: (g, 0, 0)),
        ],
        out_specs=pl.BlockSpec((HW_WIDE, CPG), lambda g: (0, g)),
        scratch_shapes=[pltpu.VMEM((PAD_ROWS, CPG), jnp.float32)],
        compiler_params=pltpu.CompilerParams(dimension_semantics=("parallel",)),
    )(x_wide, w1_io, g1, b1, w2_g, g2, b2)


# ----------------------------------------------------------------------------
# Kernel 2: final 1x1 conv + BN, tiled over output channels (128 per step)
# ----------------------------------------------------------------------------
def _pw_conv_bn_kernel(x_ref, w_ref, g_ref, b_ref, o_ref):
    rows = lax.broadcasted_iota(jnp.int32, (HW_WIDE, 1), 0)
    valid = (rows & (W_WIDE - 1)) < W
    inv_n = 1.0 / N_VALID
    y = jnp.dot(x_ref[...], w_ref[...], preferred_element_type=jnp.float32)
    m = jnp.sum(jnp.where(valid, y, 0.0), axis=0, keepdims=True) * inv_n
    d = y - m
    v = jnp.sum(jnp.where(valid, d * d, 0.0), axis=0, keepdims=True) * inv_n
    o_ref[...] = (d * lax.rsqrt(v + EPS) * g_ref[...] + b_ref[...]).astype(o_ref.dtype)


def pw_conv_bn(x_wide, w_io, gamma, beta):
    tn = CPG
    return pl.pallas_call(
        _pw_conv_bn_kernel,
        out_shape=jax.ShapeDtypeStruct((HW_WIDE, C), jnp.float32),
        grid=(C // tn,),
        in_specs=[
            pl.BlockSpec((HW_WIDE, C), lambda j: (0, 0)),
            pl.BlockSpec((C, tn), lambda j: (0, j)),
            pl.BlockSpec((1, tn), lambda j: (0, j)),
            pl.BlockSpec((1, tn), lambda j: (0, j)),
        ],
        out_specs=pl.BlockSpec((HW_WIDE, tn), lambda j: (0, j)),
        compiler_params=pltpu.CompilerParams(dimension_semantics=("parallel",)),
    )(x_wide, w_io, gamma, beta)


# ----------------------------------------------------------------------------
# Full forward (glue: layout transforms only)
# ----------------------------------------------------------------------------
@jax.jit
def forward(x_nchw, params):
    n = x_nchw.shape[0]
    assert n == 1, "kernels assume N=1 (BN population hard-coded to 196)"
    x = jnp.transpose(x_nchw, (0, 2, 3, 1))                      # NCHW -> NHWC
    x = jnp.pad(x, ((0, 0), (0, 0), (0, W_WIDE - W), (0, 0)))    # pad W: 14 -> 16
    x_wide = x.reshape(n * H * W_WIDE, C).astype(jnp.bfloat16)   # (224, 896)

    h2 = fused_conv1_gconv2(x_wide, params["w1_io"], params["g1"], params["b1"],
                            params["w2_g"], params["g2"], params["b2"])
    y = pw_conv_bn(h2, params["w3_io"], params["g3"], params["b3"])

    y = y.reshape(n, H, W_WIDE, C)[:, :, :W, :]                  # drop padded cols
    return jnp.transpose(y, (0, 3, 1, 2))                        # NHWC -> NCHW


# ----------------------------------------------------------------------------
# Pure-JAX reference (numerical sanity check)
# ----------------------------------------------------------------------------
def ref_forward(x_nchw, w1_oihw, w2_oihw, w3_oihw, g1, b1, g2, b2, g3, b3):
    def bn(y, g, b):
        m = jnp.mean(y, axis=(0, 1, 2), keepdims=True)
        v = jnp.mean(jnp.square(y - m), axis=(0, 1, 2), keepdims=True)
        return (y - m) * jax.lax.rsqrt(v + EPS) * g + b

    x = jnp.transpose(x_nchw, (0, 2, 3, 1))
    dn = ("NHWC", "HWIO", "NHWC")
    y = jax.lax.conv_general_dilated(x, jnp.transpose(w1_oihw, (2, 3, 1, 0)),
                                     (1, 1), "VALID", dimension_numbers=dn)
    y = jnp.maximum(bn(y, g1, b1), 0.0)
    y = jax.lax.conv_general_dilated(y, jnp.transpose(w2_oihw, (2, 3, 1, 0)),
                                     (1, 1), "SAME", dimension_numbers=dn,
                                     feature_group_count=GROUPS)
    y = jnp.maximum(bn(y, g2, b2), 0.0)
    y = jax.lax.conv_general_dilated(y, jnp.transpose(w3_oihw, (2, 3, 1, 0)),
                                     (1, 1), "VALID", dimension_numbers=dn)
    y = bn(y, g3, b3)
    return jnp.transpose(y, (0, 3, 1, 2))


if __name__ == "__main__":
    key = jax.random.PRNGKey(0)
    k0, k1, k2, k3 = jax.random.split(key, 4)

    N = 1
    x189 = jax.random.normal(k0, (N, C, H, W), jnp.float32)

    # Conv weights in PyTorch (O, I, kH, kW) convention, deterministic init.
    w1 = jax.random.normal(k1, (C, C, 1, 1), jnp.float32) * (1.0 / (C ** 0.5))
    w2 = jax.random.normal(k2, (C, CPG, 3, 3), jnp.float32) * (1.0 / ((9 * CPG) ** 0.5))
    w3 = jax.random.normal(k3, (C, C, 1, 1), jnp.float32) * (1.0 / (C ** 0.5))
    # BatchNorm affine params: PyTorch default init.
    g1 = jnp.ones((C,), jnp.float32); b1 = jnp.zeros((C,), jnp.float32)
    g2 = jnp.ones((C,), jnp.float32); b2 = jnp.zeros((C,), jnp.float32)
    g3 = jnp.ones((C,), jnp.float32); b3 = jnp.zeros((C,), jnp.float32)
    # TODO(synk): BN running_mean/var buffer updates (training side effect) are not materialized.

    params = {
        # 1x1 conv weights as (C_in, C_out) matmul operands, bf16.
        "w1_io": jnp.transpose(w1[:, :, 0, 0], (1, 0)).astype(jnp.bfloat16),
        "w3_io": jnp.transpose(w3[:, :, 0, 0], (1, 0)).astype(jnp.bfloat16),
        # Grouped 3x3 weights as (group, tap=ky*3+kx, c_in, c_out), bf16.
        "w2_g": jnp.transpose(w2.reshape(GROUPS, CPG, CPG, 3, 3),
                              (0, 3, 4, 2, 1)).reshape(GROUPS, 9, CPG, CPG
                                                       ).astype(jnp.bfloat16),
        # BN affine params, grouped / flat.
        "g1": g1.reshape(GROUPS, 1, CPG), "b1": b1.reshape(GROUPS, 1, CPG),
        "g2": g2.reshape(GROUPS, 1, CPG), "b2": b2.reshape(GROUPS, 1, CPG),
        "g3": g3.reshape(1, C), "b3": b3.reshape(1, C),
    }

    out = forward(x189, params)
    out = jax.block_until_ready(out)
    assert out.shape == (N, C, H, W) and out.dtype == jnp.float32

    ref = ref_forward(x189, w1, w2, w3, g1, b1, g2, b2, g3, b3)
    ref = jax.block_until_ready(ref)
    assert bool(jnp.allclose(out, ref, atol=5e-2, rtol=5e-2)), \
        float(jnp.max(jnp.abs(out - ref)))

    print("KERNEL_OK")
</pallas_src>

<mosaic_0001>
module attributes {stable_mosaic.version = 11 : i64} {
  func.func @_pw_conv_bn_kernel(%arg0: i32, %arg1: memref<224x896xbf16, #tpu.memory_space<vmem>>, %arg2: memref<896x128xbf16, #tpu.memory_space<vmem>>, %arg3: memref<1x128xf32, #tpu.memory_space<vmem>>, %arg4: memref<1x128xf32, #tpu.memory_space<vmem>>, %arg5: memref<224x128xf32, #tpu.memory_space<vmem>>) attributes {dimension_semantics = [#tpu.dimension_semantics<parallel>], iteration_bounds = array<i64: 7>, scalar_prefetch = 0 : i64, scratch_operands = 0 : i64, tpu.core_type = #tpu.core_type<tc>, window_params = [{pipeline_mode = #tpu.pipeline_mode<synchronous>, transform_indices = @transform_0, window_bounds = array<i64: 224, 896>}, {transform_indices = @transform_1, window_bounds = array<i64: 896, 128>}, {transform_indices = @transform_2, window_bounds = array<i64: 1, 128>}, {transform_indices = @transform_3, window_bounds = array<i64: 1, 128>}, {transform_indices = @transform_4, window_bounds = array<i64: 224, 128>}]} {
    %0 = tpu.iota {dimensions = array<i32: 0>} : vector<224x1xi32>
    %c15_i32 = arith.constant 15 : i32
    %1 = vector.broadcast %c15_i32 : i32 to vector<224x1xi32>
    %2 = arith.andi %0, %1 : vector<224x1xi32>
    %c14_i32 = arith.constant 14 : i32
    %3 = vector.broadcast %c14_i32 : i32 to vector<224x1xi32>
    %4 = arith.cmpi slt, %2, %3 : vector<224x1xi32>
    %c0 = arith.constant 0 : index
    %c0_0 = arith.constant 0 : index
    %5 = vector.load %arg1[%c0, %c0_0] : memref<224x896xbf16, #tpu.memory_space<vmem>>, vector<224x896xbf16>
    %c0_1 = arith.constant 0 : index
    %c0_2 = arith.constant 0 : index
    %6 = vector.load %arg2[%c0_1, %c0_2] : memref<896x128xbf16, #tpu.memory_space<vmem>>, vector<896x128xbf16>
    %cst = arith.constant dense<0.000000e+00> : vector<224x128xf32>
    %7 = tpu.matmul %5, %6, %cst {dimension_numbers = #tpu.dot_dimension_numbers<[1], [0], [0], [1], [0, 0, 1, 1], [], []>} : vector<224x896xbf16>, vector<896x128xbf16>, vector<224x128xf32> -> vector<224x128xf32>
    %cst_3 = arith.constant 0.000000e+00 : f32
    %8 = vector.shape_cast %4 : vector<224x1xi1> to vector<224x1xi1>
    %9 = vector.broadcast %8 : vector<224x1xi1> to vector<224x128xi1>
    %10 = vector.broadcast %cst_3 : f32 to vector<224x128xf32>
    %11 = arith.select %9, %7, %10 : vector<224x128xi1>, vector<224x128xf32>
    %cst_4 = arith.constant dense<0.000000e+00> : vector<128xf32>
    %12 = vector.multi_reduction <add>, %11, %cst_4 [0] : vector<224x128xf32> to vector<128xf32>
    %13 = vector.shape_cast %12 : vector<128xf32> to vector<1x128xf32>
    %cst_5 = arith.constant 0.00510204071 : f32
    %14 = vector.broadcast %cst_5 : f32 to vector<1x128xf32>
    %15 = arith.mulf %13, %14 : vector<1x128xf32>
    %16 = vector.broadcast %15 : vector<1x128xf32> to vector<224x128xf32>
    %17 = arith.subf %7, %16 : vector<224x128xf32>
    %18 = arith.mulf %17, %17 : vector<224x128xf32>
    %cst_6 = arith.constant 0.000000e+00 : f32
    %19 = vector.shape_cast %4 : vector<224x1xi1> to vector<224x1xi1>
    %20 = vector.broadcast %19 : vector<224x1xi1> to vector<224x128xi1>
    %21 = vector.broadcast %cst_6 : f32 to vector<224x128xf32>
    %22 = arith.select %20, %18, %21 : vector<224x128xi1>, vector<224x128xf32>
    %cst_7 = arith.constant dense<0.000000e+00> : vector<128xf32>
    %23 = vector.multi_reduction <add>, %22, %cst_7 [0] : vector<224x128xf32> to vector<128xf32>
    %24 = vector.shape_cast %23 : vector<128xf32> to vector<1x128xf32>
    %cst_8 = arith.constant 0.00510204071 : f32
    %25 = vector.broadcast %cst_8 : f32 to vector<1x128xf32>
    %26 = arith.mulf %24, %25 : vector<1x128xf32>
    %cst_9 = arith.constant 9.99999974E-6 : f32
    %27 = vector.broadcast %cst_9 : f32 to vector<1x128xf32>
    %28 = arith.addf %26, %27 : vector<1x128xf32>
    %29 = math.rsqrt %28 : vector<1x128xf32>
    %30 = vector.broadcast %29 : vector<1x128xf32> to vector<224x128xf32>
    %31 = arith.mulf %17, %30 : vector<224x128xf32>
    %c0_10 = arith.constant 0 : index
    %c0_11 = arith.constant 0 : index
    %32 = vector.load %arg3[%c0_10, %c0_11] : memref<1x128xf32, #tpu.memory_space<vmem>>, vector<1x128xf32>
    %33 = vector.broadcast %32 : vector<1x128xf32> to vector<224x128xf32>
    %34 = arith.mulf %31, %33 : vector<224x128xf32>
    %c0_12 = arith.constant 0 : index
    %c0_13 = arith.constant 0 : index
    %35 = vector.load %arg4[%c0_12, %c0_13] : memref<1x128xf32, #tpu.memory_space<vmem>>, vector<1x128xf32>
    %36 = vector.broadcast %35 : vector<1x128xf32> to vector<224x128xf32>
    %37 = arith.addf %34, %36 : vector<224x128xf32>
    %c0_14 = arith.constant 0 : index
    %c0_15 = arith.constant 0 : index
    %38 = vector.load %arg5[%c0_14, %c0_15] : memref<224x128xf32, #tpu.memory_space<vmem>>, vector<224x128xf32>
    tpu.vector_store %arg5[%c0_14, %c0_15], %37 {strides = array<i32>} : memref<224x128xf32, #tpu.memory_space<vmem>>, vector<224x128xf32>,
    return
  }
  func.func @transform_0(%arg0: i32) -> (i32, i32) {
    %c0_i32 = arith.constant 0 : i32
    %c0_i32_0 = arith.constant 0 : i32
    %c0_i32_1 = arith.constant 0 : i32
    return %c0_i32, %c0_i32_0 : i32, i32
  }
  func.func @transform_1(%arg0: i32) -> (i32, i32) {
    %c0_i32 = arith.constant 0 : i32
    %c0_i32_0 = arith.constant 0 : i32
    return %c0_i32, %arg0 : i32, i32
  }
  func.func @transform_2(%arg0: i32) -> (i32, i32) {
    %c0_i32 = arith.constant 0 : i32
    %c0_i32_0 = arith.constant 0 : i32
    return %c0_i32, %arg0 : i32, i32
  }
  func.func @transform_3(%arg0: i32) -> (i32, i32) {
    %c0_i32 = arith.constant 0 : i32
    %c0_i32_0 = arith.constant 0 : i32
    return %c0_i32, %arg0 : i32, i32
  }
  func.func @transform_4(%arg0: i32) -> (i32, i32) {
    %c0_i32 = arith.constant 0 : i32
    %c0_i32_0 = arith.constant 0 : i32
    return %c0_i32, %arg0 : i32, i32
  }
}

module attributes {stable_mosaic.version = 11 : i64} {
  func.func @_fused_group_kernel(%arg0: i32, %arg1: memref<224x896xbf16, #tpu.memory_space<vmem>>, %arg2: memref<896x128xbf16, #tpu.memory_space<vmem>>, %arg3: memref<1x1x128xf32, #tpu.memory_space<vmem>>, %arg4: memref<1x1x128xf32, #tpu.memory_space<vmem>>, %arg5: memref<1x9x128x128xbf16, #tpu.memory_space<vmem>>, %arg6: memref<1x1x128xf32, #tpu.memory_space<vmem>>, %arg7: memref<1x1x128xf32, #tpu.memory_space<vmem>>, %arg8: memref<224x128xbf16, #tpu.memory_space<vmem>>, %arg9: memref<272x128xf32, #tpu.memory_space<vmem>>) attributes {dimension_semantics = [#tpu.dimension_semantics<parallel>], iteration_bounds = array<i64: 7>, scalar_prefetch = 0 : i64, scratch_operands = 1 : i64, tpu.core_type = #tpu.core_type<tc>, window_params = [{pipeline_mode = #tpu.pipeline_mode<synchronous>, transform_indices = @transform_0, window_bounds = array<i64: 224, 896>}, {transform_indices = @transform_1, window_bounds = array<i64: 896, 128>}, {transform_indices = @transform_2, window_bounds = array<i64: 1, 1, 128>}, {transform_indices = @transform_3, window_bounds = array<i64: 1, 1, 128>}, {transform_indices = @transform_4, window_bounds = array<i64: 1, 9, 128, 128>}, {transform_indices = @transform_5, window_bounds = array<i64: 1, 1, 128>}, {transform_indices = @transform_6, window_bounds = array<i64: 1, 1, 128>}, {transform_indices = @transform_7, window_bounds = array<i64: 224, 128>}]} {
    %0 = tpu.iota {dimensions = array<i32: 0>} : vector<224x1xi32>
    %c15_i32 = arith.constant 15 : i32
    %1 = vector.broadcast %c15_i32 : i32 to vector<224x1xi32>
    %2 = arith.andi %0, %1 : vector<224x1xi32>
    %c14_i32 = arith.constant 14 : i32
    %3 = vector.broadcast %c14_i32 : i32 to vector<224x1xi32>
    %4 = arith.cmpi slt, %2, %3 : vector<224x1xi32>
    %c0 = arith.constant 0 : index
    %c0_0 = arith.constant 0 : index
    %5 = vector.load %arg1[%c0, %c0_0] : memref<224x896xbf16, #tpu.memory_space<vmem>>, vector<224x896xbf16>
    %c0_1 = arith.constant 0 : index
    %c0_2 = arith.constant 0 : index
    %6 = vector.load %arg2[%c0_1, %c0_2] : memref<896x128xbf16, #tpu.memory_space<vmem>>, vector<896x128xbf16>
    %cst = arith.constant dense<0.000000e+00> : vector<224x128xf32>
    %7 = tpu.matmul %5, %6, %cst {dimension_numbers = #tpu.dot_dimension_numbers<[1], [0], [0], [1], [0, 0, 1, 1], [], []>} : vector<224x896xbf16>, vector<896x128xbf16>, vector<224x128xf32> -> vector<224x128xf32>
    %cst_3 = arith.constant 0.000000e+00 : f32
    %8 = vector.shape_cast %4 : vector<224x1xi1> to vector<224x1xi1>
    %9 = vector.broadcast %8 : vector<224x1xi1> to vector<224x128xi1>
    %10 = vector.broadcast %cst_3 : f32 to vector<224x128xf32>
    %11 = arith.select %9, %7, %10 : vector<224x128xi1>, vector<224x128xf32>
    %cst_4 = arith.constant dense<0.000000e+00> : vector<128xf32>
    %12 = vector.multi_reduction <add>, %11, %cst_4 [0] : vector<224x128xf32> to vector<128xf32>
    %13 = vector.shape_cast %12 : vector<128xf32> to vector<1x128xf32>
    %cst_5 = arith.constant 0.00510204071 : f32
    %14 = vector.broadcast %cst_5 : f32 to vector<1x128xf32>
    %15 = arith.mulf %13, %14 : vector<1x128xf32>
    %16 = vector.broadcast %15 : vector<1x128xf32> to vector<224x128xf32>
    %17 = arith.subf %7, %16 : vector<224x128xf32>
    %18 = arith.mulf %17, %17 : vector<224x128xf32>
    %cst_6 = arith.constant 0.000000e+00 : f32
    %19 = vector.shape_cast %4 : vector<224x1xi1> to vector<224x1xi1>
    %20 = vector.broadcast %19 : vector<224x1xi1> to vector<224x128xi1>
    %21 = vector.broadcast %cst_6 : f32 to vector<224x128xf32>
    %22 = arith.select %20, %18, %21 : vector<224x128xi1>, vector<224x128xf32>
    %cst_7 = arith.constant dense<0.000000e+00> : vector<128xf32>
    %23 = vector.multi_reduction <add>, %22, %cst_7 [0] : vector<224x128xf32> to vector<128xf32>
    %24 = vector.shape_cast %23 : vector<128xf32> to vector<1x128xf32>
    %cst_8 = arith.constant 0.00510204071 : f32
    %25 = vector.broadcast %cst_8 : f32 to vector<1x128xf32>
    %26 = arith.mulf %24, %25 : vector<1x128xf32>
    %cst_9 = arith.constant 9.99999974E-6 : f32
    %27 = vector.broadcast %cst_9 : f32 to vector<1x128xf32>
    %28 = arith.addf %26, %27 : vector<1x128xf32>
    %29 = math.rsqrt %28 : vector<1x128xf32>
    %30 = vector.broadcast %29 : vector<1x128xf32> to vector<224x128xf32>
    %31 = arith.mulf %17, %30 : vector<224x128xf32>
    %c0_10 = arith.constant 0 : index
    %c0_11 = arith.constant 0 : index
    %c0_12 = arith.constant 0 : index
    %32 = vector.load %arg3[%c0_10, %c0_11, %c0_12] : memref<1x1x128xf32, #tpu.memory_space<vmem>>, vector<1x1x128xf32>
    %33 = vector.shape_cast %32 : vector<1x1x128xf32> to vector<1x128xf32>
    %34 = vector.broadcast %33 : vector<1x128xf32> to vector<224x128xf32>
    %35 = arith.mulf %31, %34 : vector<224x128xf32>
    %c0_13 = arith.constant 0 : index
    %c0_14 = arith.constant 0 : index
    %c0_15 = arith.constant 0 : index
    %36 = vector.load %arg4[%c0_13, %c0_14, %c0_15] : memref<1x1x128xf32, #tpu.memory_space<vmem>>, vector<1x1x128xf32>
    %37 = vector.shape_cast %36 : vector<1x1x128xf32> to vector<1x128xf32>
    %38 = vector.broadcast %37 : vector<1x128xf32> to vector<224x128xf32>
    %39 = arith.addf %35, %38 : vector<224x128xf32>
    %cst_16 = arith.constant 0.000000e+00 : f32
    %40 = vector.broadcast %cst_16 : f32 to vector<224x128xf32>
    %41 = arith.maximumf %39, %40 : vector<224x128xf32>
    %cst_17 = arith.constant 0.000000e+00 : f32
    %42 = vector.shape_cast %4 : vector<224x1xi1> to vector<224x1xi1>
    %43 = vector.broadcast %42 : vector<224x1xi1> to vector<224x128xi1>
    %44 = vector.broadcast %cst_17 : f32 to vector<224x128xf32>
    %45 = arith.select %43, %41, %44 : vector<224x128xi1>, vector<224x128xf32>
    %cst_18 = arith.constant 0.000000e+00 : f32
    %46 = vector.broadcast %cst_18 : f32 to vector<24x128xf32>
    %c0_19 = arith.constant 0 : index
    %c0_20 = arith.constant 0 : index
    %47 = vector.load %arg9[%c0_19, %c0_20] : memref<272x128xf32, #tpu.memory_space<vmem>>, vector<24x128xf32>
    tpu.vector_store %arg9[%c0_19, %c0_20], %46 {strides = array<i32>} : memref<272x128xf32, #tpu.memory_space<vmem>>, vector<24x128xf32>,
    %c24 = arith.constant 24 : index
    %c0_21 = arith.constant 0 : index
    %48 = vector.load %arg9[%c24, %c0_21] : memref<272x128xf32, #tpu.memory_space<vmem>>, vector<224x128xf32>
    tpu.vector_store %arg9[%c24, %c0_21], %45 {strides = array<i32>} : memref<272x128xf32, #tpu.memory_space<vmem>>, vector<224x128xf32>,
    %cst_22 = arith.constant 0.000000e+00 : f32
    %49 = vector.broadcast %cst_22 : f32 to vector<24x128xf32>
    %c248 = arith.constant 248 : index
    %c0_23 = arith.constant 0 : index
    %50 = vector.load %arg9[%c248, %c0_23] : memref<272x128xf32, #tpu.memory_space<vmem>>, vector<24x128xf32>
    tpu.vector_store %arg9[%c248, %c0_23], %49 {strides = array<i32>} : memref<272x128xf32, #tpu.memory_space<vmem>>, vector<24x128xf32>,
    %cst_24 = arith.constant 0.000000e+00 : f32
    %51 = vector.broadcast %cst_24 : f32 to vector<224x128xf32>
    %c0_25 = arith.constant 0 : index
    %c0_26 = arith.constant 0 : index
    %52 = vector.load %arg9[%c0_25, %c0_26] : memref<272x128xf32, #tpu.memory_space<vmem>>, vector<240x128xf32>
    %53 = vector.extract_strided_slice %52 {offsets = [7, 0], sizes = [224, 128], strides = [1, 1]} : vector<240x128xf32> to vector<224x128xf32>
    %54 = arith.truncf %53 : vector<224x128xf32> to vector<224x128xbf16>
    %c0_27 = arith.constant 0 : index
    %c0_28 = arith.constant 0 : index
    %c0_29 = arith.constant 0 : index
    %c0_30 = arith.constant 0 : index
    %55 = vector.load %arg5[%c0_27, %c0_28, %c0_29, %c0_30] : memref<1x9x128x128xbf16, #tpu.memory_space<vmem>>, vector<1x1x128x128xbf16>
    %56 = vector.shape_cast %55 : vector<1x1x128x128xbf16> to vector<128x128xbf16>
    %cst_31 = arith.constant dense<0.000000e+00> : vector<224x128xf32>
    %57 = tpu.matmul %54, %56, %cst_31 {dimension_numbers = #tpu.dot_dimension_numbers<[1], [0], [0], [1], [0, 0, 1, 1], [], []>} : vector<224x128xbf16>, vector<128x128xbf16>, vector<224x128xf32> -> vector<224x128xf32>
    %58 = arith.addf %51, %57 : vector<224x128xf32>
    %59 = vector.extract_strided_slice %52 {offsets = [8, 0], sizes = [224, 128], strides = [1, 1]} : vector<240x128xf32> to vector<224x128xf32>
    %60 = arith.truncf %59 : vector<224x128xf32> to vector<224x128xbf16>
    %c0_32 = arith.constant 0 : index
    %c1 = arith.constant 1 : index
    %c0_33 = arith.constant 0 : index
    %c0_34 = arith.constant 0 : index
    %61 = vector.load %arg5[%c0_32, %c1, %c0_33, %c0_34] : memref<1x9x128x128xbf16, #tpu.memory_space<vmem>>, vector<1x1x128x128xbf16>
    %62 = vector.shape_cast %61 : vector<1x1x128x128xbf16> to vector<128x128xbf16>
    %cst_35 = arith.constant dense<0.000000e+00> : vector<224x128xf32>
    %63 = tpu.matmul %60, %62, %cst_35 {dimension_numbers = #tpu.dot_dimension_numbers<[1], [0], [0], [1], [0, 0, 1, 1], [], []>} : vector<224x128xbf16>, vector<128x128xbf16>, vector<224x128xf32> -> vector<224x128xf32>
    %64 = arith.addf %58, %63 : vector<224x128xf32>
    %65 = vector.extract_strided_slice %52 {offsets = [9, 0], sizes = [224, 128], strides = [1, 1]} : vector<240x128xf32> to vector<224x128xf32>
    %66 = arith.truncf %65 : vector<224x128xf32> to vector<224x128xbf16>
    %c0_36 = arith.constant 0 : index
    %c2 = arith.constant 2 : index
    %c0_37 = arith.constant 0 : index
    %c0_38 = arith.constant 0 : index
    %67 = vector.load %arg5[%c0_36, %c2, %c0_37, %c0_38] : memref<1x9x128x128xbf16, #tpu.memory_space<vmem>>, vector<1x1x128x128xbf16>
    %68 = vector.shape_cast %67 : vector<1x1x128x128xbf16> to vector<128x128xbf16>
    %cst_39 = arith.constant dense<0.000000e+00> : vector<224x128xf32>
    %69 = tpu.matmul %66, %68, %cst_39 {dimension_numbers = #tpu.dot_dimension_numbers<[1], [0], [0], [1], [0, 0, 1, 1], [], []>} : vector<224x128xbf16>, vector<128x128xbf16>, vector<224x128xf32> -> vector<224x128xf32>
    %70 = arith.addf %64, %69 : vector<224x128xf32>
    %c16 = arith.constant 16 : index
    %c0_40 = arith.constant 0 : index
    %71 = vector.load %arg9[%c16, %c0_40] : memref<272x128xf32, #tpu.memory_space<vmem>>, vector<240x128xf32>
    %72 = vector.extract_strided_slice %71 {offsets = [7, 0], sizes = [224, 128], strides = [1, 1]} : vector<240x128xf32> to vector<224x128xf32>
    %73 = arith.truncf %72 : vector<224x128xf32> to vector<224x128xbf16>
    %c0_41 = arith.constant 0 : index
    %c3 = arith.constant 3 : index
    %c0_42 = arith.constant 0 : index
    %c0_43 = arith.constant 0 : index
    %74 = vector.load %arg5[%c0_41, %c3, %c0_42, %c0_43] : memref<1x9x128x128xbf16, #tpu.memory_space<vmem>>, vector<1x1x128x128xbf16>
    %75 = vector.shape_cast %74 : vector<1x1x128x128xbf16> to vector<128x128xbf16>
    %cst_44 = arith.constant dense<0.000000e+00> : vector<224x128xf32>
    %76 = tpu.matmul %73, %75, %cst_44 {dimension_numbers = #tpu.dot_dimension_numbers<[1], [0], [0], [1], [0, 0, 1, 1], [], []>} : vector<224x128xbf16>, vector<128x128xbf16>, vector<224x128xf32> -> vector<224x128xf32>
    %77 = arith.addf %70, %76 : vector<224x128xf32>
    %78 = vector.extract_strided_slice %71 {offsets = [8, 0], sizes = [224, 128], strides = [1, 1]} : vector<240x128xf32> to vector<224x128xf32>
    %79 = arith.truncf %78 : vector<224x128xf32> to vector<224x128xbf16>
    %c0_45 = arith.constant 0 : index
    %c4 = arith.constant 4 : index
    %c0_46 = arith.constant 0 : index
    %c0_47 = arith.constant 0 : index
    %80 = vector.load %arg5[%c0_45, %c4, %c0_46, %c0_47] : memref<1x9x128x128xbf16, #tpu.memory_space<vmem>>, vector<1x1x128x128xbf16>
    %81 = vector.shape_cast %80 : vector<1x1x128x128xbf16> to vector<128x128xbf16>
    %cst_48 = arith.constant dense<0.000000e+00> : vector<224x128xf32>
    %82 = tpu.matmul %79, %81, %cst_48 {dimension_numbers = #tpu.dot_dimension_numbers<[1], [0], [0], [1], [0, 0, 1, 1], [], []>} : vector<224x128xbf16>, vector<128x128xbf16>, vector<224x128xf32> -> vector<224x128xf32>
    %83 = arith.addf %77, %82 : vector<224x128xf32>
    %84 = vector.extract_strided_slice %71 {offsets = [9, 0], sizes = [224, 128], strides = [1, 1]} : vector<240x128xf32> to vector<224x128xf32>
    %85 = arith.truncf %84 : vector<224x128xf32> to vector<224x128xbf16>
    %c0_49 = arith.constant 0 : index
    %c5 = arith.constant 5 : index
    %c0_50 = arith.constant 0 : index
    %c0_51 = arith.constant 0 : index
    %86 = vector.load %arg5[%c0_49, %c5, %c0_50, %c0_51] : memref<1x9x128x128xbf16, #tpu.memory_space<vmem>>, vector<1x1x128x128xbf16>
    %87 = vector.shape_cast %86 : vector<1x1x128x128xbf16> to vector<128x128xbf16>
    %cst_52 = arith.constant dense<0.000000e+00> : vector<224x128xf32>
    %88 = tpu.matmul %85, %87, %cst_52 {dimension_numbers = #tpu.dot_dimension_numbers<[1], [0], [0], [1], [0, 0, 1, 1], [], []>} : vector<224x128xbf16>, vector<128x128xbf16>, vector<224x128xf32> -> vector<224x128xf32>
    %89 = arith.addf %83, %88 : vector<224x128xf32>
    %c32 = arith.constant 32 : index
    %c0_53 = arith.constant 0 : index
    %90 = vector.load %arg9[%c32, %c0_53] : memref<272x128xf32, #tpu.memory_space<vmem>>, vector<240x128xf32>
    %91 = vector.extract_strided_slice %90 {offsets = [7, 0], sizes = [224, 128], strides = [1, 1]} : vector<240x128xf32> to vector<224x128xf32>
    %92 = arith.truncf %91 : vector<224x128xf32> to vector<224x128xbf16>
    %c0_54 = arith.constant 0 : index
    %c6 = arith.constant 6 : index
    %c0_55 = arith.constant 0 : index
    %c0_56 = arith.constant 0 : index
    %93 = vector.load %arg5[%c0_54, %c6, %c0_55, %c0_56] : memref<1x9x128x128xbf16, #tpu.memory_space<vmem>>, vector<1x1x128x128xbf16>
    %94 = vector.shape_cast %93 : vector<1x1x128x128xbf16> to vector<128x128xbf16>
    %cst_57 = arith.constant dense<0.000000e+00> : vector<224x128xf32>
    %95 = tpu.matmul %92, %94, %cst_57 {dimension_numbers = #tpu.dot_dimension_numbers<[1], [0], [0], [1], [0, 0, 1, 1], [], []>} : vector<224x128xbf16>, vector<128x128xbf16>, vector<224x128xf32> -> vector<224x128xf32>
    %96 = arith.addf %89, %95 : vector<224x128xf32>
    %97 = vector.extract_strided_slice %90 {offsets = [8, 0], sizes = [224, 128], strides = [1, 1]} : vector<240x128xf32> to vector<224x128xf32>
    %98 = arith.truncf %97 : vector<224x128xf32> to vector<224x128xbf16>
    %c0_58 = arith.constant 0 : index
    %c7 = arith.constant 7 : index
    %c0_59 = arith.constant 0 : index
    %c0_60 = arith.constant 0 : index
    %99 = vector.load %arg5[%c0_58, %c7, %c0_59, %c0_60] : memref<1x9x128x128xbf16, #tpu.memory_space<vmem>>, vector<1x1x128x128xbf16>
    %100 = vector.shape_cast %99 : vector<1x1x128x128xbf16> to vector<128x128xbf16>
    %cst_61 = arith.constant dense<0.000000e+00> : vector<224x128xf32>
    %101 = tpu.matmul %98, %100, %cst_61 {dimension_numbers = #tpu.dot_dimension_numbers<[1], [0], [0], [1], [0, 0, 1, 1], [], []>} : vector<224x128xbf16>, vector<128x128xbf16>, vector<224x128xf32> -> vector<224x128xf32>
    %102 = arith.addf %96, %101 : vector<224x128xf32>
    %103 = vector.extract_strided_slice %90 {offsets = [9, 0], sizes = [224, 128], strides = [1, 1]} : vector<240x128xf32> to vector<224x128xf32>
    %104 = arith.truncf %103 : vector<224x128xf32> to vector<224x128xbf16>
    %c0_62 = arith.constant 0 : index
    %c8 = arith.constant 8 : index
    %c0_63 = arith.constant 0 : index
    %c0_64 = arith.constant 0 : index
    %105 = vector.load %arg5[%c0_62, %c8, %c0_63, %c0_64] : memref<1x9x128x128xbf16, #tpu.memory_space<vmem>>, vector<1x1x128x128xbf16>
    %106 = vector.shape_cast %105 : vector<1x1x128x128xbf16> to vector<128x128xbf16>
    %cst_65 = arith.constant dense<0.000000e+00> : vector<224x128xf32>
    %107 = tpu.matmul %104, %106, %cst_65 {dimension_numbers = #tpu.dot_dimension_numbers<[1], [0], [0], [1], [0, 0, 1, 1], [], []>} : vector<224x128xbf16>, vector<128x128xbf16>, vector<224x128xf32> -> vector<224x128xf32>
    %108 = arith.addf %102, %107 : vector<224x128xf32>
    %cst_66 = arith.constant 0.000000e+00 : f32
    %109 = vector.shape_cast %4 : vector<224x1xi1> to vector<224x1xi1>
    %110 = vector.broadcast %109 : vector<224x1xi1> to vector<224x128xi1>
    %111 = vector.broadcast %cst_66 : f32 to vector<224x128xf32>
    %112 = arith.select %110, %108, %111 : vector<224x128xi1>, vector<224x128xf32>
    %cst_67 = arith.constant dense<0.000000e+00> : vector<128xf32>
    %113 = vector.multi_reduction <add>, %112, %cst_67 [0] : vector<224x128xf32> to vector<128xf32>
    %114 = vector.shape_cast %113 : vector<128xf32> to vector<1x128xf32>
    %cst_68 = arith.constant 0.00510204071 : f32
    %115 = vector.broadcast %cst_68 : f32 to vector<1x128xf32>
    %116 = arith.mulf %114, %115 : vector<1x128xf32>
    %117 = vector.broadcast %116 : vector<1x128xf32> to vector<224x128xf32>
    %118 = arith.subf %108, %117 : vector<224x128xf32>
    %119 = arith.mulf %118, %118 : vector<224x128xf32>
    %cst_69 = arith.constant 0.000000e+00 : f32
    %120 = vector.shape_cast %4 : vector<224x1xi1> to vector<224x1xi1>
    %121 = vector.broadcast %120 : vector<224x1xi1> to vector<224x128xi1>
    %122 = vector.broadcast %cst_69 : f32 to vector<224x128xf32>
    %123 = arith.select %121, %119, %122 : vector<224x128xi1>, vector<224x128xf32>
    %cst_70 = arith.constant dense<0.000000e+00> : vector<128xf32>
    %124 = vector.multi_reduction <add>, %123, %cst_70 [0] : vector<224x128xf32> to vector<128xf32>
    %125 = vector.shape_cast %124 : vector<128xf32> to vector<1x128xf32>
    %cst_71 = arith.constant 0.00510204071 : f32
    %126 = vector.broadcast %cst_71 : f32 to vector<1x128xf32>
    %127 = arith.mulf %125, %126 : vector<1x128xf32>
    %cst_72 = arith.constant 9.99999974E-6 : f32
    %128 = vector.broadcast %cst_72 : f32 to vector<1x128xf32>
    %129 = arith.addf %127, %128 : vector<1x128xf32>
    %130 = math.rsqrt %129 : vector<1x128xf32>
    %131 = vector.broadcast %130 : vector<1x128xf32> to vector<224x128xf32>
    %132 = arith.mulf %118, %131 : vector<224x128xf32>
    %c0_73 = arith.constant 0 : index
    %c0_74 = arith.constant 0 : index
    %c0_75 = arith.constant 0 : index
    %133 = vector.load %arg6[%c0_73, %c0_74, %c0_75] : memref<1x1x128xf32, #tpu.memory_space<vmem>>, vector<1x1x128xf32>
    %134 = vector.shape_cast %133 : vector<1x1x128xf32> to vector<1x128xf32>
    %135 = vector.broadcast %134 : vector<1x128xf32> to vector<224x128xf32>
    %136 = arith.mulf %132, %135 : vector<224x128xf32>
    %c0_76 = arith.constant 0 : index
    %c0_77 = arith.constant 0 : index
    %c0_78 = arith.constant 0 : index
    %137 = vector.load %arg7[%c0_76, %c0_77, %c0_78] : memref<1x1x128xf32, #tpu.memory_space<vmem>>, vector<1x1x128xf32>
    %138 = vector.shape_cast %137 : vector<1x1x128xf32> to vector<1x128xf32>
    %139 = vector.broadcast %138 : vector<1x128xf32> to vector<224x128xf32>
    %140 = arith.addf %136, %139 : vector<224x128xf32>
    %cst_79 = arith.constant 0.000000e+00 : f32
    %141 = vector.broadcast %cst_79 : f32 to vector<224x128xf32>
    %142 = arith.maximumf %140, %141 : vector<224x128xf32>
    %cst_80 = arith.constant 0.000000e+00 : f32
    %143 = vector.shape_cast %4 : vector<224x1xi1> to vector<224x1xi1>
    %144 = vector.broadcast %143 : vector<224x1xi1> to vector<224x128xi1>
    %145 = vector.broadcast %cst_80 : f32 to vector<224x128xf32>
    %146 = arith.select %144, %142, %145 : vector<224x128xi1>, vector<224x128xf32>
    %147 = arith.truncf %146 : vector<224x128xf32> to vector<224x128xbf16>
    %c0_81 = arith.constant 0 : index
    %c0_82 = arith.constant 0 : index
    %148 = vector.load %arg8[%c0_81, %c0_82] : memref<224x128xbf16, #tpu.memory_space<vmem>>, vector<224x128xbf16>
    tpu.vector_store %arg8[%c0_81, %c0_82], %147 {strides = array<i32>} : memref<224x128xbf16, #tpu.memory_space<vmem>>, vector<224x128xbf16>,
    return
  }
  func.func @transform_0(%arg0: i32) -> (i32, i32) {
    %c0_i32 = arith.constant 0 : i32
    %c0_i32_0 = arith.constant 0 : i32
    %c0_i32_1 = arith.constant 0 : i32
    return %c0_i32, %c0_i32_0 : i32, i32
  }
  func.func @transform_1(%arg0: i32) -> (i32, i32) {
    %c0_i32 = arith.constant 0 : i32
    %c0_i32_0 = arith.constant 0 : i32
    return %c0_i32, %arg0 : i32, i32
  }
  func.func @transform_2(%arg0: i32) -> (i32, i32, i32) {
    %c0_i32 = arith.constant 0 : i32
    %c0_i32_0 = arith.constant 0 : i32
    %c0_i32_1 = arith.constant 0 : i32
    return %arg0, %c0_i32, %c0_i32_0 : i32, i32, i32
  }
  func.func @transform_3(%arg0: i32) -> (i32, i32, i32) {
    %c0_i32 = arith.constant 0 : i32
    %c0_i32_0 = arith.constant 0 : i32
    %c0_i32_1 = arith.constant 0 : i32
    return %arg0, %c0_i32, %c0_i32_0 : i32, i32, i32
  }
  func.func @transform_4(%arg0: i32) -> (i32, i32, i32, i32) {
    %c0_i32 = arith.constant 0 : i32
    %c0_i32_0 = arith.constant 0 : i32
    %c0_i32_1 = arith.constant 0 : i32
    %c0_i32_2 = arith.constant 0 : i32
    return %arg0, %c0_i32, %c0_i32_0, %c0_i32_1 : i32, i32, i32, i32
  }
  func.func @transform_5(%arg0: i32) -> (i32, i32, i32) {
    %c0_i32 = arith.constant 0 : i32
    %c0_i32_0 = arith.constant 0 : i32
    %c0_i32_1 = arith.constant 0 : i32
    return %arg0, %c0_i32, %c0_i32_0 : i32, i32, i32
  }
  func.func @transform_6(%arg0: i32) -> (i32, i32, i32) {
    %c0_i32 = arith.constant 0 : i32
    %c0_i32_0 = arith.constant 0 : i32
    %c0_i32_1 = arith.constant 0 : i32
    return %arg0, %c0_i32, %c0_i32_0 : i32, i32, i32
  }
  func.func @transform_7(%arg0: i32) -> (i32, i32) {
    %c0_i32 = arith.constant 0 : i32
    %c0_i32_0 = arith.constant 0 : i32
    return %c0_i32, %arg0 : i32, i32
  }
}

</mosaic_0001>

<llo_original>
// kernel: forward.3
$region0: #{forward.3}
  #allocation0 [shape = 'u32[]', space=smem, size = 0x4, offset = 0x4, fixed_abs, tag = 'smem constant byte address 0x4 - core index']
  #allocation1 [shape = 'u32[144,128]{1,0:T(1,128)}', space=vmem, size = 0x12000, scoped, tag = 'internal scratch']
  %s0 = inlined_call_operand.vmem [shape: bf16[224,896], index: 0, kind: input, shape index: {}]
  %s1 = inlined_call_operand.vmem [shape: bf16[896,896], index: 1, kind: input, shape index: {}]
  %s2 = inlined_call_operand.vmem [shape: f32[1,896], index: 2, kind: input, shape index: {}]
  %s3 = inlined_call_operand.vmem [shape: f32[1,896], index: 3, kind: input, shape index: {}]
  %s4 = inlined_call_operand.vmem [shape: f32[224,896], index: 4, kind: output, shape index: {}]
  %s5 = sld [smem:[#allocation0]]
  $region124: #{forward.3} parent=0
    _
  %s7 = ssub.s32 1, %s5
  %s8 = scalar_select 0, %s7, %s5
  $region1: #{forward.3} parent=0
    #allocation2 [shape = 'u8[458752]{0}', space=vmem, size = 0x70000, scoped, tag = 'input window, operand 1']
    #allocation3 [shape = 'u8[229376]{0}', space=vmem, size = 0x38000, scoped, tag = 'output window, operand 0']
    loop: start=0, step=1, limit=9
    $region2: #{forward.3} parent=1 // loop_pre_header
      _
    $region3: #{forward.3} parent=1 // loop_header
      %s10 = sphi 0, %s14
      %p11 = scmp.ge.s32.totalorder %s10, 9
      %s18 = sphi 0, %s18
      %s20 = sphi 0, %s18
      %s21 = sphi 0, %s20
      %s35 = sphi 0, %s21
      %s41 = sphi 0, %s43
      %s44 = sphi 0, %s41
      %s45 = sphi 0, %s44
      %s61 = sphi 0, %s45
      %s67 = sphi 0, %s69
      %s70 = sphi 0, %s67
      %s71 = sphi 0, %s70
      %s87 = sphi 0, %s71
      %s93 = sphi 0, %s95
      %s96 = sphi 0, %s93
      %s97 = sphi 0, %s96
      %s113 = sphi 0, %s97
      %s119 = sphi 0, %s121
      %s122 = sphi 0, %s119
      %s123 = sphi 0, %s122
      %s139 = sphi 0, %s123
    $region4: #{forward.3} parent=1 // loop_header_branch
      %13 = sbr.rel (%p11) target = $region8
    $region5: #{forward.3} parent=1 // loop_body
      %s15 = ssub.s32 %s10, 1
      %s16 = ssub.s32 %s10, 2
      %s17 = sadd.s32 %s10, 1
      %s19 = sadd.s32 %s18, 1
      %p22 = scmp.eq.s32.totalorder %s10, 6
      %p23 = scmp.ne.s32.totalorder %s18, %s20
      %p24 = scmp.eq.s32.totalorder %s10, 0
      %p25 = por %p23, %p24
      %p26 = scmp.ne.s32.totalorder %s18, %s20
      %p27 = scmp.eq.s32.totalorder %s15, 6
      %p28 = por %p26, %p27
      %p29 = scmp.ne.s32.totalorder %s20, %s21
      %p30 = scmp.eq.s32.totalorder %s15, 0
      %p31 = por %p29, %p30
      %p32 = scmp.ne.s32.totalorder %s20, %s21
      %p33 = scmp.eq.s32.totalorder %s16, 6
      %p34 = por %p32, %p33
      %p36 = scmp.ne.s32.totalorder %s21, %s35
      %p37 = scmp.eq.s32.totalorder %s16, 0
      %p38 = por %p36, %p37
      %s39 = ssub.s32 %s10, %s17
      %p40 = scmp.eq.s32.totalorder %s39, 0
      %s42 = sadd.s32 %s41, 1
      %s43 = scalar_select %p40, %s41, %s42
      %p46 = pneg %p40
      %p47 = scmp.eq.s32.totalorder %s10, 6
      %p48 = por %p46, %p47
      %p49 = scmp.ne.s32.totalorder %s41, %s44
      %p50 = scmp.eq.s32.totalorder %s10, 0
      %p51 = por %p49, %p50
      %p52 = scmp.ne.s32.totalorder %s41, %s44
      %p53 = scmp.eq.s32.totalorder %s15, 6
      %p54 = por %p52, %p53
      %p55 = scmp.ne.s32.totalorder %s44, %s45
      %p56 = scmp.eq.s32.totalorder %s15, 0
      %p57 = por %p55, %p56
      %p58 = scmp.ne.s32.totalorder %s44, %s45
      %p59 = scmp.eq.s32.totalorder %s16, 6
      %p60 = por %p58, %p59
      %p62 = scmp.ne.s32.totalorder %s45, %s61
      %p63 = scmp.eq.s32.totalorder %s16, 0
      %p64 = por %p62, %p63
      %s65 = ssub.s32 %s10, %s17
      %p66 = scmp.eq.s32.totalorder %s65, 0
      %s68 = sadd.s32 %s67, 1
      %s69 = scalar_select %p66, %s67, %s68
      %p72 = pneg %p66
      %p73 = scmp.eq.s32.totalorder %s10, 6
      %p74 = por %p72, %p73
      %p75 = scmp.ne.s32.totalorder %s67, %s70
      %p76 = scmp.eq.s32.totalorder %s10, 0
      %p77 = por %p75, %p76
      %p78 = scmp.ne.s32.totalorder %s67, %s70
      %p79 = scmp.eq.s32.totalorder %s15, 6
      %p80 = por %p78, %p79
      %p81 = scmp.ne.s32.totalorder %s70, %s71
      %p82 = scmp.eq.s32.totalorder %s15, 0
      %p83 = por %p81, %p82
      %p84 = scmp.ne.s32.totalorder %s70, %s71
      %p85 = scmp.eq.s32.totalorder %s16, 6
      %p86 = por %p84, %p85
      %p88 = scmp.ne.s32.totalorder %s71, %s87
      %p89 = scmp.eq.s32.totalorder %s16, 0
      %p90 = por %p88, %p89
      %s91 = ssub.s32 %s10, %s17
      %p92 = scmp.eq.s32.totalorder %s91, 0
      %s94 = sadd.s32 %s93, 1
      %s95 = scalar_select %p92, %s93, %s94
      %p98 = pneg %p92
      %p99 = scmp.eq.s32.totalorder %s10, 6
      %p100 = por %p98, %p99
      %p101 = scmp.ne.s32.totalorder %s93, %s96
      %p102 = scmp.eq.s32.totalorder %s10, 0
      %p103 = por %p101, %p102
      %p104 = scmp.ne.s32.totalorder %s93, %s96
      %p105 = scmp.eq.s32.totalorder %s15, 6
      %p106 = por %p104, %p105
      %p107 = scmp.ne.s32.totalorder %s96, %s97
      %p108 = scmp.eq.s32.totalorder %s15, 0
      %p109 = por %p107, %p108
      %p110 = scmp.ne.s32.totalorder %s96, %s97
      %p111 = scmp.eq.s32.totalorder %s16, 6
      %p112 = por %p110, %p111
      %p114 = scmp.ne.s32.totalorder %s97, %s113
      %p115 = scmp.eq.s32.totalorder %s16, 0
      %p116 = por %p114, %p115
      %s117 = ssub.s32 %s10, %s17
      %p118 = scmp.eq.s32.totalorder %s117, 0
      %s120 = sadd.s32 %s119, 1
      %s121 = scalar_select %p118, %s119, %s120
      %p124 = pneg %p118
      %p125 = scmp.eq.s32.totalorder %s10, 6
      %p126 = por %p124, %p125
      %p127 = scmp.ne.s32.totalorder %s119, %s122
      %p128 = scmp.eq.s32.totalorder %s10, 0
      %p129 = por %p127, %p128
      %p130 = scmp.ne.s32.totalorder %s119, %s122
      %p131 = scmp.eq.s32.totalorder %s15, 6
      %p132 = por %p130, %p131
      %p133 = scmp.ne.s32.totalorder %s122, %s123
      %p134 = scmp.eq.s32.totalorder %s15, 0
      %p135 = por %p133, %p134
      %p136 = scmp.ne.s32.totalorder %s122, %s123
      %p137 = scmp.eq.s32.totalorder %s16, 6
      %p138 = por %p136, %p137
      %p140 = scmp.ne.s32.totalorder %s123, %s139
      %p141 = scmp.eq.s32.totalorder %s16, 0
      %p142 = por %p140, %p141
      %p143 = scmp.le.s32.totalorder 1, %s10
      %p144 = scmp.lt.s32.totalorder %s10, 8
      %p145 = pnand %p143, %p144
      %p146 = pneg %p145
      // Predicated region
      $region9: #{forward.3} parent=5 // pred_check
        _
      $region10: #{forward.3} parent=5 // pred_check_branch
        %148 = sbr.rel (%p145) target = $region12
      $region11: #{forward.3} parent=5 // pred_region
        %s149 = ssub.s32 %s10, 1
        // Predicated region
        $region13: #{forward.3} parent=11 // pred_check
          %p150 = pneg %p31
        $region14: #{forward.3} parent=11 // pred_check_branch
          %152 = sbr.rel (%p150) target = $region16
        $region15: #{forward.3} parent=11 // pred_region
          _
        $region16: #{forward.3} parent=11 // pred_fallthru
          _
      $region12: #{forward.3} parent=5 // pred_fallthru
        _
      %p153 = scmp.lt.s32.totalorder %s10, 7
      // Predicated region
      $region17: #{forward.3} parent=5 // pred_check
        %p154 = pneg %p153
      $region18: #{forward.3} parent=5 // pred_check_branch
        %156 = sbr.rel (%p154) target = $region20
      $region19: #{forward.3} parent=5 // pred_region
        // Predicated region
        $region21: #{forward.3} parent=19 // pred_check
          %p157 = pneg %p51
        $region22: #{forward.3} parent=19 // pred_check_branch
          %159 = sbr.rel (%p157) target = $region24
        $region23: #{forward.3} parent=19 // pred_region
          %s160 = sand.u32 %s41, 1
          %s161 = sand.u32 %s41, 1
          %s162 = smul.addr %s161, 448
          %s163 = scalar_lea.vmem [#allocation2], %s162
          %s164 = smul.addr %s10, 4
          %s165 = scalar_lea.vmem %s1, %s164
          // Predicated region
          $region25: #{forward.3} parent=23 // pred_check
            _
          $region26: #{forward.3} parent=23 // pred_check_branch
            %167 = sbr.rel (0) target = $region28
          $region27: #{forward.3} parent=23 // pred_region
            // Predicated region
            $region29: #{forward.3} parent=27 // pred_check
              _
            $region30: #{forward.3} parent=27 // pred_check_branch
              %169 = sbr.rel target = $region32
            $region31: #{forward.3} parent=27 // pred_region
              // Predicated region
              $region44: #{forward.3} parent=31 // pred_check
                _
              $region45: #{forward.3} parent=31 // pred_check_branch
                %406 = sbr.rel (0) target = $region47
              $region46: #{forward.3} parent=31 // pred_region
                loop: start=0, step=1, limit=1
                $region48: #{forward.3} parent=46 // loop_pre_header
                  _
                $region49: #{forward.3} parent=46 // loop_header
                  %s408 = sphi 0, %s412
                  %p409 = scmp.ge.s32.totalorder %s408, 1
                  %s413 = sphi %s165, %s165
                  %s414 = sphi %s163, %s163
                $region50: #{forward.3} parent=46 // loop_header_branch
                  %411 = sbr.rel (%p409) target = $region54
                $region51: #{forward.3} parent=46 // loop_body
                  _
                $region52: #{forward.3} parent=46 // loop_footer
                  %s412 = sadd.s32 1, %s408
                $region53: #{forward.3} parent=46 // loop_footer_branch
                  %407 = sbr.rel target = $region49
                $region54: #{forward.3} parent=46 // loop_exit
                  _
                loop: start=0, step=1, limit=1
                $region55: #{forward.3} parent=46 // loop_pre_header
                  _
                $region56: #{forward.3} parent=46 // loop_header
                  %s417 = sphi 0, %s421
                  %p418 = scmp.ge.s32.totalorder %s417, 1
                  %s422 = sphi %s165, %s165
                  %s423 = sphi %s163, %s163
                $region57: #{forward.3} parent=46 // loop_header_branch
                  %420 = sbr.rel (%p418) target = $region61
                $region58: #{forward.3} parent=46 // loop_body
                  %v424 = vld [vmem:[%s422] sm:$0xf]
                  %425 = vst [vmem:[%s423] sm:$0xf] %v424
                  %v426 = vld [vmem:[%s422 + $0x1c] sm:$0xf]
                  %427 = vst [vmem:[%s423 + $0x4] sm:$0xf] %v426
                  %v428 = vld [vmem:[%s422 + $0x38] sm:$0xf]
                  %429 = vst [vmem:[%s423 + $0x8] sm:$0xf] %v428
                  %v430 = vld [vmem:[%s422 + $0x54] sm:$0xf]
                  %431 = vst [vmem:[%s423 + $0xc] sm:$0xf] %v430
                  %v432 = vld [vmem:[%s422 + $0x70] sm:$0xf]
                  %433 = vst [vmem:[%s423 + $0x10] sm:$0xf] %v432
                  %v434 = vld [vmem:[%s422 + $0x8c] sm:$0xf]
                  %435 = vst [vmem:[%s423 + $0x14] sm:$0xf] %v434
                  %v436 = vld [vmem:[%s422 + $0xa8] sm:$0xf]
                  %437 = vst [vmem:[%s423 + $0x18] sm:$0xf] %v436
                  %v438 = vld [vmem:[%s422 + $0xc4] sm:$0xf]
                  %439 = vst [vmem:[%s423 + $0x1c] sm:$0xf] %v438
                  %v440 = vld [vmem:[%s422 + $0xe0] sm:$0xf]
                  %441 = vst [vmem:[%s423 + $0x20] sm:$0xf] %v440
                  %v442 = vld [vmem:[%s422 + $0xfc] sm:$0xf]
                  %443 = vst [vmem:[%s423 + $0x24] sm:$0xf] %v442
                  %v444 = vld [vmem:[%s422 + $0x118] sm:$0xf]
                  %445 = vst [vmem:[%s423 + $0x28] sm:$0xf] %v444
                  %v446 = vld [vmem:[%s422 + $0x134] sm:$0xf]
                  %447 = vst [vmem:[%s423 + $0x2c] sm:$0xf] %v446
                  %v448 = vld [vmem:[%s422 + $0x150] sm:$0xf]
                  %449 = vst [vmem:[%s423 + $0x30] sm:$0xf] %v448
                  %v450 = vld [vmem:[%s422 + $0x16c] sm:$0xf]
                  %451 = vst [vmem:[%s423 + $0x34] sm:$0xf] %v450
                  %v452 = vld [vmem:[%s422 + $0x188] sm:$0xf]
                  %453 = vst [vmem:[%s423 + $0x38] sm:$0xf] %v452
                  %v454 = vld [vmem:[%s422 + $0x1a4] sm:$0xf]
                  %455 = vst [vmem:[%s423 + $0x3c] sm:$0xf] %v454
                  %v456 = vld [vmem:[%s422 + $0x1c0] sm:$0xf]
                  %457 = vst [vmem:[%s423 + $0x40] sm:$0xf] %v456
                  %v458 = vld [vmem:[%s422 + $0x1dc] sm:$0xf]
                  %459 = vst [vmem:[%s423 + $0x44] sm:$0xf] %v458
                  %v460 = vld [vmem:[%s422 + $0x1f8] sm:$0xf]
                  %461 = vst [vmem:[%s423 + $0x48] sm:$0xf] %v460
                  %v462 = vld [vmem:[%s422 + $0x214] sm:$0xf]
                  %463 = vst [vmem:[%s423 + $0x4c] sm:$0xf] %v462
                  %v464 = vld [vmem:[%s422 + $0x230] sm:$0xf]
                  %465 = vst [vmem:[%s423 + $0x50] sm:$0xf] %v464
                  %v466 = vld [vmem:[%s422 + $0x24c] sm:$0xf]
                  %467 = vst [vmem:[%s423 + $0x54] sm:$0xf] %v466
                  %v468 = vld [vmem:[%s422 + $0x268] sm:$0xf]
                  %469 = vst [vmem:[%s423 + $0x58] sm:$0xf] %v468
                  %v470 = vld [vmem:[%s422 + $0x284] sm:$0xf]
                  %471 = vst [vmem:[%s423 + $0x5c] sm:$0xf] %v470
                  %v472 = vld [vmem:[%s422 + $0x2a0] sm:$0xf]
                  %473 = vst [vmem:[%s423 + $0x60] sm:$0xf] %v472
                  %v474 = vld [vmem:[%s422 + $0x2bc] sm:$0xf]
                  %475 = vst [vmem:[%s423 + $0x64] sm:$0xf] %v474
                  %v476 = vld [vmem:[%s422 + $0x2d8] sm:$0xf]
                  %477 = vst [vmem:[%s423 + $0x68] sm:$0xf] %v476
                  %v478 = vld [vmem:[%s422 + $0x2f4] sm:$0xf]
                  %479 = vst [vmem:[%s423 + $0x6c] sm:$0xf] %v478
                  %v480 = vld [vmem:[%s422 + $0x310] sm:$0xf]
                  %481 = vst [vmem:[%s423 + $0x70] sm:$0xf] %v480
                  %v482 = vld [vmem:[%s422 + $0x32c] sm:$0xf]
                  %483 = vst [vmem:[%s423 + $0x74] sm:$0xf] %v482
                  %v484 = vld [vmem:[%s422 + $0x348] sm:$0xf]
                  %485 = vst [vmem:[%s423 + $0x78] sm:$0xf] %v484
                  %v486 = vld [vmem:[%s422 + $0x364] sm:$0xf]
                  %487 = vst [vmem:[%s423 + $0x7c] sm:$0xf] %v486
                  %v488 = vld [vmem:[%s422 + $0x380] sm:$0xf]
                  %489 = vst [vmem:[%s423 + $0x80] sm:$0xf] %v488
                  %v490 = vld [vmem:[%s422 + $0x39c] sm:$0xf]
                  %491 = vst [vmem:[%s423 + $0x84] sm:$0xf] %v490
                  %v492 = vld [vmem:[%s422 + $0x3b8] sm:$0xf]
                  %493 = vst [vmem:[%s423 + $0x88] sm:$0xf] %v492
                  %v494 = vld [vmem:[%s422 + $0x3d4] sm:$0xf]
                  %495 = vst [vmem:[%s423 + $0x8c] sm:$0xf] %v494
                  %v496 = vld [vmem:[%s422 + $0x3f0] sm:$0xf]
                  %497 = vst [vmem:[%s423 + $0x90] sm:$0xf] %v496
                  %v498 = vld [vmem:[%s422 + $0x40c] sm:$0xf]
                  %499 = vst [vmem:[%s423 + $0x94] sm:$0xf] %v498
                  %v500 = vld [vmem:[%s422 + $0x428] sm:$0xf]
                  %501 = vst [vmem:[%s423 + $0x98] sm:$0xf] %v500
                  %v502 = vld [vmem:[%s422 + $0x444] sm:$0xf]
                  %503 = vst [vmem:[%s423 + $0x9c] sm:$0xf] %v502
                  %v504 = vld [vmem:[%s422 + $0x460] sm:$0xf]
                  %505 = vst [vmem:[%s423 + $0xa0] sm:$0xf] %v504
                  %v506 = vld [vmem:[%s422 + $0x47c] sm:$0xf]
                  %507 = vst [vmem:[%s423 + $0xa4] sm:$0xf] %v506
                  %v508 = vld [vmem:[%s422 + $0x498] sm:$0xf]
                  %509 = vst [vmem:[%s423 + $0xa8] sm:$0xf] %v508
                  %v510 = vld [vmem:[%s422 + $0x4b4] sm:$0xf]
                  %511 = vst [vmem:[%s423 + $0xac] sm:$0xf] %v510
                  %v512 = vld [vmem:[%s422 + $0x4d0] sm:$0xf]
                  %513 = vst [vmem:[%s423 + $0xb0] sm:$0xf] %v512
                  %v514 = vld [vmem:[%s422 + $0x4ec] sm:$0xf]
                  %515 = vst [vmem:[%s423 + $0xb4] sm:$0xf] %v514
                  %v516 = vld [vmem:[%s422 + $0x508] sm:$0xf]
                  %517 = vst [vmem:[%s423 + $0xb8] sm:$0xf] %v516
                  %v518 = vld [vmem:[%s422 + $0x524] sm:$0xf]
                  %519 = vst [vmem:[%s423 + $0xbc] sm:$0xf] %v518
                  %v520 = vld [vmem:[%s422 + $0x540] sm:$0xf]
                  %521 = vst [vmem:[%s423 + $0xc0] sm:$0xf] %v520
                  %v522 = vld [vmem:[%s422 + $0x55c] sm:$0xf]
                  %523 = vst [vmem:[%s423 + $0xc4] sm:$0xf] %v522
                  %v524 = vld [vmem:[%s422 + $0x578] sm:$0xf]
                  %525 = vst [vmem:[%s423 + $0xc8] sm:$0xf] %v524
                  %v526 = vld [vmem:[%s422 + $0x594] sm:$0xf]
                  %527 = vst [vmem:[%s423 + $0xcc] sm:$0xf] %v526
                  %v528 = vld [vmem:[%s422 + $0x5b0] sm:$0xf]
                  %529 = vst [vmem:[%s423 + $0xd0] sm:$0xf] %v528
                  %v530 = vld [vmem:[%s422 + $0x5cc] sm:$0xf]
                  %531 = vst [vmem:[%s423 + $0xd4] sm:$0xf] %v530
                  %v532 = vld [vmem:[%s422 + $0x5e8] sm:$0xf]
                  %533 = vst [vmem:[%s423 + $0xd8] sm:$0xf] %v532
                  %v534 = vld [vmem:[%s422 + $0x604] sm:$0xf]
                  %535 = vst [vmem:[%s423 + $0xdc] sm:$0xf] %v534
                  %v536 = vld [vmem:[%s422 + $0x620] sm:$0xf]
                  %537 = vst [vmem:[%s423 + $0xe0] sm:$0xf] %v536
                  %v538 = vld [vmem:[%s422 + $0x63c] sm:$0xf]
                  %539 = vst [vmem:[%s423 + $0xe4] sm:$0xf] %v538
                  %v540 = vld [vmem:[%s422 + $0x658] sm:$0xf]
                  %541 = vst [vmem:[%s423 + $0xe8] sm:$0xf] %v540
                  %v542 = vld [vmem:[%s422 + $0x674] sm:$0xf]
                  %543 = vst [vmem:[%s423 + $0xec] sm:$0xf] %v542
                  %v544 = vld [vmem:[%s422 + $0x690] sm:$0xf]
                  %545 = vst [vmem:[%s423 + $0xf0] sm:$0xf] %v544
                  %v546 = vld [vmem:[%s422 + $0x6ac] sm:$0xf]
                  %547 = vst [vmem:[%s423 + $0xf4] sm:$0xf] %v546
                  %v548 = vld [vmem:[%s422 + $0x6c8] sm:$0xf]
                  %549 = vst [vmem:[%s423 + $0xf8] sm:$0xf] %v548
                  %v550 = vld [vmem:[%s422 + $0x6e4] sm:$0xf]
                  %551 = vst [vmem:[%s423 + $0xfc] sm:$0xf] %v550
                  %v552 = vld [vmem:[%s422 + $0x700] sm:$0xf]
                  %553 = vst [vmem:[%s423 + $0x100] sm:$0xf] %v552
                  %v554 = vld [vmem:[%s422 + $0x71c] sm:$0xf]
                  %555 = vst [vmem:[%s423 + $0x104] sm:$0xf] %v554
                  %v556 = vld [vmem:[%s422 + $0x738] sm:$0xf]
                  %557 = vst [vmem:[%s423 + $0x108] sm:$0xf] %v556
                  %v558 = vld [vmem:[%s422 + $0x754] sm:$0xf]
                  %559 = vst [vmem:[%s423 + $0x10c] sm:$0xf] %v558
                  %v560 = vld [vmem:[%s422 + $0x770] sm:$0xf]
                  %561 = vst [vmem:[%s423 + $0x110] sm:$0xf] %v560
                  %v562 = vld [vmem:[%s422 + $0x78c] sm:$0xf]
                  %563 = vst [vmem:[%s423 + $0x114] sm:$0xf] %v562
                  %v564 = vld [vmem:[%s422 + $0x7a8] sm:$0xf]
                  %565 = vst [vmem:[%s423 + $0x118] sm:$0xf] %v564
                  %v566 = vld [vmem:[%s422 + $0x7c4] sm:$0xf]
                  %567 = vst [vmem:[%s423 + $0x11c] sm:$0xf] %v566
                  %v568 = vld [vmem:[%s422 + $0x7e0] sm:$0xf]
                  %569 = vst [vmem:[%s423 + $0x120] sm:$0xf] %v568
                  %v570 = vld [vmem:[%s422 + $0x7fc] sm:$0xf]
                  %571 = vst [vmem:[%s423 + $0x124] sm:$0xf] %v570
                  %v572 = vld [vmem:[%s422 + $0x818] sm:$0xf]
                  %573 = vst [vmem:[%s423 + $0x128] sm:$0xf] %v572
                  %v574 = vld [vmem:[%s422 + $0x834] sm:$0xf]
                  %575 = vst [vmem:[%s423 + $0x12c] sm:$0xf] %v574
                  %v576 = vld [vmem:[%s422 + $0x850] sm:$0xf]
                  %577 = vst [vmem:[%s423 + $0x130] sm:$0xf] %v576
                  %v578 = vld [vmem:[%s422 + $0x86c] sm:$0xf]
                  %579 = vst [vmem:[%s423 + $0x134] sm:$0xf] %v578
                  %v580 = vld [vmem:[%s422 + $0x888] sm:$0xf]
                  %581 = vst [vmem:[%s423 + $0x138] sm:$0xf] %v580
                  %v582 = vld [vmem:[%s422 + $0x8a4] sm:$0xf]
                  %583 = vst [vmem:[%s423 + $0x13c] sm:$0xf] %v582
                  %v584 = vld [vmem:[%s422 + $0x8c0] sm:$0xf]
                  %585 = vst [vmem:[%s423 + $0x140] sm:$0xf] %v584
                  %v586 = vld [vmem:[%s422 + $0x8dc] sm:$0xf]
                  %587 = vst [vmem:[%s423 + $0x144] sm:$0xf] %v586
                  %v588 = vld [vmem:[%s422 + $0x8f8] sm:$0xf]
                  %589 = vst [vmem:[%s423 + $0x148] sm:$0xf] %v588
                  %v590 = vld [vmem:[%s422 + $0x914] sm:$0xf]
                  %591 = vst [vmem:[%s423 + $0x14c] sm:$0xf] %v590
                  %v592 = vld [vmem:[%s422 + $0x930] sm:$0xf]
                  %593 = vst [vmem:[%s423 + $0x150] sm:$0xf] %v592
                  %v594 = vld [vmem:[%s422 + $0x94c] sm:$0xf]
                  %595 = vst [vmem:[%s423 + $0x154] sm:$0xf] %v594
                  %v596 = vld [vmem:[%s422 + $0x968] sm:$0xf]
                  %597 = vst [vmem:[%s423 + $0x158] sm:$0xf] %v596
                  %v598 = vld [vmem:[%s422 + $0x984] sm:$0xf]
                  %599 = vst [vmem:[%s423 + $0x15c] sm:$0xf] %v598
                  %v600 = vld [vmem:[%s422 + $0x9a0] sm:$0xf]
                  %601 = vst [vmem:[%s423 + $0x160] sm:$0xf] %v600
                  %v602 = vld [vmem:[%s422 + $0x9bc] sm:$0xf]
                  %603 = vst [vmem:[%s423 + $0x164] sm:$0xf] %v602
                  %v604 = vld [vmem:[%s422 + $0x9d8] sm:$0xf]
                  %605 = vst [vmem:[%s423 + $0x168] sm:$0xf] %v604
                  %v606 = vld [vmem:[%s422 + $0x9f4] sm:$0xf]
                  %607 = vst [vmem:[%s423 + $0x16c] sm:$0xf] %v606
                  %v608 = vld [vmem:[%s422 + $0xa10] sm:$0xf]
                  %609 = vst [vmem:[%s423 + $0x170] sm:$0xf] %v608
                  %v610 = vld [vmem:[%s422 + $0xa2c] sm:$0xf]
                  %611 = vst [vmem:[%s423 + $0x174] sm:$0xf] %v610
                  %v612 = vld [vmem:[%s422 + $0xa48] sm:$0xf]
                  %613 = vst [vmem:[%s423 + $0x178] sm:$0xf] %v612
                  %v614 = vld [vmem:[%s422 + $0xa64] sm:$0xf]
                  %615 = vst [vmem:[%s423 + $0x17c] sm:$0xf] %v614
                  %v616 = vld [vmem:[%s422 + $0xa80] sm:$0xf]
                  %617 = vst [vmem:[%s423 + $0x180] sm:$0xf] %v616
                  %v618 = vld [vmem:[%s422 + $0xa9c] sm:$0xf]
                  %619 = vst [vmem:[%s423 + $0x184] sm:$0xf] %v618
                  %v620 = vld [vmem:[%s422 + $0xab8] sm:$0xf]
                  %621 = vst [vmem:[%s423 + $0x188] sm:$0xf] %v620
                  %v622 = vld [vmem:[%s422 + $0xad4] sm:$0xf]
                  %623 = vst [vmem:[%s423 + $0x18c] sm:$0xf] %v622
                  %v624 = vld [vmem:[%s422 + $0xaf0] sm:$0xf]
                  %625 = vst [vmem:[%s423 + $0x190] sm:$0xf] %v624
                  %v626 = vld [vmem:[%s422 + $0xb0c] sm:$0xf]
                  %627 = vst [vmem:[%s423 + $0x194] sm:$0xf] %v626
                  %v628 = vld [vmem:[%s422 + $0xb28] sm:$0xf]
                  %629 = vst [vmem:[%s423 + $0x198] sm:$0xf] %v628
                  %v630 = vld [vmem:[%s422 + $0xb44] sm:$0xf]
                  %631 = vst [vmem:[%s423 + $0x19c] sm:$0xf] %v630
                  %v632 = vld [vmem:[%s422 + $0xb60] sm:$0xf]
                  %633 = vst [vmem:[%s423 + $0x1a0] sm:$0xf] %v632
                  %v634 = vld [vmem:[%s422 + $0xb7c] sm:$0xf]
                  %635 = vst [vmem:[%s423 + $0x1a4] sm:$0xf] %v634
                  %v636 = vld [vmem:[%s422 + $0xb98] sm:$0xf]
                  %637 = vst [vmem:[%s423 + $0x1a8] sm:$0xf] %v636
                  %v638 = vld [vmem:[%s422 + $0xbb4] sm:$0xf]
                  %639 = vst [vmem:[%s423 + $0x1ac] sm:$0xf] %v638
                  %v640 = vld [vmem:[%s422 + $0xbd0] sm:$0xf]
                  %641 = vst [vmem:[%s423 + $0x1b0] sm:$0xf] %v640
                  %v642 = vld [vmem:[%s422 + $0xbec] sm:$0xf]
                  %643 = vst [vmem:[%s423 + $0x1b4] sm:$0xf] %v642
                  %v644 = vld [vmem:[%s422 + $0xc08] sm:$0xf]
                  %645 = vst [vmem:[%s423 + $0x1b8] sm:$0xf] %v644
                  %v646 = vld [vmem:[%s422 + $0xc24] sm:$0xf]
                  %647 = vst [vmem:[%s423 + $0x1bc] sm:$0xf] %v646
                $region59: #{forward.3} parent=46 // loop_footer
                  %s421 = sadd.s32 1, %s417
                $region60: #{forward.3} parent=46 // loop_footer_branch
                  %416 = sbr.rel target = $region56
                $region61: #{forward.3} parent=46 // loop_exit
                  _
              $region47: #{forward.3} parent=31 // pred_fallthru
                _
            $region32: #{forward.3} parent=27 // pred_fallthru
              _
            // Predicated region
            $region33: #{forward.3} parent=27 // pred_check
              _
            $region34: #{forward.3} parent=27 // pred_check_branch
              %171 = sbr.rel (0) target = $region36
            $region35: #{forward.3} parent=27 // pred_region
              loop: start=0, step=1, limit=1
              $region37: #{forward.3} parent=35 // loop_pre_header
                _
              $region38: #{forward.3} parent=35 // loop_header
                %s174 = sphi 0, %s178
                %p175 = scmp.ge.s32.totalorder %s174, 1
                %s179 = sphi %s165, %s165
                %s180 = sphi %s163, %s163
              $region39: #{forward.3} parent=35 // loop_header_branch
                %177 = sbr.rel (%p175) target = $region43
              $region40: #{forward.3} parent=35 // loop_body
                %v181 = vld [vmem:[%s179] sm:$0xf]
                %182 = vst [vmem:[%s180] sm:$0xf] %v181
                %v183 = vld [vmem:[%s179 + $0x1c] sm:$0xf]
                %184 = vst [vmem:[%s180 + $0x4] sm:$0xf] %v183
                %v185 = vld [vmem:[%s179 + $0x38] sm:$0xf]
                %186 = vst [vmem:[%s180 + $0x8] sm:$0xf] %v185
                %v187 = vld [vmem:[%s179 + $0x54] sm:$0xf]
                %188 = vst [vmem:[%s180 + $0xc] sm:$0xf] %v187
                %v189 = vld [vmem:[%s179 + $0x70] sm:$0xf]
                %190 = vst [vmem:[%s180 + $0x10] sm:$0xf] %v189
                %v191 = vld [vmem:[%s179 + $0x8c] sm:$0xf]
                %192 = vst [vmem:[%s180 + $0x14] sm:$0xf] %v191
                %v193 = vld [vmem:[%s179 + $0xa8] sm:$0xf]
                %194 = vst [vmem:[%s180 + $0x18] sm:$0xf] %v193
                %v195 = vld [vmem:[%s179 + $0xc4] sm:$0xf]
                %196 = vst [vmem:[%s180 + $0x1c] sm:$0xf] %v195
                %v197 = vld [vmem:[%s179 + $0xe0] sm:$0xf]
                %198 = vst [vmem:[%s180 + $0x20] sm:$0xf] %v197
                %v199 = vld [vmem:[%s179 + $0xfc] sm:$0xf]
                %200 = vst [vmem:[%s180 + $0x24] sm:$0xf] %v199
                %v201 = vld [vmem:[%s179 + $0x118] sm:$0xf]
                %202 = vst [vmem:[%s180 + $0x28] sm:$0xf] %v201
                %v203 = vld [vmem:[%s179 + $0x134] sm:$0xf]
                %204 = vst [vmem:[%s180 + $0x2c] sm:$0xf] %v203
                %v205 = vld [vmem:[%s179 + $0x150] sm:$0xf]
                %206 = vst [vmem:[%s180 + $0x30] sm:$0xf] %v205
                %v207 = vld [vmem:[%s179 + $0x16c] sm:$0xf]
                %208 = vst [vmem:[%s180 + $0x34] sm:$0xf] %v207
                %v209 = vld [vmem:[%s179 + $0x188] sm:$0xf]
                %210 = vst [vmem:[%s180 + $0x38] sm:$0xf] %v209
                %v211 = vld [vmem:[%s179 + $0x1a4] sm:$0xf]
                %212 = vst [vmem:[%s180 + $0x3c] sm:$0xf] %v211
                %v213 = vld [vmem:[%s179 + $0x1c0] sm:$0xf]
                %214 = vst [vmem:[%s180 + $0x40] sm:$0xf] %v213
                %v215 = vld [vmem:[%s179 + $0x1dc] sm:$0xf]
                %216 = vst [vmem:[%s180 + $0x44] sm:$0xf] %v215
                %v217 = vld [vmem:[%s179 + $0x1f8] sm:$0xf]
                %218 = vst [vmem:[%s180 + $0x48] sm:$0xf] %v217
                %v219 = vld [vmem:[%s179 + $0x214] sm:$0xf]
                %220 = vst [vmem:[%s180 + $0x4c] sm:$0xf] %v219
                %v221 = vld [vmem:[%s179 + $0x230] sm:$0xf]
                %222 = vst [vmem:[%s180 + $0x50] sm:$0xf] %v221
                %v223 = vld [vmem:[%s179 + $0x24c] sm:$0xf]
                %224 = vst [vmem:[%s180 + $0x54] sm:$0xf] %v223
                %v225 = vld [vmem:[%s179 + $0x268] sm:$0xf]
                %226 = vst [vmem:[%s180 + $0x58] sm:$0xf] %v225
                %v227 = vld [vmem:[%s179 + $0x284] sm:$0xf]
                %228 = vst [vmem:[%s180 + $0x5c] sm:$0xf] %v227
                %v229 = vld [vmem:[%s179 + $0x2a0] sm:$0xf]
                %230 = vst [vmem:[%s180 + $0x60] sm:$0xf] %v229
                %v231 = vld [vmem:[%s179 + $0x2bc] sm:$0xf]
                %232 = vst [vmem:[%s180 + $0x64] sm:$0xf] %v231
                %v233 = vld [vmem:[%s179 + $0x2d8] sm:$0xf]
                %234 = vst [vmem:[%s180 + $0x68] sm:$0xf] %v233
                %v235 = vld [vmem:[%s179 + $0x2f4] sm:$0xf]
                %236 = vst [vmem:[%s180 + $0x6c] sm:$0xf] %v235
                %v237 = vld [vmem:[%s179 + $0x310] sm:$0xf]
                %238 = vst [vmem:[%s180 + $0x70] sm:$0xf] %v237
                %v239 = vld [vmem:[%s179 + $0x32c] sm:$0xf]
                %240 = vst [vmem:[%s180 + $0x74] sm:$0xf] %v239
                %v241 = vld [vmem:[%s179 + $0x348] sm:$0xf]
                %242 = vst [vmem:[%s180 + $0x78] sm:$0xf] %v241
                %v243 = vld [vmem:[%s179 + $0x364] sm:$0xf]
                %244 = vst [vmem:[%s180 + $0x7c] sm:$0xf] %v243
                %v245 = vld [vmem:[%s179 + $0x380] sm:$0xf]
                %246 = vst [vmem:[%s180 + $0x80] sm:$0xf] %v245
                %v247 = vld [vmem:[%s179 + $0x39c] sm:$0xf]
                %248 = vst [vmem:[%s180 + $0x84] sm:$0xf] %v247
                %v249 = vld [vmem:[%s179 + $0x3b8] sm:$0xf]
                %250 = vst [vmem:[%s180 + $0x88] sm:$0xf] %v249
                %v251 = vld [vmem:[%s179 + $0x3d4] sm:$0xf]
                %252 = vst [vmem:[%s180 + $0x8c] sm:$0xf] %v251
                %v253 = vld [vmem:[%s179 + $0x3f0] sm:$0xf]
                %254 = vst [vmem:[%s180 + $0x90] sm:$0xf] %v253
                %v255 = vld [vmem:[%s179 + $0x40c] sm:$0xf]
                %256 = vst [vmem:[%s180 + $0x94] sm:$0xf] %v255
                %v257 = vld [vmem:[%s179 + $0x428] sm:$0xf]
                %258 = vst [vmem:[%s180 + $0x98] sm:$0xf] %v257
                %v259 = vld [vmem:[%s179 + $0x444] sm:$0xf]
                %260 = vst [vmem:[%s180 + $0x9c] sm:$0xf] %v259
                %v261 = vld [vmem:[%s179 + $0x460] sm:$0xf]
                %262 = vst [vmem:[%s180 + $0xa0] sm:$0xf] %v261
                %v263 = vld [vmem:[%s179 + $0x47c] sm:$0xf]
                %264 = vst [vmem:[%s180 + $0xa4] sm:$0xf] %v263
                %v265 = vld [vmem:[%s179 + $0x498] sm:$0xf]
                %266 = vst [vmem:[%s180 + $0xa8] sm:$0xf] %v265
                %v267 = vld [vmem:[%s179 + $0x4b4] sm:$0xf]
                %268 = vst [vmem:[%s180 + $0xac] sm:$0xf] %v267
                %v269 = vld [vmem:[%s179 + $0x4d0] sm:$0xf]
                %270 = vst [vmem:[%s180 + $0xb0] sm:$0xf] %v269
                %v271 = vld [vmem:[%s179 + $0x4ec] sm:$0xf]
                %272 = vst [vmem:[%s180 + $0xb4] sm:$0xf] %v271
                %v273 = vld [vmem:[%s179 + $0x508] sm:$0xf]
                %274 = vst [vmem:[%s180 + $0xb8] sm:$0xf] %v273
                %v275 = vld [vmem:[%s179 + $0x524] sm:$0xf]
                %276 = vst [vmem:[%s180 + $0xbc] sm:$0xf] %v275
                %v277 = vld [vmem:[%s179 + $0x540] sm:$0xf]
                %278 = vst [vmem:[%s180 + $0xc0] sm:$0xf] %v277
                %v279 = vld [vmem:[%s179 + $0x55c] sm:$0xf]
                %280 = vst [vmem:[%s180 + $0xc4] sm:$0xf] %v279
                %v281 = vld [vmem:[%s179 + $0x578] sm:$0xf]
                %282 = vst [vmem:[%s180 + $0xc8] sm:$0xf] %v281
                %v283 = vld [vmem:[%s179 + $0x594] sm:$0xf]
                %284 = vst [vmem:[%s180 + $0xcc] sm:$0xf] %v283
                %v285 = vld [vmem:[%s179 + $0x5b0] sm:$0xf]
                %286 = vst [vmem:[%s180 + $0xd0] sm:$0xf] %v285
                %v287 = vld [vmem:[%s179 + $0x5cc] sm:$0xf]
                %288 = vst [vmem:[%s180 + $0xd4] sm:$0xf] %v287
                %v289 = vld [vmem:[%s179 + $0x5e8] sm:$0xf]
                %290 = vst [vmem:[%s180 + $0xd8] sm:$0xf] %v289
                %v291 = vld [vmem:[%s179 + $0x604] sm:$0xf]
                %292 = vst [vmem:[%s180 + $0xdc] sm:$0xf] %v291
                %v293 = vld [vmem:[%s179 + $0x620] sm:$0xf]
                %294 = vst [vmem:[%s180 + $0xe0] sm:$0xf] %v293
                %v295 = vld [vmem:[%s179 + $0x63c] sm:$0xf]
                %296 = vst [vmem:[%s180 + $0xe4] sm:$0xf] %v295
                %v297 = vld [vmem:[%s179 + $0x658] sm:$0xf]
                %298 = vst [vmem:[%s180 + $0xe8] sm:$0xf] %v297
                %v299 = vld [vmem:[%s179 + $0x674] sm:$0xf]
                %300 = vst [vmem:[%s180 + $0xec] sm:$0xf] %v299
                %v301 = vld [vmem:[%s179 + $0x690] sm:$0xf]
                %302 = vst [vmem:[%s180 + $0xf0] sm:$0xf] %v301
                %v303 = vld [vmem:[%s179 + $0x6ac] sm:$0xf]
                %304 = vst [vmem:[%s180 + $0xf4] sm:$0xf] %v303
                %v305 = vld [vmem:[%s179 + $0x6c8] sm:$0xf]
                %306 = vst [vmem:[%s180 + $0xf8] sm:$0xf] %v305
                %v307 = vld [vmem:[%s179 + $0x6e4] sm:$0xf]
                %308 = vst [vmem:[%s180 + $0xfc] sm:$0xf] %v307
                %v309 = vld [vmem:[%s179 + $0x700] sm:$0xf]
                %310 = vst [vmem:[%s180 + $0x100] sm:$0xf] %v309
                %v311 = vld [vmem:[%s179 + $0x71c] sm:$0xf]
                %312 = vst [vmem:[%s180 + $0x104] sm:$0xf] %v311
                %v313 = vld [vmem:[%s179 + $0x738] sm:$0xf]
                %314 = vst [vmem:[%s180 + $0x108] sm:$0xf] %v313
                %v315 = vld [vmem:[%s179 + $0x754] sm:$0xf]
                %316 = vst [vmem:[%s180 + $0x10c] sm:$0xf] %v315
                %v317 = vld [vmem:[%s179 + $0x770] sm:$0xf]
                %318 = vst [vmem:[%s180 + $0x110] sm:$0xf] %v317
                %v319 = vld [vmem:[%s179 + $0x78c] sm:$0xf]
                %320 = vst [vmem:[%s180 + $0x114] sm:$0xf] %v319
                %v321 = vld [vmem:[%s179 + $0x7a8] sm:$0xf]
                %322 = vst [vmem:[%s180 + $0x118] sm:$0xf] %v321
                %v323 = vld [vmem:[%s179 + $0x7c4] sm:$0xf]
                %324 = vst [vmem:[%s180 + $0x11c] sm:$0xf] %v323
                %v325 = vld [vmem:[%s179 + $0x7e0] sm:$0xf]
                %326 = vst [vmem:[%s180 + $0x120] sm:$0xf] %v325
                %v327 = vld [vmem:[%s179 + $0x7fc] sm:$0xf]
                %328 = vst [vmem:[%s180 + $0x124] sm:$0xf] %v327
                %v329 = vld [vmem:[%s179 + $0x818] sm:$0xf]
                %330 = vst [vmem:[%s180 + $0x128] sm:$0xf] %v329
                %v331 = vld [vmem:[%s179 + $0x834] sm:$0xf]
                %332 = vst [vmem:[%s180 + $0x12c] sm:$0xf] %v331
                %v333 = vld [vmem:[%s179 + $0x850] sm:$0xf]
                %334 = vst [vmem:[%s180 + $0x130] sm:$0xf] %v333
                %v335 = vld [vmem:[%s179 + $0x86c] sm:$0xf]
                %336 = vst [vmem:[%s180 + $0x134] sm:$0xf] %v335
                %v337 = vld [vmem:[%s179 + $0x888] sm:$0xf]
                %338 = vst [vmem:[%s180 + $0x138] sm:$0xf] %v337
                %v339 = vld [vmem:[%s179 + $0x8a4] sm:$0xf]
                %340 = vst [vmem:[%s180 + $0x13c] sm:$0xf] %v339
                %v341 = vld [vmem:[%s179 + $0x8c0] sm:$0xf]
                %342 = vst [vmem:[%s180 + $0x140] sm:$0xf] %v341
                %v343 = vld [vmem:[%s179 + $0x8dc] sm:$0xf]
                %344 = vst [vmem:[%s180 + $0x144] sm:$0xf] %v343
                %v345 = vld [vmem:[%s179 + $0x8f8] sm:$0xf]
                %346 = vst [vmem:[%s180 + $0x148] sm:$0xf] %v345
                %v347 = vld [vmem:[%s179 + $0x914] sm:$0xf]
                %348 = vst [vmem:[%s180 + $0x14c] sm:$0xf] %v347
                %v349 = vld [vmem:[%s179 + $0x930] sm:$0xf]
                %350 = vst [vmem:[%s180 + $0x150] sm:$0xf] %v349
                %v351 = vld [vmem:[%s179 + $0x94c] sm:$0xf]
                %352 = vst [vmem:[%s180 + $0x154] sm:$0xf] %v351
                %v353 = vld [vmem:[%s179 + $0x968] sm:$0xf]
                %354 = vst [vmem:[%s180 + $0x158] sm:$0xf] %v353
                %v355 = vld [vmem:[%s179 + $0x984] sm:$0xf]
                %356 = vst [vmem:[%s180 + $0x15c] sm:$0xf] %v355
                %v357 = vld [vmem:[%s179 + $0x9a0] sm:$0xf]
                %358 = vst [vmem:[%s180 + $0x160] sm:$0xf] %v357
                %v359 = vld [vmem:[%s179 + $0x9bc] sm:$0xf]
                %360 = vst [vmem:[%s180 + $0x164] sm:$0xf] %v359
                %v361 = vld [vmem:[%s179 + $0x9d8] sm:$0xf]
                %362 = vst [vmem:[%s180 + $0x168] sm:$0xf] %v361
                %v363 = vld [vmem:[%s179 + $0x9f4] sm:$0xf]
                %364 = vst [vmem:[%s180 + $0x16c] sm:$0xf] %v363
                %v365 = vld [vmem:[%s179 + $0xa10] sm:$0xf]
                %366 = vst [vmem:[%s180 + $0x170] sm:$0xf] %v365
                %v367 = vld [vmem:[%s179 + $0xa2c] sm:$0xf]
                %368 = vst [vmem:[%s180 + $0x174] sm:$0xf] %v367
                %v369 = vld [vmem:[%s179 + $0xa48] sm:$0xf]
                %370 = vst [vmem:[%s180 + $0x178] sm:$0xf] %v369
                %v371 = vld [vmem:[%s179 + $0xa64] sm:$0xf]
                %372 = vst [vmem:[%s180 + $0x17c] sm:$0xf] %v371
                %v373 = vld [vmem:[%s179 + $0xa80] sm:$0xf]
                %374 = vst [vmem:[%s180 + $0x180] sm:$0xf] %v373
                %v375 = vld [vmem:[%s179 + $0xa9c] sm:$0xf]
                %376 = vst [vmem:[%s180 + $0x184] sm:$0xf] %v375
                %v377 = vld [vmem:[%s179 + $0xab8] sm:$0xf]
                %378 = vst [vmem:[%s180 + $0x188] sm:$0xf] %v377
                %v379 = vld [vmem:[%s179 + $0xad4] sm:$0xf]
                %380 = vst [vmem:[%s180 + $0x18c] sm:$0xf] %v379
                %v381 = vld [vmem:[%s179 + $0xaf0] sm:$0xf]
                %382 = vst [vmem:[%s180 + $0x190] sm:$0xf] %v381
                %v383 = vld [vmem:[%s179 + $0xb0c] sm:$0xf]
                %384 = vst [vmem:[%s180 + $0x194] sm:$0xf] %v383
                %v385 = vld [vmem:[%s179 + $0xb28] sm:$0xf]
                %386 = vst [vmem:[%s180 + $0x198] sm:$0xf] %v385
                %v387 = vld [vmem:[%s179 + $0xb44] sm:$0xf]
                %388 = vst [vmem:[%s180 + $0x19c] sm:$0xf] %v387
                %v389 = vld [vmem:[%s179 + $0xb60] sm:$0xf]
                %390 = vst [vmem:[%s180 + $0x1a0] sm:$0xf] %v389
                %v391 = vld [vmem:[%s179 + $0xb7c] sm:$0xf]
                %392 = vst [vmem:[%s180 + $0x1a4] sm:$0xf] %v391
                %v393 = vld [vmem:[%s179 + $0xb98] sm:$0xf]
                %394 = vst [vmem:[%s180 + $0x1a8] sm:$0xf] %v393
                %v395 = vld [vmem:[%s179 + $0xbb4] sm:$0xf]
                %396 = vst [vmem:[%s180 + $0x1ac] sm:$0xf] %v395
                %v397 = vld [vmem:[%s179 + $0xbd0] sm:$0xf]
                %398 = vst [vmem:[%s180 + $0x1b0] sm:$0xf] %v397
                %v399 = vld [vmem:[%s179 + $0xbec] sm:$0xf]
                %400 = vst [vmem:[%s180 + $0x1b4] sm:$0xf] %v399
                %v401 = vld [vmem:[%s179 + $0xc08] sm:$0xf]
                %402 = vst [vmem:[%s180 + $0x1b8] sm:$0xf] %v401
                %v403 = vld [vmem:[%s179 + $0xc24] sm:$0xf]
                %404 = vst [vmem:[%s180 + $0x1bc] sm:$0xf] %v403
              $region41: #{forward.3} parent=35 // loop_footer
                %s178 = sadd.s32 1, %s174
              $region42: #{forward.3} parent=35 // loop_footer_branch
                %173 = sbr.rel target = $region38
              $region43: #{forward.3} parent=35 // loop_exit
                _
            $region36: #{forward.3} parent=27 // pred_fallthru
              _
          $region28: #{forward.3} parent=23 // pred_fallthru
            _
          %648 = vnop
        $region24: #{forward.3} parent=19 // pred_fallthru
          _
        // Predicated region
        $region62: #{forward.3} parent=19 // pred_check
          %p649 = pneg %p77
        $region63: #{forward.3} parent=19 // pred_check_branch
          %651 = sbr.rel (%p649) target = $region65
        $region64: #{forward.3} parent=19 // pred_region
          %p652 = scmp.lt.s32.totalorder %s10, 6
          %s653 = scalar_select %p652, %s10, 6
          %s654 = scalar_lea.vmem %s2, %s653
        $region65: #{forward.3} parent=19 // pred_fallthru
          _
        // Predicated region
        $region66: #{forward.3} parent=19 // pred_check
          %p655 = pneg %p103
        $region67: #{forward.3} parent=19 // pred_check_branch
          %657 = sbr.rel (%p655) target = $region69
        $region68: #{forward.3} parent=19 // pred_region
          %p658 = scmp.lt.s32.totalorder %s10, 6
          %s659 = scalar_select %p658, %s10, 6
          %s660 = scalar_lea.vmem %s3, %s659
        $region69: #{forward.3} parent=19 // pred_fallthru
          _
      $region20: #{forward.3} parent=5 // pred_fallthru
        _
      %p661 = scmp.le.s32.totalorder 1, %s10
      %p662 = scmp.lt.s32.totalorder %s10, 8
      %p663 = pnand %p661, %p662
      %p664 = pneg %p663
      // Predicated region
      $region70: #{forward.3} parent=5 // pred_check
        _
      $region71: #{forward.3} parent=5 // pred_check_branch
        %666 = sbr.rel (%p663) target = $region73
      $region72: #{forward.3} parent=5 // pred_region
        %s667 = ssub.s32 %s10, 1
        %s668 = sand.u32 %s44, 1
        %s669 = sand.u32 %s44, 1
        %s670 = smul.addr %s669, 448
        %s671 = scalar_lea.vmem [#allocation2], %s670
        // Predicated region
        $region74: #{forward.3} parent=72 // pred_check
          %p672 = pneg %p57
        $region75: #{forward.3} parent=72 // pred_check_branch
          %674 = sbr.rel (%p672) target = $region77
        $region76: #{forward.3} parent=72 // pred_region
          _
        $region77: #{forward.3} parent=72 // pred_fallthru
          _
        %p675 = pneg %p31
        %p676 = pneg %p28
        %s677 = sand.u32 %s44, 1
        %s678 = sand.u32 %s44, 1
        %s679 = smul.addr %s678, 448
        %s680 = scalar_lea.vmem [#allocation2], %s679
        %p681 = pneg %p57
        %p682 = pneg %p54
        %p683 = scmp.lt.s32.totalorder %s15, 6
        %s684 = scalar_select %p683, %s15, 6
        %s685 = scalar_lea.vmem %s2, %s684
        %p686 = pneg %p83
        %p687 = pneg %p80
        %p688 = scmp.lt.s32.totalorder %s15, 6
        %s689 = scalar_select %p688, %s15, 6
        %s690 = scalar_lea.vmem %s3, %s689
        %p691 = pneg %p109
        %p692 = pneg %p106
        %p693 = pneg %p135
        %p694 = pneg %p132
        %s695 = sand.u32 %s122, 1
        %s696 = sand.u32 %s122, 1
        %s697 = smul.addr %s696, 224
        %s698 = scalar_lea.vmem [#allocation3], %s697
        %p699 = scmp.lt.s32.totalorder %s15, 6
        %s700 = scalar_select %p699, %s15, 6
        %s701 = scalar_lea.vmem %s2, %s700
        %p702 = scmp.lt.s32.totalorder %s15, 6
        %s703 = scalar_select %p702, %s15, 6
        %s704 = scalar_lea.vmem %s3, %s703
        %v706 = vlaneseq
        %v707 = vshrl.u32 %v706, 7
        %v708 = vadd.s32 %v707, 8
        %v709 = vadd.s32 %v707, 16
        %v710 = vadd.s32 %v707, 24
        %v711 = vadd.s32 %v707, 32
        %v712 = vadd.s32 %v707, 40
        %v713 = vadd.s32 %v707, 48
        %v714 = vadd.s32 %v707, 56
        %v715 = vadd.s32 %v707, 64
        %v716 = vadd.s32 %v707, 72
        %v717 = vadd.s32 %v707, 80
        %v718 = vadd.s32 %v707, 88
        %v719 = vadd.s32 %v707, 96
        %v720 = vadd.s32 %v707, 104
        %v721 = vadd.s32 %v707, 112
        %v722 = vadd.s32 %v707, 120
        %v723 = vadd.s32 %v707, 128
        %v724 = vadd.s32 %v707, 136
        %v725 = vadd.s32 %v707, 144
        %v726 = vadd.s32 %v707, 152
        %v727 = vadd.s32 %v707, 160
        %v728 = vadd.s32 %v707, 168
        %v729 = vadd.s32 %v707, 176
        %v730 = vadd.s32 %v707, 184
        %v731 = vadd.s32 %v707, 192
        %v732 = vadd.s32 %v707, 200
        %v733 = vadd.s32 %v707, 208
        %v734 = vadd.s32 %v707, 216
        %v735 = vand.u32 %v707, 15
        %v736 = vand.u32 %v708, 15
        %v737 = vand.u32 %v709, 15
        %v738 = vand.u32 %v710, 15
        %v739 = vand.u32 %v711, 15
        %v740 = vand.u32 %v712, 15
        %v741 = vand.u32 %v713, 15
        %v742 = vand.u32 %v714, 15
        %v743 = vand.u32 %v715, 15
        %v744 = vand.u32 %v716, 15
        %v745 = vand.u32 %v717, 15
        %v746 = vand.u32 %v718, 15
        %v747 = vand.u32 %v719, 15
        %v748 = vand.u32 %v720, 15
        %v749 = vand.u32 %v721, 15
        %v750 = vand.u32 %v722, 15
        %v751 = vand.u32 %v723, 15
        %v752 = vand.u32 %v724, 15
        %v753 = vand.u32 %v725, 15
        %v754 = vand.u32 %v726, 15
        %v755 = vand.u32 %v727, 15
        %v756 = vand.u32 %v728, 15
        %v757 = vand.u32 %v729, 15
        %v758 = vand.u32 %v730, 15
        %v759 = vand.u32 %v731, 15
        %v760 = vand.u32 %v732, 15
        %v761 = vand.u32 %v733, 15
        %v762 = vand.u32 %v734, 15
        %vm763 = vcmp.lt.s32.totalorder %v735, 14
        %vm764 = vcmp.lt.s32.totalorder %v736, 14
        %vm765 = vcmp.lt.s32.totalorder %v737, 14
        %vm766 = vcmp.lt.s32.totalorder %v738, 14
        %vm767 = vcmp.lt.s32.totalorder %v739, 14
        %vm768 = vcmp.lt.s32.totalorder %v740, 14
        %vm769 = vcmp.lt.s32.totalorder %v741, 14
        %vm770 = vcmp.lt.s32.totalorder %v742, 14
        %vm771 = vcmp.lt.s32.totalorder %v743, 14
        %vm772 = vcmp.lt.s32.totalorder %v744, 14
        %vm773 = vcmp.lt.s32.totalorder %v745, 14
        %vm774 = vcmp.lt.s32.totalorder %v746, 14
        %vm775 = vcmp.lt.s32.totalorder %v747, 14
        %vm776 = vcmp.lt.s32.totalorder %v748, 14
        %vm777 = vcmp.lt.s32.totalorder %v749, 14
        %vm778 = vcmp.lt.s32.totalorder %v750, 14
        %vm779 = vcmp.lt.s32.totalorder %v751, 14
        %vm780 = vcmp.lt.s32.totalorder %v752, 14
        %vm781 = vcmp.lt.s32.totalorder %v753, 14
        %vm782 = vcmp.lt.s32.totalorder %v754, 14
        %vm783 = vcmp.lt.s32.totalorder %v755, 14
        %vm784 = vcmp.lt.s32.totalorder %v756, 14
        %vm785 = vcmp.lt.s32.totalorder %v757, 14
        %vm786 = vcmp.lt.s32.totalorder %v758, 14
        %vm787 = vcmp.lt.s32.totalorder %v759, 14
        %vm788 = vcmp.lt.s32.totalorder %v760, 14
        %vm789 = vcmp.lt.s32.totalorder %v761, 14
        %vm790 = vcmp.lt.s32.totalorder %v762, 14
        %v791 = vld [vmem:[%s0] sm:$0xff]
        %v792 = vld [vmem:[%s0 + $0x8] sm:$0xff]
        %v793 = vld [vmem:[%s0 + $0x10] sm:$0xff]
        %v794 = vld [vmem:[%s0 + $0x18] sm:$0xf]
        %v795 = vld [vmem:[%s0 + $0x1c] sm:$0xff]
        %v796 = vld [vmem:[%s0 + $0x24] sm:$0xff]
        %v797 = vld [vmem:[%s0 + $0x2c] sm:$0xff]
        %v798 = vld [vmem:[%s0 + $0x34] sm:$0xf]
        %v799 = vld [vmem:[%s0 + $0x38] sm:$0xff]
        %v800 = vld [vmem:[%s0 + $0x40] sm:$0xff]
        %v801 = vld [vmem:[%s0 + $0x48] sm:$0xff]
        %v802 = vld [vmem:[%s0 + $0x50] sm:$0xf]
        %v803 = vld [vmem:[%s0 + $0x54] sm:$0xff]
        %v804 = vld [vmem:[%s0 + $0x5c] sm:$0xff]
        %v805 = vld [vmem:[%s0 + $0x64] sm:$0xff]
        %v806 = vld [vmem:[%s0 + $0x6c] sm:$0xf]
        %v807 = vld [vmem:[%s0 + $0x70] sm:$0xff]
        %v808 = vld [vmem:[%s0 + $0x78] sm:$0xff]
        %v809 = vld [vmem:[%s0 + $0x80] sm:$0xff]
        %v810 = vld [vmem:[%s0 + $0x88] sm:$0xf]
        %v811 = vld [vmem:[%s0 + $0x8c] sm:$0xff]
        %v812 = vld [vmem:[%s0 + $0x94] sm:$0xff]
        %v813 = vld [vmem:[%s0 + $0x9c] sm:$0xff]
        %v814 = vld [vmem:[%s0 + $0xa4] sm:$0xf]
        %v815 = vld [vmem:[%s0 + $0xa8] sm:$0xff]
        %v816 = vld [vmem:[%s0 + $0xb0] sm:$0xff]
        %v817 = vld [vmem:[%s0 + $0xb8] sm:$0xff]
        %v818 = vld [vmem:[%s0 + $0xc0] sm:$0xf]
        %v819 = vld [vmem:[%s0 + $0xc4] sm:$0xff]
        %v820 = vld [vmem:[%s0 + $0xcc] sm:$0xff]
        %v821 = vld [vmem:[%s0 + $0xd4] sm:$0xff]
        %v822 = vld [vmem:[%s0 + $0xdc] sm:$0xf]
        %v823 = vld [vmem:[%s0 + $0xe0] sm:$0xff]
        %v824 = vld [vmem:[%s0 + $0xe8] sm:$0xff]
        %v825 = vld [vmem:[%s0 + $0xf0] sm:$0xff]
        %v826 = vld [vmem:[%s0 + $0xf8] sm:$0xf]
        %v827 = vld [vmem:[%s0 + $0xfc] sm:$0xff]
        %v828 = vld [vmem:[%s0 + $0x104] sm:$0xff]
        %v829 = vld [vmem:[%s0 + $0x10c] sm:$0xff]
        %v830 = vld [vmem:[%s0 + $0x114] sm:$0xf]
        %v831 = vld [vmem:[%s0 + $0x118] sm:$0xff]
        %v832 = vld [vmem:[%s0 + $0x120] sm:$0xff]
        %v833 = vld [vmem:[%s0 + $0x128] sm:$0xff]
        %v834 = vld [vmem:[%s0 + $0x130] sm:$0xf]
        %v835 = vld [vmem:[%s0 + $0x134] sm:$0xff]
        %v836 = vld [vmem:[%s0 + $0x13c] sm:$0xff]
        %v837 = vld [vmem:[%s0 + $0x144] sm:$0xff]
        %v838 = vld [vmem:[%s0 + $0x14c] sm:$0xf]
        %v839 = vld [vmem:[%s0 + $0x150] sm:$0xff]
        %v840 = vld [vmem:[%s0 + $0x158] sm:$0xff]
        %v841 = vld [vmem:[%s0 + $0x160] sm:$0xff]
        %v842 = vld [vmem:[%s0 + $0x168] sm:$0xf]
        %v843 = vld [vmem:[%s0 + $0x16c] sm:$0xff]
        %v844 = vld [vmem:[%s0 + $0x174] sm:$0xff]
        %v845 = vld [vmem:[%s0 + $0x17c] sm:$0xff]
        %v846 = vld [vmem:[%s0 + $0x184] sm:$0xf]
        %v847 = vld [vmem:[%s0 + $0x188] sm:$0xff]
        %v848 = vld [vmem:[%s0 + $0x190] sm:$0xff]
        %v849 = vld [vmem:[%s0 + $0x198] sm:$0xff]
        %v850 = vld [vmem:[%s0 + $0x1a0] sm:$0xf]
        %v851 = vld [vmem:[%s0 + $0x1a4] sm:$0xff]
        %v852 = vld [vmem:[%s0 + $0x1ac] sm:$0xff]
        %v853 = vld [vmem:[%s0 + $0x1b4] sm:$0xff]
        %v854 = vld [vmem:[%s0 + $0x1bc] sm:$0xf]
        %v855 = vld [vmem:[%s0 + $0x1c0] sm:$0xff]
        %v856 = vld [vmem:[%s0 + $0x1c8] sm:$0xff]
        %v857 = vld [vmem:[%s0 + $0x1d0] sm:$0xff]
        %v858 = vld [vmem:[%s0 + $0x1d8] sm:$0xf]
        %v859 = vld [vmem:[%s0 + $0x1dc] sm:$0xff]
        %v860 = vld [vmem:[%s0 + $0x1e4] sm:$0xff]
        %v861 = vld [vmem:[%s0 + $0x1ec] sm:$0xff]
        %v862 = vld [vmem:[%s0 + $0x1f4] sm:$0xf]
        %v863 = vld [vmem:[%s0 + $0x1f8] sm:$0xff]
        %v864 = vld [vmem:[%s0 + $0x200] sm:$0xff]
        %v865 = vld [vmem:[%s0 + $0x208] sm:$0xff]
        %v866 = vld [vmem:[%s0 + $0x210] sm:$0xf]
        %v867 = vld [vmem:[%s0 + $0x214] sm:$0xff]
        %v868 = vld [vmem:[%s0 + $0x21c] sm:$0xff]
        %v869 = vld [vmem:[%s0 + $0x224] sm:$0xff]
        %v870 = vld [vmem:[%s0 + $0x22c] sm:$0xf]
        %v871 = vld [vmem:[%s0 + $0x230] sm:$0xff]
        %v872 = vld [vmem:[%s0 + $0x238] sm:$0xff]
        %v873 = vld [vmem:[%s0 + $0x240] sm:$0xff]
        %v874 = vld [vmem:[%s0 + $0x248] sm:$0xf]
        %v875 = vld [vmem:[%s0 + $0x24c] sm:$0xff]
        %v876 = vld [vmem:[%s0 + $0x254] sm:$0xff]
        %v877 = vld [vmem:[%s0 + $0x25c] sm:$0xff]
        %v878 = vld [vmem:[%s0 + $0x264] sm:$0xf]
        %v879 = vld [vmem:[%s0 + $0x268] sm:$0xff]
        %v880 = vld [vmem:[%s0 + $0x270] sm:$0xff]
        %v881 = vld [vmem:[%s0 + $0x278] sm:$0xff]
        %v882 = vld [vmem:[%s0 + $0x280] sm:$0xf]
        %v883 = vld [vmem:[%s0 + $0x284] sm:$0xff]
        %v884 = vld [vmem:[%s0 + $0x28c] sm:$0xff]
        %v885 = vld [vmem:[%s0 + $0x294] sm:$0xff]
        %v886 = vld [vmem:[%s0 + $0x29c] sm:$0xf]
        %v887 = vld [vmem:[%s0 + $0x2a0] sm:$0xff]
        %v888 = vld [vmem:[%s0 + $0x2a8] sm:$0xff]
        %v889 = vld [vmem:[%s0 + $0x2b0] sm:$0xff]
        %v890 = vld [vmem:[%s0 + $0x2b8] sm:$0xf]
        %v891 = vld [vmem:[%s0 + $0x2bc] sm:$0xff]
        %v892 = vld [vmem:[%s0 + $0x2c4] sm:$0xff]
        %v893 = vld [vmem:[%s0 + $0x2cc] sm:$0xff]
        %v894 = vld [vmem:[%s0 + $0x2d4] sm:$0xf]
        %v895 = vld [vmem:[%s0 + $0x2d8] sm:$0xff]
        %v896 = vld [vmem:[%s0 + $0x2e0] sm:$0xff]
        %v897 = vld [vmem:[%s0 + $0x2e8] sm:$0xff]
        %v898 = vld [vmem:[%s0 + $0x2f0] sm:$0xf]
        %v899 = vld [vmem:[%s0 + $0x2f4] sm:$0xff]
        %v900 = vld [vmem:[%s0 + $0x2fc] sm:$0xff]
        %v901 = vld [vmem:[%s0 + $0x304] sm:$0xff]
        %v902 = vld [vmem:[%s0 + $0x30c] sm:$0xf]
        %v903 = vld [vmem:[%s671] sm:$0xf]
        %v904 = vld [vmem:[%s671 + $0x4] sm:$0xf]
        %v905 = vld [vmem:[%s671 + $0x8] sm:$0xf]
        %v906 = vld [vmem:[%s671 + $0xc] sm:$0xf]
        %v907 = vld [vmem:[%s671 + $0x10] sm:$0xf]
        %v908 = vld [vmem:[%s671 + $0x14] sm:$0xf]
        %v909 = vld [vmem:[%s671 + $0x18] sm:$0xf]
        %v910 = vld [vmem:[%s671 + $0x1c] sm:$0xf]
        %v911 = vld [vmem:[%s671 + $0x20] sm:$0xf]
        %v912 = vld [vmem:[%s671 + $0x24] sm:$0xf]
        %v913 = vld [vmem:[%s671 + $0x28] sm:$0xf]
        %v914 = vld [vmem:[%s671 + $0x2c] sm:$0xf]
        %v915 = vld [vmem:[%s671 + $0x30] sm:$0xf]
        %v916 = vld [vmem:[%s671 + $0x34] sm:$0xf]
        %v917 = vld [vmem:[%s671 + $0x38] sm:$0xf]
        %v918 = vld [vmem:[%s671 + $0x3c] sm:$0xf]
        %v919 = vld [vmem:[%s671 + $0x40] sm:$0xf]
        %v920 = vld [vmem:[%s671 + $0x44] sm:$0xf]
        %v921 = vld [vmem:[%s671 + $0x48] sm:$0xf]
        %v922 = vld [vmem:[%s671 + $0x4c] sm:$0xf]
        %v923 = vld [vmem:[%s671 + $0x50] sm:$0xf]
        %v924 = vld [vmem:[%s671 + $0x54] sm:$0xf]
        %v925 = vld [vmem:[%s671 + $0x58] sm:$0xf]
        %v926 = vld [vmem:[%s671 + $0x5c] sm:$0xf]
        %v927 = vld [vmem:[%s671 + $0x60] sm:$0xf]
        %v928 = vld [vmem:[%s671 + $0x64] sm:$0xf]
        %v929 = vld [vmem:[%s671 + $0x68] sm:$0xf]
        %v930 = vld [vmem:[%s671 + $0x6c] sm:$0xf]
        %v931 = vld [vmem:[%s671 + $0x70] sm:$0xf]
        %v932 = vld [vmem:[%s671 + $0x74] sm:$0xf]
        %v933 = vld [vmem:[%s671 + $0x78] sm:$0xf]
        %v934 = vld [vmem:[%s671 + $0x7c] sm:$0xf]
        %v935 = vld [vmem:[%s671 + $0x80] sm:$0xf]
        %v936 = vld [vmem:[%s671 + $0x84] sm:$0xf]
        %v937 = vld [vmem:[%s671 + $0x88] sm:$0xf]
        %v938 = vld [vmem:[%s671 + $0x8c] sm:$0xf]
        %v939 = vld [vmem:[%s671 + $0x90] sm:$0xf]
        %v940 = vld [vmem:[%s671 + $0x94] sm:$0xf]
        %v941 = vld [vmem:[%s671 + $0x98] sm:$0xf]
        %v942 = vld [vmem:[%s671 + $0x9c] sm:$0xf]
        %v943 = vld [vmem:[%s671 + $0xa0] sm:$0xf]
        %v944 = vld [vmem:[%s671 + $0xa4] sm:$0xf]
        %v945 = vld [vmem:[%s671 + $0xa8] sm:$0xf]
        %v946 = vld [vmem:[%s671 + $0xac] sm:$0xf]
        %v947 = vld [vmem:[%s671 + $0xb0] sm:$0xf]
        %v948 = vld [vmem:[%s671 + $0xb4] sm:$0xf]
        %v949 = vld [vmem:[%s671 + $0xb8] sm:$0xf]
        %v950 = vld [vmem:[%s671 + $0xbc] sm:$0xf]
        %v951 = vld [vmem:[%s671 + $0xc0] sm:$0xf]
        %v952 = vld [vmem:[%s671 + $0xc4] sm:$0xf]
        %v953 = vld [vmem:[%s671 + $0xc8] sm:$0xf]
        %v954 = vld [vmem:[%s671 + $0xcc] sm:$0xf]
        %v955 = vld [vmem:[%s671 + $0xd0] sm:$0xf]
        %v956 = vld [vmem:[%s671 + $0xd4] sm:$0xf]
        %v957 = vld [vmem:[%s671 + $0xd8] sm:$0xf]
        %v958 = vld [vmem:[%s671 + $0xdc] sm:$0xf]
        %v959 = vld [vmem:[%s671 + $0xe0] sm:$0xf]
        %v960 = vld [vmem:[%s671 + $0xe4] sm:$0xf]
        %v961 = vld [vmem:[%s671 + $0xe8] sm:$0xf]
        %v962 = vld [vmem:[%s671 + $0xec] sm:$0xf]
        %v963 = vld [vmem:[%s671 + $0xf0] sm:$0xf]
        %v964 = vld [vmem:[%s671 + $0xf4] sm:$0xf]
        %v965 = vld [vmem:[%s671 + $0xf8] sm:$0xf]
        %v966 = vld [vmem:[%s671 + $0xfc] sm:$0xf]
        %v967 = vld [vmem:[%s671 + $0x100] sm:$0xf]
        %v968 = vld [vmem:[%s671 + $0x104] sm:$0xf]
        %v969 = vld [vmem:[%s671 + $0x108] sm:$0xf]
        %v970 = vld [vmem:[%s671 + $0x10c] sm:$0xf]
        %v971 = vld [vmem:[%s671 + $0x110] sm:$0xf]
        %v972 = vld [vmem:[%s671 + $0x114] sm:$0xf]
        %v973 = vld [vmem:[%s671 + $0x118] sm:$0xf]
        %v974 = vld [vmem:[%s671 + $0x11c] sm:$0xf]
        %v975 = vld [vmem:[%s671 + $0x120] sm:$0xf]
        %v976 = vld [vmem:[%s671 + $0x124] sm:$0xf]
        %v977 = vld [vmem:[%s671 + $0x128] sm:$0xf]
        %v978 = vld [vmem:[%s671 + $0x12c] sm:$0xf]
        %v979 = vld [vmem:[%s671 + $0x130] sm:$0xf]
        %v980 = vld [vmem:[%s671 + $0x134] sm:$0xf]
        %v981 = vld [vmem:[%s671 + $0x138] sm:$0xf]
        %v982 = vld [vmem:[%s671 + $0x13c] sm:$0xf]
        %v983 = vld [vmem:[%s671 + $0x140] sm:$0xf]
        %v984 = vld [vmem:[%s671 + $0x144] sm:$0xf]
        %v985 = vld [vmem:[%s671 + $0x148] sm:$0xf]
        %v986 = vld [vmem:[%s671 + $0x14c] sm:$0xf]
        %v987 = vld [vmem:[%s671 + $0x150] sm:$0xf]
        %v988 = vld [vmem:[%s671 + $0x154] sm:$0xf]
        %v989 = vld [vmem:[%s671 + $0x158] sm:$0xf]
        %v990 = vld [vmem:[%s671 + $0x15c] sm:$0xf]
        %v991 = vld [vmem:[%s671 + $0x160] sm:$0xf]
        %v992 = vld [vmem:[%s671 + $0x164] sm:$0xf]
        %v993 = vld [vmem:[%s671 + $0x168] sm:$0xf]
        %v994 = vld [vmem:[%s671 + $0x16c] sm:$0xf]
        %v995 = vld [vmem:[%s671 + $0x170] sm:$0xf]
        %v996 = vld [vmem:[%s671 + $0x174] sm:$0xf]
        %v997 = vld [vmem:[%s671 + $0x178] sm:$0xf]
        %v998 = vld [vmem:[%s671 + $0x17c] sm:$0xf]
        %v999 = vld [vmem:[%s671 + $0x180] sm:$0xf]
        %v1000 = vld [vmem:[%s671 + $0x184] sm:$0xf]
        %v1001 = vld [vmem:[%s671 + $0x188] sm:$0xf]
        %v1002 = vld [vmem:[%s671 + $0x18c] sm:$0xf]
        %v1003 = vld [vmem:[%s671 + $0x190] sm:$0xf]
        %v1004 = vld [vmem:[%s671 + $0x194] sm:$0xf]
        %v1005 = vld [vmem:[%s671 + $0x198] sm:$0xf]
        %v1006 = vld [vmem:[%s671 + $0x19c] sm:$0xf]
        %v1007 = vld [vmem:[%s671 + $0x1a0] sm:$0xf]
        %v1008 = vld [vmem:[%s671 + $0x1a4] sm:$0xf]
        %v1009 = vld [vmem:[%s671 + $0x1a8] sm:$0xf]
        %v1010 = vld [vmem:[%s671 + $0x1ac] sm:$0xf]
        %v1011 = vld [vmem:[%s671 + $0x1b0] sm:$0xf]
        %v1012 = vld [vmem:[%s671 + $0x1b4] sm:$0xf]
        %v1013 = vld [vmem:[%s671 + $0x1b8] sm:$0xf]
        %v1014 = vld [vmem:[%s671 + $0x1bc] sm:$0xf]
        %v1127 = vunpack.c.l.b16 %v791
        %v1128 = vunpack.c.h.b16 %v791
        %v1129 = vunpack.c.l.b16 %v792
        %v1130 = vunpack.c.h.b16 %v792
        %v1131 = vunpack.c.l.b16 %v793
        %v1132 = vunpack.c.h.b16 %v793
        %v1133 = vunpack.c.l.b16 %v794
        %v1134 = vunpack.c.l.b16 %v795
        %v1135 = vunpack.c.h.b16 %v795
        %v1136 = vunpack.c.l.b16 %v796
        %v1137 = vunpack.c.h.b16 %v796
        %v1138 = vunpack.c.l.b16 %v797
        %v1139 = vunpack.c.h.b16 %v797
        %v1140 = vunpack.c.l.b16 %v798
        %v1141 = vunpack.c.l.b16 %v799
        %v1142 = vunpack.c.h.b16 %v799
        %v1143 = vunpack.c.l.b16 %v800
        %v1144 = vunpack.c.h.b16 %v800
        %v1145 = vunpack.c.l.b16 %v801
        %v1146 = vunpack.c.h.b16 %v801
        %v1147 = vunpack.c.l.b16 %v802
        %v1148 = vunpack.c.l.b16 %v803
        %v1149 = vunpack.c.h.b16 %v803
        %v1150 = vunpack.c.l.b16 %v804
        %v1151 = vunpack.c.h.b16 %v804
        %v1152 = vunpack.c.l.b16 %v805
        %v1153 = vunpack.c.h.b16 %v805
        %v1154 = vunpack.c.l.b16 %v806
        %v1155 = vunpack.c.l.b16 %v807
        %v1156 = vunpack.c.h.b16 %v807
        %v1157 = vunpack.c.l.b16 %v808
        %v1158 = vunpack.c.h.b16 %v808
        %v1159 = vunpack.c.l.b16 %v809
        %v1160 = vunpack.c.h.b16 %v809
        %v1161 = vunpack.c.l.b16 %v810
        %v1162 = vunpack.c.l.b16 %v811
        %v1163 = vunpack.c.h.b16 %v811
        %v1164 = vunpack.c.l.b16 %v812
        %v1165 = vunpack.c.h.b16 %v812
        %v1166 = vunpack.c.l.b16 %v813
        %v1167 = vunpack.c.h.b16 %v813
        %v1168 = vunpack.c.l.b16 %v814
        %v1169 = vunpack.c.l.b16 %v815
        %v1170 = vunpack.c.h.b16 %v815
        %v1171 = vunpack.c.l.b16 %v816
        %v1172 = vunpack.c.h.b16 %v816
        %v1173 = vunpack.c.l.b16 %v817
        %v1174 = vunpack.c.h.b16 %v817
        %v1175 = vunpack.c.l.b16 %v818
        %v1176 = vunpack.c.l.b16 %v819
        %v1177 = vunpack.c.h.b16 %v819
        %v1178 = vunpack.c.l.b16 %v820
        %v1179 = vunpack.c.h.b16 %v820
        %v1180 = vunpack.c.l.b16 %v821
        %v1181 = vunpack.c.h.b16 %v821
        %v1182 = vunpack.c.l.b16 %v822
        %v1183 = vunpack.c.l.b16 %v823
        %v1184 = vunpack.c.h.b16 %v823
        %v1185 = vunpack.c.l.b16 %v824
        %v1186 = vunpack.c.h.b16 %v824
        %v1187 = vunpack.c.l.b16 %v825
        %v1188 = vunpack.c.h.b16 %v825
        %v1189 = vunpack.c.l.b16 %v826
        %v1190 = vunpack.c.l.b16 %v827
        %v1191 = vunpack.c.h.b16 %v827
        %v1192 = vunpack.c.l.b16 %v828
        %v1193 = vunpack.c.h.b16 %v828
        %v1194 = vunpack.c.l.b16 %v829
        %v1195 = vunpack.c.h.b16 %v829
        %v1196 = vunpack.c.l.b16 %v830
        %v1197 = vunpack.c.l.b16 %v831
        %v1198 = vunpack.c.h.b16 %v831
        %v1199 = vunpack.c.l.b16 %v832
        %v1200 = vunpack.c.h.b16 %v832
        %v1201 = vunpack.c.l.b16 %v833
        %v1202 = vunpack.c.h.b16 %v833
        %v1203 = vunpack.c.l.b16 %v834
        %v1204 = vunpack.c.l.b16 %v835
        %v1205 = vunpack.c.h.b16 %v835
        %v1206 = vunpack.c.l.b16 %v836
        %v1207 = vunpack.c.h.b16 %v836
        %v1208 = vunpack.c.l.b16 %v837
        %v1209 = vunpack.c.h.b16 %v837
        %v1210 = vunpack.c.l.b16 %v838
        %v1211 = vunpack.c.l.b16 %v839
        %v1212 = vunpack.c.h.b16 %v839
        %v1213 = vunpack.c.l.b16 %v840
        %v1214 = vunpack.c.h.b16 %v840
        %v1215 = vunpack.c.l.b16 %v841
        %v1216 = vunpack.c.h.b16 %v841
        %v1217 = vunpack.c.l.b16 %v842
        %v1218 = vunpack.c.l.b16 %v843
        %v1219 = vunpack.c.h.b16 %v843
        %v1220 = vunpack.c.l.b16 %v844
        %v1221 = vunpack.c.h.b16 %v844
        %v1222 = vunpack.c.l.b16 %v845
        %v1223 = vunpack.c.h.b16 %v845
        %v1224 = vunpack.c.l.b16 %v846
        %v1225 = vunpack.c.l.b16 %v847
        %v1226 = vunpack.c.h.b16 %v847
        %v1227 = vunpack.c.l.b16 %v848
        %v1228 = vunpack.c.h.b16 %v848
        %v1229 = vunpack.c.l.b16 %v849
        %v1230 = vunpack.c.h.b16 %v849
        %v1231 = vunpack.c.l.b16 %v850
        %v1232 = vunpack.c.l.b16 %v851
        %v1233 = vunpack.c.h.b16 %v851
        %v1234 = vunpack.c.l.b16 %v852
        %v1235 = vunpack.c.h.b16 %v852
        %v1236 = vunpack.c.l.b16 %v853
        %v1237 = vunpack.c.h.b16 %v853
        %v1238 = vunpack.c.l.b16 %v854
        %v1239 = vunpack.c.l.b16 %v855
        %v1240 = vunpack.c.h.b16 %v855
        %v1241 = vunpack.c.l.b16 %v856
        %v1242 = vunpack.c.h.b16 %v856
        %v1243 = vunpack.c.l.b16 %v857
        %v1244 = vunpack.c.h.b16 %v857
        %v1245 = vunpack.c.l.b16 %v858
        %v1246 = vunpack.c.l.b16 %v859
        %v1247 = vunpack.c.h.b16 %v859
        %v1248 = vunpack.c.l.b16 %v860
        %v1249 = vunpack.c.h.b16 %v860
        %v1250 = vunpack.c.l.b16 %v861
        %v1251 = vunpack.c.h.b16 %v861
        %v1252 = vunpack.c.l.b16 %v862
        %v1253 = vunpack.c.l.b16 %v863
        %v1254 = vunpack.c.h.b16 %v863
        %v1255 = vunpack.c.l.b16 %v864
        %v1256 = vunpack.c.h.b16 %v864
        %v1257 = vunpack.c.l.b16 %v865
        %v1258 = vunpack.c.h.b16 %v865
        %v1259 = vunpack.c.l.b16 %v866
        %v1260 = vunpack.c.l.b16 %v867
        %v1261 = vunpack.c.h.b16 %v867
        %v1262 = vunpack.c.l.b16 %v868
        %v1263 = vunpack.c.h.b16 %v868
        %v1264 = vunpack.c.l.b16 %v869
        %v1265 = vunpack.c.h.b16 %v869
        %v1266 = vunpack.c.l.b16 %v870
        %v1267 = vunpack.c.l.b16 %v871
        %v1268 = vunpack.c.h.b16 %v871
        %v1269 = vunpack.c.l.b16 %v872
        %v1270 = vunpack.c.h.b16 %v872
        %v1271 = vunpack.c.l.b16 %v873
        %v1272 = vunpack.c.h.b16 %v873
        %v1273 = vunpack.c.l.b16 %v874
        %v1274 = vunpack.c.l.b16 %v875
        %v1275 = vunpack.c.h.b16 %v875
        %v1276 = vunpack.c.l.b16 %v876
        %v1277 = vunpack.c.h.b16 %v876
        %v1278 = vunpack.c.l.b16 %v877
        %v1279 = vunpack.c.h.b16 %v877
        %v1280 = vunpack.c.l.b16 %v878
        %v1281 = vunpack.c.l.b16 %v879
        %v1282 = vunpack.c.h.b16 %v879
        %v1283 = vunpack.c.l.b16 %v880
        %v1284 = vunpack.c.h.b16 %v880
        %v1285 = vunpack.c.l.b16 %v881
        %v1286 = vunpack.c.h.b16 %v881
        %v1287 = vunpack.c.l.b16 %v882
        %v1288 = vunpack.c.l.b16 %v883
        %v1289 = vunpack.c.h.b16 %v883
        %v1290 = vunpack.c.l.b16 %v884
        %v1291 = vunpack.c.h.b16 %v884
        %v1292 = vunpack.c.l.b16 %v885
        %v1293 = vunpack.c.h.b16 %v885
        %v1294 = vunpack.c.l.b16 %v886
        %v1295 = vunpack.c.l.b16 %v887
        %v1296 = vunpack.c.h.b16 %v887
        %v1297 = vunpack.c.l.b16 %v888
        %v1298 = vunpack.c.h.b16 %v888
        %v1299 = vunpack.c.l.b16 %v889
        %v1300 = vunpack.c.h.b16 %v889
        %v1301 = vunpack.c.l.b16 %v890
        %v1302 = vunpack.c.l.b16 %v891
        %v1303 = vunpack.c.h.b16 %v891
        %v1304 = vunpack.c.l.b16 %v892
        %v1305 = vunpack.c.h.b16 %v892
        %v1306 = vunpack.c.l.b16 %v893
        %v1307 = vunpack.c.h.b16 %v893
        %v1308 = vunpack.c.l.b16 %v894
        %v1309 = vunpack.c.l.b16 %v895
        %v1310 = vunpack.c.h.b16 %v895
        %v1311 = vunpack.c.l.b16 %v896
        %v1312 = vunpack.c.h.b16 %v896
        %v1313 = vunpack.c.l.b16 %v897
        %v1314 = vunpack.c.h.b16 %v897
        %v1315 = vunpack.c.l.b16 %v898
        %v1316 = vunpack.c.l.b16 %v899
        %v1317 = vunpack.c.h.b16 %v899
        %v1318 = vunpack.c.l.b16 %v900
        %v1319 = vunpack.c.h.b16 %v900
        %v1320 = vunpack.c.l.b16 %v901
        %v1321 = vunpack.c.h.b16 %v901
        %v1322 = vunpack.c.l.b16 %v902
        %v1323 = vpack.c.b16 %v1134, %v1127
        %v1324 = vpack.c.b16 %v1135, %v1128
        %v1325 = vpack.c.b16 %v1136, %v1129
        %v1326 = vpack.c.b16 %v1137, %v1130
        %v1327 = vpack.c.b16 %v1138, %v1131
        %v1328 = vpack.c.b16 %v1139, %v1132
        %v1329 = vpack.c.b16 %v1140, %v1133
        %v1330 = vpack.c.b16 %v1148, %v1141
        %v1331 = vpack.c.b16 %v1149, %v1142
        %v1332 = vpack.c.b16 %v1150, %v1143
        %v1333 = vpack.c.b16 %v1151, %v1144
        %v1334 = vpack.c.b16 %v1152, %v1145
        %v1335 = vpack.c.b16 %v1153, %v1146
        %v1336 = vpack.c.b16 %v1154, %v1147
        %v1337 = vpack.c.b16 %v1162, %v1155
        %v1338 = vpack.c.b16 %v1163, %v1156
        %v1339 = vpack.c.b16 %v1164, %v1157
        %v1340 = vpack.c.b16 %v1165, %v1158
        %v1341 = vpack.c.b16 %v1166, %v1159
        %v1342 = vpack.c.b16 %v1167, %v1160
        %v1343 = vpack.c.b16 %v1168, %v1161
        %v1344 = vpack.c.b16 %v1176, %v1169
        %v1345 = vpack.c.b16 %v1177, %v1170
        %v1346 = vpack.c.b16 %v1178, %v1171
        %v1347 = vpack.c.b16 %v1179, %v1172
        %v1348 = vpack.c.b16 %v1180, %v1173
        %v1349 = vpack.c.b16 %v1181, %v1174
        %v1350 = vpack.c.b16 %v1182, %v1175
        %v1351 = vpack.c.b16 %v1190, %v1183
        %v1352 = vpack.c.b16 %v1191, %v1184
        %v1353 = vpack.c.b16 %v1192, %v1185
        %v1354 = vpack.c.b16 %v1193, %v1186
        %v1355 = vpack.c.b16 %v1194, %v1187
        %v1356 = vpack.c.b16 %v1195, %v1188
        %v1357 = vpack.c.b16 %v1196, %v1189
        %v1358 = vpack.c.b16 %v1204, %v1197
        %v1359 = vpack.c.b16 %v1205, %v1198
        %v1360 = vpack.c.b16 %v1206, %v1199
        %v1361 = vpack.c.b16 %v1207, %v1200
        %v1362 = vpack.c.b16 %v1208, %v1201
        %v1363 = vpack.c.b16 %v1209, %v1202
        %v1364 = vpack.c.b16 %v1210, %v1203
        %v1365 = vpack.c.b16 %v1218, %v1211
        %v1366 = vpack.c.b16 %v1219, %v1212
        %v1367 = vpack.c.b16 %v1220, %v1213
        %v1368 = vpack.c.b16 %v1221, %v1214
        %v1369 = vpack.c.b16 %v1222, %v1215
        %v1370 = vpack.c.b16 %v1223, %v1216
        %v1371 = vpack.c.b16 %v1224, %v1217
        %v1372 = vpack.c.b16 %v1232, %v1225
        %v1373 = vpack.c.b16 %v1233, %v1226
        %v1374 = vpack.c.b16 %v1234, %v1227
        %v1375 = vpack.c.b16 %v1235, %v1228
        %v1376 = vpack.c.b16 %v1236, %v1229
        %v1377 = vpack.c.b16 %v1237, %v1230
        %v1378 = vpack.c.b16 %v1238, %v1231
        %v1379 = vpack.c.b16 %v1246, %v1239
        %v1380 = vpack.c.b16 %v1247, %v1240
        %v1381 = vpack.c.b16 %v1248, %v1241
        %v1382 = vpack.c.b16 %v1249, %v1242
        %v1383 = vpack.c.b16 %v1250, %v1243
        %v1384 = vpack.c.b16 %v1251, %v1244
        %v1385 = vpack.c.b16 %v1252, %v1245
        %v1386 = vpack.c.b16 %v1260, %v1253
        %v1387 = vpack.c.b16 %v1261, %v1254
        %v1388 = vpack.c.b16 %v1262, %v1255
        %v1389 = vpack.c.b16 %v1263, %v1256
        %v1390 = vpack.c.b16 %v1264, %v1257
        %v1391 = vpack.c.b16 %v1265, %v1258
        %v1392 = vpack.c.b16 %v1266, %v1259
        %v1393 = vpack.c.b16 %v1274, %v1267
        %v1394 = vpack.c.b16 %v1275, %v1268
        %v1395 = vpack.c.b16 %v1276, %v1269
        %v1396 = vpack.c.b16 %v1277, %v1270
        %v1397 = vpack.c.b16 %v1278, %v1271
        %v1398 = vpack.c.b16 %v1279, %v1272
        %v1399 = vpack.c.b16 %v1280, %v1273
        %v1400 = vpack.c.b16 %v1288, %v1281
        %v1401 = vpack.c.b16 %v1289, %v1282
        %v1402 = vpack.c.b16 %v1290, %v1283
        %v1403 = vpack.c.b16 %v1291, %v1284
        %v1404 = vpack.c.b16 %v1292, %v1285
        %v1405 = vpack.c.b16 %v1293, %v1286
        %v1406 = vpack.c.b16 %v1294, %v1287
        %v1407 = vpack.c.b16 %v1302, %v1295
        %v1408 = vpack.c.b16 %v1303, %v1296
        %v1409 = vpack.c.b16 %v1304, %v1297
        %v1410 = vpack.c.b16 %v1305, %v1298
        %v1411 = vpack.c.b16 %v1306, %v1299
        %v1412 = vpack.c.b16 %v1307, %v1300
        %v1413 = vpack.c.b16 %v1308, %v1301
        %v1414 = vpack.c.b16 %v1316, %v1309
        %v1415 = vpack.c.b16 %v1317, %v1310
        %v1416 = vpack.c.b16 %v1318, %v1311
        %v1417 = vpack.c.b16 %v1319, %v1312
        %v1418 = vpack.c.b16 %v1320, %v1313
        %v1419 = vpack.c.b16 %v1321, %v1314
        %v1420 = vpack.c.b16 %v1322, %v1315
        %v1631 = vunpack.c.l.b16 %v903
        %v1632 = vunpack.c.l.b16 %v904
        %v1633 = vunpack.c.l.b16 %v905
        %v1634 = vunpack.c.l.b16 %v906
        %v1635 = vunpack.c.l.b16 %v907
        %v1636 = vunpack.c.l.b16 %v908
        %v1637 = vunpack.c.l.b16 %v909
        %v1638 = vunpack.c.l.b16 %v910
        %v1639 = vunpack.c.l.b16 %v911
        %v1640 = vunpack.c.l.b16 %v912
        %v1641 = vunpack.c.l.b16 %v913
        %v1642 = vunpack.c.l.b16 %v914
        %v1643 = vunpack.c.l.b16 %v915
        %v1644 = vunpack.c.l.b16 %v916
        %v1645 = vunpack.c.l.b16 %v917
        %v1646 = vunpack.c.l.b16 %v918
        %v1647 = vunpack.c.l.b16 %v919
        %v1648 = vunpack.c.l.b16 %v920
        %v1649 = vunpack.c.l.b16 %v921
        %v1650 = vunpack.c.l.b16 %v922
        %v1651 = vunpack.c.l.b16 %v923
        %v1652 = vunpack.c.l.b16 %v924
        %v1653 = vunpack.c.l.b16 %v925
        %v1654 = vunpack.c.l.b16 %v926
        %v1655 = vunpack.c.l.b16 %v927
        %v1656 = vunpack.c.l.b16 %v928
        %v1657 = vunpack.c.l.b16 %v929
        %v1658 = vunpack.c.l.b16 %v930
        %v1659 = vunpack.c.l.b16 %v931
        %v1660 = vunpack.c.l.b16 %v932
        %v1661 = vunpack.c.l.b16 %v933
        %v1662 = vunpack.c.l.b16 %v934
        %v1663 = vunpack.c.l.b16 %v935
        %v1664 = vunpack.c.l.b16 %v936
        %v1665 = vunpack.c.l.b16 %v937
        %v1666 = vunpack.c.l.b16 %v938
        %v1667 = vunpack.c.l.b16 %v939
        %v1668 = vunpack.c.l.b16 %v940
        %v1669 = vunpack.c.l.b16 %v941
        %v1670 = vunpack.c.l.b16 %v942
        %v1671 = vunpack.c.l.b16 %v943
        %v1672 = vunpack.c.l.b16 %v944
        %v1673 = vunpack.c.l.b16 %v945
        %v1674 = vunpack.c.l.b16 %v946
        %v1675 = vunpack.c.l.b16 %v947
        %v1676 = vunpack.c.l.b16 %v948
        %v1677 = vunpack.c.l.b16 %v949
        %v1678 = vunpack.c.l.b16 %v950
        %v1679 = vunpack.c.l.b16 %v951
        %v1680 = vunpack.c.l.b16 %v952
        %v1681 = vunpack.c.l.b16 %v953
        %v1682 = vunpack.c.l.b16 %v954
        %v1683 = vunpack.c.l.b16 %v955
        %v1684 = vunpack.c.l.b16 %v956
        %v1685 = vunpack.c.l.b16 %v957
        %v1686 = vunpack.c.l.b16 %v958
        %v1687 = vunpack.c.l.b16 %v959
        %v1688 = vunpack.c.l.b16 %v960
        %v1689 = vunpack.c.l.b16 %v961
        %v1690 = vunpack.c.l.b16 %v962
        %v1691 = vunpack.c.l.b16 %v963
        %v1692 = vunpack.c.l.b16 %v964
        %v1693 = vunpack.c.l.b16 %v965
        %v1694 = vunpack.c.l.b16 %v966
        %v1695 = vunpack.c.l.b16 %v967
        %v1696 = vunpack.c.l.b16 %v968
        %v1697 = vunpack.c.l.b16 %v969
        %v1698 = vunpack.c.l.b16 %v970
        %v1699 = vunpack.c.l.b16 %v971
        %v1700 = vunpack.c.l.b16 %v972
        %v1701 = vunpack.c.l.b16 %v973
        %v1702 = vunpack.c.l.b16 %v974
        %v1703 = vunpack.c.l.b16 %v975
        %v1704 = vunpack.c.l.b16 %v976
        %v1705 = vunpack.c.l.b16 %v977
        %v1706 = vunpack.c.l.b16 %v978
        %v1707 = vunpack.c.l.b16 %v979
        %v1708 = vunpack.c.l.b16 %v980
        %v1709 = vunpack.c.l.b16 %v981
        %v1710 = vunpack.c.l.b16 %v982
        %v1711 = vunpack.c.l.b16 %v983
        %v1712 = vunpack.c.l.b16 %v984
        %v1713 = vunpack.c.l.b16 %v985
        %v1714 = vunpack.c.l.b16 %v986
        %v1715 = vunpack.c.l.b16 %v987
        %v1716 = vunpack.c.l.b16 %v988
        %v1717 = vunpack.c.l.b16 %v989
        %v1718 = vunpack.c.l.b16 %v990
        %v1719 = vunpack.c.l.b16 %v991
        %v1720 = vunpack.c.l.b16 %v992
        %v1721 = vunpack.c.l.b16 %v993
        %v1722 = vunpack.c.l.b16 %v994
        %v1723 = vunpack.c.l.b16 %v995
        %v1724 = vunpack.c.l.b16 %v996
        %v1725 = vunpack.c.l.b16 %v997
        %v1726 = vunpack.c.l.b16 %v998
        %v1727 = vunpack.c.l.b16 %v999
        %v1728 = vunpack.c.l.b16 %v1000
        %v1729 = vunpack.c.l.b16 %v1001
        %v1730 = vunpack.c.l.b16 %v1002
        %v1731 = vunpack.c.l.b16 %v1003
        %v1732 = vunpack.c.l.b16 %v1004
        %v1733 = vunpack.c.l.b16 %v1005
        %v1734 = vunpack.c.l.b16 %v1006
        %v1735 = vunpack.c.l.b16 %v1007
        %v1736 = vunpack.c.l.b16 %v1008
        %v1737 = vunpack.c.l.b16 %v1009
        %v1738 = vunpack.c.l.b16 %v1010
        %v1739 = vunpack.c.l.b16 %v1011
        %v1740 = vunpack.c.l.b16 %v1012
        %v1741 = vunpack.c.l.b16 %v1013
        %v1742 = vunpack.c.l.b16 %v1014
        %v1743 = vpack.c.b16 %v1632, %v1631
        %v1744 = vpack.c.b16 %v1634, %v1633
        %v1745 = vpack.c.b16 %v1636, %v1635
        %v1746 = vpack.c.b16 %v1638, %v1637
        %v1747 = vpack.c.b16 %v1640, %v1639
        %v1748 = vpack.c.b16 %v1642, %v1641
        %v1749 = vpack.c.b16 %v1644, %v1643
        %v1750 = vpack.c.b16 %v1646, %v1645
        %v1751 = vpack.c.b16 %v1648, %v1647
        %v1752 = vpack.c.b16 %v1650, %v1649
        %v1753 = vpack.c.b16 %v1652, %v1651
        %v1754 = vpack.c.b16 %v1654, %v1653
        %v1755 = vpack.c.b16 %v1656, %v1655
        %v1756 = vpack.c.b16 %v1658, %v1657
        %v1757 = vpack.c.b16 %v1660, %v1659
        %v1758 = vpack.c.b16 %v1662, %v1661
        %v1759 = vpack.c.b16 %v1664, %v1663
        %v1760 = vpack.c.b16 %v1666, %v1665
        %v1761 = vpack.c.b16 %v1668, %v1667
        %v1762 = vpack.c.b16 %v1670, %v1669
        %v1763 = vpack.c.b16 %v1672, %v1671
        %v1764 = vpack.c.b16 %v1674, %v1673
        %v1765 = vpack.c.b16 %v1676, %v1675
        %v1766 = vpack.c.b16 %v1678, %v1677
        %v1767 = vpack.c.b16 %v1680, %v1679
        %v1768 = vpack.c.b16 %v1682, %v1681
        %v1769 = vpack.c.b16 %v1684, %v1683
        %v1770 = vpack.c.b16 %v1686, %v1685
        %v1771 = vpack.c.b16 %v1688, %v1687
        %v1772 = vpack.c.b16 %v1690, %v1689
        %v1773 = vpack.c.b16 %v1692, %v1691
        %v1774 = vpack.c.b16 %v1694, %v1693
        %v1775 = vpack.c.b16 %v1696, %v1695
        %v1776 = vpack.c.b16 %v1698, %v1697
        %v1777 = vpack.c.b16 %v1700, %v1699
        %v1778 = vpack.c.b16 %v1702, %v1701
        %v1779 = vpack.c.b16 %v1704, %v1703
        %v1780 = vpack.c.b16 %v1706, %v1705
        %v1781 = vpack.c.b16 %v1708, %v1707
        %v1782 = vpack.c.b16 %v1710, %v1709
        %v1783 = vpack.c.b16 %v1712, %v1711
        %v1784 = vpack.c.b16 %v1714, %v1713
        %v1785 = vpack.c.b16 %v1716, %v1715
        %v1786 = vpack.c.b16 %v1718, %v1717
        %v1787 = vpack.c.b16 %v1720, %v1719
        %v1788 = vpack.c.b16 %v1722, %v1721
        %v1789 = vpack.c.b16 %v1724, %v1723
        %v1790 = vpack.c.b16 %v1726, %v1725
        %v1791 = vpack.c.b16 %v1728, %v1727
        %v1792 = vpack.c.b16 %v1730, %v1729
        %v1793 = vpack.c.b16 %v1732, %v1731
        %v1794 = vpack.c.b16 %v1734, %v1733
        %v1795 = vpack.c.b16 %v1736, %v1735
        %v1796 = vpack.c.b16 %v1738, %v1737
        %v1797 = vpack.c.b16 %v1740, %v1739
        %v1798 = vpack.c.b16 %v1742, %v1741
        %1855 = vmatprep.subr.bf16.mxu0 0
        %1856 = vmatpush1.bf16.msra.mxu0 %v1743
        %1857 = vmatprep.subr.bf16.mxu0 0
        %1858 = vmatpush1.bf16.msra.mxu0 %v1744
        %1859 = vmatprep.subr.bf16.mxu0 0
        %1860 = vmatpush1.bf16.msra.mxu0 %v1745
        %1861 = vmatprep.subr.bf16.mxu0 0
        %1862 = vmatpush1.bf16.msra.mxu0 %v1746
        %1863 = vmatprep.subr.bf16.mxu0 0
        %1864 = vmatpush1.bf16.msra.mxu0 %v1747
        %1865 = vmatprep.subr.bf16.mxu0 0
        %1866 = vmatpush1.bf16.msra.mxu0 %v1748
        %1867 = vmatprep.subr.bf16.mxu0 0
        %1868 = vmatpush1.bf16.msra.mxu0 %v1749
        %1869 = vmatprep.subr.bf16.mxu0 0
        %1870 = vmatpush1.bf16.msra.mxu0 %v1750
        %1871 = vmatprep.subr.bf16.mxu0 0
        %1872 = vmatpush1.bf16.msra.mxu0 %v1751
        %1873 = vmatprep.subr.bf16.mxu0 0
        %1874 = vmatpush1.bf16.msra.mxu0 %v1752
        %1875 = vmatprep.subr.bf16.mxu0 0
        %1876 = vmatpush1.bf16.msra.mxu0 %v1753
        %1877 = vmatprep.subr.bf16.mxu0 0
        %1878 = vmatpush1.bf16.msra.mxu0 %v1754
        %1879 = vmatprep.subr.bf16.mxu0 0
        %1880 = vmatpush1.bf16.msra.mxu0 %v1755
        %1881 = vmatprep.subr.bf16.mxu0 0
        %1882 = vmatpush1.bf16.msra.mxu0 %v1756
        %1883 = vmatprep.subr.bf16.mxu0 0
        %1884 = vmatpush1.bf16.msra.mxu0 %v1757
        %1885 = vmatprep.subr.bf16.mxu0 0
        %1886 = vmatpush1.bf16.msra.mxu0 %v1758
        %1887 = vmatprep.mubr.bf16.mxu0 %v1324
        %1888 = vmatmul.mubr.bf16.gmra.mrb[0].mxu0 %v1323
        %v1889 = vpop.f32.mrb[0].mxu0
        %v1890 = vadd.f32 0.0, %v1889
        %v1891 = vpop.f32.mrb[0].mxu0
        %v1892 = vpop.f32.mrb[0].mxu0
        %v1893 = vadd.f32 0.0, %v1892
        %v1894 = vpop.f32.mrb[0].mxu0
        %1895 = vmatprep.mubr.bf16.mxu0 %v1331
        %1896 = vmatmul.mubr.bf16.gmra.mrb[0].mxu0 %v1330
        %v1897 = vpop.f32.mrb[0].mxu0
        %v1898 = vadd.f32 0.0, %v1897
        %v1899 = vpop.f32.mrb[0].mxu0
        %v1900 = vpop.f32.mrb[0].mxu0
        %v1901 = vadd.f32 0.0, %v1900
        %v1902 = vpop.f32.mrb[0].mxu0
        %1903 = vmatprep.mubr.bf16.mxu0 %v1338
        %1904 = vmatmul.mubr.bf16.gmra.mrb[0].mxu0 %v1337
        %v1905 = vpop.f32.mrb[0].mxu0
        %v1906 = vadd.f32 0.0, %v1905
        %v1907 = vpop.f32.mrb[0].mxu0
        %v1908 = vpop.f32.mrb[0].mxu0
        %v1909 = vadd.f32 0.0, %v1908
        %v1910 = vpop.f32.mrb[0].mxu0
        %1911 = vmatprep.mubr.bf16.mxu0 %v1345
        %1912 = vmatmul.mubr.bf16.gmra.mrb[0].mxu0 %v1344
        %v1913 = vpop.f32.mrb[0].mxu0
        %v1914 = vadd.f32 0.0, %v1913
        %v1915 = vpop.f32.mrb[0].mxu0
        %v1916 = vpop.f32.mrb[0].mxu0
        %v1917 = vadd.f32 0.0, %v1916
        %v1918 = vpop.f32.mrb[0].mxu0
        %1919 = vmatprep.mubr.bf16.mxu0 %v1352
        %1920 = vmatmul.mubr.bf16.gmra.mrb[0].mxu0 %v1351
        %v1921 = vpop.f32.mrb[0].mxu0
        %v1922 = vadd.f32 0.0, %v1921
        %v1923 = vpop.f32.mrb[0].mxu0
        %v1924 = vpop.f32.mrb[0].mxu0
        %v1925 = vadd.f32 0.0, %v1924
        %v1926 = vpop.f32.mrb[0].mxu0
        %1927 = vmatprep.mubr.bf16.mxu0 %v1359
        %1928 = vmatmul.mubr.bf16.gmra.mrb[0].mxu0 %v1358
        %v1929 = vpop.f32.mrb[0].mxu0
        %v1930 = vadd.f32 0.0, %v1929
        %v1931 = vpop.f32.mrb[0].mxu0
        %v1932 = vpop.f32.mrb[0].mxu0
        %v1933 = vadd.f32 0.0, %v1932
        %v1934 = vpop.f32.mrb[0].mxu0
        %1935 = vmatprep.mubr.bf16.mxu0 %v1366
        %1936 = vmatmul.mubr.bf16.gmra.mrb[0].mxu0 %v1365
        %v1937 = vpop.f32.mrb[0].mxu0
        %v1938 = vadd.f32 0.0, %v1937
        %v1939 = vpop.f32.mrb[0].mxu0
        %v1940 = vpop.f32.mrb[0].mxu0
        %v1941 = vadd.f32 0.0, %v1940
        %v1942 = vpop.f32.mrb[0].mxu0
        %1943 = vmatprep.mubr.bf16.mxu0 %v1373
        %1944 = vmatmul.mubr.bf16.gmra.mrb[0].mxu0 %v1372
        %v1945 = vpop.f32.mrb[0].mxu0
        %v1946 = vadd.f32 0.0, %v1945
        %v1947 = vpop.f32.mrb[0].mxu0
        %v1948 = vpop.f32.mrb[0].mxu0
        %v1949 = vadd.f32 0.0, %v1948
        %v1950 = vpop.f32.mrb[0].mxu0
        %1951 = vmatprep.mubr.bf16.mxu0 %v1380
        %1952 = vmatmul.mubr.bf16.gmra.mrb[0].mxu0 %v1379
        %v1953 = vpop.f32.mrb[0].mxu0
        %v1954 = vadd.f32 0.0, %v1953
        %v1955 = vpop.f32.mrb[0].mxu0
        %v1956 = vpop.f32.mrb[0].mxu0
        %v1957 = vadd.f32 0.0, %v1956
        %v1958 = vpop.f32.mrb[0].mxu0
        %1959 = vmatprep.mubr.bf16.mxu0 %v1387
        %1960 = vmatmul.mubr.bf16.gmra.mrb[0].mxu0 %v1386
        %v1961 = vpop.f32.mrb[0].mxu0
        %v1962 = vadd.f32 0.0, %v1961
        %v1963 = vpop.f32.mrb[0].mxu0
        %v1964 = vpop.f32.mrb[0].mxu0
        %v1965 = vadd.f32 0.0, %v1964
        %v1966 = vpop.f32.mrb[0].mxu0
        %1967 = vmatprep.mubr.bf16.mxu0 %v1394
        %1968 = vmatmul.mubr.bf16.gmra.mrb[0].mxu0 %v1393
        %v1969 = vpop.f32.mrb[0].mxu0
        %v1970 = vadd.f32 0.0, %v1969
        %v1971 = vpop.f32.mrb[0].mxu0
        %v1972 = vpop.f32.mrb[0].mxu0
        %v1973 = vadd.f32 0.0, %v1972
        %v1974 = vpop.f32.mrb[0].mxu0
        %1975 = vmatprep.mubr.bf16.mxu0 %v1401
        %1976 = vmatmul.mubr.bf16.gmra.mrb[0].mxu0 %v1400
        %v1977 = vpop.f32.mrb[0].mxu0
        %v1978 = vadd.f32 0.0, %v1977
        %v1979 = vpop.f32.mrb[0].mxu0
        %v1980 = vpop.f32.mrb[0].mxu0
        %v1981 = vadd.f32 0.0, %v1980
        %v1982 = vpop.f32.mrb[0].mxu0
        %1983 = vmatprep.mubr.bf16.mxu0 %v1408
        %1984 = vmatmul.mubr.bf16.gmra.mrb[0].mxu0 %v1407
        %v1985 = vpop.f32.mrb[0].mxu0
        %v1986 = vadd.f32 0.0, %v1985
        %v1987 = vpop.f32.mrb[0].mxu0
        %v1988 = vpop.f32.mrb[0].mxu0
        %v1989 = vadd.f32 0.0, %v1988
        %v1990 = vpop.f32.mrb[0].mxu0
        %1991 = vmatprep.mubr.bf16.mxu0 %v1415
        %1992 = vmatmul.mubr.bf16.gmra.mrb[0].mxu0 %v1414
        %v1993 = vpop.f32.mrb[0].mxu0
        %v1994 = vadd.f32 0.0, %v1993
        %v1995 = vpop.f32.mrb[0].mxu0
        %v1996 = vpop.f32.mrb[0].mxu0
        %v1997 = vadd.f32 0.0, %v1996
        %v1998 = vpop.f32.mrb[0].mxu0
        %1999 = vdwg.mxu0
        %2000 = vmatprep.subr.bf16.mxu0 0
        %2001 = vmatpush1.bf16.msra.mxu0 %v1759
        %2002 = vmatprep.subr.bf16.mxu0 0
        %2003 = vmatpush1.bf16.msra.mxu0 %v1760
        %2004 = vmatprep.subr.bf16.mxu0 0
        %2005 = vmatpush1.bf16.msra.mxu0 %v1761
        %2006 = vmatprep.subr.bf16.mxu0 0
        %2007 = vmatpush1.bf16.msra.mxu0 %v1762
        %2008 = vmatprep.subr.bf16.mxu0 0
        %2009 = vmatpush1.bf16.msra.mxu0 %v1763
        %2010 = vmatprep.subr.bf16.mxu0 0
        %2011 = vmatpush1.bf16.msra.mxu0 %v1764
        %2012 = vmatprep.subr.bf16.mxu0 0
        %2013 = vmatpush1.bf16.msra.mxu0 %v1765
        %2014 = vmatprep.subr.bf16.mxu0 0
        %2015 = vmatpush1.bf16.msra.mxu0 %v1766
        %2016 = vmatprep.subr.bf16.mxu0 0
        %2017 = vmatpush1.bf16.msra.mxu0 %v1767
        %2018 = vmatprep.subr.bf16.mxu0 0
        %2019 = vmatpush1.bf16.msra.mxu0 %v1768
        %2020 = vmatprep.subr.bf16.mxu0 0
        %2021 = vmatpush1.bf16.msra.mxu0 %v1769
        %2022 = vmatprep.subr.bf16.mxu0 0
        %2023 = vmatpush1.bf16.msra.mxu0 %v1770
        %2024 = vmatprep.subr.bf16.mxu0 0
        %2025 = vmatpush1.bf16.msra.mxu0 %v1771
        %2026 = vmatprep.subr.bf16.mxu0 0
        %2027 = vmatpush1.bf16.msra.mxu0 %v1772
        %2028 = vmatprep.subr.bf16.mxu0 0
        %2029 = vmatpush1.bf16.msra.mxu0 %v1773
        %2030 = vmatprep.subr.bf16.mxu0 0
        %2031 = vmatpush1.bf16.msra.mxu0 %v1774
        %2032 = vmatprep.mubr.bf16.mxu0 %v1326
        %2033 = vmatmul.mubr.bf16.gmra.mrb[0].mxu0 %v1325
        %v2034 = vpop.f32.mrb[0].mxu0
        %v2035 = vadd.f32 %v1890, %v2034
        %v2036 = vpop.f32.mrb[0].mxu0
        %v2037 = vpop.f32.mrb[0].mxu0
        %v2038 = vadd.f32 %v1893, %v2037
        %v2039 = vpop.f32.mrb[0].mxu0
        %2040 = vmatprep.mubr.bf16.mxu0 %v1333
        %2041 = vmatmul.mubr.bf16.gmra.mrb[0].mxu0 %v1332
        %v2042 = vpop.f32.mrb[0].mxu0
        %v2043 = vadd.f32 %v1898, %v2042
        %v2044 = vpop.f32.mrb[0].mxu0
        %v2045 = vpop.f32.mrb[0].mxu0
        %v2046 = vadd.f32 %v1901, %v2045
        %v2047 = vpop.f32.mrb[0].mxu0
        %2048 = vmatprep.mubr.bf16.mxu0 %v1340
        %2049 = vmatmul.mubr.bf16.gmra.mrb[0].mxu0 %v1339
        %v2050 = vpop.f32.mrb[0].mxu0
        %v2051 = vadd.f32 %v1906, %v2050
        %v2052 = vpop.f32.mrb[0].mxu0
        %v2053 = vpop.f32.mrb[0].mxu0
        %v2054 = vadd.f32 %v1909, %v2053
        %v2055 = vpop.f32.mrb[0].mxu0
        %2056 = vmatprep.mubr.bf16.mxu0 %v1347
        %2057 = vmatmul.mubr.bf16.gmra.mrb[0].mxu0 %v1346
        %v2058 = vpop.f32.mrb[0].mxu0
        %v2059 = vadd.f32 %v1914, %v2058
        %v2060 = vpop.f32.mrb[0].mxu0
        %v2061 = vpop.f32.mrb[0].mxu0
        %v2062 = vadd.f32 %v1917, %v2061
        %v2063 = vpop.f32.mrb[0].mxu0
        %2064 = vmatprep.mubr.bf16.mxu0 %v1354
        %2065 = vmatmul.mubr.bf16.gmra.mrb[0].mxu0 %v1353
        %v2066 = vpop.f32.mrb[0].mxu0
        %v2067 = vadd.f32 %v1922, %v2066
        %v2068 = vpop.f32.mrb[0].mxu0
        %v2069 = vpop.f32.mrb[0].mxu0
        %v2070 = vadd.f32 %v1925, %v2069
        %v2071 = vpop.f32.mrb[0].mxu0
        %2072 = vmatprep.mubr.bf16.mxu0 %v1361
        %2073 = vmatmul.mubr.bf16.gmra.mrb[0].mxu0 %v1360
        %v2074 = vpop.f32.mrb[0].mxu0
        %v2075 = vadd.f32 %v1930, %v2074
        %v2076 = vpop.f32.mrb[0].mxu0
        %v2077 = vpop.f32.mrb[0].mxu0
        %v2078 = vadd.f32 %v1933, %v2077
        %v2079 = vpop.f32.mrb[0].mxu0
        %2080 = vmatprep.mubr.bf16.mxu0 %v1368
        %2081 = vmatmul.mubr.bf16.gmra.mrb[0].mxu0 %v1367
        %v2082 = vpop.f32.mrb[0].mxu0
        %v2083 = vadd.f32 %v1938, %v2082
        %v2084 = vpop.f32.mrb[0].mxu0
        %v2085 = vpop.f32.mrb[0].mxu0
        %v2086 = vadd.f32 %v1941, %v2085
        %v2087 = vpop.f32.mrb[0].mxu0
        %2088 = vmatprep.mubr.bf16.mxu0 %v1375
        %2089 = vmatmul.mubr.bf16.gmra.mrb[0].mxu0 %v1374
        %v2090 = vpop.f32.mrb[0].mxu0
        %v2091 = vadd.f32 %v1946, %v2090
        %v2092 = vpop.f32.mrb[0].mxu0
        %v2093 = vpop.f32.mrb[0].mxu0
        %v2094 = vadd.f32 %v1949, %v2093
        %v2095 = vpop.f32.mrb[0].mxu0
        %2096 = vmatprep.mubr.bf16.mxu0 %v1382
        %2097 = vmatmul.mubr.bf16.gmra.mrb[0].mxu0 %v1381
        %v2098 = vpop.f32.mrb[0].mxu0
        %v2099 = vadd.f32 %v1954, %v2098
        %v2100 = vpop.f32.mrb[0].mxu0
        %v2101 = vpop.f32.mrb[0].mxu0
        %v2102 = vadd.f32 %v1957, %v2101
        %v2103 = vpop.f32.mrb[0].mxu0
        %2104 = vmatprep.mubr.bf16.mxu0 %v1389
        %2105 = vmatmul.mubr.bf16.gmra.mrb[0].mxu0 %v1388
        %v2106 = vpop.f32.mrb[0].mxu0
        %v2107 = vadd.f32 %v1962, %v2106
        %v2108 = vpop.f32.mrb[0].mxu0
        %v2109 = vpop.f32.mrb[0].mxu0
        %v2110 = vadd.f32 %v1965, %v2109
        %v2111 = vpop.f32.mrb[0].mxu0
        %2112 = vmatprep.mubr.bf16.mxu0 %v1396
        %2113 = vmatmul.mubr.bf16.gmra.mrb[0].mxu0 %v1395
        %v2114 = vpop.f32.mrb[0].mxu0
        %v2115 = vadd.f32 %v1970, %v2114
        %v2116 = vpop.f32.mrb[0].mxu0
        %v2117 = vpop.f32.mrb[0].mxu0
        %v2118 = vadd.f32 %v1973, %v2117
        %v2119 = vpop.f32.mrb[0].mxu0
        %2120 = vmatprep.mubr.bf16.mxu0 %v1403
        %2121 = vmatmul.mubr.bf16.gmra.mrb[0].mxu0 %v1402
        %v2122 = vpop.f32.mrb[0].mxu0
        %v2123 = vadd.f32 %v1978, %v2122
        %v2124 = vpop.f32.mrb[0].mxu0
        %v2125 = vpop.f32.mrb[0].mxu0
        %v2126 = vadd.f32 %v1981, %v2125
        %v2127 = vpop.f32.mrb[0].mxu0
        %2128 = vmatprep.mubr.bf16.mxu0 %v1410
        %2129 = vmatmul.mubr.bf16.gmra.mrb[0].mxu0 %v1409
        %v2130 = vpop.f32.mrb[0].mxu0
        %v2131 = vadd.f32 %v1986, %v2130
        %v2132 = vpop.f32.mrb[0].mxu0
        %v2133 = vpop.f32.mrb[0].mxu0
        %v2134 = vadd.f32 %v1989, %v2133
        %v2135 = vpop.f32.mrb[0].mxu0
        %2136 = vmatprep.mubr.bf16.mxu0 %v1417
        %2137 = vmatmul.mubr.bf16.gmra.mrb[0].mxu0 %v1416
        %v2138 = vpop.f32.mrb[0].mxu0
        %v2139 = vadd.f32 %v1994, %v2138
        %v2140 = vpop.f32.mrb[0].mxu0
        %v2141 = vpop.f32.mrb[0].mxu0
        %v2142 = vadd.f32 %v1997, %v2141
        %v2143 = vpop.f32.mrb[0].mxu0
        %2144 = vdwg.mxu0
        %2145 = vmatprep.subr.bf16.mxu0 0
        %2146 = vmatpush1.bf16.msra.mxu0 %v1775
        %2147 = vmatprep.subr.bf16.mxu0 0
        %2148 = vmatpush1.bf16.msra.mxu0 %v1776
        %2149 = vmatprep.subr.bf16.mxu0 0
        %2150 = vmatpush1.bf16.msra.mxu0 %v1777
        %2151 = vmatprep.subr.bf16.mxu0 0
        %2152 = vmatpush1.bf16.msra.mxu0 %v1778
        %2153 = vmatprep.subr.bf16.mxu0 0
        %2154 = vmatpush1.bf16.msra.mxu0 %v1779
        %2155 = vmatprep.subr.bf16.mxu0 0
        %2156 = vmatpush1.bf16.msra.mxu0 %v1780
        %2157 = vmatprep.subr.bf16.mxu0 0
        %2158 = vmatpush1.bf16.msra.mxu0 %v1781
        %2159 = vmatprep.subr.bf16.mxu0 0
        %2160 = vmatpush1.bf16.msra.mxu0 %v1782
        %2161 = vmatprep.subr.bf16.mxu0 0
        %2162 = vmatpush1.bf16.msra.mxu0 %v1783
        %2163 = vmatprep.subr.bf16.mxu0 0
        %2164 = vmatpush1.bf16.msra.mxu0 %v1784
        %2165 = vmatprep.subr.bf16.mxu0 0
        %2166 = vmatpush1.bf16.msra.mxu0 %v1785
        %2167 = vmatprep.subr.bf16.mxu0 0
        %2168 = vmatpush1.bf16.msra.mxu0 %v1786
        %2169 = vmatprep.subr.bf16.mxu0 0
        %2170 = vmatpush1.bf16.msra.mxu0 %v1787
        %2171 = vmatprep.subr.bf16.mxu0 0
        %2172 = vmatpush1.bf16.msra.mxu0 %v1788
        %2173 = vmatprep.subr.bf16.mxu0 0
        %2174 = vmatpush1.bf16.msra.mxu0 %v1789
        %2175 = vmatprep.subr.bf16.mxu0 0
        %2176 = vmatpush1.bf16.msra.mxu0 %v1790
        %2177 = vmatprep.mubr.bf16.mxu0 %v1328
        %2178 = vmatmul.mubr.bf16.gmra.mrb[0].mxu0 %v1327
        %v2179 = vpop.f32.mrb[0].mxu0
        %v2180 = vadd.f32 %v2035, %v2179
        %v2181 = vpop.f32.mrb[0].mxu0
        %v2182 = vpop.f32.mrb[0].mxu0
        %v2183 = vadd.f32 %v2038, %v2182
        %v2184 = vpop.f32.mrb[0].mxu0
        %2185 = vmatprep.mubr.bf16.mxu0 %v1335
        %2186 = vmatmul.mubr.bf16.gmra.mrb[0].mxu0 %v1334
        %v2187 = vpop.f32.mrb[0].mxu0
        %v2188 = vadd.f32 %v2043, %v2187
        %v2189 = vpop.f32.mrb[0].mxu0
        %v2190 = vpop.f32.mrb[0].mxu0
        %v2191 = vadd.f32 %v2046, %v2190
        %v2192 = vpop.f32.mrb[0].mxu0
        %2193 = vmatprep.mubr.bf16.mxu0 %v1342
        %2194 = vmatmul.mubr.bf16.gmra.mrb[0].mxu0 %v1341
        %v2195 = vpop.f32.mrb[0].mxu0
        %v2196 = vadd.f32 %v2051, %v2195
        %v2197 = vpop.f32.mrb[0].mxu0
        %v2198 = vpop.f32.mrb[0].mxu0
        %v2199 = vadd.f32 %v2054, %v2198
        %v2200 = vpop.f32.mrb[0].mxu0
        %2201 = vmatprep.mubr.bf16.mxu0 %v1349
        %2202 = vmatmul.mubr.bf16.gmra.mrb[0].mxu0 %v1348
        %v2203 = vpop.f32.mrb[0].mxu0
        %v2204 = vadd.f32 %v2059, %v2203
        %v2205 = vpop.f32.mrb[0].mxu0
        %v2206 = vpop.f32.mrb[0].mxu0
        %v2207 = vadd.f32 %v2062, %v2206
        %v2208 = vpop.f32.mrb[0].mxu0
        %2209 = vmatprep.mubr.bf16.mxu0 %v1356
        %2210 = vmatmul.mubr.bf16.gmra.mrb[0].mxu0 %v1355
        %v2211 = vpop.f32.mrb[0].mxu0
        %v2212 = vadd.f32 %v2067, %v2211
        %v2213 = vpop.f32.mrb[0].mxu0
        %v2214 = vpop.f32.mrb[0].mxu0
        %v2215 = vadd.f32 %v2070, %v2214
        %v2216 = vpop.f32.mrb[0].mxu0
        %2217 = vmatprep.mubr.bf16.mxu0 %v1363
        %2218 = vmatmul.mubr.bf16.gmra.mrb[0].mxu0 %v1362
        %v2219 = vpop.f32.mrb[0].mxu0
        %v2220 = vadd.f32 %v2075, %v2219
        %v2221 = vpop.f32.mrb[0].mxu0
        %v2222 = vpop.f32.mrb[0].mxu0
        %v2223 = vadd.f32 %v2078, %v2222
        %v2224 = vpop.f32.mrb[0].mxu0
        %2225 = vmatprep.mubr.bf16.mxu0 %v1370
        %2226 = vmatmul.mubr.bf16.gmra.mrb[0].mxu0 %v1369
        %v2227 = vpop.f32.mrb[0].mxu0
        %v2228 = vadd.f32 %v2083, %v2227
        %v2229 = vpop.f32.mrb[0].mxu0
        %v2230 = vpop.f32.mrb[0].mxu0
        %v2231 = vadd.f32 %v2086, %v2230
        %v2232 = vpop.f32.mrb[0].mxu0
        %2233 = vmatprep.mubr.bf16.mxu0 %v1377
        %2234 = vmatmul.mubr.bf16.gmra.mrb[0].mxu0 %v1376
        %v2235 = vpop.f32.mrb[0].mxu0
        %v2236 = vadd.f32 %v2091, %v2235
        %v2237 = vpop.f32.mrb[0].mxu0
        %v2238 = vpop.f32.mrb[0].mxu0
        %v2239 = vadd.f32 %v2094, %v2238
        %v2240 = vpop.f32.mrb[0].mxu0
        %2241 = vmatprep.mubr.bf16.mxu0 %v1384
        %2242 = vmatmul.mubr.bf16.gmra.mrb[0].mxu0 %v1383
        %v2243 = vpop.f32.mrb[0].mxu0
        %v2244 = vadd.f32 %v2099, %v2243
        %v2245 = vpop.f32.mrb[0].mxu0
        %v2246 = vpop.f32.mrb[0].mxu0
        %v2247 = vadd.f32 %v2102, %v2246
        %v2248 = vpop.f32.mrb[0].mxu0
        %2249 = vmatprep.mubr.bf16.mxu0 %v1391
        %2250 = vmatmul.mubr.bf16.gmra.mrb[0].mxu0 %v1390
        %v2251 = vpop.f32.mrb[0].mxu0
        %v2252 = vadd.f32 %v2107, %v2251
        %v2253 = vpop.f32.mrb[0].mxu0
        %v2254 = vpop.f32.mrb[0].mxu0
        %v2255 = vadd.f32 %v2110, %v2254
        %v2256 = vpop.f32.mrb[0].mxu0
        %2257 = vmatprep.mubr.bf16.mxu0 %v1398
        %2258 = vmatmul.mubr.bf16.gmra.mrb[0].mxu0 %v1397
        %v2259 = vpop.f32.mrb[0].mxu0
        %v2260 = vadd.f32 %v2115, %v2259
        %v2261 = vpop.f32.mrb[0].mxu0
        %v2262 = vpop.f32.mrb[0].mxu0
        %v2263 = vadd.f32 %v2118, %v2262
        %v2264 = vpop.f32.mrb[0].mxu0
        %2265 = vmatprep.mubr.bf16.mxu0 %v1405
        %2266 = vmatmul.mubr.bf16.gmra.mrb[0].mxu0 %v1404
        %v2267 = vpop.f32.mrb[0].mxu0
        %v2268 = vadd.f32 %v2123, %v2267
        %v2269 = vpop.f32.mrb[0].mxu0
        %v2270 = vpop.f32.mrb[0].mxu0
        %v2271 = vadd.f32 %v2126, %v2270
        %v2272 = vpop.f32.mrb[0].mxu0
        %2273 = vmatprep.mubr.bf16.mxu0 %v1412
        %2274 = vmatmul.mubr.bf16.gmra.mrb[0].mxu0 %v1411
        %v2275 = vpop.f32.mrb[0].mxu0
        %v2276 = vadd.f32 %v2131, %v2275
        %v2277 = vpop.f32.mrb[0].mxu0
        %v2278 = vpop.f32.mrb[0].mxu0
        %v2279 = vadd.f32 %v2134, %v2278
        %v2280 = vpop.f32.mrb[0].mxu0
        %2281 = vmatprep.mubr.bf16.mxu0 %v1419
        %2282 = vmatmul.mubr.bf16.gmra.mrb[0].mxu0 %v1418
        %v2283 = vpop.f32.mrb[0].mxu0
        %v2284 = vadd.f32 %v2139, %v2283
        %v2285 = vpop.f32.mrb[0].mxu0
        %v2286 = vpop.f32.mrb[0].mxu0
        %v2287 = vadd.f32 %v2142, %v2286
        %v2288 = vpop.f32.mrb[0].mxu0
        %2289 = vdwg.mxu0
        %2290 = vmatprep.subr.bf16.mxu0 0
        %2291 = vmatpush1.bf16.msra.mxu0 %v1791
        %2292 = vmatprep.subr.bf16.mxu0 0
        %2293 = vmatpush1.bf16.msra.mxu0 %v1792
        %2294 = vmatprep.subr.bf16.mxu0 0
        %2295 = vmatpush1.bf16.msra.mxu0 %v1793
        %2296 = vmatprep.subr.bf16.mxu0 0
        %2297 = vmatpush1.bf16.msra.mxu0 %v1794
        %2298 = vmatprep.subr.bf16.mxu0 0
        %2299 = vmatpush1.bf16.msra.mxu0 %v1795
        %2300 = vmatprep.subr.bf16.mxu0 0
        %2301 = vmatpush1.bf16.msra.mxu0 %v1796
        %2302 = vmatprep.subr.bf16.mxu0 0
        %2303 = vmatpush1.bf16.msra.mxu0 %v1797
        %2304 = vmatprep.subr.bf16.mxu0 0
        %2305 = vmatpush1.bf16.msra.mxu0 %v1798
        %2306 = vmatprep.subr.bf16.mxu0 0
        %2307 = vmatpush1.bf16.msra.mxu0 0
        %2308 = vmatprep.subr.bf16.mxu0 0
        %2309 = vmatpush1.bf16.msra.mxu0 0
        %2310 = vmatprep.subr.bf16.mxu0 0
        %2311 = vmatpush1.bf16.msra.mxu0 0
        %2312 = vmatprep.subr.bf16.mxu0 0
        %2313 = vmatpush1.bf16.msra.mxu0 0
        %2314 = vmatprep.subr.bf16.mxu0 0
        %2315 = vmatpush1.bf16.msra.mxu0 0
        %2316 = vmatprep.subr.bf16.mxu0 0
        %2317 = vmatpush1.bf16.msra.mxu0 0
        %2318 = vmatprep.subr.bf16.mxu0 0
        %2319 = vmatpush1.bf16.msra.mxu0 0
        %2320 = vmatprep.subr.bf16.mxu0 0
        %2321 = vmatpush1.bf16.msra.mxu0 0
        %2322 = vmatprep.mubr.bf16.mxu0 0
        %2323 = vmatmul.mubr.bf16.gmra.mrb[0].mxu0 %v1329
        %v2324 = vpop.f32.mrb[0].mxu0
        %v2325 = vadd.f32 %v2180, %v2324
        %v2326 = vpop.f32.mrb[0].mxu0
        %v2327 = vpop.f32.mrb[0].mxu0
        %v2328 = vadd.f32 %v2183, %v2327
        %v2329 = vpop.f32.mrb[0].mxu0
        %2330 = vmatprep.mubr.bf16.mxu0 0
        %2331 = vmatmul.mubr.bf16.gmra.mrb[0].mxu0 %v1336
        %v2332 = vpop.f32.mrb[0].mxu0
        %v2333 = vadd.f32 %v2188, %v2332
        %v2334 = vpop.f32.mrb[0].mxu0
        %v2335 = vpop.f32.mrb[0].mxu0
        %v2336 = vadd.f32 %v2191, %v2335
        %v2337 = vpop.f32.mrb[0].mxu0
        %2338 = vmatprep.mubr.bf16.mxu0 0
        %2339 = vmatmul.mubr.bf16.gmra.mrb[0].mxu0 %v1343
        %v2340 = vpop.f32.mrb[0].mxu0
        %v2341 = vadd.f32 %v2196, %v2340
        %v2342 = vpop.f32.mrb[0].mxu0
        %v2343 = vpop.f32.mrb[0].mxu0
        %v2344 = vadd.f32 %v2199, %v2343
        %v2345 = vpop.f32.mrb[0].mxu0
        %2346 = vmatprep.mubr.bf16.mxu0 0
        %2347 = vmatmul.mubr.bf16.gmra.mrb[0].mxu0 %v1350
        %v2348 = vpop.f32.mrb[0].mxu0
        %v2349 = vadd.f32 %v2204, %v2348
        %v2350 = vpop.f32.mrb[0].mxu0
        %v2351 = vpop.f32.mrb[0].mxu0
        %v2352 = vadd.f32 %v2207, %v2351
        %v2353 = vpop.f32.mrb[0].mxu0
        %2354 = vmatprep.mubr.bf16.mxu0 0
        %2355 = vmatmul.mubr.bf16.gmra.mrb[0].mxu0 %v1357
        %v2356 = vpop.f32.mrb[0].mxu0
        %v2357 = vadd.f32 %v2212, %v2356
        %v2358 = vpop.f32.mrb[0].mxu0
        %v2359 = vpop.f32.mrb[0].mxu0
        %v2360 = vadd.f32 %v2215, %v2359
        %v2361 = vpop.f32.mrb[0].mxu0
        %2362 = vmatprep.mubr.bf16.mxu0 0
        %2363 = vmatmul.mubr.bf16.gmra.mrb[0].mxu0 %v1364
        %v2364 = vpop.f32.mrb[0].mxu0
        %v2365 = vadd.f32 %v2220, %v2364
        %v2366 = vpop.f32.mrb[0].mxu0
        %v2367 = vpop.f32.mrb[0].mxu0
        %v2368 = vadd.f32 %v2223, %v2367
        %v2369 = vpop.f32.mrb[0].mxu0
        %2370 = vmatprep.mubr.bf16.mxu0 0
        %2371 = vmatmul.mubr.bf16.gmra.mrb[0].mxu0 %v1371
        %v2372 = vpop.f32.mrb[0].mxu0
        %v2373 = vadd.f32 %v2228, %v2372
        %v2374 = vpop.f32.mrb[0].mxu0
        %v2375 = vpop.f32.mrb[0].mxu0
        %v2376 = vadd.f32 %v2231, %v2375
        %v2377 = vpop.f32.mrb[0].mxu0
        %2378 = vmatprep.mubr.bf16.mxu0 0
        %2379 = vmatmul.mubr.bf16.gmra.mrb[0].mxu0 %v1378
        %v2380 = vpop.f32.mrb[0].mxu0
        %v2381 = vadd.f32 %v2236, %v2380
        %v2382 = vpop.f32.mrb[0].mxu0
        %v2383 = vpop.f32.mrb[0].mxu0
        %v2384 = vadd.f32 %v2239, %v2383
        %v2385 = vpop.f32.mrb[0].mxu0
        %2386 = vmatprep.mubr.bf16.mxu0 0
        %2387 = vmatmul.mubr.bf16.gmra.mrb[0].mxu0 %v1385
        %v2388 = vpop.f32.mrb[0].mxu0
        %v2389 = vadd.f32 %v2244, %v2388
        %v2390 = vpop.f32.mrb[0].mxu0
        %v2391 = vpop.f32.mrb[0].mxu0
        %v2392 = vadd.f32 %v2247, %v2391
        %v2393 = vpop.f32.mrb[0].mxu0
        %2394 = vmatprep.mubr.bf16.mxu0 0
        %2395 = vmatmul.mubr.bf16.gmra.mrb[0].mxu0 %v1392
        %v2396 = vpop.f32.mrb[0].mxu0
        %v2397 = vadd.f32 %v2252, %v2396
        %v2398 = vpop.f32.mrb[0].mxu0
        %v2399 = vpop.f32.mrb[0].mxu0
        %v2400 = vadd.f32 %v2255, %v2399
        %v2401 = vpop.f32.mrb[0].mxu0
        %2402 = vmatprep.mubr.bf16.mxu0 0
        %2403 = vmatmul.mubr.bf16.gmra.mrb[0].mxu0 %v1399
        %v2404 = vpop.f32.mrb[0].mxu0
        %v2405 = vadd.f32 %v2260, %v2404
        %v2406 = vpop.f32.mrb[0].mxu0
        %v2407 = vpop.f32.mrb[0].mxu0
        %v2408 = vadd.f32 %v2263, %v2407
        %v2409 = vpop.f32.mrb[0].mxu0
        %2410 = vmatprep.mubr.bf16.mxu0 0
        %2411 = vmatmul.mubr.bf16.gmra.mrb[0].mxu0 %v1406
        %v2412 = vpop.f32.mrb[0].mxu0
        %v2413 = vadd.f32 %v2268, %v2412
        %v2414 = vpop.f32.mrb[0].mxu0
        %v2415 = vpop.f32.mrb[0].mxu0
        %v2416 = vadd.f32 %v2271, %v2415
        %v2417 = vpop.f32.mrb[0].mxu0
        %2418 = vmatprep.mubr.bf16.mxu0 0
        %2419 = vmatmul.mubr.bf16.gmra.mrb[0].mxu0 %v1413
        %v2420 = vpop.f32.mrb[0].mxu0
        %v2421 = vadd.f32 %v2276, %v2420
        %v2422 = vpop.f32.mrb[0].mxu0
        %v2423 = vpop.f32.mrb[0].mxu0
        %v2424 = vadd.f32 %v2279, %v2423
        %v2425 = vpop.f32.mrb[0].mxu0
        %2426 = vmatprep.mubr.bf16.mxu0 0
        %2427 = vmatmul.mubr.bf16.gmra.mrb[0].mxu0 %v1420
        %v2428 = vpop.f32.mrb[0].mxu0
        %v2429 = vadd.f32 %v2284, %v2428
        %v2430 = vpop.f32.mrb[0].mxu0
        %v2431 = vpop.f32.mrb[0].mxu0
        %v2432 = vadd.f32 %v2287, %v2431
        %v2433 = vpop.f32.mrb[0].mxu0
        %2434 = vdwg.mxu0
        %v2435 = vsel %vm763, 1, 0
        %v2436 = vsel %vm764, 1, 0
        %v2437 = vsel %vm765, 1, 0
        %v2438 = vsel %vm766, 1, 0
        %v2439 = vsel %vm767, 1, 0
        %v2440 = vsel %vm768, 1, 0
        %v2441 = vsel %vm769, 1, 0
        %v2442 = vsel %vm770, 1, 0
        %v2443 = vsel %vm771, 1, 0
        %v2444 = vsel %vm772, 1, 0
        %v2445 = vsel %vm773, 1, 0
        %v2446 = vsel %vm774, 1, 0
        %v2447 = vsel %vm775, 1, 0
        %v2448 = vsel %vm776, 1, 0
        %v2449 = vsel %vm777, 1, 0
        %v2450 = vsel %vm778, 1, 0
        %v2451 = vsel %vm779, 1, 0
        %v2452 = vsel %vm780, 1, 0
        %v2453 = vsel %vm781, 1, 0
        %v2454 = vsel %vm782, 1, 0
        %v2455 = vsel %vm783, 1, 0
        %v2456 = vsel %vm784, 1, 0
        %v2457 = vsel %vm785, 1, 0
        %v2458 = vsel %vm786, 1, 0
        %v2459 = vsel %vm787, 1, 0
        %v2460 = vsel %vm788, 1, 0
        %v2461 = vsel %vm789, 1, 0
        %v2462 = vsel %vm790, 1, 0
        %vm2463 = vcmp.eq.s32.totalorder %v2435, 1
        %vm2464 = vcmp.eq.s32.totalorder %v2436, 1
        %vm2465 = vcmp.eq.s32.totalorder %v2437, 1
        %vm2466 = vcmp.eq.s32.totalorder %v2438, 1
        %vm2467 = vcmp.eq.s32.totalorder %v2439, 1
        %vm2468 = vcmp.eq.s32.totalorder %v2440, 1
        %vm2469 = vcmp.eq.s32.totalorder %v2441, 1
        %vm2470 = vcmp.eq.s32.totalorder %v2442, 1
        %vm2471 = vcmp.eq.s32.totalorder %v2443, 1
        %vm2472 = vcmp.eq.s32.totalorder %v2444, 1
        %vm2473 = vcmp.eq.s32.totalorder %v2445, 1
        %vm2474 = vcmp.eq.s32.totalorder %v2446, 1
        %vm2475 = vcmp.eq.s32.totalorder %v2447, 1
        %vm2476 = vcmp.eq.s32.totalorder %v2448, 1
        %vm2477 = vcmp.eq.s32.totalorder %v2449, 1
        %vm2478 = vcmp.eq.s32.totalorder %v2450, 1
        %vm2479 = vcmp.eq.s32.totalorder %v2451, 1
        %vm2480 = vcmp.eq.s32.totalorder %v2452, 1
        %vm2481 = vcmp.eq.s32.totalorder %v2453, 1
        %vm2482 = vcmp.eq.s32.totalorder %v2454, 1
        %vm2483 = vcmp.eq.s32.totalorder %v2455, 1
        %vm2484 = vcmp.eq.s32.totalorder %v2456, 1
        %vm2485 = vcmp.eq.s32.totalorder %v2457, 1
        %vm2486 = vcmp.eq.s32.totalorder %v2458, 1
        %vm2487 = vcmp.eq.s32.totalorder %v2459, 1
        %vm2488 = vcmp.eq.s32.totalorder %v2460, 1
        %vm2489 = vcmp.eq.s32.totalorder %v2461, 1
        %vm2490 = vcmp.eq.s32.totalorder %v2462, 1
        %v2491 = vsel %vm2463, %v2325, 0.0
        %v2492 = vsel %vm2464, %v2328, 0.0
        %v2493 = vsel %vm2465, %v2333, 0.0
        %v2494 = vsel %vm2466, %v2336, 0.0
        %v2495 = vsel %vm2467, %v2341, 0.0
        %v2496 = vsel %vm2468, %v2344, 0.0
        %v2497 = vsel %vm2469, %v2349, 0.0
        %v2498 = vsel %vm2470, %v2352, 0.0
        %v2499 = vsel %vm2471, %v2357, 0.0
        %v2500 = vsel %vm2472, %v2360, 0.0
        %v2501 = vsel %vm2473, %v2365, 0.0
        %v2502 = vsel %vm2474, %v2368, 0.0
        %v2503 = vsel %vm2475, %v2373, 0.0
        %v2504 = vsel %vm2476, %v2376, 0.0
        %v2505 = vsel %vm2477, %v2381, 0.0
        %v2506 = vsel %vm2478, %v2384, 0.0
        %v2507 = vsel %vm2479, %v2389, 0.0
        %v2508 = vsel %vm2480, %v2392, 0.0
        %v2509 = vsel %vm2481, %v2397, 0.0
        %v2510 = vsel %vm2482, %v2400, 0.0
        %v2511 = vsel %vm2483, %v2405, 0.0
        %v2512 = vsel %vm2484, %v2408, 0.0
        %v2513 = vsel %vm2485, %v2413, 0.0
        %v2514 = vsel %vm2486, %v2416, 0.0
        %v2515 = vsel %vm2487, %v2421, 0.0
        %v2516 = vsel %vm2488, %v2424, 0.0
        %v2517 = vsel %vm2489, %v2429, 0.0
        %v2518 = vsel %vm2490, %v2432, 0.0
        %v2519 = vadd.f32 %v2491, %v2492
        %v2520 = vadd.f32 %v2519, %v2493
        %v2521 = vadd.f32 %v2520, %v2494
        %v2522 = vadd.f32 %v2521, %v2495
        %v2523 = vadd.f32 %v2522, %v2496
        %v2524 = vadd.f32 %v2523, %v2497
        %v2525 = vadd.f32 %v2524, %v2498
        %v2526 = vadd.f32 %v2525, %v2499
        %v2527 = vadd.f32 %v2526, %v2500
        %v2528 = vadd.f32 %v2527, %v2501
        %v2529 = vadd.f32 %v2528, %v2502
        %v2530 = vadd.f32 %v2529, %v2503
        %v2531 = vadd.f32 %v2530, %v2504
        %v2532 = vadd.f32 %v2531, %v2505
        %v2533 = vadd.f32 %v2532, %v2506
        %v2534 = vadd.f32 %v2533, %v2507
        %v2535 = vadd.f32 %v2534, %v2508
        %v2536 = vadd.f32 %v2535, %v2509
        %v2537 = vadd.f32 %v2536, %v2510
        %v2538 = vadd.f32 %v2537, %v2511
        %v2539 = vadd.f32 %v2538, %v2512
        %v2540 = vadd.f32 %v2539, %v2513
        %v2541 = vadd.f32 %v2540, %v2514
        %v2542 = vadd.f32 %v2541, %v2515
        %v2543 = vadd.f32 %v2542, %v2516
        %v2544 = vadd.f32 %v2543, %v2517
        %v2545 = vadd.f32 %v2544, %v2518
        %v2546 = vrot.slane %v2545, 4
        %v2547 = vadd.f32 %v2545, %v2546
        %v2548 = vrot.slane %v2547, 2
        %v2549 = vadd.f32 %v2547, %v2548
        %v2550 = vrot.slane %v2549, 1
        %v2551 = vadd.f32 %v2549, %v2550
        %v2552 = vmul.f32 %v2551, 0.0051020407
        %v2553 = vsub.f32 %v2325, %v2552
        %v2554 = vsub.f32 %v2328, %v2552
        %v2555 = vsub.f32 %v2333, %v2552
        %v2556 = vsub.f32 %v2336, %v2552
        %v2557 = vsub.f32 %v2341, %v2552
        %v2558 = vsub.f32 %v2344, %v2552
        %v2559 = vsub.f32 %v2349, %v2552
        %v2560 = vsub.f32 %v2352, %v2552
        %v2561 = vsub.f32 %v2357, %v2552
        %v2562 = vsub.f32 %v2360, %v2552
        %v2563 = vsub.f32 %v2365, %v2552
        %v2564 = vsub.f32 %v2368, %v2552
        %v2565 = vsub.f32 %v2373, %v2552
        %v2566 = vsub.f32 %v2376, %v2552
        %v2567 = vsub.f32 %v2381, %v2552
        %v2568 = vsub.f32 %v2384, %v2552
        %v2569 = vsub.f32 %v2389, %v2552
        %v2570 = vsub.f32 %v2392, %v2552
        %v2571 = vsub.f32 %v2397, %v2552
        %v2572 = vsub.f32 %v2400, %v2552
        %v2573 = vsub.f32 %v2405, %v2552
        %v2574 = vsub.f32 %v2408, %v2552
        %v2575 = vsub.f32 %v2413, %v2552
        %v2576 = vsub.f32 %v2416, %v2552
        %v2577 = vsub.f32 %v2421, %v2552
        %v2578 = vsub.f32 %v2424, %v2552
        %v2579 = vsub.f32 %v2429, %v2552
        %v2580 = vsub.f32 %v2432, %v2552
        %v2581 = vmul.f32 %v2553, %v2553
        %v2582 = vmul.f32 %v2554, %v2554
        %v2583 = vmul.f32 %v2555, %v2555
        %v2584 = vmul.f32 %v2556, %v2556
        %v2585 = vmul.f32 %v2557, %v2557
        %v2586 = vmul.f32 %v2558, %v2558
        %v2587 = vmul.f32 %v2559, %v2559
        %v2588 = vmul.f32 %v2560, %v2560
        %v2589 = vmul.f32 %v2561, %v2561
        %v2590 = vmul.f32 %v2562, %v2562
        %v2591 = vmul.f32 %v2563, %v2563
        %v2592 = vmul.f32 %v2564, %v2564
        %v2593 = vmul.f32 %v2565, %v2565
        %v2594 = vmul.f32 %v2566, %v2566
        %v2595 = vmul.f32 %v2567, %v2567
        %v2596 = vmul.f32 %v2568, %v2568
        %v2597 = vmul.f32 %v2569, %v2569
        %v2598 = vmul.f32 %v2570, %v2570
        %v2599 = vmul.f32 %v2571, %v2571
        %v2600 = vmul.f32 %v2572, %v2572
        %v2601 = vmul.f32 %v2573, %v2573
        %v2602 = vmul.f32 %v2574, %v2574
        %v2603 = vmul.f32 %v2575, %v2575
        %v2604 = vmul.f32 %v2576, %v2576
        %v2605 = vmul.f32 %v2577, %v2577
        %v2606 = vmul.f32 %v2578, %v2578
        %v2607 = vmul.f32 %v2579, %v2579
        %v2608 = vmul.f32 %v2580, %v2580
        %v2609 = vsel %vm2463, %v2581, 0.0
        %v2610 = vsel %vm2464, %v2582, 0.0
        %v2611 = vsel %vm2465, %v2583, 0.0
        %v2612 = vsel %vm2466, %v2584, 0.0
        %v2613 = vsel %vm2467, %v2585, 0.0
        %v2614 = vsel %vm2468, %v2586, 0.0
        %v2615 = vsel %vm2469, %v2587, 0.0
        %v2616 = vsel %vm2470, %v2588, 0.0
        %v2617 = vsel %vm2471, %v2589, 0.0
        %v2618 = vsel %vm2472, %v2590, 0.0
        %v2619 = vsel %vm2473, %v2591, 0.0
        %v2620 = vsel %vm2474, %v2592, 0.0
        %v2621 = vsel %vm2475, %v2593, 0.0
        %v2622 = vsel %vm2476, %v2594, 0.0
        %v2623 = vsel %vm2477, %v2595, 0.0
        %v2624 = vsel %vm2478, %v2596, 0.0
        %v2625 = vsel %vm2479, %v2597, 0.0
        %v2626 = vsel %vm2480, %v2598, 0.0
        %v2627 = vsel %vm2481, %v2599, 0.0
        %v2628 = vsel %vm2482, %v2600, 0.0
        %v2629 = vsel %vm2483, %v2601, 0.0
        %v2630 = vsel %vm2484, %v2602, 0.0
        %v2631 = vsel %vm2485, %v2603, 0.0
        %v2632 = vsel %vm2486, %v2604, 0.0
        %v2633 = vsel %vm2487, %v2605, 0.0
        %v2634 = vsel %vm2488, %v2606, 0.0
        %v2635 = vsel %vm2489, %v2607, 0.0
        %v2636 = vsel %vm2490, %v2608, 0.0
        %v2637 = vadd.f32 %v2609, %v2610
        %v2638 = vadd.f32 %v2637, %v2611
        %v2639 = vadd.f32 %v2638, %v2612
        %v2640 = vadd.f32 %v2639, %v2613
        %v2641 = vadd.f32 %v2640, %v2614
        %v2642 = vadd.f32 %v2641, %v2615
        %v2643 = vadd.f32 %v2642, %v2616
        %v2644 = vadd.f32 %v2643, %v2617
        %v2645 = vadd.f32 %v2644, %v2618
        %v2646 = vadd.f32 %v2645, %v2619
        %v2647 = vadd.f32 %v2646, %v2620
        %v2648 = vadd.f32 %v2647, %v2621
        %v2649 = vadd.f32 %v2648, %v2622
        %v2650 = vadd.f32 %v2649, %v2623
        %v2651 = vadd.f32 %v2650, %v2624
        %v2652 = vadd.f32 %v2651, %v2625
        %v2653 = vadd.f32 %v2652, %v2626
        %v2654 = vadd.f32 %v2653, %v2627
        %v2655 = vadd.f32 %v2654, %v2628
        %v2656 = vadd.f32 %v2655, %v2629
        %v2657 = vadd.f32 %v2656, %v2630
        %v2658 = vadd.f32 %v2657, %v2631
        %v2659 = vadd.f32 %v2658, %v2632
        %v2660 = vadd.f32 %v2659, %v2633
        %v2661 = vadd.f32 %v2660, %v2634
        %v2662 = vadd.f32 %v2661, %v2635
        %v2663 = vadd.f32 %v2662, %v2636
        %v2664 = vrot.slane %v2663, 4
        %v2665 = vadd.f32 %v2663, %v2664
        %v2666 = vrot.slane %v2665, 2
        %v2667 = vadd.f32 %v2665, %v2666
        %v2668 = vrot.slane %v2667, 1
        %v2669 = vadd.f32 %v2667, %v2668
        %v2670 = vmul.f32 %v2669, 0.0051020407
        %v2671 = vadd.f32 %v2670, 1e-05
        %v2672 = vrsqrt.pop %v2671
        %v2673 = vmul.f32 %v2553, %v2672
        %v2674 = vmul.f32 %v2554, %v2672
        %v2675 = vmul.f32 %v2555, %v2672
        %v2676 = vmul.f32 %v2556, %v2672
        %v2677 = vmul.f32 %v2557, %v2672
        %v2678 = vmul.f32 %v2558, %v2672
        %v2679 = vmul.f32 %v2559, %v2672
        %v2680 = vmul.f32 %v2560, %v2672
        %v2681 = vmul.f32 %v2561, %v2672
        %v2682 = vmul.f32 %v2562, %v2672
        %v2683 = vmul.f32 %v2563, %v2672
        %v2684 = vmul.f32 %v2564, %v2672
        %v2685 = vmul.f32 %v2565, %v2672
        %v2686 = vmul.f32 %v2566, %v2672
        %v2687 = vmul.f32 %v2567, %v2672
        %v2688 = vmul.f32 %v2568, %v2672
        %v2689 = vmul.f32 %v2569, %v2672
        %v2690 = vmul.f32 %v2570, %v2672
        %v2691 = vmul.f32 %v2571, %v2672
        %v2692 = vmul.f32 %v2572, %v2672
        %v2693 = vmul.f32 %v2573, %v2672
        %v2694 = vmul.f32 %v2574, %v2672
        %v2695 = vmul.f32 %v2575, %v2672
        %v2696 = vmul.f32 %v2576, %v2672
        %v2697 = vmul.f32 %v2577, %v2672
        %v2698 = vmul.f32 %v2578, %v2672
        %v2699 = vmul.f32 %v2579, %v2672
        %v2700 = vmul.f32 %v2580, %v2672
        %v2701 = vld [vmem:[%s701] sm:$0x1]
        %v2703 = vlaneseq
        %v2704 = vshrl.u32 %v2703, 7
        %v2705 = vsub.s32 0, %v2704
        %v2706 = vrot.slane %v2701, %v2705
        %v2708 = vmul.f32 %v2673, %v2706
        %v2709 = vmul.f32 %v2674, %v2706
        %v2710 = vmul.f32 %v2675, %v2706
        %v2711 = vmul.f32 %v2676, %v2706
        %v2712 = vmul.f32 %v2677, %v2706
        %v2713 = vmul.f32 %v2678, %v2706
        %v2714 = vmul.f32 %v2679, %v2706
        %v2715 = vmul.f32 %v2680, %v2706
        %v2716 = vmul.f32 %v2681, %v2706
        %v2717 = vmul.f32 %v2682, %v2706
        %v2718 = vmul.f32 %v2683, %v2706
        %v2719 = vmul.f32 %v2684, %v2706
        %v2720 = vmul.f32 %v2685, %v2706
        %v2721 = vmul.f32 %v2686, %v2706
        %v2722 = vmul.f32 %v2687, %v2706
        %v2723 = vmul.f32 %v2688, %v2706
        %v2724 = vmul.f32 %v2689, %v2706
        %v2725 = vmul.f32 %v2690, %v2706
        %v2726 = vmul.f32 %v2691, %v2706
        %v2727 = vmul.f32 %v2692, %v2706
        %v2728 = vmul.f32 %v2693, %v2706
        %v2729 = vmul.f32 %v2694, %v2706
        %v2730 = vmul.f32 %v2695, %v2706
        %v2731 = vmul.f32 %v2696, %v2706
        %v2732 = vmul.f32 %v2697, %v2706
        %v2733 = vmul.f32 %v2698, %v2706
        %v2734 = vmul.f32 %v2699, %v2706
        %v2735 = vmul.f32 %v2700, %v2706
        %v2736 = vld [vmem:[%s704] sm:$0x1]
        %v2738 = vlaneseq
        %v2739 = vshrl.u32 %v2738, 7
        %v2740 = vsub.s32 0, %v2739
        %v2741 = vrot.slane %v2736, %v2740
        %v2743 = vadd.f32 %v2708, %v2741
        %v2744 = vadd.f32 %v2709, %v2741
        %v2745 = vadd.f32 %v2710, %v2741
        %v2746 = vadd.f32 %v2711, %v2741
        %v2747 = vadd.f32 %v2712, %v2741
        %v2748 = vadd.f32 %v2713, %v2741
        %v2749 = vadd.f32 %v2714, %v2741
        %v2750 = vadd.f32 %v2715, %v2741
        %v2751 = vadd.f32 %v2716, %v2741
        %v2752 = vadd.f32 %v2717, %v2741
        %v2753 = vadd.f32 %v2718, %v2741
        %v2754 = vadd.f32 %v2719, %v2741
        %v2755 = vadd.f32 %v2720, %v2741
        %v2756 = vadd.f32 %v2721, %v2741
        %v2757 = vadd.f32 %v2722, %v2741
        %v2758 = vadd.f32 %v2723, %v2741
        %v2759 = vadd.f32 %v2724, %v2741
        %v2760 = vadd.f32 %v2725, %v2741
        %v2761 = vadd.f32 %v2726, %v2741
        %v2762 = vadd.f32 %v2727, %v2741
        %v2763 = vadd.f32 %v2728, %v2741
        %v2764 = vadd.f32 %v2729, %v2741
        %v2765 = vadd.f32 %v2730, %v2741
        %v2766 = vadd.f32 %v2731, %v2741
        %v2767 = vadd.f32 %v2732, %v2741
        %v2768 = vadd.f32 %v2733, %v2741
        %v2769 = vadd.f32 %v2734, %v2741
        %v2770 = vadd.f32 %v2735, %v2741
        %2771 = vst [vmem:[%s698] sm:$0xff] %v2743
        %2772 = vst [vmem:[%s698 + $0x8] sm:$0xff] %v2744
        %2773 = vst [vmem:[%s698 + $0x10] sm:$0xff] %v2745
        %2774 = vst [vmem:[%s698 + $0x18] sm:$0xff] %v2746
        %2775 = vst [vmem:[%s698 + $0x20] sm:$0xff] %v2747
        %2776 = vst [vmem:[%s698 + $0x28] sm:$0xff] %v2748
        %2777 = vst [vmem:[%s698 + $0x30] sm:$0xff] %v2749
        %2778 = vst [vmem:[%s698 + $0x38] sm:$0xff] %v2750
        %2779 = vst [vmem:[%s698 + $0x40] sm:$0xff] %v2751
        %2780 = vst [vmem:[%s698 + $0x48] sm:$0xff] %v2752
        %2781 = vst [vmem:[%s698 + $0x50] sm:$0xff] %v2753
        %2782 = vst [vmem:[%s698 + $0x58] sm:$0xff] %v2754
        %2783 = vst [vmem:[%s698 + $0x60] sm:$0xff] %v2755
        %2784 = vst [vmem:[%s698 + $0x68] sm:$0xff] %v2756
        %2785 = vst [vmem:[%s698 + $0x70] sm:$0xff] %v2757
        %2786 = vst [vmem:[%s698 + $0x78] sm:$0xff] %v2758
        %2787 = vst [vmem:[%s698 + $0x80] sm:$0xff] %v2759
        %2788 = vst [vmem:[%s698 + $0x88] sm:$0xff] %v2760
        %2789 = vst [vmem:[%s698 + $0x90] sm:$0xff] %v2761
        %2790 = vst [vmem:[%s698 + $0x98] sm:$0xff] %v2762
        %2791 = vst [vmem:[%s698 + $0xa0] sm:$0xff] %v2763
        %2792 = vst [vmem:[%s698 + $0xa8] sm:$0xff] %v2764
        %2793 = vst [vmem:[%s698 + $0xb0] sm:$0xff] %v2765
        %2794 = vst [vmem:[%s698 + $0xb8] sm:$0xff] %v2766
        %2795 = vst [vmem:[%s698 + $0xc0] sm:$0xff] %v2767
        %2796 = vst [vmem:[%s698 + $0xc8] sm:$0xff] %v2768
        %2797 = vst [vmem:[%s698 + $0xd0] sm:$0xff] %v2769
        %2798 = vst [vmem:[%s698 + $0xd8] sm:$0xff] %v2770
        %s2799 = sand.u32 %s122, 1
        %s2800 = sand.u32 %s122, 1
        %s2801 = smul.addr %s2800, 224
        %s2802 = scalar_lea.vmem [#allocation3], %s2801
        // Predicated region
        $region78: #{forward.3} parent=72 // pred_check
          %p2803 = pneg %p132
        $region79: #{forward.3} parent=72 // pred_check_branch
          %2805 = sbr.rel (%p2803) target = $region81
        $region80: #{forward.3} parent=72 // pred_region
          %s2806 = smul.addr %s15, 8
          %s2807 = scalar_lea.vmem %s4, %s2806
          // Predicated region
          $region82: #{forward.3} parent=80 // pred_check
            _
          $region83: #{forward.3} parent=80 // pred_check_branch
            %2809 = sbr.rel (0) target = $region85
          $region84: #{forward.3} parent=80 // pred_region
            // Predicated region
            $region86: #{forward.3} parent=84 // pred_check
              _
            $region87: #{forward.3} parent=84 // pred_check_branch
              %2811 = sbr.rel (0) target = $region89
            $region88: #{forward.3} parent=84 // pred_region
              // Predicated region
              $region101: #{forward.3} parent=88 // pred_check
                _
              $region102: #{forward.3} parent=88 // pred_check_branch
                %2880 = sbr.rel (0) target = $region104
              $region103: #{forward.3} parent=88 // pred_region
                loop: start=0, step=1, limit=1
                $region105: #{forward.3} parent=103 // loop_pre_header
                  _
                $region106: #{forward.3} parent=103 // loop_header
                  %s2882 = sphi 0, %s2886
                  %p2883 = scmp.ge.s32.totalorder %s2882, 1
                  %s2887 = sphi %s2802, %s2802
                  %s2888 = sphi %s2807, %s2807
                $region107: #{forward.3} parent=103 // loop_header_branch
                  %2885 = sbr.rel (%p2883) target = $region111
                $region108: #{forward.3} parent=103 // loop_body
                  %v2889 = vld [vmem:[%s2887] sm:$0xff]
                  %2890 = vst [vmem:[%s2888] sm:$0xff] %v2889
                  %v2891 = vld [vmem:[%s2887 + $0x8] sm:$0xff]
                  %2892 = vst [vmem:[%s2888 + $0x38] sm:$0xff] %v2891
                  %v2893 = vld [vmem:[%s2887 + $0x10] sm:$0xff]
                  %2894 = vst [vmem:[%s2888 + $0x70] sm:$0xff] %v2893
                  %v2895 = vld [vmem:[%s2887 + $0x18] sm:$0xff]
                  %2896 = vst [vmem:[%s2888 + $0xa8] sm:$0xff] %v2895
                  %v2897 = vld [vmem:[%s2887 + $0x20] sm:$0xff]
                  %2898 = vst [vmem:[%s2888 + $0xe0] sm:$0xff] %v2897
                  %v2899 = vld [vmem:[%s2887 + $0x28] sm:$0xff]
                  %2900 = vst [vmem:[%s2888 + $0x118] sm:$0xff] %v2899
                  %v2901 = vld [vmem:[%s2887 + $0x30] sm:$0xff]
                  %2902 = vst [vmem:[%s2888 + $0x150] sm:$0xff] %v2901
                  %v2903 = vld [vmem:[%s2887 + $0x38] sm:$0xff]
                  %2904 = vst [vmem:[%s2888 + $0x188] sm:$0xff] %v2903
                  %v2905 = vld [vmem:[%s2887 + $0x40] sm:$0xff]
                  %2906 = vst [vmem:[%s2888 + $0x1c0] sm:$0xff] %v2905
                  %v2907 = vld [vmem:[%s2887 + $0x48] sm:$0xff]
                  %2908 = vst [vmem:[%s2888 + $0x1f8] sm:$0xff] %v2907
                  %v2909 = vld [vmem:[%s2887 + $0x50] sm:$0xff]
                  %2910 = vst [vmem:[%s2888 + $0x230] sm:$0xff] %v2909
                  %v2911 = vld [vmem:[%s2887 + $0x58] sm:$0xff]
                  %2912 = vst [vmem:[%s2888 + $0x268] sm:$0xff] %v2911
                  %v2913 = vld [vmem:[%s2887 + $0x60] sm:$0xff]
                  %2914 = vst [vmem:[%s2888 + $0x2a0] sm:$0xff] %v2913
                  %v2915 = vld [vmem:[%s2887 + $0x68] sm:$0xff]
                  %2916 = vst [vmem:[%s2888 + $0x2d8] sm:$0xff] %v2915
                  %v2917 = vld [vmem:[%s2887 + $0x70] sm:$0xff]
                  %2918 = vst [vmem:[%s2888 + $0x310] sm:$0xff] %v2917
                  %v2919 = vld [vmem:[%s2887 + $0x78] sm:$0xff]
                  %2920 = vst [vmem:[%s2888 + $0x348] sm:$0xff] %v2919
                  %v2921 = vld [vmem:[%s2887 + $0x80] sm:$0xff]
                  %2922 = vst [vmem:[%s2888 + $0x380] sm:$0xff] %v2921
                  %v2923 = vld [vmem:[%s2887 + $0x88] sm:$0xff]
                  %2924 = vst [vmem:[%s2888 + $0x3b8] sm:$0xff] %v2923
                  %v2925 = vld [vmem:[%s2887 + $0x90] sm:$0xff]
                  %2926 = vst [vmem:[%s2888 + $0x3f0] sm:$0xff] %v2925
                  %v2927 = vld [vmem:[%s2887 + $0x98] sm:$0xff]
                  %2928 = vst [vmem:[%s2888 + $0x428] sm:$0xff] %v2927
                  %v2929 = vld [vmem:[%s2887 + $0xa0] sm:$0xff]
                  %2930 = vst [vmem:[%s2888 + $0x460] sm:$0xff] %v2929
                  %v2931 = vld [vmem:[%s2887 + $0xa8] sm:$0xff]
                  %2932 = vst [vmem:[%s2888 + $0x498] sm:$0xff] %v2931
                  %v2933 = vld [vmem:[%s2887 + $0xb0] sm:$0xff]
                  %2934 = vst [vmem:[%s2888 + $0x4d0] sm:$0xff] %v2933
                  %v2935 = vld [vmem:[%s2887 + $0xb8] sm:$0xff]
                  %2936 = vst [vmem:[%s2888 + $0x508] sm:$0xff] %v2935
                  %v2937 = vld [vmem:[%s2887 + $0xc0] sm:$0xff]
                  %2938 = vst [vmem:[%s2888 + $0x540] sm:$0xff] %v2937
                  %v2939 = vld [vmem:[%s2887 + $0xc8] sm:$0xff]
                  %2940 = vst [vmem:[%s2888 + $0x578] sm:$0xff] %v2939
                  %v2941 = vld [vmem:[%s2887 + $0xd0] sm:$0xff]
                  %2942 = vst [vmem:[%s2888 + $0x5b0] sm:$0xff] %v2941
                  %v2943 = vld [vmem:[%s2887 + $0xd8] sm:$0xff]
                  %2944 = vst [vmem:[%s2888 + $0x5e8] sm:$0xff] %v2943
                $region109: #{forward.3} parent=103 // loop_footer
                  %s2886 = sadd.s32 1, %s2882
                $region110: #{forward.3} parent=103 // loop_footer_branch
                  %2881 = sbr.rel target = $region106
                $region111: #{forward.3} parent=103 // loop_exit
                  _
              $region104: #{forward.3} parent=88 // pred_fallthru
                _
              // Predicated region
              $region112: #{forward.3} parent=88 // pred_check
                _
              $region113: #{forward.3} parent=88 // pred_check_branch
                %2946 = sbr.rel target = $region115
              $region114: #{forward.3} parent=88 // pred_region
                _
              $region115: #{forward.3} parent=88 // pred_fallthru
                _
            $region89: #{forward.3} parent=84 // pred_fallthru
              _
            // Predicated region
            $region90: #{forward.3} parent=84 // pred_check
              _
            $region91: #{forward.3} parent=84 // pred_check_branch
              %2813 = sbr.rel target = $region93
            $region92: #{forward.3} parent=84 // pred_region
              loop: start=0, step=1, limit=1
              $region94: #{forward.3} parent=92 // loop_pre_header
                _
              $region95: #{forward.3} parent=92 // loop_header
                %s2816 = sphi 0, %s2820
                %p2817 = scmp.ge.s32.totalorder %s2816, 1
                %s2821 = sphi %s2802, %s2802
                %s2822 = sphi %s2807, %s2807
              $region96: #{forward.3} parent=92 // loop_header_branch
                %2819 = sbr.rel (%p2817) target = $region100
              $region97: #{forward.3} parent=92 // loop_body
                %v2823 = vld [vmem:[%s2821] sm:$0xff]
                %2824 = vst [vmem:[%s2822] sm:$0xff] %v2823
                %v2825 = vld [vmem:[%s2821 + $0x8] sm:$0xff]
                %2826 = vst [vmem:[%s2822 + $0x38] sm:$0xff] %v2825
                %v2827 = vld [vmem:[%s2821 + $0x10] sm:$0xff]
                %2828 = vst [vmem:[%s2822 + $0x70] sm:$0xff] %v2827
                %v2829 = vld [vmem:[%s2821 + $0x18] sm:$0xff]
                %2830 = vst [vmem:[%s2822 + $0xa8] sm:$0xff] %v2829
                %v2831 = vld [vmem:[%s2821 + $0x20] sm:$0xff]
                %2832 = vst [vmem:[%s2822 + $0xe0] sm:$0xff] %v2831
                %v2833 = vld [vmem:[%s2821 + $0x28] sm:$0xff]
                %2834 = vst [vmem:[%s2822 + $0x118] sm:$0xff] %v2833
                %v2835 = vld [vmem:[%s2821 + $0x30] sm:$0xff]
                %2836 = vst [vmem:[%s2822 + $0x150] sm:$0xff] %v2835
                %v2837 = vld [vmem:[%s2821 + $0x38] sm:$0xff]
                %2838 = vst [vmem:[%s2822 + $0x188] sm:$0xff] %v2837
                %v2839 = vld [vmem:[%s2821 + $0x40] sm:$0xff]
                %2840 = vst [vmem:[%s2822 + $0x1c0] sm:$0xff] %v2839
                %v2841 = vld [vmem:[%s2821 + $0x48] sm:$0xff]
                %2842 = vst [vmem:[%s2822 + $0x1f8] sm:$0xff] %v2841
                %v2843 = vld [vmem:[%s2821 + $0x50] sm:$0xff]
                %2844 = vst [vmem:[%s2822 + $0x230] sm:$0xff] %v2843
                %v2845 = vld [vmem:[%s2821 + $0x58] sm:$0xff]
                %2846 = vst [vmem:[%s2822 + $0x268] sm:$0xff] %v2845
                %v2847 = vld [vmem:[%s2821 + $0x60] sm:$0xff]
                %2848 = vst [vmem:[%s2822 + $0x2a0] sm:$0xff] %v2847
                %v2849 = vld [vmem:[%s2821 + $0x68] sm:$0xff]
                %2850 = vst [vmem:[%s2822 + $0x2d8] sm:$0xff] %v2849
                %v2851 = vld [vmem:[%s2821 + $0x70] sm:$0xff]
                %2852 = vst [vmem:[%s2822 + $0x310] sm:$0xff] %v2851
                %v2853 = vld [vmem:[%s2821 + $0x78] sm:$0xff]
                %2854 = vst [vmem:[%s2822 + $0x348] sm:$0xff] %v2853
                %v2855 = vld [vmem:[%s2821 + $0x80] sm:$0xff]
                %2856 = vst [vmem:[%s2822 + $0x380] sm:$0xff] %v2855
                %v2857 = vld [vmem:[%s2821 + $0x88] sm:$0xff]
                %2858 = vst [vmem:[%s2822 + $0x3b8] sm:$0xff] %v2857
                %v2859 = vld [vmem:[%s2821 + $0x90] sm:$0xff]
                %2860 = vst [vmem:[%s2822 + $0x3f0] sm:$0xff] %v2859
                %v2861 = vld [vmem:[%s2821 + $0x98] sm:$0xff]
                %2862 = vst [vmem:[%s2822 + $0x428] sm:$0xff] %v2861
                %v2863 = vld [vmem:[%s2821 + $0xa0] sm:$0xff]
                %2864 = vst [vmem:[%s2822 + $0x460] sm:$0xff] %v2863
                %v2865 = vld [vmem:[%s2821 + $0xa8] sm:$0xff]
                %2866 = vst [vmem:[%s2822 + $0x498] sm:$0xff] %v2865
                %v2867 = vld [vmem:[%s2821 + $0xb0] sm:$0xff]
                %2868 = vst [vmem:[%s2822 + $0x4d0] sm:$0xff] %v2867
                %v2869 = vld [vmem:[%s2821 + $0xb8] sm:$0xff]
                %2870 = vst [vmem:[%s2822 + $0x508] sm:$0xff] %v2869
                %v2871 = vld [vmem:[%s2821 + $0xc0] sm:$0xff]
                %2872 = vst [vmem:[%s2822 + $0x540] sm:$0xff] %v2871
                %v2873 = vld [vmem:[%s2821 + $0xc8] sm:$0xff]
                %2874 = vst [vmem:[%s2822 + $0x578] sm:$0xff] %v2873
                %v2875 = vld [vmem:[%s2821 + $0xd0] sm:$0xff]
                %2876 = vst [vmem:[%s2822 + $0x5b0] sm:$0xff] %v2875
                %v2877 = vld [vmem:[%s2821 + $0xd8] sm:$0xff]
                %2878 = vst [vmem:[%s2822 + $0x5e8] sm:$0xff] %v2877
              $region98: #{forward.3} parent=92 // loop_footer
                %s2820 = sadd.s32 1, %s2816
              $region99: #{forward.3} parent=92 // loop_footer_branch
                %2815 = sbr.rel target = $region95
              $region100: #{forward.3} parent=92 // loop_exit
                _
            $region93: #{forward.3} parent=84 // pred_fallthru
              _
          $region85: #{forward.3} parent=80 // pred_fallthru
            _
          %2947 = vnop
        $region81: #{forward.3} parent=72 // pred_fallthru
          _
      $region73: #{forward.3} parent=5 // pred_fallthru
        _
      %p2948 = scmp.le.s32.totalorder 2, %s10
      // Predicated region
      $region116: #{forward.3} parent=5 // pred_check
        %p2949 = pneg %p2948
      $region117: #{forward.3} parent=5 // pred_check_branch
        %2951 = sbr.rel (%p2949) target = $region119
      $region118: #{forward.3} parent=5 // pred_region
        %s2952 = ssub.s32 %s10, 2
        // Predicated region
        $region120: #{forward.3} parent=118 // pred_check
          %p2953 = pneg %p138
        $region121: #{forward.3} parent=118 // pred_check_branch
          %2955 = sbr.rel (%p2953) target = $region123
        $region122: #{forward.3} parent=118 // pred_region
          %s2956 = sand.u32 %s123, 1
          %s2957 = sand.u32 %s123, 1
          %s2958 = smul.addr %s2957, 224
          %s2959 = scalar_lea.vmem [#allocation3], %s2958
        $region123: #{forward.3} parent=118 // pred_fallthru
          _
      $region119: #{forward.3} parent=5 // pred_fallthru
        _
    $region6: #{forward.3} parent=1 // loop_footer
      %s14 = sadd.s32 1, %s10
    $region7: #{forward.3} parent=1 // loop_footer_branch
      %9 = sbr.rel target = $region3
    $region8: #{forward.3} parent=1 // loop_exit
      _

// kernel: forward.2
$region0: #{forward.2}
  #allocation0 [shape = 'u32[]', space=smem, size = 0x4, offset = 0x4, fixed_abs, tag = 'smem constant byte address 0x4 - core index']
  #allocation1 [shape = 'u32[144,128]{1,0:T(1,128)}', space=vmem, size = 0x12000, scoped, tag = 'internal scratch']
  #allocation2 [shape = 'f32[272,128]{1,0:T(8,128)}', space=vmem, size = 0x22000, scoped, tag = 'scratch operand']
  %s0 = inlined_call_operand.vmem [shape: bf16[224,896], index: 0, kind: input, shape index: {}]
  %s1 = inlined_call_operand.vmem [shape: bf16[896,896], index: 1, kind: input, shape index: {}]
  %s2 = inlined_call_operand.vmem [shape: f32[7,1,128], index: 2, kind: input, shape index: {}]
  %s3 = inlined_call_operand.vmem [shape: f32[7,1,128], index: 3, kind: input, shape index: {}]
  %s4 = inlined_call_operand.hbm [shape: bf16[7,9,128,128], index: 4, kind: input, shape index: {}]
  %s5 = inlined_call_operand.vmem [shape: f32[7,1,128], index: 5, kind: input, shape index: {}]
  %s6 = inlined_call_operand.vmem [shape: f32[7,1,128], index: 6, kind: input, shape index: {}]
  %s7 = inlined_call_operand.vmem [shape: bf16[224,896], index: 7, kind: output, shape index: {}]
  %s8 = sld [smem:[#allocation0]]
  $region143: #{forward.2} parent=0
    _
  %s10 = ssub.s32 1, %s8
  %s11 = scalar_select 0, %s10, %s8
  $region1: #{forward.2} parent=0
    #allocation3 [shape = 'u8[458752]{0}', space=vmem, size = 0x70000, scoped, tag = 'input window, operand 1']
    #allocation4 [shape = 'u8[589824]{0}', space=vmem, size = 0x90000, scoped, tag = 'input window, operand 4']
    #allocation5 [shape = 's32[2]{0}', space=sflag, size = 0x8, scoped, tag = 'scoped memory for forward.2']
    #allocation6 [shape = 'u8[114688]{0}', space=vmem, size = 0x1c000, scoped, tag = 'output window, operand 0']
    %12 = vsyncpa [#allocation5], 0
    %s13 = scalar_lea.sflag [#allocation5], 1
    %14 = vsyncpa %s13, 0
    loop: start=0, step=1, limit=9
    $region2: #{forward.2} parent=1 // loop_pre_header
      _
    $region3: #{forward.2} parent=1 // loop_header
      %s16 = sphi 0, %s20
      %p17 = scmp.ge.s32.totalorder %s16, 9
      %s24 = sphi 0, %s24
      %s26 = sphi 0, %s24
      %s27 = sphi 0, %s26
      %s41 = sphi 0, %s27
      %s47 = sphi 0, %s49
      %s50 = sphi 0, %s47
      %s51 = sphi 0, %s50
      %s67 = sphi 0, %s51
      %s73 = sphi 0, %s75
      %s76 = sphi 0, %s73
      %s77 = sphi 0, %s76
      %s93 = sphi 0, %s77
      %s99 = sphi 0, %s101
      %s102 = sphi 0, %s99
      %s103 = sphi 0, %s102
      %s119 = sphi 0, %s103
      %s125 = sphi 0, %s127
      %s128 = sphi 0, %s125
      %s129 = sphi 0, %s128
      %s145 = sphi 0, %s129
      %s151 = sphi 0, %s153
      %s154 = sphi 0, %s151
      %s155 = sphi 0, %s154
      %s171 = sphi 0, %s155
      %s177 = sphi 0, %s179
      %s180 = sphi 0, %s177
      %s181 = sphi 0, %s180
      %s197 = sphi 0, %s181
      %s203 = sphi 0, %s205
      %s206 = sphi 0, %s203
      %s207 = sphi 0, %s206
      %s223 = sphi 0, %s207
    $region4: #{forward.2} parent=1 // loop_header_branch
      %19 = sbr.rel (%p17) target = $region8
    $region5: #{forward.2} parent=1 // loop_body
      %s21 = ssub.s32 %s16, 1
      %s22 = ssub.s32 %s16, 2
      %s23 = sadd.s32 %s16, 1
      %s25 = sadd.s32 %s24, 1
      %p28 = scmp.eq.s32.totalorder %s16, 6
      %p29 = scmp.ne.s32.totalorder %s24, %s26
      %p30 = scmp.eq.s32.totalorder %s16, 0
      %p31 = por %p29, %p30
      %p32 = scmp.ne.s32.totalorder %s24, %s26
      %p33 = scmp.eq.s32.totalorder %s21, 6
      %p34 = por %p32, %p33
      %p35 = scmp.ne.s32.totalorder %s26, %s27
      %p36 = scmp.eq.s32.totalorder %s21, 0
      %p37 = por %p35, %p36
      %p38 = scmp.ne.s32.totalorder %s26, %s27
      %p39 = scmp.eq.s32.totalorder %s22, 6
      %p40 = por %p38, %p39
      %p42 = scmp.ne.s32.totalorder %s27, %s41
      %p43 = scmp.eq.s32.totalorder %s22, 0
      %p44 = por %p42, %p43
      %s45 = ssub.s32 %s16, %s23
      %p46 = scmp.eq.s32.totalorder %s45, 0
      %s48 = sadd.s32 %s47, 1
      %s49 = scalar_select %p46, %s47, %s48
      %p52 = pneg %p46
      %p53 = scmp.eq.s32.totalorder %s16, 6
      %p54 = por %p52, %p53
      %p55 = scmp.ne.s32.totalorder %s47, %s50
      %p56 = scmp.eq.s32.totalorder %s16, 0
      %p57 = por %p55, %p56
      %p58 = scmp.ne.s32.totalorder %s47, %s50
      %p59 = scmp.eq.s32.totalorder %s21, 6
      %p60 = por %p58, %p59
      %p61 = scmp.ne.s32.totalorder %s50, %s51
      %p62 = scmp.eq.s32.totalorder %s21, 0
      %p63 = por %p61, %p62
      %p64 = scmp.ne.s32.totalorder %s50, %s51
      %p65 = scmp.eq.s32.totalorder %s22, 6
      %p66 = por %p64, %p65
      %p68 = scmp.ne.s32.totalorder %s51, %s67
      %p69 = scmp.eq.s32.totalorder %s22, 0
      %p70 = por %p68, %p69
      %s71 = ssub.s32 %s16, %s23
      %p72 = scmp.eq.s32.totalorder %s71, 0
      %s74 = sadd.s32 %s73, 1
      %s75 = scalar_select %p72, %s73, %s74
      %p78 = pneg %p72
      %p79 = scmp.eq.s32.totalorder %s16, 6
      %p80 = por %p78, %p79
      %p81 = scmp.ne.s32.totalorder %s73, %s76
      %p82 = scmp.eq.s32.totalorder %s16, 0
      %p83 = por %p81, %p82
      %p84 = scmp.ne.s32.totalorder %s73, %s76
      %p85 = scmp.eq.s32.totalorder %s21, 6
      %p86 = por %p84, %p85
      %p87 = scmp.ne.s32.totalorder %s76, %s77
      %p88 = scmp.eq.s32.totalorder %s21, 0
      %p89 = por %p87, %p88
      %p90 = scmp.ne.s32.totalorder %s76, %s77
      %p91 = scmp.eq.s32.totalorder %s22, 6
      %p92 = por %p90, %p91
      %p94 = scmp.ne.s32.totalorder %s77, %s93
      %p95 = scmp.eq.s32.totalorder %s22, 0
      %p96 = por %p94, %p95
      %s97 = ssub.s32 %s16, %s23
      %p98 = scmp.eq.s32.totalorder %s97, 0
      %s100 = sadd.s32 %s99, 1
      %s101 = scalar_select %p98, %s99, %s100
      %p104 = pneg %p98
      %p105 = scmp.eq.s32.totalorder %s16, 6
      %p106 = por %p104, %p105
      %p107 = scmp.ne.s32.totalorder %s99, %s102
      %p108 = scmp.eq.s32.totalorder %s16, 0
      %p109 = por %p107, %p108
      %p110 = scmp.ne.s32.totalorder %s99, %s102
      %p111 = scmp.eq.s32.totalorder %s21, 6
      %p112 = por %p110, %p111
      %p113 = scmp.ne.s32.totalorder %s102, %s103
      %p114 = scmp.eq.s32.totalorder %s21, 0
      %p115 = por %p113, %p114
      %p116 = scmp.ne.s32.totalorder %s102, %s103
      %p117 = scmp.eq.s32.totalorder %s22, 6
      %p118 = por %p116, %p117
      %p120 = scmp.ne.s32.totalorder %s103, %s119
      %p121 = scmp.eq.s32.totalorder %s22, 0
      %p122 = por %p120, %p121
      %s123 = ssub.s32 %s16, %s23
      %p124 = scmp.eq.s32.totalorder %s123, 0
      %s126 = sadd.s32 %s125, 1
      %s127 = scalar_select %p124, %s125, %s126
      %p130 = pneg %p124
      %p131 = scmp.eq.s32.totalorder %s16, 6
      %p132 = por %p130, %p131
      %p133 = scmp.ne.s32.totalorder %s125, %s128
      %p134 = scmp.eq.s32.totalorder %s16, 0
      %p135 = por %p133, %p134
      %p136 = scmp.ne.s32.totalorder %s125, %s128
      %p137 = scmp.eq.s32.totalorder %s21, 6
      %p138 = por %p136, %p137
      %p139 = scmp.ne.s32.totalorder %s128, %s129
      %p140 = scmp.eq.s32.totalorder %s21, 0
      %p141 = por %p139, %p140
      %p142 = scmp.ne.s32.totalorder %s128, %s129
      %p143 = scmp.eq.s32.totalorder %s22, 6
      %p144 = por %p142, %p143
      %p146 = scmp.ne.s32.totalorder %s129, %s145
      %p147 = scmp.eq.s32.totalorder %s22, 0
      %p148 = por %p146, %p147
      %s149 = ssub.s32 %s16, %s23
      %p150 = scmp.eq.s32.totalorder %s149, 0
      %s152 = sadd.s32 %s151, 1
      %s153 = scalar_select %p150, %s151, %s152
      %p156 = pneg %p150
      %p157 = scmp.eq.s32.totalorder %s16, 6
      %p158 = por %p156, %p157
      %p159 = scmp.ne.s32.totalorder %s151, %s154
      %p160 = scmp.eq.s32.totalorder %s16, 0
      %p161 = por %p159, %p160
      %p162 = scmp.ne.s32.totalorder %s151, %s154
      %p163 = scmp.eq.s32.totalorder %s21, 6
      %p164 = por %p162, %p163
      %p165 = scmp.ne.s32.totalorder %s154, %s155
      %p166 = scmp.eq.s32.totalorder %s21, 0
      %p167 = por %p165, %p166
      %p168 = scmp.ne.s32.totalorder %s154, %s155
      %p169 = scmp.eq.s32.totalorder %s22, 6
      %p170 = por %p168, %p169
      %p172 = scmp.ne.s32.totalorder %s155, %s171
      %p173 = scmp.eq.s32.totalorder %s22, 0
      %p174 = por %p172, %p173
      %s175 = ssub.s32 %s16, %s23
      %p176 = scmp.eq.s32.totalorder %s175, 0
      %s178 = sadd.s32 %s177, 1
      %s179 = scalar_select %p176, %s177, %s178
      %p182 = pneg %p176
      %p183 = scmp.eq.s32.totalorder %s16, 6
      %p184 = por %p182, %p183
      %p185 = scmp.ne.s32.totalorder %s177, %s180
      %p186 = scmp.eq.s32.totalorder %s16, 0
      %p187 = por %p185, %p186
      %p188 = scmp.ne.s32.totalorder %s177, %s180
      %p189 = scmp.eq.s32.totalorder %s21, 6
      %p190 = por %p188, %p189
      %p191 = scmp.ne.s32.totalorder %s180, %s181
      %p192 = scmp.eq.s32.totalorder %s21, 0
      %p193 = por %p191, %p192
      %p194 = scmp.ne.s32.totalorder %s180, %s181
      %p195 = scmp.eq.s32.totalorder %s22, 6
      %p196 = por %p194, %p195
      %p198 = scmp.ne.s32.totalorder %s181, %s197
      %p199 = scmp.eq.s32.totalorder %s22, 0
      %p200 = por %p198, %p199
      %s201 = ssub.s32 %s16, %s23
      %p202 = scmp.eq.s32.totalorder %s201, 0
      %s204 = sadd.s32 %s203, 1
      %s205 = scalar_select %p202, %s203, %s204
      %p208 = pneg %p202
      %p209 = scmp.eq.s32.totalorder %s16, 6
      %p210 = por %p208, %p209
      %p211 = scmp.ne.s32.totalorder %s203, %s206
      %p212 = scmp.eq.s32.totalorder %s16, 0
      %p213 = por %p211, %p212
      %p214 = scmp.ne.s32.totalorder %s203, %s206
      %p215 = scmp.eq.s32.totalorder %s21, 6
      %p216 = por %p214, %p215
      %p217 = scmp.ne.s32.totalorder %s206, %s207
      %p218 = scmp.eq.s32.totalorder %s21, 0
      %p219 = por %p217, %p218
      %p220 = scmp.ne.s32.totalorder %s206, %s207
      %p221 = scmp.eq.s32.totalorder %s22, 6
      %p222 = por %p220, %p221
      %p224 = scmp.ne.s32.totalorder %s207, %s223
      %p225 = scmp.eq.s32.totalorder %s22, 0
      %p226 = por %p224, %p225
      %p227 = scmp.le.s32.totalorder 1, %s16
      %p228 = scmp.lt.s32.totalorder %s16, 8
      %p229 = pnand %p227, %p228
      %p230 = pneg %p229
      // Predicated region
      $region9: #{forward.2} parent=5 // pred_check
        _
      $region10: #{forward.2} parent=5 // pred_check_branch
        %232 = sbr.rel (%p229) target = $region12
      $region11: #{forward.2} parent=5 // pred_region
        %s233 = ssub.s32 %s16, 1
        // Predicated region
        $region13: #{forward.2} parent=11 // pred_check
          %p234 = pneg %p37
        $region14: #{forward.2} parent=11 // pred_check_branch
          %236 = sbr.rel (%p234) target = $region16
        $region15: #{forward.2} parent=11 // pred_region
          _
        $region16: #{forward.2} parent=11 // pred_fallthru
          _
      $region12: #{forward.2} parent=5 // pred_fallthru
        _
      %p237 = scmp.lt.s32.totalorder %s16, 7
      // Predicated region
      $region17: #{forward.2} parent=5 // pred_check
        %p238 = pneg %p237
      $region18: #{forward.2} parent=5 // pred_check_branch
        %240 = sbr.rel (%p238) target = $region20
      $region19: #{forward.2} parent=5 // pred_region
        // Predicated region
        $region21: #{forward.2} parent=19 // pred_check
          %p241 = pneg %p57
        $region22: #{forward.2} parent=19 // pred_check_branch
          %243 = sbr.rel (%p241) target = $region24
        $region23: #{forward.2} parent=19 // pred_region
          %s244 = sand.u32 %s47, 1
          %s245 = sand.u32 %s47, 1
          %s246 = smul.addr %s245, 448
          %s247 = scalar_lea.vmem [#allocation3], %s246
          %s248 = smul.addr %s16, 4
          %s249 = scalar_lea.vmem %s1, %s248
          // Predicated region
          $region25: #{forward.2} parent=23 // pred_check
            _
          $region26: #{forward.2} parent=23 // pred_check_branch
            %251 = sbr.rel (0) target = $region28
          $region27: #{forward.2} parent=23 // pred_region
            // Predicated region
            $region29: #{forward.2} parent=27 // pred_check
              _
            $region30: #{forward.2} parent=27 // pred_check_branch
              %253 = sbr.rel target = $region32
            $region31: #{forward.2} parent=27 // pred_region
              // Predicated region
              $region44: #{forward.2} parent=31 // pred_check
                _
              $region45: #{forward.2} parent=31 // pred_check_branch
                %490 = sbr.rel (0) target = $region47
              $region46: #{forward.2} parent=31 // pred_region
                loop: start=0, step=1, limit=1
                $region48: #{forward.2} parent=46 // loop_pre_header
                  _
                $region49: #{forward.2} parent=46 // loop_header
                  %s492 = sphi 0, %s496
                  %p493 = scmp.ge.s32.totalorder %s492, 1
                  %s497 = sphi %s249, %s249
                  %s498 = sphi %s247, %s247
                $region50: #{forward.2} parent=46 // loop_header_branch
                  %495 = sbr.rel (%p493) target = $region54
                $region51: #{forward.2} parent=46 // loop_body
                  _
                $region52: #{forward.2} parent=46 // loop_footer
                  %s496 = sadd.s32 1, %s492
                $region53: #{forward.2} parent=46 // loop_footer_branch
                  %491 = sbr.rel target = $region49
                $region54: #{forward.2} parent=46 // loop_exit
                  _
                loop: start=0, step=1, limit=1
                $region55: #{forward.2} parent=46 // loop_pre_header
                  _
                $region56: #{forward.2} parent=46 // loop_header
                  %s501 = sphi 0, %s505
                  %p502 = scmp.ge.s32.totalorder %s501, 1
                  %s506 = sphi %s249, %s249
                  %s507 = sphi %s247, %s247
                $region57: #{forward.2} parent=46 // loop_header_branch
                  %504 = sbr.rel (%p502) target = $region61
                $region58: #{forward.2} parent=46 // loop_body
                  %v508 = vld [vmem:[%s506] sm:$0xf]
                  %509 = vst [vmem:[%s507] sm:$0xf] %v508
                  %v510 = vld [vmem:[%s506 + $0x1c] sm:$0xf]
                  %511 = vst [vmem:[%s507 + $0x4] sm:$0xf] %v510
                  %v512 = vld [vmem:[%s506 + $0x38] sm:$0xf]
                  %513 = vst [vmem:[%s507 + $0x8] sm:$0xf] %v512
                  %v514 = vld [vmem:[%s506 + $0x54] sm:$0xf]
                  %515 = vst [vmem:[%s507 + $0xc] sm:$0xf] %v514
                  %v516 = vld [vmem:[%s506 + $0x70] sm:$0xf]
                  %517 = vst [vmem:[%s507 + $0x10] sm:$0xf] %v516
                  %v518 = vld [vmem:[%s506 + $0x8c] sm:$0xf]
                  %519 = vst [vmem:[%s507 + $0x14] sm:$0xf] %v518
                  %v520 = vld [vmem:[%s506 + $0xa8] sm:$0xf]
                  %521 = vst [vmem:[%s507 + $0x18] sm:$0xf] %v520
                  %v522 = vld [vmem:[%s506 + $0xc4] sm:$0xf]
                  %523 = vst [vmem:[%s507 + $0x1c] sm:$0xf] %v522
                  %v524 = vld [vmem:[%s506 + $0xe0] sm:$0xf]
                  %525 = vst [vmem:[%s507 + $0x20] sm:$0xf] %v524
                  %v526 = vld [vmem:[%s506 + $0xfc] sm:$0xf]
                  %527 = vst [vmem:[%s507 + $0x24] sm:$0xf] %v526
                  %v528 = vld [vmem:[%s506 + $0x118] sm:$0xf]
                  %529 = vst [vmem:[%s507 + $0x28] sm:$0xf] %v528
                  %v530 = vld [vmem:[%s506 + $0x134] sm:$0xf]
                  %531 = vst [vmem:[%s507 + $0x2c] sm:$0xf] %v530
                  %v532 = vld [vmem:[%s506 + $0x150] sm:$0xf]
                  %533 = vst [vmem:[%s507 + $0x30] sm:$0xf] %v532
                  %v534 = vld [vmem:[%s506 + $0x16c] sm:$0xf]
                  %535 = vst [vmem:[%s507 + $0x34] sm:$0xf] %v534
                  %v536 = vld [vmem:[%s506 + $0x188] sm:$0xf]
                  %537 = vst [vmem:[%s507 + $0x38] sm:$0xf] %v536
                  %v538 = vld [vmem:[%s506 + $0x1a4] sm:$0xf]
                  %539 = vst [vmem:[%s507 + $0x3c] sm:$0xf] %v538
                  %v540 = vld [vmem:[%s506 + $0x1c0] sm:$0xf]
                  %541 = vst [vmem:[%s507 + $0x40] sm:$0xf] %v540
                  %v542 = vld [vmem:[%s506 + $0x1dc] sm:$0xf]
                  %543 = vst [vmem:[%s507 + $0x44] sm:$0xf] %v542
                  %v544 = vld [vmem:[%s506 + $0x1f8] sm:$0xf]
                  %545 = vst [vmem:[%s507 + $0x48] sm:$0xf] %v544
                  %v546 = vld [vmem:[%s506 + $0x214] sm:$0xf]
                  %547 = vst [vmem:[%s507 + $0x4c] sm:$0xf] %v546
                  %v548 = vld [vmem:[%s506 + $0x230] sm:$0xf]
                  %549 = vst [vmem:[%s507 + $0x50] sm:$0xf] %v548
                  %v550 = vld [vmem:[%s506 + $0x24c] sm:$0xf]
                  %551 = vst [vmem:[%s507 + $0x54] sm:$0xf] %v550
                  %v552 = vld [vmem:[%s506 + $0x268] sm:$0xf]
                  %553 = vst [vmem:[%s507 + $0x58] sm:$0xf] %v552
                  %v554 = vld [vmem:[%s506 + $0x284] sm:$0xf]
                  %555 = vst [vmem:[%s507 + $0x5c] sm:$0xf] %v554
                  %v556 = vld [vmem:[%s506 + $0x2a0] sm:$0xf]
                  %557 = vst [vmem:[%s507 + $0x60] sm:$0xf] %v556
                  %v558 = vld [vmem:[%s506 + $0x2bc] sm:$0xf]
                  %559 = vst [vmem:[%s507 + $0x64] sm:$0xf] %v558
                  %v560 = vld [vmem:[%s506 + $0x2d8] sm:$0xf]
                  %561 = vst [vmem:[%s507 + $0x68] sm:$0xf] %v560
                  %v562 = vld [vmem:[%s506 + $0x2f4] sm:$0xf]
                  %563 = vst [vmem:[%s507 + $0x6c] sm:$0xf] %v562
                  %v564 = vld [vmem:[%s506 + $0x310] sm:$0xf]
                  %565 = vst [vmem:[%s507 + $0x70] sm:$0xf] %v564
                  %v566 = vld [vmem:[%s506 + $0x32c] sm:$0xf]
                  %567 = vst [vmem:[%s507 + $0x74] sm:$0xf] %v566
                  %v568 = vld [vmem:[%s506 + $0x348] sm:$0xf]
                  %569 = vst [vmem:[%s507 + $0x78] sm:$0xf] %v568
                  %v570 = vld [vmem:[%s506 + $0x364] sm:$0xf]
                  %571 = vst [vmem:[%s507 + $0x7c] sm:$0xf] %v570
                  %v572 = vld [vmem:[%s506 + $0x380] sm:$0xf]
                  %573 = vst [vmem:[%s507 + $0x80] sm:$0xf] %v572
                  %v574 = vld [vmem:[%s506 + $0x39c] sm:$0xf]
                  %575 = vst [vmem:[%s507 + $0x84] sm:$0xf] %v574
                  %v576 = vld [vmem:[%s506 + $0x3b8] sm:$0xf]
                  %577 = vst [vmem:[%s507 + $0x88] sm:$0xf] %v576
                  %v578 = vld [vmem:[%s506 + $0x3d4] sm:$0xf]
                  %579 = vst [vmem:[%s507 + $0x8c] sm:$0xf] %v578
                  %v580 = vld [vmem:[%s506 + $0x3f0] sm:$0xf]
                  %581 = vst [vmem:[%s507 + $0x90] sm:$0xf] %v580
                  %v582 = vld [vmem:[%s506 + $0x40c] sm:$0xf]
                  %583 = vst [vmem:[%s507 + $0x94] sm:$0xf] %v582
                  %v584 = vld [vmem:[%s506 + $0x428] sm:$0xf]
                  %585 = vst [vmem:[%s507 + $0x98] sm:$0xf] %v584
                  %v586 = vld [vmem:[%s506 + $0x444] sm:$0xf]
                  %587 = vst [vmem:[%s507 + $0x9c] sm:$0xf] %v586
                  %v588 = vld [vmem:[%s506 + $0x460] sm:$0xf]
                  %589 = vst [vmem:[%s507 + $0xa0] sm:$0xf] %v588
                  %v590 = vld [vmem:[%s506 + $0x47c] sm:$0xf]
                  %591 = vst [vmem:[%s507 + $0xa4] sm:$0xf] %v590
                  %v592 = vld [vmem:[%s506 + $0x498] sm:$0xf]
                  %593 = vst [vmem:[%s507 + $0xa8] sm:$0xf] %v592
                  %v594 = vld [vmem:[%s506 + $0x4b4] sm:$0xf]
                  %595 = vst [vmem:[%s507 + $0xac] sm:$0xf] %v594
                  %v596 = vld [vmem:[%s506 + $0x4d0] sm:$0xf]
                  %597 = vst [vmem:[%s507 + $0xb0] sm:$0xf] %v596
                  %v598 = vld [vmem:[%s506 + $0x4ec] sm:$0xf]
                  %599 = vst [vmem:[%s507 + $0xb4] sm:$0xf] %v598
                  %v600 = vld [vmem:[%s506 + $0x508] sm:$0xf]
                  %601 = vst [vmem:[%s507 + $0xb8] sm:$0xf] %v600
                  %v602 = vld [vmem:[%s506 + $0x524] sm:$0xf]
                  %603 = vst [vmem:[%s507 + $0xbc] sm:$0xf] %v602
                  %v604 = vld [vmem:[%s506 + $0x540] sm:$0xf]
                  %605 = vst [vmem:[%s507 + $0xc0] sm:$0xf] %v604
                  %v606 = vld [vmem:[%s506 + $0x55c] sm:$0xf]
                  %607 = vst [vmem:[%s507 + $0xc4] sm:$0xf] %v606
                  %v608 = vld [vmem:[%s506 + $0x578] sm:$0xf]
                  %609 = vst [vmem:[%s507 + $0xc8] sm:$0xf] %v608
                  %v610 = vld [vmem:[%s506 + $0x594] sm:$0xf]
                  %611 = vst [vmem:[%s507 + $0xcc] sm:$0xf] %v610
                  %v612 = vld [vmem:[%s506 + $0x5b0] sm:$0xf]
                  %613 = vst [vmem:[%s507 + $0xd0] sm:$0xf] %v612
                  %v614 = vld [vmem:[%s506 + $0x5cc] sm:$0xf]
                  %615 = vst [vmem:[%s507 + $0xd4] sm:$0xf] %v614
                  %v616 = vld [vmem:[%s506 + $0x5e8] sm:$0xf]
                  %617 = vst [vmem:[%s507 + $0xd8] sm:$0xf] %v616
                  %v618 = vld [vmem:[%s506 + $0x604] sm:$0xf]
                  %619 = vst [vmem:[%s507 + $0xdc] sm:$0xf] %v618
                  %v620 = vld [vmem:[%s506 + $0x620] sm:$0xf]
                  %621 = vst [vmem:[%s507 + $0xe0] sm:$0xf] %v620
                  %v622 = vld [vmem:[%s506 + $0x63c] sm:$0xf]
                  %623 = vst [vmem:[%s507 + $0xe4] sm:$0xf] %v622
                  %v624 = vld [vmem:[%s506 + $0x658] sm:$0xf]
                  %625 = vst [vmem:[%s507 + $0xe8] sm:$0xf] %v624
                  %v626 = vld [vmem:[%s506 + $0x674] sm:$0xf]
                  %627 = vst [vmem:[%s507 + $0xec] sm:$0xf] %v626
                  %v628 = vld [vmem:[%s506 + $0x690] sm:$0xf]
                  %629 = vst [vmem:[%s507 + $0xf0] sm:$0xf] %v628
                  %v630 = vld [vmem:[%s506 + $0x6ac] sm:$0xf]
                  %631 = vst [vmem:[%s507 + $0xf4] sm:$0xf] %v630
                  %v632 = vld [vmem:[%s506 + $0x6c8] sm:$0xf]
                  %633 = vst [vmem:[%s507 + $0xf8] sm:$0xf] %v632
                  %v634 = vld [vmem:[%s506 + $0x6e4] sm:$0xf]
                  %635 = vst [vmem:[%s507 + $0xfc] sm:$0xf] %v634
                  %v636 = vld [vmem:[%s506 + $0x700] sm:$0xf]
                  %637 = vst [vmem:[%s507 + $0x100] sm:$0xf] %v636
                  %v638 = vld [vmem:[%s506 + $0x71c] sm:$0xf]
                  %639 = vst [vmem:[%s507 + $0x104] sm:$0xf] %v638
                  %v640 = vld [vmem:[%s506 + $0x738] sm:$0xf]
                  %641 = vst [vmem:[%s507 + $0x108] sm:$0xf] %v640
                  %v642 = vld [vmem:[%s506 + $0x754] sm:$0xf]
                  %643 = vst [vmem:[%s507 + $0x10c] sm:$0xf] %v642
                  %v644 = vld [vmem:[%s506 + $0x770] sm:$0xf]
                  %645 = vst [vmem:[%s507 + $0x110] sm:$0xf] %v644
                  %v646 = vld [vmem:[%s506 + $0x78c] sm:$0xf]
                  %647 = vst [vmem:[%s507 + $0x114] sm:$0xf] %v646
                  %v648 = vld [vmem:[%s506 + $0x7a8] sm:$0xf]
                  %649 = vst [vmem:[%s507 + $0x118] sm:$0xf] %v648
                  %v650 = vld [vmem:[%s506 + $0x7c4] sm:$0xf]
                  %651 = vst [vmem:[%s507 + $0x11c] sm:$0xf] %v650
                  %v652 = vld [vmem:[%s506 + $0x7e0] sm:$0xf]
                  %653 = vst [vmem:[%s507 + $0x120] sm:$0xf] %v652
                  %v654 = vld [vmem:[%s506 + $0x7fc] sm:$0xf]
                  %655 = vst [vmem:[%s507 + $0x124] sm:$0xf] %v654
                  %v656 = vld [vmem:[%s506 + $0x818] sm:$0xf]
                  %657 = vst [vmem:[%s507 + $0x128] sm:$0xf] %v656
                  %v658 = vld [vmem:[%s506 + $0x834] sm:$0xf]
                  %659 = vst [vmem:[%s507 + $0x12c] sm:$0xf] %v658
                  %v660 = vld [vmem:[%s506 + $0x850] sm:$0xf]
                  %661 = vst [vmem:[%s507 + $0x130] sm:$0xf] %v660
                  %v662 = vld [vmem:[%s506 + $0x86c] sm:$0xf]
                  %663 = vst [vmem:[%s507 + $0x134] sm:$0xf] %v662
                  %v664 = vld [vmem:[%s506 + $0x888] sm:$0xf]
                  %665 = vst [vmem:[%s507 + $0x138] sm:$0xf] %v664
                  %v666 = vld [vmem:[%s506 + $0x8a4] sm:$0xf]
                  %667 = vst [vmem:[%s507 + $0x13c] sm:$0xf] %v666
                  %v668 = vld [vmem:[%s506 + $0x8c0] sm:$0xf]
                  %669 = vst [vmem:[%s507 + $0x140] sm:$0xf] %v668
                  %v670 = vld [vmem:[%s506 + $0x8dc] sm:$0xf]
                  %671 = vst [vmem:[%s507 + $0x144] sm:$0xf] %v670
                  %v672 = vld [vmem:[%s506 + $0x8f8] sm:$0xf]
                  %673 = vst [vmem:[%s507 + $0x148] sm:$0xf] %v672
                  %v674 = vld [vmem:[%s506 + $0x914] sm:$0xf]
                  %675 = vst [vmem:[%s507 + $0x14c] sm:$0xf] %v674
                  %v676 = vld [vmem:[%s506 + $0x930] sm:$0xf]
                  %677 = vst [vmem:[%s507 + $0x150] sm:$0xf] %v676
                  %v678 = vld [vmem:[%s506 + $0x94c] sm:$0xf]
                  %679 = vst [vmem:[%s507 + $0x154] sm:$0xf] %v678
                  %v680 = vld [vmem:[%s506 + $0x968] sm:$0xf]
                  %681 = vst [vmem:[%s507 + $0x158] sm:$0xf] %v680
                  %v682 = vld [vmem:[%s506 + $0x984] sm:$0xf]
                  %683 = vst [vmem:[%s507 + $0x15c] sm:$0xf] %v682
                  %v684 = vld [vmem:[%s506 + $0x9a0] sm:$0xf]
                  %685 = vst [vmem:[%s507 + $0x160] sm:$0xf] %v684
                  %v686 = vld [vmem:[%s506 + $0x9bc] sm:$0xf]
                  %687 = vst [vmem:[%s507 + $0x164] sm:$0xf] %v686
                  %v688 = vld [vmem:[%s506 + $0x9d8] sm:$0xf]
                  %689 = vst [vmem:[%s507 + $0x168] sm:$0xf] %v688
                  %v690 = vld [vmem:[%s506 + $0x9f4] sm:$0xf]
                  %691 = vst [vmem:[%s507 + $0x16c] sm:$0xf] %v690
                  %v692 = vld [vmem:[%s506 + $0xa10] sm:$0xf]
                  %693 = vst [vmem:[%s507 + $0x170] sm:$0xf] %v692
                  %v694 = vld [vmem:[%s506 + $0xa2c] sm:$0xf]
                  %695 = vst [vmem:[%s507 + $0x174] sm:$0xf] %v694
                  %v696 = vld [vmem:[%s506 + $0xa48] sm:$0xf]
                  %697 = vst [vmem:[%s507 + $0x178] sm:$0xf] %v696
                  %v698 = vld [vmem:[%s506 + $0xa64] sm:$0xf]
                  %699 = vst [vmem:[%s507 + $0x17c] sm:$0xf] %v698
                  %v700 = vld [vmem:[%s506 + $0xa80] sm:$0xf]
                  %701 = vst [vmem:[%s507 + $0x180] sm:$0xf] %v700
                  %v702 = vld [vmem:[%s506 + $0xa9c] sm:$0xf]
                  %703 = vst [vmem:[%s507 + $0x184] sm:$0xf] %v702
                  %v704 = vld [vmem:[%s506 + $0xab8] sm:$0xf]
                  %705 = vst [vmem:[%s507 + $0x188] sm:$0xf] %v704
                  %v706 = vld [vmem:[%s506 + $0xad4] sm:$0xf]
                  %707 = vst [vmem:[%s507 + $0x18c] sm:$0xf] %v706
                  %v708 = vld [vmem:[%s506 + $0xaf0] sm:$0xf]
                  %709 = vst [vmem:[%s507 + $0x190] sm:$0xf] %v708
                  %v710 = vld [vmem:[%s506 + $0xb0c] sm:$0xf]
                  %711 = vst [vmem:[%s507 + $0x194] sm:$0xf] %v710
                  %v712 = vld [vmem:[%s506 + $0xb28] sm:$0xf]
                  %713 = vst [vmem:[%s507 + $0x198] sm:$0xf] %v712
                  %v714 = vld [vmem:[%s506 + $0xb44] sm:$0xf]
                  %715 = vst [vmem:[%s507 + $0x19c] sm:$0xf] %v714
                  %v716 = vld [vmem:[%s506 + $0xb60] sm:$0xf]
                  %717 = vst [vmem:[%s507 + $0x1a0] sm:$0xf] %v716
                  %v718 = vld [vmem:[%s506 + $0xb7c] sm:$0xf]
                  %719 = vst [vmem:[%s507 + $0x1a4] sm:$0xf] %v718
                  %v720 = vld [vmem:[%s506 + $0xb98] sm:$0xf]
                  %721 = vst [vmem:[%s507 + $0x1a8] sm:$0xf] %v720
                  %v722 = vld [vmem:[%s506 + $0xbb4] sm:$0xf]
                  %723 = vst [vmem:[%s507 + $0x1ac] sm:$0xf] %v722
                  %v724 = vld [vmem:[%s506 + $0xbd0] sm:$0xf]
                  %725 = vst [vmem:[%s507 + $0x1b0] sm:$0xf] %v724
                  %v726 = vld [vmem:[%s506 + $0xbec] sm:$0xf]
                  %727 = vst [vmem:[%s507 + $0x1b4] sm:$0xf] %v726
                  %v728 = vld [vmem:[%s506 + $0xc08] sm:$0xf]
                  %729 = vst [vmem:[%s507 + $0x1b8] sm:$0xf] %v728
                  %v730 = vld [vmem:[%s506 + $0xc24] sm:$0xf]
                  %731 = vst [vmem:[%s507 + $0x1bc] sm:$0xf] %v730
                $region59: #{forward.2} parent=46 // loop_footer
                  %s505 = sadd.s32 1, %s501
                $region60: #{forward.2} parent=46 // loop_footer_branch
                  %500 = sbr.rel target = $region56
                $region61: #{forward.2} parent=46 // loop_exit
                  _
              $region47: #{forward.2} parent=31 // pred_fallthru
                _
            $region32: #{forward.2} parent=27 // pred_fallthru
              _
            // Predicated region
            $region33: #{forward.2} parent=27 // pred_check
              _
            $region34: #{forward.2} parent=27 // pred_check_branch
              %255 = sbr.rel (0) target = $region36
            $region35: #{forward.2} parent=27 // pred_region
              loop: start=0, step=1, limit=1
              $region37: #{forward.2} parent=35 // loop_pre_header
                _
              $region38: #{forward.2} parent=35 // loop_header
                %s258 = sphi 0, %s262
                %p259 = scmp.ge.s32.totalorder %s258, 1
                %s263 = sphi %s249, %s249
                %s264 = sphi %s247, %s247
              $region39: #{forward.2} parent=35 // loop_header_branch
                %261 = sbr.rel (%p259) target = $region43
              $region40: #{forward.2} parent=35 // loop_body
                %v265 = vld [vmem:[%s263] sm:$0xf]
                %266 = vst [vmem:[%s264] sm:$0xf] %v265
                %v267 = vld [vmem:[%s263 + $0x1c] sm:$0xf]
                %268 = vst [vmem:[%s264 + $0x4] sm:$0xf] %v267
                %v269 = vld [vmem:[%s263 + $0x38] sm:$0xf]
                %270 = vst [vmem:[%s264 + $0x8] sm:$0xf] %v269
                %v271 = vld [vmem:[%s263 + $0x54] sm:$0xf]
                %272 = vst [vmem:[%s264 + $0xc] sm:$0xf] %v271
                %v273 = vld [vmem:[%s263 + $0x70] sm:$0xf]
                %274 = vst [vmem:[%s264 + $0x10] sm:$0xf] %v273
                %v275 = vld [vmem:[%s263 + $0x8c] sm:$0xf]
                %276 = vst [vmem:[%s264 + $0x14] sm:$0xf] %v275
                %v277 = vld [vmem:[%s263 + $0xa8] sm:$0xf]
                %278 = vst [vmem:[%s264 + $0x18] sm:$0xf] %v277
                %v279 = vld [vmem:[%s263 + $0xc4] sm:$0xf]
                %280 = vst [vmem:[%s264 + $0x1c] sm:$0xf] %v279
                %v281 = vld [vmem:[%s263 + $0xe0] sm:$0xf]
                %282 = vst [vmem:[%s264 + $0x20] sm:$0xf] %v281
                %v283 = vld [vmem:[%s263 + $0xfc] sm:$0xf]
                %284 = vst [vmem:[%s264 + $0x24] sm:$0xf] %v283
                %v285 = vld [vmem:[%s263 + $0x118] sm:$0xf]
                %286 = vst [vmem:[%s264 + $0x28] sm:$0xf] %v285
                %v287 = vld [vmem:[%s263 + $0x134] sm:$0xf]
                %288 = vst [vmem:[%s264 + $0x2c] sm:$0xf] %v287
                %v289 = vld [vmem:[%s263 + $0x150] sm:$0xf]
                %290 = vst [vmem:[%s264 + $0x30] sm:$0xf] %v289
                %v291 = vld [vmem:[%s263 + $0x16c] sm:$0xf]
                %292 = vst [vmem:[%s264 + $0x34] sm:$0xf] %v291
                %v293 = vld [vmem:[%s263 + $0x188] sm:$0xf]
                %294 = vst [vmem:[%s264 + $0x38] sm:$0xf] %v293
                %v295 = vld [vmem:[%s263 + $0x1a4] sm:$0xf]
                %296 = vst [vmem:[%s264 + $0x3c] sm:$0xf] %v295
                %v297 = vld [vmem:[%s263 + $0x1c0] sm:$0xf]
                %298 = vst [vmem:[%s264 + $0x40] sm:$0xf] %v297
                %v299 = vld [vmem:[%s263 + $0x1dc] sm:$0xf]
                %300 = vst [vmem:[%s264 + $0x44] sm:$0xf] %v299
                %v301 = vld [vmem:[%s263 + $0x1f8] sm:$0xf]
                %302 = vst [vmem:[%s264 + $0x48] sm:$0xf] %v301
                %v303 = vld [vmem:[%s263 + $0x214] sm:$0xf]
                %304 = vst [vmem:[%s264 + $0x4c] sm:$0xf] %v303
                %v305 = vld [vmem:[%s263 + $0x230] sm:$0xf]
                %306 = vst [vmem:[%s264 + $0x50] sm:$0xf] %v305
                %v307 = vld [vmem:[%s263 + $0x24c] sm:$0xf]
                %308 = vst [vmem:[%s264 + $0x54] sm:$0xf] %v307
                %v309 = vld [vmem:[%s263 + $0x268] sm:$0xf]
                %310 = vst [vmem:[%s264 + $0x58] sm:$0xf] %v309
                %v311 = vld [vmem:[%s263 + $0x284] sm:$0xf]
                %312 = vst [vmem:[%s264 + $0x5c] sm:$0xf] %v311
                %v313 = vld [vmem:[%s263 + $0x2a0] sm:$0xf]
                %314 = vst [vmem:[%s264 + $0x60] sm:$0xf] %v313
                %v315 = vld [vmem:[%s263 + $0x2bc] sm:$0xf]
                %316 = vst [vmem:[%s264 + $0x64] sm:$0xf] %v315
                %v317 = vld [vmem:[%s263 + $0x2d8] sm:$0xf]
                %318 = vst [vmem:[%s264 + $0x68] sm:$0xf] %v317
                %v319 = vld [vmem:[%s263 + $0x2f4] sm:$0xf]
                %320 = vst [vmem:[%s264 + $0x6c] sm:$0xf] %v319
                %v321 = vld [vmem:[%s263 + $0x310] sm:$0xf]
                %322 = vst [vmem:[%s264 + $0x70] sm:$0xf] %v321
                %v323 = vld [vmem:[%s263 + $0x32c] sm:$0xf]
                %324 = vst [vmem:[%s264 + $0x74] sm:$0xf] %v323
                %v325 = vld [vmem:[%s263 + $0x348] sm:$0xf]
                %326 = vst [vmem:[%s264 + $0x78] sm:$0xf] %v325
                %v327 = vld [vmem:[%s263 + $0x364] sm:$0xf]
                %328 = vst [vmem:[%s264 + $0x7c] sm:$0xf] %v327
                %v329 = vld [vmem:[%s263 + $0x380] sm:$0xf]
                %330 = vst [vmem:[%s264 + $0x80] sm:$0xf] %v329
                %v331 = vld [vmem:[%s263 + $0x39c] sm:$0xf]
                %332 = vst [vmem:[%s264 + $0x84] sm:$0xf] %v331
                %v333 = vld [vmem:[%s263 + $0x3b8] sm:$0xf]
                %334 = vst [vmem:[%s264 + $0x88] sm:$0xf] %v333
                %v335 = vld [vmem:[%s263 + $0x3d4] sm:$0xf]
                %336 = vst [vmem:[%s264 + $0x8c] sm:$0xf] %v335
                %v337 = vld [vmem:[%s263 + $0x3f0] sm:$0xf]
                %338 = vst [vmem:[%s264 + $0x90] sm:$0xf] %v337
                %v339 = vld [vmem:[%s263 + $0x40c] sm:$0xf]
                %340 = vst [vmem:[%s264 + $0x94] sm:$0xf] %v339
                %v341 = vld [vmem:[%s263 + $0x428] sm:$0xf]
                %342 = vst [vmem:[%s264 + $0x98] sm:$0xf] %v341
                %v343 = vld [vmem:[%s263 + $0x444] sm:$0xf]
                %344 = vst [vmem:[%s264 + $0x9c] sm:$0xf] %v343
                %v345 = vld [vmem:[%s263 + $0x460] sm:$0xf]
                %346 = vst [vmem:[%s264 + $0xa0] sm:$0xf] %v345
                %v347 = vld [vmem:[%s263 + $0x47c] sm:$0xf]
                %348 = vst [vmem:[%s264 + $0xa4] sm:$0xf] %v347
                %v349 = vld [vmem:[%s263 + $0x498] sm:$0xf]
                %350 = vst [vmem:[%s264 + $0xa8] sm:$0xf] %v349
                %v351 = vld [vmem:[%s263 + $0x4b4] sm:$0xf]
                %352 = vst [vmem:[%s264 + $0xac] sm:$0xf] %v351
                %v353 = vld [vmem:[%s263 + $0x4d0] sm:$0xf]
                %354 = vst [vmem:[%s264 + $0xb0] sm:$0xf] %v353
                %v355 = vld [vmem:[%s263 + $0x4ec] sm:$0xf]
                %356 = vst [vmem:[%s264 + $0xb4] sm:$0xf] %v355
                %v357 = vld [vmem:[%s263 + $0x508] sm:$0xf]
                %358 = vst [vmem:[%s264 + $0xb8] sm:$0xf] %v357
                %v359 = vld [vmem:[%s263 + $0x524] sm:$0xf]
                %360 = vst [vmem:[%s264 + $0xbc] sm:$0xf] %v359
                %v361 = vld [vmem:[%s263 + $0x540] sm:$0xf]
                %362 = vst [vmem:[%s264 + $0xc0] sm:$0xf] %v361
                %v363 = vld [vmem:[%s263 + $0x55c] sm:$0xf]
                %364 = vst [vmem:[%s264 + $0xc4] sm:$0xf] %v363
                %v365 = vld [vmem:[%s263 + $0x578] sm:$0xf]
                %366 = vst [vmem:[%s264 + $0xc8] sm:$0xf] %v365
                %v367 = vld [vmem:[%s263 + $0x594] sm:$0xf]
                %368 = vst [vmem:[%s264 + $0xcc] sm:$0xf] %v367
                %v369 = vld [vmem:[%s263 + $0x5b0] sm:$0xf]
                %370 = vst [vmem:[%s264 + $0xd0] sm:$0xf] %v369
                %v371 = vld [vmem:[%s263 + $0x5cc] sm:$0xf]
                %372 = vst [vmem:[%s264 + $0xd4] sm:$0xf] %v371
                %v373 = vld [vmem:[%s263 + $0x5e8] sm:$0xf]
                %374 = vst [vmem:[%s264 + $0xd8] sm:$0xf] %v373
                %v375 = vld [vmem:[%s263 + $0x604] sm:$0xf]
                %376 = vst [vmem:[%s264 + $0xdc] sm:$0xf] %v375
                %v377 = vld [vmem:[%s263 + $0x620] sm:$0xf]
                %378 = vst [vmem:[%s264 + $0xe0] sm:$0xf] %v377
                %v379 = vld [vmem:[%s263 + $0x63c] sm:$0xf]
                %380 = vst [vmem:[%s264 + $0xe4] sm:$0xf] %v379
                %v381 = vld [vmem:[%s263 + $0x658] sm:$0xf]
                %382 = vst [vmem:[%s264 + $0xe8] sm:$0xf] %v381
                %v383 = vld [vmem:[%s263 + $0x674] sm:$0xf]
                %384 = vst [vmem:[%s264 + $0xec] sm:$0xf] %v383
                %v385 = vld [vmem:[%s263 + $0x690] sm:$0xf]
                %386 = vst [vmem:[%s264 + $0xf0] sm:$0xf] %v385
                %v387 = vld [vmem:[%s263 + $0x6ac] sm:$0xf]
                %388 = vst [vmem:[%s264 + $0xf4] sm:$0xf] %v387
                %v389 = vld [vmem:[%s263 + $0x6c8] sm:$0xf]
                %390 = vst [vmem:[%s264 + $0xf8] sm:$0xf] %v389
                %v391 = vld [vmem:[%s263 + $0x6e4] sm:$0xf]
                %392 = vst [vmem:[%s264 + $0xfc] sm:$0xf] %v391
                %v393 = vld [vmem:[%s263 + $0x700] sm:$0xf]
                %394 = vst [vmem:[%s264 + $0x100] sm:$0xf] %v393
                %v395 = vld [vmem:[%s263 + $0x71c] sm:$0xf]
                %396 = vst [vmem:[%s264 + $0x104] sm:$0xf] %v395
                %v397 = vld [vmem:[%s263 + $0x738] sm:$0xf]
                %398 = vst [vmem:[%s264 + $0x108] sm:$0xf] %v397
                %v399 = vld [vmem:[%s263 + $0x754] sm:$0xf]
                %400 = vst [vmem:[%s264 + $0x10c] sm:$0xf] %v399
                %v401 = vld [vmem:[%s263 + $0x770] sm:$0xf]
                %402 = vst [vmem:[%s264 + $0x110] sm:$0xf] %v401
                %v403 = vld [vmem:[%s263 + $0x78c] sm:$0xf]
                %404 = vst [vmem:[%s264 + $0x114] sm:$0xf] %v403
                %v405 = vld [vmem:[%s263 + $0x7a8] sm:$0xf]
                %406 = vst [vmem:[%s264 + $0x118] sm:$0xf] %v405
                %v407 = vld [vmem:[%s263 + $0x7c4] sm:$0xf]
                %408 = vst [vmem:[%s264 + $0x11c] sm:$0xf] %v407
                %v409 = vld [vmem:[%s263 + $0x7e0] sm:$0xf]
                %410 = vst [vmem:[%s264 + $0x120] sm:$0xf] %v409
                %v411 = vld [vmem:[%s263 + $0x7fc] sm:$0xf]
                %412 = vst [vmem:[%s264 + $0x124] sm:$0xf] %v411
                %v413 = vld [vmem:[%s263 + $0x818] sm:$0xf]
                %414 = vst [vmem:[%s264 + $0x128] sm:$0xf] %v413
                %v415 = vld [vmem:[%s263 + $0x834] sm:$0xf]
                %416 = vst [vmem:[%s264 + $0x12c] sm:$0xf] %v415
                %v417 = vld [vmem:[%s263 + $0x850] sm:$0xf]
                %418 = vst [vmem:[%s264 + $0x130] sm:$0xf] %v417
                %v419 = vld [vmem:[%s263 + $0x86c] sm:$0xf]
                %420 = vst [vmem:[%s264 + $0x134] sm:$0xf] %v419
                %v421 = vld [vmem:[%s263 + $0x888] sm:$0xf]
                %422 = vst [vmem:[%s264 + $0x138] sm:$0xf] %v421
                %v423 = vld [vmem:[%s263 + $0x8a4] sm:$0xf]
                %424 = vst [vmem:[%s264 + $0x13c] sm:$0xf] %v423
                %v425 = vld [vmem:[%s263 + $0x8c0] sm:$0xf]
                %426 = vst [vmem:[%s264 + $0x140] sm:$0xf] %v425
                %v427 = vld [vmem:[%s263 + $0x8dc] sm:$0xf]
                %428 = vst [vmem:[%s264 + $0x144] sm:$0xf] %v427
                %v429 = vld [vmem:[%s263 + $0x8f8] sm:$0xf]
                %430 = vst [vmem:[%s264 + $0x148] sm:$0xf] %v429
                %v431 = vld [vmem:[%s263 + $0x914] sm:$0xf]
                %432 = vst [vmem:[%s264 + $0x14c] sm:$0xf] %v431
                %v433 = vld [vmem:[%s263 + $0x930] sm:$0xf]
                %434 = vst [vmem:[%s264 + $0x150] sm:$0xf] %v433
                %v435 = vld [vmem:[%s263 + $0x94c] sm:$0xf]
                %436 = vst [vmem:[%s264 + $0x154] sm:$0xf] %v435
                %v437 = vld [vmem:[%s263 + $0x968] sm:$0xf]
                %438 = vst [vmem:[%s264 + $0x158] sm:$0xf] %v437
                %v439 = vld [vmem:[%s263 + $0x984] sm:$0xf]
                %440 = vst [vmem:[%s264 + $0x15c] sm:$0xf] %v439
                %v441 = vld [vmem:[%s263 + $0x9a0] sm:$0xf]
                %442 = vst [vmem:[%s264 + $0x160] sm:$0xf] %v441
                %v443 = vld [vmem:[%s263 + $0x9bc] sm:$0xf]
                %444 = vst [vmem:[%s264 + $0x164] sm:$0xf] %v443
                %v445 = vld [vmem:[%s263 + $0x9d8] sm:$0xf]
                %446 = vst [vmem:[%s264 + $0x168] sm:$0xf] %v445
                %v447 = vld [vmem:[%s263 + $0x9f4] sm:$0xf]
                %448 = vst [vmem:[%s264 + $0x16c] sm:$0xf] %v447
                %v449 = vld [vmem:[%s263 + $0xa10] sm:$0xf]
                %450 = vst [vmem:[%s264 + $0x170] sm:$0xf] %v449
                %v451 = vld [vmem:[%s263 + $0xa2c] sm:$0xf]
                %452 = vst [vmem:[%s264 + $0x174] sm:$0xf] %v451
                %v453 = vld [vmem:[%s263 + $0xa48] sm:$0xf]
                %454 = vst [vmem:[%s264 + $0x178] sm:$0xf] %v453
                %v455 = vld [vmem:[%s263 + $0xa64] sm:$0xf]
                %456 = vst [vmem:[%s264 + $0x17c] sm:$0xf] %v455
                %v457 = vld [vmem:[%s263 + $0xa80] sm:$0xf]
                %458 = vst [vmem:[%s264 + $0x180] sm:$0xf] %v457
                %v459 = vld [vmem:[%s263 + $0xa9c] sm:$0xf]
                %460 = vst [vmem:[%s264 + $0x184] sm:$0xf] %v459
                %v461 = vld [vmem:[%s263 + $0xab8] sm:$0xf]
                %462 = vst [vmem:[%s264 + $0x188] sm:$0xf] %v461
                %v463 = vld [vmem:[%s263 + $0xad4] sm:$0xf]
                %464 = vst [vmem:[%s264 + $0x18c] sm:$0xf] %v463
                %v465 = vld [vmem:[%s263 + $0xaf0] sm:$0xf]
                %466 = vst [vmem:[%s264 + $0x190] sm:$0xf] %v465
                %v467 = vld [vmem:[%s263 + $0xb0c] sm:$0xf]
                %468 = vst [vmem:[%s264 + $0x194] sm:$0xf] %v467
                %v469 = vld [vmem:[%s263 + $0xb28] sm:$0xf]
                %470 = vst [vmem:[%s264 + $0x198] sm:$0xf] %v469
                %v471 = vld [vmem:[%s263 + $0xb44] sm:$0xf]
                %472 = vst [vmem:[%s264 + $0x19c] sm:$0xf] %v471
                %v473 = vld [vmem:[%s263 + $0xb60] sm:$0xf]
                %474 = vst [vmem:[%s264 + $0x1a0] sm:$0xf] %v473
                %v475 = vld [vmem:[%s263 + $0xb7c] sm:$0xf]
                %476 = vst [vmem:[%s264 + $0x1a4] sm:$0xf] %v475
                %v477 = vld [vmem:[%s263 + $0xb98] sm:$0xf]
                %478 = vst [vmem:[%s264 + $0x1a8] sm:$0xf] %v477
                %v479 = vld [vmem:[%s263 + $0xbb4] sm:$0xf]
                %480 = vst [vmem:[%s264 + $0x1ac] sm:$0xf] %v479
                %v481 = vld [vmem:[%s263 + $0xbd0] sm:$0xf]
                %482 = vst [vmem:[%s264 + $0x1b0] sm:$0xf] %v481
                %v483 = vld [vmem:[%s263 + $0xbec] sm:$0xf]
                %484 = vst [vmem:[%s264 + $0x1b4] sm:$0xf] %v483
                %v485 = vld [vmem:[%s263 + $0xc08] sm:$0xf]
                %486 = vst [vmem:[%s264 + $0x1b8] sm:$0xf] %v485
                %v487 = vld [vmem:[%s263 + $0xc24] sm:$0xf]
                %488 = vst [vmem:[%s264 + $0x1bc] sm:$0xf] %v487
              $region41: #{forward.2} parent=35 // loop_footer
                %s262 = sadd.s32 1, %s258
              $region42: #{forward.2} parent=35 // loop_footer_branch
                %257 = sbr.rel target = $region38
              $region43: #{forward.2} parent=35 // loop_exit
                _
            $region36: #{forward.2} parent=27 // pred_fallthru
              _
          $region28: #{forward.2} parent=23 // pred_fallthru
            _
          %732 = vnop
        $region24: #{forward.2} parent=19 // pred_fallthru
          _
        // Predicated region
        $region62: #{forward.2} parent=19 // pred_check
          %p733 = pneg %p83
        $region63: #{forward.2} parent=19 // pred_check_branch
          %735 = sbr.rel (%p733) target = $region65
        $region64: #{forward.2} parent=19 // pred_region
          %p736 = scmp.lt.s32.totalorder %s16, 6
          %s737 = scalar_select %p736, %s16, 6
          %s738 = scalar_lea.vmem %s2, %s737
        $region65: #{forward.2} parent=19 // pred_fallthru
          _
        // Predicated region
        $region66: #{forward.2} parent=19 // pred_check
          %p739 = pneg %p109
        $region67: #{forward.2} parent=19 // pred_check_branch
          %741 = sbr.rel (%p739) target = $region69
        $region68: #{forward.2} parent=19 // pred_region
          %p742 = scmp.lt.s32.totalorder %s16, 6
          %s743 = scalar_select %p742, %s16, 6
          %s744 = scalar_lea.vmem %s3, %s743
        $region69: #{forward.2} parent=19 // pred_fallthru
          _
        // Predicated region
        $region70: #{forward.2} parent=19 // pred_check
          %p745 = pneg %p135
        $region71: #{forward.2} parent=19 // pred_check_branch
          %747 = sbr.rel (%p745) target = $region73
        $region72: #{forward.2} parent=19 // pred_region
          %s748 = sand.u32 %s125, 1
          %s749 = scalar_lea.sflag [#allocation5], %s748
          %s750 = sand.u32 %s125, 1
          %s751 = smul.addr %s750, 576
          %s752 = scalar_lea.vmem [#allocation4], %s751
          %s754 = ssub.s32 9216, 9216
          %755 = vsyncadd %s749, %s754
          %s756 = smul.addr %s16, 144
          %s757 = smul.addr %s756, 64
          %s758 = scalar_lea.hbm %s4, %s757
          %s759 = sshll.u32 %s752, 4
          %s760 = int_to_ptr.vmem [resolvable:$true] %s759
          %765 = dma.hbm_to_vmem [thread:$0]  %s758, 9216, %s760, %s749, 64, 64, 4
        $region73: #{forward.2} parent=19 // pred_fallthru
          _
        // Predicated region
        $region74: #{forward.2} parent=19 // pred_check
          %p766 = pneg %p161
        $region75: #{forward.2} parent=19 // pred_check_branch
          %768 = sbr.rel (%p766) target = $region77
        $region76: #{forward.2} parent=19 // pred_region
          %p769 = scmp.lt.s32.totalorder %s16, 6
          %s770 = scalar_select %p769, %s16, 6
          %s771 = scalar_lea.vmem %s5, %s770
        $region77: #{forward.2} parent=19 // pred_fallthru
          _
        // Predicated region
        $region78: #{forward.2} parent=19 // pred_check
          %p772 = pneg %p187
        $region79: #{forward.2} parent=19 // pred_check_branch
          %774 = sbr.rel (%p772) target = $region81
        $region80: #{forward.2} parent=19 // pred_region
          %p775 = scmp.lt.s32.totalorder %s16, 6
          %s776 = scalar_select %p775, %s16, 6
          %s777 = scalar_lea.vmem %s6, %s776
        $region81: #{forward.2} parent=19 // pred_fallthru
          _
      $region20: #{forward.2} parent=5 // pred_fallthru
        _
      %p778 = scmp.le.s32.totalorder 1, %s16
      %p779 = scmp.lt.s32.totalorder %s16, 8
      %p780 = pnand %p778, %p779
      %p781 = pneg %p780
      // Predicated region
      $region82: #{forward.2} parent=5 // pred_check
        _
      $region83: #{forward.2} parent=5 // pred_check_branch
        %783 = sbr.rel (%p780) target = $region85
      $region84: #{forward.2} parent=5 // pred_region
        %s784 = ssub.s32 %s16, 1
        %s785 = sand.u32 %s50, 1
        %s786 = sand.u32 %s50, 1
        %s787 = smul.addr %s786, 448
        %s788 = scalar_lea.vmem [#allocation3], %s787
        // Predicated region
        $region86: #{forward.2} parent=84 // pred_check
          %p789 = pneg %p63
        $region87: #{forward.2} parent=84 // pred_check_branch
          %791 = sbr.rel (%p789) target = $region89
        $region88: #{forward.2} parent=84 // pred_region
          _
        $region89: #{forward.2} parent=84 // pred_fallthru
          _
        %s792 = sand.u32 %s128, 1
        %s793 = scalar_lea.sflag [#allocation5], %s792
        %s794 = sand.u32 %s128, 1
        %s795 = smul.addr %s794, 576
        %s796 = scalar_lea.vmem [#allocation4], %s795
        // Predicated region
        $region90: #{forward.2} parent=84 // pred_check
          %p797 = pneg %p141
        $region91: #{forward.2} parent=84 // pred_check_branch
          %799 = sbr.rel (%p797) target = $region93
        $region92: #{forward.2} parent=84 // pred_region
          %800 = dma.done %s793, 9216
        $region93: #{forward.2} parent=84 // pred_fallthru
          _
        %p801 = pneg %p37
        %p802 = pneg %p34
        %s803 = sand.u32 %s50, 1
        %s804 = sand.u32 %s50, 1
        %s805 = smul.addr %s804, 448
        %s806 = scalar_lea.vmem [#allocation3], %s805
        %p807 = pneg %p63
        %p808 = pneg %p60
        %p809 = scmp.lt.s32.totalorder %s21, 6
        %s810 = scalar_select %p809, %s21, 6
        %s811 = scalar_lea.vmem %s2, %s810
        %p812 = pneg %p89
        %p813 = pneg %p86
        %p814 = scmp.lt.s32.totalorder %s21, 6
        %s815 = scalar_select %p814, %s21, 6
        %s816 = scalar_lea.vmem %s3, %s815
        %p817 = pneg %p115
        %p818 = pneg %p112
        %s819 = sand.u32 %s128, 1
        %s820 = scalar_lea.sflag [#allocation5], %s819
        %s821 = sand.u32 %s128, 1
        %s822 = smul.addr %s821, 576
        %s823 = scalar_lea.vmem [#allocation4], %s822
        %p824 = pneg %p141
        %p825 = pneg %p138
        %p826 = scmp.lt.s32.totalorder %s21, 6
        %s827 = scalar_select %p826, %s21, 6
        %s828 = scalar_lea.vmem %s5, %s827
        %p829 = pneg %p167
        %p830 = pneg %p164
        %p831 = scmp.lt.s32.totalorder %s21, 6
        %s832 = scalar_select %p831, %s21, 6
        %s833 = scalar_lea.vmem %s6, %s832
        %p834 = pneg %p193
        %p835 = pneg %p190
        %p836 = pneg %p219
        %p837 = pneg %p216
        %s838 = sand.u32 %s206, 1
        %s839 = sand.u32 %s206, 1
        %s840 = smul.addr %s839, 112
        %s841 = scalar_lea.vmem [#allocation6], %s840
        %p842 = scmp.lt.s32.totalorder %s21, 6
        %s843 = scalar_select %p842, %s21, 6
        %s844 = scalar_lea.vmem %s2, %s843
        %p845 = scmp.lt.s32.totalorder %s21, 6
        %s846 = scalar_select %p845, %s21, 6
        %s847 = scalar_lea.vmem %s3, %s846
        %p848 = scmp.lt.s32.totalorder %s21, 6
        %s849 = scalar_select %p848, %s21, 6
        %s850 = scalar_lea.vmem %s5, %s849
        %p851 = scmp.lt.s32.totalorder %s21, 6
        %s852 = scalar_select %p851, %s21, 6
        %s853 = scalar_lea.vmem %s6, %s852
        %v855 = vlaneseq
        %v856 = vshrl.u32 %v855, 7
        %v857 = vadd.s32 %v856, 8
        %v858 = vadd.s32 %v856, 16
        %v859 = vadd.s32 %v856, 24
        %v860 = vadd.s32 %v856, 32
        %v861 = vadd.s32 %v856, 40
        %v862 = vadd.s32 %v856, 48
        %v863 = vadd.s32 %v856, 56
        %v864 = vadd.s32 %v856, 64
        %v865 = vadd.s32 %v856, 72
        %v866 = vadd.s32 %v856, 80
        %v867 = vadd.s32 %v856, 88
        %v868 = vadd.s32 %v856, 96
        %v869 = vadd.s32 %v856, 104
        %v870 = vadd.s32 %v856, 112
        %v871 = vadd.s32 %v856, 120
        %v872 = vadd.s32 %v856, 128
        %v873 = vadd.s32 %v856, 136
        %v874 = vadd.s32 %v856, 144
        %v875 = vadd.s32 %v856, 152
        %v876 = vadd.s32 %v856, 160
        %v877 = vadd.s32 %v856, 168
        %v878 = vadd.s32 %v856, 176
        %v879 = vadd.s32 %v856, 184
        %v880 = vadd.s32 %v856, 192
        %v881 = vadd.s32 %v856, 200
        %v882 = vadd.s32 %v856, 208
        %v883 = vadd.s32 %v856, 216
        %v884 = vand.u32 %v856, 15
        %v885 = vand.u32 %v857, 15
        %v886 = vand.u32 %v858, 15
        %v887 = vand.u32 %v859, 15
        %v888 = vand.u32 %v860, 15
        %v889 = vand.u32 %v861, 15
        %v890 = vand.u32 %v862, 15
        %v891 = vand.u32 %v863, 15
        %v892 = vand.u32 %v864, 15
        %v893 = vand.u32 %v865, 15
        %v894 = vand.u32 %v866, 15
        %v895 = vand.u32 %v867, 15
        %v896 = vand.u32 %v868, 15
        %v897 = vand.u32 %v869, 15
        %v898 = vand.u32 %v870, 15
        %v899 = vand.u32 %v871, 15
        %v900 = vand.u32 %v872, 15
        %v901 = vand.u32 %v873, 15
        %v902 = vand.u32 %v874, 15
        %v903 = vand.u32 %v875, 15
        %v904 = vand.u32 %v876, 15
        %v905 = vand.u32 %v877, 15
        %v906 = vand.u32 %v878, 15
        %v907 = vand.u32 %v879, 15
        %v908 = vand.u32 %v880, 15
        %v909 = vand.u32 %v881, 15
        %v910 = vand.u32 %v882, 15
        %v911 = vand.u32 %v883, 15
        %vm912 = vcmp.lt.s32.totalorder %v884, 14
        %vm913 = vcmp.lt.s32.totalorder %v885, 14
        %vm914 = vcmp.lt.s32.totalorder %v886, 14
        %vm915 = vcmp.lt.s32.totalorder %v887, 14
        %vm916 = vcmp.lt.s32.totalorder %v888, 14
        %vm917 = vcmp.lt.s32.totalorder %v889, 14
        %vm918 = vcmp.lt.s32.totalorder %v890, 14
        %vm919 = vcmp.lt.s32.totalorder %v891, 14
        %vm920 = vcmp.lt.s32.totalorder %v892, 14
        %vm921 = vcmp.lt.s32.totalorder %v893, 14
        %vm922 = vcmp.lt.s32.totalorder %v894, 14
        %vm923 = vcmp.lt.s32.totalorder %v895, 14
        %vm924 = vcmp.lt.s32.totalorder %v896, 14
        %vm925 = vcmp.lt.s32.totalorder %v897, 14
        %vm926 = vcmp.lt.s32.totalorder %v898, 14
        %vm927 = vcmp.lt.s32.totalorder %v899, 14
        %vm928 = vcmp.lt.s32.totalorder %v900, 14
        %vm929 = vcmp.lt.s32.totalorder %v901, 14
        %vm930 = vcmp.lt.s32.totalorder %v902, 14
        %vm931 = vcmp.lt.s32.totalorder %v903, 14
        %vm932 = vcmp.lt.s32.totalorder %v904, 14
        %vm933 = vcmp.lt.s32.totalorder %v905, 14
        %vm934 = vcmp.lt.s32.totalorder %v906, 14
        %vm935 = vcmp.lt.s32.totalorder %v907, 14
        %vm936 = vcmp.lt.s32.totalorder %v908, 14
        %vm937 = vcmp.lt.s32.totalorder %v909, 14
        %vm938 = vcmp.lt.s32.totalorder %v910, 14
        %vm939 = vcmp.lt.s32.totalorder %v911, 14
        %v940 = vld [vmem:[%s0] sm:$0xff]
        %v941 = vld [vmem:[%s0 + $0x8] sm:$0xff]
        %v942 = vld [vmem:[%s0 + $0x10] sm:$0xff]
        %v943 = vld [vmem:[%s0 + $0x18] sm:$0xf]
        %v944 = vld [vmem:[%s0 + $0x1c] sm:$0xff]
        %v945 = vld [vmem:[%s0 + $0x24] sm:$0xff]
        %v946 = vld [vmem:[%s0 + $0x2c] sm:$0xff]
        %v947 = vld [vmem:[%s0 + $0x34] sm:$0xf]
        %v948 = vld [vmem:[%s0 + $0x38] sm:$0xff]
        %v949 = vld [vmem:[%s0 + $0x40] sm:$0xff]
        %v950 = vld [vmem:[%s0 + $0x48] sm:$0xff]
        %v951 = vld [vmem:[%s0 + $0x50] sm:$0xf]
        %v952 = vld [vmem:[%s0 + $0x54] sm:$0xff]
        %v953 = vld [vmem:[%s0 + $0x5c] sm:$0xff]
        %v954 = vld [vmem:[%s0 + $0x64] sm:$0xff]
        %v955 = vld [vmem:[%s0 + $0x6c] sm:$0xf]
        %v956 = vld [vmem:[%s0 + $0x70] sm:$0xff]
        %v957 = vld [vmem:[%s0 + $0x78] sm:$0xff]
        %v958 = vld [vmem:[%s0 + $0x80] sm:$0xff]
        %v959 = vld [vmem:[%s0 + $0x88] sm:$0xf]
        %v960 = vld [vmem:[%s0 + $0x8c] sm:$0xff]
        %v961 = vld [vmem:[%s0 + $0x94] sm:$0xff]
        %v962 = vld [vmem:[%s0 + $0x9c] sm:$0xff]
        %v963 = vld [vmem:[%s0 + $0xa4] sm:$0xf]
        %v964 = vld [vmem:[%s0 + $0xa8] sm:$0xff]
        %v965 = vld [vmem:[%s0 + $0xb0] sm:$0xff]
        %v966 = vld [vmem:[%s0 + $0xb8] sm:$0xff]
        %v967 = vld [vmem:[%s0 + $0xc0] sm:$0xf]
        %v968 = vld [vmem:[%s0 + $0xc4] sm:$0xff]
        %v969 = vld [vmem:[%s0 + $0xcc] sm:$0xff]
        %v970 = vld [vmem:[%s0 + $0xd4] sm:$0xff]
        %v971 = vld [vmem:[%s0 + $0xdc] sm:$0xf]
        %v972 = vld [vmem:[%s0 + $0xe0] sm:$0xff]
        %v973 = vld [vmem:[%s0 + $0xe8] sm:$0xff]
        %v974 = vld [vmem:[%s0 + $0xf0] sm:$0xff]
        %v975 = vld [vmem:[%s0 + $0xf8] sm:$0xf]
        %v976 = vld [vmem:[%s0 + $0xfc] sm:$0xff]
        %v977 = vld [vmem:[%s0 + $0x104] sm:$0xff]
        %v978 = vld [vmem:[%s0 + $0x10c] sm:$0xff]
        %v979 = vld [vmem:[%s0 + $0x114] sm:$0xf]
        %v980 = vld [vmem:[%s0 + $0x118] sm:$0xff]
        %v981 = vld [vmem:[%s0 + $0x120] sm:$0xff]
        %v982 = vld [vmem:[%s0 + $0x128] sm:$0xff]
        %v983 = vld [vmem:[%s0 + $0x130] sm:$0xf]
        %v984 = vld [vmem:[%s0 + $0x134] sm:$0xff]
        %v985 = vld [vmem:[%s0 + $0x13c] sm:$0xff]
        %v986 = vld [vmem:[%s0 + $0x144] sm:$0xff]
        %v987 = vld [vmem:[%s0 + $0x14c] sm:$0xf]
        %v988 = vld [vmem:[%s0 + $0x150] sm:$0xff]
        %v989 = vld [vmem:[%s0 + $0x158] sm:$0xff]
        %v990 = vld [vmem:[%s0 + $0x160] sm:$0xff]
        %v991 = vld [vmem:[%s0 + $0x168] sm:$0xf]
        %v992 = vld [vmem:[%s0 + $0x16c] sm:$0xff]
        %v993 = vld [vmem:[%s0 + $0x174] sm:$0xff]
        %v994 = vld [vmem:[%s0 + $0x17c] sm:$0xff]
        %v995 = vld [vmem:[%s0 + $0x184] sm:$0xf]
        %v996 = vld [vmem:[%s0 + $0x188] sm:$0xff]
        %v997 = vld [vmem:[%s0 + $0x190] sm:$0xff]
        %v998 = vld [vmem:[%s0 + $0x198] sm:$0xff]
        %v999 = vld [vmem:[%s0 + $0x1a0] sm:$0xf]
        %v1000 = vld [vmem:[%s0 + $0x1a4] sm:$0xff]
        %v1001 = vld [vmem:[%s0 + $0x1ac] sm:$0xff]
        %v1002 = vld [vmem:[%s0 + $0x1b4] sm:$0xff]
        %v1003 = vld [vmem:[%s0 + $0x1bc] sm:$0xf]
        %v1004 = vld [vmem:[%s0 + $0x1c0] sm:$0xff]
        %v1005 = vld [vmem:[%s0 + $0x1c8] sm:$0xff]
        %v1006 = vld [vmem:[%s0 + $0x1d0] sm:$0xff]
        %v1007 = vld [vmem:[%s0 + $0x1d8] sm:$0xf]
        %v1008 = vld [vmem:[%s0 + $0x1dc] sm:$0xff]
        %v1009 = vld [vmem:[%s0 + $0x1e4] sm:$0xff]
        %v1010 = vld [vmem:[%s0 + $0x1ec] sm:$0xff]
        %v1011 = vld [vmem:[%s0 + $0x1f4] sm:$0xf]
        %v1012 = vld [vmem:[%s0 + $0x1f8] sm:$0xff]
        %v1013 = vld [vmem:[%s0 + $0x200] sm:$0xff]
        %v1014 = vld [vmem:[%s0 + $0x208] sm:$0xff]
        %v1015 = vld [vmem:[%s0 + $0x210] sm:$0xf]
        %v1016 = vld [vmem:[%s0 + $0x214] sm:$0xff]
        %v1017 = vld [vmem:[%s0 + $0x21c] sm:$0xff]
        %v1018 = vld [vmem:[%s0 + $0x224] sm:$0xff]
        %v1019 = vld [vmem:[%s0 + $0x22c] sm:$0xf]
        %v1020 = vld [vmem:[%s0 + $0x230] sm:$0xff]
        %v1021 = vld [vmem:[%s0 + $0x238] sm:$0xff]
        %v1022 = vld [vmem:[%s0 + $0x240] sm:$0xff]
        %v1023 = vld [vmem:[%s0 + $0x248] sm:$0xf]
        %v1024 = vld [vmem:[%s0 + $0x24c] sm:$0xff]
        %v1025 = vld [vmem:[%s0 + $0x254] sm:$0xff]
        %v1026 = vld [vmem:[%s0 + $0x25c] sm:$0xff]
        %v1027 = vld [vmem:[%s0 + $0x264] sm:$0xf]
        %v1028 = vld [vmem:[%s0 + $0x268] sm:$0xff]
        %v1029 = vld [vmem:[%s0 + $0x270] sm:$0xff]
        %v1030 = vld [vmem:[%s0 + $0x278] sm:$0xff]
        %v1031 = vld [vmem:[%s0 + $0x280] sm:$0xf]
        %v1032 = vld [vmem:[%s0 + $0x284] sm:$0xff]
        %v1033 = vld [vmem:[%s0 + $0x28c] sm:$0xff]
        %v1034 = vld [vmem:[%s0 + $0x294] sm:$0xff]
        %v1035 = vld [vmem:[%s0 + $0x29c] sm:$0xf]
        %v1036 = vld [vmem:[%s0 + $0x2a0] sm:$0xff]
        %v1037 = vld [vmem:[%s0 + $0x2a8] sm:$0xff]
        %v1038 = vld [vmem:[%s0 + $0x2b0] sm:$0xff]
        %v1039 = vld [vmem:[%s0 + $0x2b8] sm:$0xf]
        %v1040 = vld [vmem:[%s0 + $0x2bc] sm:$0xff]
        %v1041 = vld [vmem:[%s0 + $0x2c4] sm:$0xff]
        %v1042 = vld [vmem:[%s0 + $0x2cc] sm:$0xff]
        %v1043 = vld [vmem:[%s0 + $0x2d4] sm:$0xf]
        %v1044 = vld [vmem:[%s0 + $0x2d8] sm:$0xff]
        %v1045 = vld [vmem:[%s0 + $0x2e0] sm:$0xff]
        %v1046 = vld [vmem:[%s0 + $0x2e8] sm:$0xff]
        %v1047 = vld [vmem:[%s0 + $0x2f0] sm:$0xf]
        %v1048 = vld [vmem:[%s0 + $0x2f4] sm:$0xff]
        %v1049 = vld [vmem:[%s0 + $0x2fc] sm:$0xff]
        %v1050 = vld [vmem:[%s0 + $0x304] sm:$0xff]
        %v1051 = vld [vmem:[%s0 + $0x30c] sm:$0xf]
        %v1052 = vld [vmem:[%s788] sm:$0xf]
        %v1053 = vld [vmem:[%s788 + $0x4] sm:$0xf]
        %v1054 = vld [vmem:[%s788 + $0x8] sm:$0xf]
        %v1055 = vld [vmem:[%s788 + $0xc] sm:$0xf]
        %v1056 = vld [vmem:[%s788 + $0x10] sm:$0xf]
        %v1057 = vld [vmem:[%s788 + $0x14] sm:$0xf]
        %v1058 = vld [vmem:[%s788 + $0x18] sm:$0xf]
        %v1059 = vld [vmem:[%s788 + $0x1c] sm:$0xf]
        %v1060 = vld [vmem:[%s788 + $0x20] sm:$0xf]
        %v1061 = vld [vmem:[%s788 + $0x24] sm:$0xf]
        %v1062 = vld [vmem:[%s788 + $0x28] sm:$0xf]
        %v1063 = vld [vmem:[%s788 + $0x2c] sm:$0xf]
        %v1064 = vld [vmem:[%s788 + $0x30] sm:$0xf]
        %v1065 = vld [vmem:[%s788 + $0x34] sm:$0xf]
        %v1066 = vld [vmem:[%s788 + $0x38] sm:$0xf]
        %v1067 = vld [vmem:[%s788 + $0x3c] sm:$0xf]
        %v1068 = vld [vmem:[%s788 + $0x40] sm:$0xf]
        %v1069 = vld [vmem:[%s788 + $0x44] sm:$0xf]
        %v1070 = vld [vmem:[%s788 + $0x48] sm:$0xf]
        %v1071 = vld [vmem:[%s788 + $0x4c] sm:$0xf]
        %v1072 = vld [vmem:[%s788 + $0x50] sm:$0xf]
        %v1073 = vld [vmem:[%s788 + $0x54] sm:$0xf]
        %v1074 = vld [vmem:[%s788 + $0x58] sm:$0xf]
        %v1075 = vld [vmem:[%s788 + $0x5c] sm:$0xf]
        %v1076 = vld [vmem:[%s788 + $0x60] sm:$0xf]
        %v1077 = vld [vmem:[%s788 + $0x64] sm:$0xf]
        %v1078 = vld [vmem:[%s788 + $0x68] sm:$0xf]
        %v1079 = vld [vmem:[%s788 + $0x6c] sm:$0xf]
        %v1080 = vld [vmem:[%s788 + $0x70] sm:$0xf]
        %v1081 = vld [vmem:[%s788 + $0x74] sm:$0xf]
        %v1082 = vld [vmem:[%s788 + $0x78] sm:$0xf]
        %v1083 = vld [vmem:[%s788 + $0x7c] sm:$0xf]
        %v1084 = vld [vmem:[%s788 + $0x80] sm:$0xf]
        %v1085 = vld [vmem:[%s788 + $0x84] sm:$0xf]
        %v1086 = vld [vmem:[%s788 + $0x88] sm:$0xf]
        %v1087 = vld [vmem:[%s788 + $0x8c] sm:$0xf]
        %v1088 = vld [vmem:[%s788 + $0x90] sm:$0xf]
        %v1089 = vld [vmem:[%s788 + $0x94] sm:$0xf]
        %v1090 = vld [vmem:[%s788 + $0x98] sm:$0xf]
        %v1091 = vld [vmem:[%s788 + $0x9c] sm:$0xf]
        %v1092 = vld [vmem:[%s788 + $0xa0] sm:$0xf]
        %v1093 = vld [vmem:[%s788 + $0xa4] sm:$0xf]
        %v1094 = vld [vmem:[%s788 + $0xa8] sm:$0xf]
        %v1095 = vld [vmem:[%s788 + $0xac] sm:$0xf]
        %v1096 = vld [vmem:[%s788 + $0xb0] sm:$0xf]
        %v1097 = vld [vmem:[%s788 + $0xb4] sm:$0xf]
        %v1098 = vld [vmem:[%s788 + $0xb8] sm:$0xf]
        %v1099 = vld [vmem:[%s788 + $0xbc] sm:$0xf]
        %v1100 = vld [vmem:[%s788 + $0xc0] sm:$0xf]
        %v1101 = vld [vmem:[%s788 + $0xc4] sm:$0xf]
        %v1102 = vld [vmem:[%s788 + $0xc8] sm:$0xf]
        %v1103 = vld [vmem:[%s788 + $0xcc] sm:$0xf]
        %v1104 = vld [vmem:[%s788 + $0xd0] sm:$0xf]
        %v1105 = vld [vmem:[%s788 + $0xd4] sm:$0xf]
        %v1106 = vld [vmem:[%s788 + $0xd8] sm:$0xf]
        %v1107 = vld [vmem:[%s788 + $0xdc] sm:$0xf]
        %v1108 = vld [vmem:[%s788 + $0xe0] sm:$0xf]
        %v1109 = vld [vmem:[%s788 + $0xe4] sm:$0xf]
        %v1110 = vld [vmem:[%s788 + $0xe8] sm:$0xf]
        %v1111 = vld [vmem:[%s788 + $0xec] sm:$0xf]
        %v1112 = vld [vmem:[%s788 + $0xf0] sm:$0xf]
        %v1113 = vld [vmem:[%s788 + $0xf4] sm:$0xf]
        %v1114 = vld [vmem:[%s788 + $0xf8] sm:$0xf]
        %v1115 = vld [vmem:[%s788 + $0xfc] sm:$0xf]
        %v1116 = vld [vmem:[%s788 + $0x100] sm:$0xf]
        %v1117 = vld [vmem:[%s788 + $0x104] sm:$0xf]
        %v1118 = vld [vmem:[%s788 + $0x108] sm:$0xf]
        %v1119 = vld [vmem:[%s788 + $0x10c] sm:$0xf]
        %v1120 = vld [vmem:[%s788 + $0x110] sm:$0xf]
        %v1121 = vld [vmem:[%s788 + $0x114] sm:$0xf]
        %v1122 = vld [vmem:[%s788 + $0x118] sm:$0xf]
        %v1123 = vld [vmem:[%s788 + $0x11c] sm:$0xf]
        %v1124 = vld [vmem:[%s788 + $0x120] sm:$0xf]
        %v1125 = vld [vmem:[%s788 + $0x124] sm:$0xf]
        %v1126 = vld [vmem:[%s788 + $0x128] sm:$0xf]
        %v1127 = vld [vmem:[%s788 + $0x12c] sm:$0xf]
        %v1128 = vld [vmem:[%s788 + $0x130] sm:$0xf]
        %v1129 = vld [vmem:[%s788 + $0x134] sm:$0xf]
        %v1130 = vld [vmem:[%s788 + $0x138] sm:$0xf]
        %v1131 = vld [vmem:[%s788 + $0x13c] sm:$0xf]
        %v1132 = vld [vmem:[%s788 + $0x140] sm:$0xf]
        %v1133 = vld [vmem:[%s788 + $0x144] sm:$0xf]
        %v1134 = vld [vmem:[%s788 + $0x148] sm:$0xf]
        %v1135 = vld [vmem:[%s788 + $0x14c] sm:$0xf]
        %v1136 = vld [vmem:[%s788 + $0x150] sm:$0xf]
        %v1137 = vld [vmem:[%s788 + $0x154] sm:$0xf]
        %v1138 = vld [vmem:[%s788 + $0x158] sm:$0xf]
        %v1139 = vld [vmem:[%s788 + $0x15c] sm:$0xf]
        %v1140 = vld [vmem:[%s788 + $0x160] sm:$0xf]
        %v1141 = vld [vmem:[%s788 + $0x164] sm:$0xf]
        %v1142 = vld [vmem:[%s788 + $0x168] sm:$0xf]
        %v1143 = vld [vmem:[%s788 + $0x16c] sm:$0xf]
        %v1144 = vld [vmem:[%s788 + $0x170] sm:$0xf]
        %v1145 = vld [vmem:[%s788 + $0x174] sm:$0xf]
        %v1146 = vld [vmem:[%s788 + $0x178] sm:$0xf]
        %v1147 = vld [vmem:[%s788 + $0x17c] sm:$0xf]
        %v1148 = vld [vmem:[%s788 + $0x180] sm:$0xf]
        %v1149 = vld [vmem:[%s788 + $0x184] sm:$0xf]
        %v1150 = vld [vmem:[%s788 + $0x188] sm:$0xf]
        %v1151 = vld [vmem:[%s788 + $0x18c] sm:$0xf]
        %v1152 = vld [vmem:[%s788 + $0x190] sm:$0xf]
        %v1153 = vld [vmem:[%s788 + $0x194] sm:$0xf]
        %v1154 = vld [vmem:[%s788 + $0x198] sm:$0xf]
        %v1155 = vld [vmem:[%s788 + $0x19c] sm:$0xf]
        %v1156 = vld [vmem:[%s788 + $0x1a0] sm:$0xf]
        %v1157 = vld [vmem:[%s788 + $0x1a4] sm:$0xf]
        %v1158 = vld [vmem:[%s788 + $0x1a8] sm:$0xf]
        %v1159 = vld [vmem:[%s788 + $0x1ac] sm:$0xf]
        %v1160 = vld [vmem:[%s788 + $0x1b0] sm:$0xf]
        %v1161 = vld [vmem:[%s788 + $0x1b4] sm:$0xf]
        %v1162 = vld [vmem:[%s788 + $0x1b8] sm:$0xf]
        %v1163 = vld [vmem:[%s788 + $0x1bc] sm:$0xf]
        %v1276 = vunpack.c.l.b16 %v940
        %v1277 = vunpack.c.h.b16 %v940
        %v1278 = vunpack.c.l.b16 %v941
        %v1279 = vunpack.c.h.b16 %v941
        %v1280 = vunpack.c.l.b16 %v942
        %v1281 = vunpack.c.h.b16 %v942
        %v1282 = vunpack.c.l.b16 %v943
        %v1283 = vunpack.c.l.b16 %v944
        %v1284 = vunpack.c.h.b16 %v944
        %v1285 = vunpack.c.l.b16 %v945
        %v1286 = vunpack.c.h.b16 %v945
        %v1287 = vunpack.c.l.b16 %v946
        %v1288 = vunpack.c.h.b16 %v946
        %v1289 = vunpack.c.l.b16 %v947
        %v1290 = vunpack.c.l.b16 %v948
        %v1291 = vunpack.c.h.b16 %v948
        %v1292 = vunpack.c.l.b16 %v949
        %v1293 = vunpack.c.h.b16 %v949
        %v1294 = vunpack.c.l.b16 %v950
        %v1295 = vunpack.c.h.b16 %v950
        %v1296 = vunpack.c.l.b16 %v951
        %v1297 = vunpack.c.l.b16 %v952
        %v1298 = vunpack.c.h.b16 %v952
        %v1299 = vunpack.c.l.b16 %v953
        %v1300 = vunpack.c.h.b16 %v953
        %v1301 = vunpack.c.l.b16 %v954
        %v1302 = vunpack.c.h.b16 %v954
        %v1303 = vunpack.c.l.b16 %v955
        %v1304 = vunpack.c.l.b16 %v956
        %v1305 = vunpack.c.h.b16 %v956
        %v1306 = vunpack.c.l.b16 %v957
        %v1307 = vunpack.c.h.b16 %v957
        %v1308 = vunpack.c.l.b16 %v958
        %v1309 = vunpack.c.h.b16 %v958
        %v1310 = vunpack.c.l.b16 %v959
        %v1311 = vunpack.c.l.b16 %v960
        %v1312 = vunpack.c.h.b16 %v960
        %v1313 = vunpack.c.l.b16 %v961
        %v1314 = vunpack.c.h.b16 %v961
        %v1315 = vunpack.c.l.b16 %v962
        %v1316 = vunpack.c.h.b16 %v962
        %v1317 = vunpack.c.l.b16 %v963
        %v1318 = vunpack.c.l.b16 %v964
        %v1319 = vunpack.c.h.b16 %v964
        %v1320 = vunpack.c.l.b16 %v965
        %v1321 = vunpack.c.h.b16 %v965
        %v1322 = vunpack.c.l.b16 %v966
        %v1323 = vunpack.c.h.b16 %v966
        %v1324 = vunpack.c.l.b16 %v967
        %v1325 = vunpack.c.l.b16 %v968
        %v1326 = vunpack.c.h.b16 %v968
        %v1327 = vunpack.c.l.b16 %v969
        %v1328 = vunpack.c.h.b16 %v969
        %v1329 = vunpack.c.l.b16 %v970
        %v1330 = vunpack.c.h.b16 %v970
        %v1331 = vunpack.c.l.b16 %v971
        %v1332 = vunpack.c.l.b16 %v972
        %v1333 = vunpack.c.h.b16 %v972
        %v1334 = vunpack.c.l.b16 %v973
        %v1335 = vunpack.c.h.b16 %v973
        %v1336 = vunpack.c.l.b16 %v974
        %v1337 = vunpack.c.h.b16 %v974
        %v1338 = vunpack.c.l.b16 %v975
        %v1339 = vunpack.c.l.b16 %v976
        %v1340 = vunpack.c.h.b16 %v976
        %v1341 = vunpack.c.l.b16 %v977
        %v1342 = vunpack.c.h.b16 %v977
        %v1343 = vunpack.c.l.b16 %v978
        %v1344 = vunpack.c.h.b16 %v978
        %v1345 = vunpack.c.l.b16 %v979
        %v1346 = vunpack.c.l.b16 %v980
        %v1347 = vunpack.c.h.b16 %v980
        %v1348 = vunpack.c.l.b16 %v981
        %v1349 = vunpack.c.h.b16 %v981
        %v1350 = vunpack.c.l.b16 %v982
        %v1351 = vunpack.c.h.b16 %v982
        %v1352 = vunpack.c.l.b16 %v983
        %v1353 = vunpack.c.l.b16 %v984
        %v1354 = vunpack.c.h.b16 %v984
        %v1355 = vunpack.c.l.b16 %v985
        %v1356 = vunpack.c.h.b16 %v985
        %v1357 = vunpack.c.l.b16 %v986
        %v1358 = vunpack.c.h.b16 %v986
        %v1359 = vunpack.c.l.b16 %v987
        %v1360 = vunpack.c.l.b16 %v988
        %v1361 = vunpack.c.h.b16 %v988
        %v1362 = vunpack.c.l.b16 %v989
        %v1363 = vunpack.c.h.b16 %v989
        %v1364 = vunpack.c.l.b16 %v990
        %v1365 = vunpack.c.h.b16 %v990
        %v1366 = vunpack.c.l.b16 %v991
        %v1367 = vunpack.c.l.b16 %v992
        %v1368 = vunpack.c.h.b16 %v992
        %v1369 = vunpack.c.l.b16 %v993
        %v1370 = vunpack.c.h.b16 %v993
        %v1371 = vunpack.c.l.b16 %v994
        %v1372 = vunpack.c.h.b16 %v994
        %v1373 = vunpack.c.l.b16 %v995
        %v1374 = vunpack.c.l.b16 %v996
        %v1375 = vunpack.c.h.b16 %v996
        %v1376 = vunpack.c.l.b16 %v997
        %v1377 = vunpack.c.h.b16 %v997
        %v1378 = vunpack.c.l.b16 %v998
        %v1379 = vunpack.c.h.b16 %v998
        %v1380 = vunpack.c.l.b16 %v999
        %v1381 = vunpack.c.l.b16 %v1000
        %v1382 = vunpack.c.h.b16 %v1000
        %v1383 = vunpack.c.l.b16 %v1001
        %v1384 = vunpack.c.h.b16 %v1001
        %v1385 = vunpack.c.l.b16 %v1002
        %v1386 = vunpack.c.h.b16 %v1002
        %v1387 = vunpack.c.l.b16 %v1003
        %v1388 = vunpack.c.l.b16 %v1004
        %v1389 = vunpack.c.h.b16 %v1004
        %v1390 = vunpack.c.l.b16 %v1005
        %v1391 = vunpack.c.h.b16 %v1005
        %v1392 = vunpack.c.l.b16 %v1006
        %v1393 = vunpack.c.h.b16 %v1006
        %v1394 = vunpack.c.l.b16 %v1007
        %v1395 = vunpack.c.l.b16 %v1008
        %v1396 = vunpack.c.h.b16 %v1008
        %v1397 = vunpack.c.l.b16 %v1009
        %v1398 = vunpack.c.h.b16 %v1009
        %v1399 = vunpack.c.l.b16 %v1010
        %v1400 = vunpack.c.h.b16 %v1010
        %v1401 = vunpack.c.l.b16 %v1011
        %v1402 = vunpack.c.l.b16 %v1012
        %v1403 = vunpack.c.h.b16 %v1012
        %v1404 = vunpack.c.l.b16 %v1013
        %v1405 = vunpack.c.h.b16 %v1013
        %v1406 = vunpack.c.l.b16 %v1014
        %v1407 = vunpack.c.h.b16 %v1014
        %v1408 = vunpack.c.l.b16 %v1015
        %v1409 = vunpack.c.l.b16 %v1016
        %v1410 = vunpack.c.h.b16 %v1016
        %v1411 = vunpack.c.l.b16 %v1017
        %v1412 = vunpack.c.h.b16 %v1017
        %v1413 = vunpack.c.l.b16 %v1018
        %v1414 = vunpack.c.h.b16 %v1018
        %v1415 = vunpack.c.l.b16 %v1019
        %v1416 = vunpack.c.l.b16 %v1020
        %v1417 = vunpack.c.h.b16 %v1020
        %v1418 = vunpack.c.l.b16 %v1021
        %v1419 = vunpack.c.h.b16 %v1021
        %v1420 = vunpack.c.l.b16 %v1022
        %v1421 = vunpack.c.h.b16 %v1022
        %v1422 = vunpack.c.l.b16 %v1023
        %v1423 = vunpack.c.l.b16 %v1024
        %v1424 = vunpack.c.h.b16 %v1024
        %v1425 = vunpack.c.l.b16 %v1025
        %v1426 = vunpack.c.h.b16 %v1025
        %v1427 = vunpack.c.l.b16 %v1026
        %v1428 = vunpack.c.h.b16 %v1026
        %v1429 = vunpack.c.l.b16 %v1027
        %v1430 = vunpack.c.l.b16 %v1028
        %v1431 = vunpack.c.h.b16 %v1028
        %v1432 = vunpack.c.l.b16 %v1029
        %v1433 = vunpack.c.h.b16 %v1029
        %v1434 = vunpack.c.l.b16 %v1030
        %v1435 = vunpack.c.h.b16 %v1030
        %v1436 = vunpack.c.l.b16 %v1031
        %v1437 = vunpack.c.l.b16 %v1032
        %v1438 = vunpack.c.h.b16 %v1032
        %v1439 = vunpack.c.l.b16 %v1033
        %v1440 = vunpack.c.h.b16 %v1033
        %v1441 = vunpack.c.l.b16 %v1034
        %v1442 = vunpack.c.h.b16 %v1034
        %v1443 = vunpack.c.l.b16 %v1035
        %v1444 = vunpack.c.l.b16 %v1036
        %v1445 = vunpack.c.h.b16 %v1036
        %v1446 = vunpack.c.l.b16 %v1037
        %v1447 = vunpack.c.h.b16 %v1037
        %v1448 = vunpack.c.l.b16 %v1038
        %v1449 = vunpack.c.h.b16 %v1038
        %v1450 = vunpack.c.l.b16 %v1039
        %v1451 = vunpack.c.l.b16 %v1040
        %v1452 = vunpack.c.h.b16 %v1040
        %v1453 = vunpack.c.l.b16 %v1041
        %v1454 = vunpack.c.h.b16 %v1041
        %v1455 = vunpack.c.l.b16 %v1042
        %v1456 = vunpack.c.h.b16 %v1042
        %v1457 = vunpack.c.l.b16 %v1043
        %v1458 = vunpack.c.l.b16 %v1044
        %v1459 = vunpack.c.h.b16 %v1044
        %v1460 = vunpack.c.l.b16 %v1045
        %v1461 = vunpack.c.h.b16 %v1045
        %v1462 = vunpack.c.l.b16 %v1046
        %v1463 = vunpack.c.h.b16 %v1046
        %v1464 = vunpack.c.l.b16 %v1047
        %v1465 = vunpack.c.l.b16 %v1048
        %v1466 = vunpack.c.h.b16 %v1048
        %v1467 = vunpack.c.l.b16 %v1049
        %v1468 = vunpack.c.h.b16 %v1049
        %v1469 = vunpack.c.l.b16 %v1050
        %v1470 = vunpack.c.h.b16 %v1050
        %v1471 = vunpack.c.l.b16 %v1051
        %v1472 = vpack.c.b16 %v1283, %v1276
        %v1473 = vpack.c.b16 %v1284, %v1277
        %v1474 = vpack.c.b16 %v1285, %v1278
        %v1475 = vpack.c.b16 %v1286, %v1279
        %v1476 = vpack.c.b16 %v1287, %v1280
        %v1477 = vpack.c.b16 %v1288, %v1281
        %v1478 = vpack.c.b16 %v1289, %v1282
        %v1479 = vpack.c.b16 %v1297, %v1290
        %v1480 = vpack.c.b16 %v1298, %v1291
        %v1481 = vpack.c.b16 %v1299, %v1292
        %v1482 = vpack.c.b16 %v1300, %v1293
        %v1483 = vpack.c.b16 %v1301, %v1294
        %v1484 = vpack.c.b16 %v1302, %v1295
        %v1485 = vpack.c.b16 %v1303, %v1296
        %v1486 = vpack.c.b16 %v1311, %v1304
        %v1487 = vpack.c.b16 %v1312, %v1305
        %v1488 = vpack.c.b16 %v1313, %v1306
        %v1489 = vpack.c.b16 %v1314, %v1307
        %v1490 = vpack.c.b16 %v1315, %v1308
        %v1491 = vpack.c.b16 %v1316, %v1309
        %v1492 = vpack.c.b16 %v1317, %v1310
        %v1493 = vpack.c.b16 %v1325, %v1318
        %v1494 = vpack.c.b16 %v1326, %v1319
        %v1495 = vpack.c.b16 %v1327, %v1320
        %v1496 = vpack.c.b16 %v1328, %v1321
        %v1497 = vpack.c.b16 %v1329, %v1322
        %v1498 = vpack.c.b16 %v1330, %v1323
        %v1499 = vpack.c.b16 %v1331, %v1324
        %v1500 = vpack.c.b16 %v1339, %v1332
        %v1501 = vpack.c.b16 %v1340, %v1333
        %v1502 = vpack.c.b16 %v1341, %v1334
        %v1503 = vpack.c.b16 %v1342, %v1335
        %v1504 = vpack.c.b16 %v1343, %v1336
        %v1505 = vpack.c.b16 %v1344, %v1337
        %v1506 = vpack.c.b16 %v1345, %v1338
        %v1507 = vpack.c.b16 %v1353, %v1346
        %v1508 = vpack.c.b16 %v1354, %v1347
        %v1509 = vpack.c.b16 %v1355, %v1348
        %v1510 = vpack.c.b16 %v1356, %v1349
        %v1511 = vpack.c.b16 %v1357, %v1350
        %v1512 = vpack.c.b16 %v1358, %v1351
        %v1513 = vpack.c.b16 %v1359, %v1352
        %v1514 = vpack.c.b16 %v1367, %v1360
        %v1515 = vpack.c.b16 %v1368, %v1361
        %v1516 = vpack.c.b16 %v1369, %v1362
        %v1517 = vpack.c.b16 %v1370, %v1363
        %v1518 = vpack.c.b16 %v1371, %v1364
        %v1519 = vpack.c.b16 %v1372, %v1365
        %v1520 = vpack.c.b16 %v1373, %v1366
        %v1521 = vpack.c.b16 %v1381, %v1374
        %v1522 = vpack.c.b16 %v1382, %v1375
        %v1523 = vpack.c.b16 %v1383, %v1376
        %v1524 = vpack.c.b16 %v1384, %v1377
        %v1525 = vpack.c.b16 %v1385, %v1378
        %v1526 = vpack.c.b16 %v1386, %v1379
        %v1527 = vpack.c.b16 %v1387, %v1380
        %v1528 = vpack.c.b16 %v1395, %v1388
        %v1529 = vpack.c.b16 %v1396, %v1389
        %v1530 = vpack.c.b16 %v1397, %v1390
        %v1531 = vpack.c.b16 %v1398, %v1391
        %v1532 = vpack.c.b16 %v1399, %v1392
        %v1533 = vpack.c.b16 %v1400, %v1393
        %v1534 = vpack.c.b16 %v1401, %v1394
        %v1535 = vpack.c.b16 %v1409, %v1402
        %v1536 = vpack.c.b16 %v1410, %v1403
        %v1537 = vpack.c.b16 %v1411, %v1404
        %v1538 = vpack.c.b16 %v1412, %v1405
        %v1539 = vpack.c.b16 %v1413, %v1406
        %v1540 = vpack.c.b16 %v1414, %v1407
        %v1541 = vpack.c.b16 %v1415, %v1408
        %v1542 = vpack.c.b16 %v1423, %v1416
        %v1543 = vpack.c.b16 %v1424, %v1417
        %v1544 = vpack.c.b16 %v1425, %v1418
        %v1545 = vpack.c.b16 %v1426, %v1419
        %v1546 = vpack.c.b16 %v1427, %v1420
        %v1547 = vpack.c.b16 %v1428, %v1421
        %v1548 = vpack.c.b16 %v1429, %v1422
        %v1549 = vpack.c.b16 %v1437, %v1430
        %v1550 = vpack.c.b16 %v1438, %v1431
        %v1551 = vpack.c.b16 %v1439, %v1432
        %v1552 = vpack.c.b16 %v1440, %v1433
        %v1553 = vpack.c.b16 %v1441, %v1434
        %v1554 = vpack.c.b16 %v1442, %v1435
        %v1555 = vpack.c.b16 %v1443, %v1436
        %v1556 = vpack.c.b16 %v1451, %v1444
        %v1557 = vpack.c.b16 %v1452, %v1445
        %v1558 = vpack.c.b16 %v1453, %v1446
        %v1559 = vpack.c.b16 %v1454, %v1447
        %v1560 = vpack.c.b16 %v1455, %v1448
        %v1561 = vpack.c.b16 %v1456, %v1449
        %v1562 = vpack.c.b16 %v1457, %v1450
        %v1563 = vpack.c.b16 %v1465, %v1458
        %v1564 = vpack.c.b16 %v1466, %v1459
        %v1565 = vpack.c.b16 %v1467, %v1460
        %v1566 = vpack.c.b16 %v1468, %v1461
        %v1567 = vpack.c.b16 %v1469, %v1462
        %v1568 = vpack.c.b16 %v1470, %v1463
        %v1569 = vpack.c.b16 %v1471, %v1464
        %v1780 = vunpack.c.l.b16 %v1052
        %v1781 = vunpack.c.l.b16 %v1053
        %v1782 = vunpack.c.l.b16 %v1054
        %v1783 = vunpack.c.l.b16 %v1055
        %v1784 = vunpack.c.l.b16 %v1056
        %v1785 = vunpack.c.l.b16 %v1057
        %v1786 = vunpack.c.l.b16 %v1058
        %v1787 = vunpack.c.l.b16 %v1059
        %v1788 = vunpack.c.l.b16 %v1060
        %v1789 = vunpack.c.l.b16 %v1061
        %v1790 = vunpack.c.l.b16 %v1062
        %v1791 = vunpack.c.l.b16 %v1063
        %v1792 = vunpack.c.l.b16 %v1064
        %v1793 = vunpack.c.l.b16 %v1065
        %v1794 = vunpack.c.l.b16 %v1066
        %v1795 = vunpack.c.l.b16 %v1067
        %v1796 = vunpack.c.l.b16 %v1068
        %v1797 = vunpack.c.l.b16 %v1069
        %v1798 = vunpack.c.l.b16 %v1070
        %v1799 = vunpack.c.l.b16 %v1071
        %v1800 = vunpack.c.l.b16 %v1072
        %v1801 = vunpack.c.l.b16 %v1073
        %v1802 = vunpack.c.l.b16 %v1074
        %v1803 = vunpack.c.l.b16 %v1075
        %v1804 = vunpack.c.l.b16 %v1076
        %v1805 = vunpack.c.l.b16 %v1077
        %v1806 = vunpack.c.l.b16 %v1078
        %v1807 = vunpack.c.l.b16 %v1079
        %v1808 = vunpack.c.l.b16 %v1080
        %v1809 = vunpack.c.l.b16 %v1081
        %v1810 = vunpack.c.l.b16 %v1082
        %v1811 = vunpack.c.l.b16 %v1083
        %v1812 = vunpack.c.l.b16 %v1084
        %v1813 = vunpack.c.l.b16 %v1085
        %v1814 = vunpack.c.l.b16 %v1086
        %v1815 = vunpack.c.l.b16 %v1087
        %v1816 = vunpack.c.l.b16 %v1088
        %v1817 = vunpack.c.l.b16 %v1089
        %v1818 = vunpack.c.l.b16 %v1090
        %v1819 = vunpack.c.l.b16 %v1091
        %v1820 = vunpack.c.l.b16 %v1092
        %v1821 = vunpack.c.l.b16 %v1093
        %v1822 = vunpack.c.l.b16 %v1094
        %v1823 = vunpack.c.l.b16 %v1095
        %v1824 = vunpack.c.l.b16 %v1096
        %v1825 = vunpack.c.l.b16 %v1097
        %v1826 = vunpack.c.l.b16 %v1098
        %v1827 = vunpack.c.l.b16 %v1099
        %v1828 = vunpack.c.l.b16 %v1100
        %v1829 = vunpack.c.l.b16 %v1101
        %v1830 = vunpack.c.l.b16 %v1102
        %v1831 = vunpack.c.l.b16 %v1103
        %v1832 = vunpack.c.l.b16 %v1104
        %v1833 = vunpack.c.l.b16 %v1105
        %v1834 = vunpack.c.l.b16 %v1106
        %v1835 = vunpack.c.l.b16 %v1107
        %v1836 = vunpack.c.l.b16 %v1108
        %v1837 = vunpack.c.l.b16 %v1109
        %v1838 = vunpack.c.l.b16 %v1110
        %v1839 = vunpack.c.l.b16 %v1111
        %v1840 = vunpack.c.l.b16 %v1112
        %v1841 = vunpack.c.l.b16 %v1113
        %v1842 = vunpack.c.l.b16 %v1114
        %v1843 = vunpack.c.l.b16 %v1115
        %v1844 = vunpack.c.l.b16 %v1116
        %v1845 = vunpack.c.l.b16 %v1117
        %v1846 = vunpack.c.l.b16 %v1118
        %v1847 = vunpack.c.l.b16 %v1119
        %v1848 = vunpack.c.l.b16 %v1120
        %v1849 = vunpack.c.l.b16 %v1121
        %v1850 = vunpack.c.l.b16 %v1122
        %v1851 = vunpack.c.l.b16 %v1123
        %v1852 = vunpack.c.l.b16 %v1124
        %v1853 = vunpack.c.l.b16 %v1125
        %v1854 = vunpack.c.l.b16 %v1126
        %v1855 = vunpack.c.l.b16 %v1127
        %v1856 = vunpack.c.l.b16 %v1128
        %v1857 = vunpack.c.l.b16 %v1129
        %v1858 = vunpack.c.l.b16 %v1130
        %v1859 = vunpack.c.l.b16 %v1131
        %v1860 = vunpack.c.l.b16 %v1132
        %v1861 = vunpack.c.l.b16 %v1133
        %v1862 = vunpack.c.l.b16 %v1134
        %v1863 = vunpack.c.l.b16 %v1135
        %v1864 = vunpack.c.l.b16 %v1136
        %v1865 = vunpack.c.l.b16 %v1137
        %v1866 = vunpack.c.l.b16 %v1138
        %v1867 = vunpack.c.l.b16 %v1139
        %v1868 = vunpack.c.l.b16 %v1140
        %v1869 = vunpack.c.l.b16 %v1141
        %v1870 = vunpack.c.l.b16 %v1142
        %v1871 = vunpack.c.l.b16 %v1143
        %v1872 = vunpack.c.l.b16 %v1144
        %v1873 = vunpack.c.l.b16 %v1145
        %v1874 = vunpack.c.l.b16 %v1146
        %v1875 = vunpack.c.l.b16 %v1147
        %v1876 = vunpack.c.l.b16 %v1148
        %v1877 = vunpack.c.l.b16 %v1149
        %v1878 = vunpack.c.l.b16 %v1150
        %v1879 = vunpack.c.l.b16 %v1151
        %v1880 = vunpack.c.l.b16 %v1152
        %v1881 = vunpack.c.l.b16 %v1153
        %v1882 = vunpack.c.l.b16 %v1154
        %v1883 = vunpack.c.l.b16 %v1155
        %v1884 = vunpack.c.l.b16 %v1156
        %v1885 = vunpack.c.l.b16 %v1157
        %v1886 = vunpack.c.l.b16 %v1158
        %v1887 = vunpack.c.l.b16 %v1159
        %v1888 = vunpack.c.l.b16 %v1160
        %v1889 = vunpack.c.l.b16 %v1161
        %v1890 = vunpack.c.l.b16 %v1162
        %v1891 = vunpack.c.l.b16 %v1163
        %v1892 = vpack.c.b16 %v1781, %v1780
        %v1893 = vpack.c.b16 %v1783, %v1782
        %v1894 = vpack.c.b16 %v1785, %v1784
        %v1895 = vpack.c.b16 %v1787, %v1786
        %v1896 = vpack.c.b16 %v1789, %v1788
        %v1897 = vpack.c.b16 %v1791, %v1790
        %v1898 = vpack.c.b16 %v1793, %v1792
        %v1899 = vpack.c.b16 %v1795, %v1794
        %v1900 = vpack.c.b16 %v1797, %v1796
        %v1901 = vpack.c.b16 %v1799, %v1798
        %v1902 = vpack.c.b16 %v1801, %v1800
        %v1903 = vpack.c.b16 %v1803, %v1802
        %v1904 = vpack.c.b16 %v1805, %v1804
        %v1905 = vpack.c.b16 %v1807, %v1806
        %v1906 = vpack.c.b16 %v1809, %v1808
        %v1907 = vpack.c.b16 %v1811, %v1810
        %v1908 = vpack.c.b16 %v1813, %v1812
        %v1909 = vpack.c.b16 %v1815, %v1814
        %v1910 = vpack.c.b16 %v1817, %v1816
        %v1911 = vpack.c.b16 %v1819, %v1818
        %v1912 = vpack.c.b16 %v1821, %v1820
        %v1913 = vpack.c.b16 %v1823, %v1822
        %v1914 = vpack.c.b16 %v1825, %v1824
        %v1915 = vpack.c.b16 %v1827, %v1826
        %v1916 = vpack.c.b16 %v1829, %v1828
        %v1917 = vpack.c.b16 %v1831, %v1830
        %v1918 = vpack.c.b16 %v1833, %v1832
        %v1919 = vpack.c.b16 %v1835, %v1834
        %v1920 = vpack.c.b16 %v1837, %v1836
        %v1921 = vpack.c.b16 %v1839, %v1838
        %v1922 = vpack.c.b16 %v1841, %v1840
        %v1923 = vpack.c.b16 %v1843, %v1842
        %v1924 = vpack.c.b16 %v1845, %v1844
        %v1925 = vpack.c.b16 %v1847, %v1846
        %v1926 = vpack.c.b16 %v1849, %v1848
        %v1927 = vpack.c.b16 %v1851, %v1850
        %v1928 = vpack.c.b16 %v1853, %v1852
        %v1929 = vpack.c.b16 %v1855, %v1854
        %v1930 = vpack.c.b16 %v1857, %v1856
        %v1931 = vpack.c.b16 %v1859, %v1858
        %v1932 = vpack.c.b16 %v1861, %v1860
        %v1933 = vpack.c.b16 %v1863, %v1862
        %v1934 = vpack.c.b16 %v1865, %v1864
        %v1935 = vpack.c.b16 %v1867, %v1866
        %v1936 = vpack.c.b16 %v1869, %v1868
        %v1937 = vpack.c.b16 %v1871, %v1870
        %v1938 = vpack.c.b16 %v1873, %v1872
        %v1939 = vpack.c.b16 %v1875, %v1874
        %v1940 = vpack.c.b16 %v1877, %v1876
        %v1941 = vpack.c.b16 %v1879, %v1878
        %v1942 = vpack.c.b16 %v1881, %v1880
        %v1943 = vpack.c.b16 %v1883, %v1882
        %v1944 = vpack.c.b16 %v1885, %v1884
        %v1945 = vpack.c.b16 %v1887, %v1886
        %v1946 = vpack.c.b16 %v1889, %v1888
        %v1947 = vpack.c.b16 %v1891, %v1890
        %2004 = vmatprep.subr.bf16.mxu0 0
        %2005 = vmatpush1.bf16.msra.mxu0 %v1892
        %2006 = vmatprep.subr.bf16.mxu0 0
        %2007 = vmatpush1.bf16.msra.mxu0 %v1893
        %2008 = vmatprep.subr.bf16.mxu0 0
        %2009 = vmatpush1.bf16.msra.mxu0 %v1894
        %2010 = vmatprep.subr.bf16.mxu0 0
        %2011 = vmatpush1.bf16.msra.mxu0 %v1895
        %2012 = vmatprep.subr.bf16.mxu0 0
        %2013 = vmatpush1.bf16.msra.mxu0 %v1896
        %2014 = vmatprep.subr.bf16.mxu0 0
        %2015 = vmatpush1.bf16.msra.mxu0 %v1897
        %2016 = vmatprep.subr.bf16.mxu0 0
        %2017 = vmatpush1.bf16.msra.mxu0 %v1898
        %2018 = vmatprep.subr.bf16.mxu0 0
        %2019 = vmatpush1.bf16.msra.mxu0 %v1899
        %2020 = vmatprep.subr.bf16.mxu0 0
        %2021 = vmatpush1.bf16.msra.mxu0 %v1900
        %2022 = vmatprep.subr.bf16.mxu0 0
        %2023 = vmatpush1.bf16.msra.mxu0 %v1901
        %2024 = vmatprep.subr.bf16.mxu0 0
        %2025 = vmatpush1.bf16.msra.mxu0 %v1902
        %2026 = vmatprep.subr.bf16.mxu0 0
        %2027 = vmatpush1.bf16.msra.mxu0 %v1903
        %2028 = vmatprep.subr.bf16.mxu0 0
        %2029 = vmatpush1.bf16.msra.mxu0 %v1904
        %2030 = vmatprep.subr.bf16.mxu0 0
        %2031 = vmatpush1.bf16.msra.mxu0 %v1905
        %2032 = vmatprep.subr.bf16.mxu0 0
        %2033 = vmatpush1.bf16.msra.mxu0 %v1906
        %2034 = vmatprep.subr.bf16.mxu0 0
        %2035 = vmatpush1.bf16.msra.mxu0 %v1907
        %2036 = vmatprep.mubr.bf16.mxu0 %v1473
        %2037 = vmatmul.mubr.bf16.gmra.mrb[0].mxu0 %v1472
        %v2038 = vpop.f32.mrb[0].mxu0
        %v2039 = vadd.f32 0.0, %v2038
        %v2040 = vpop.f32.mrb[0].mxu0
        %v2041 = vpop.f32.mrb[0].mxu0
        %v2042 = vadd.f32 0.0, %v2041
        %v2043 = vpop.f32.mrb[0].mxu0
        %2044 = vmatprep.mubr.bf16.mxu0 %v1480
        %2045 = vmatmul.mubr.bf16.gmra.mrb[0].mxu0 %v1479
        %v2046 = vpop.f32.mrb[0].mxu0
        %v2047 = vadd.f32 0.0, %v2046
        %v2048 = vpop.f32.mrb[0].mxu0
        %v2049 = vpop.f32.mrb[0].mxu0
        %v2050 = vadd.f32 0.0, %v2049
        %v2051 = vpop.f32.mrb[0].mxu0
        %2052 = vmatprep.mubr.bf16.mxu0 %v1487
        %2053 = vmatmul.mubr.bf16.gmra.mrb[0].mxu0 %v1486
        %v2054 = vpop.f32.mrb[0].mxu0
        %v2055 = vadd.f32 0.0, %v2054
        %v2056 = vpop.f32.mrb[0].mxu0
        %v2057 = vpop.f32.mrb[0].mxu0
        %v2058 = vadd.f32 0.0, %v2057
        %v2059 = vpop.f32.mrb[0].mxu0
        %2060 = vmatprep.mubr.bf16.mxu0 %v1494
        %2061 = vmatmul.mubr.bf16.gmra.mrb[0].mxu0 %v1493
        %v2062 = vpop.f32.mrb[0].mxu0
        %v2063 = vadd.f32 0.0, %v2062
        %v2064 = vpop.f32.mrb[0].mxu0
        %v2065 = vpop.f32.mrb[0].mxu0
        %v2066 = vadd.f32 0.0, %v2065
        %v2067 = vpop.f32.mrb[0].mxu0
        %2068 = vmatprep.mubr.bf16.mxu0 %v1501
        %2069 = vmatmul.mubr.bf16.gmra.mrb[0].mxu0 %v1500
        %v2070 = vpop.f32.mrb[0].mxu0
        %v2071 = vadd.f32 0.0, %v2070
        %v2072 = vpop.f32.mrb[0].mxu0
        %v2073 = vpop.f32.mrb[0].mxu0
        %v2074 = vadd.f32 0.0, %v2073
        %v2075 = vpop.f32.mrb[0].mxu0
        %2076 = vmatprep.mubr.bf16.mxu0 %v1508
        %2077 = vmatmul.mubr.bf16.gmra.mrb[0].mxu0 %v1507
        %v2078 = vpop.f32.mrb[0].mxu0
        %v2079 = vadd.f32 0.0, %v2078
        %v2080 = vpop.f32.mrb[0].mxu0
        %v2081 = vpop.f32.mrb[0].mxu0
        %v2082 = vadd.f32 0.0, %v2081
        %v2083 = vpop.f32.mrb[0].mxu0
        %2084 = vmatprep.mubr.bf16.mxu0 %v1515
        %2085 = vmatmul.mubr.bf16.gmra.mrb[0].mxu0 %v1514
        %v2086 = vpop.f32.mrb[0].mxu0
        %v2087 = vadd.f32 0.0, %v2086
        %v2088 = vpop.f32.mrb[0].mxu0
        %v2089 = vpop.f32.mrb[0].mxu0
        %v2090 = vadd.f32 0.0, %v2089
        %v2091 = vpop.f32.mrb[0].mxu0
        %2092 = vmatprep.mubr.bf16.mxu0 %v1522
        %2093 = vmatmul.mubr.bf16.gmra.mrb[0].mxu0 %v1521
        %v2094 = vpop.f32.mrb[0].mxu0
        %v2095 = vadd.f32 0.0, %v2094
        %v2096 = vpop.f32.mrb[0].mxu0
        %v2097 = vpop.f32.mrb[0].mxu0
        %v2098 = vadd.f32 0.0, %v2097
        %v2099 = vpop.f32.mrb[0].mxu0
        %2100 = vmatprep.mubr.bf16.mxu0 %v1529
        %2101 = vmatmul.mubr.bf16.gmra.mrb[0].mxu0 %v1528
        %v2102 = vpop.f32.mrb[0].mxu0
        %v2103 = vadd.f32 0.0, %v2102
        %v2104 = vpop.f32.mrb[0].mxu0
        %v2105 = vpop.f32.mrb[0].mxu0
        %v2106 = vadd.f32 0.0, %v2105
        %v2107 = vpop.f32.mrb[0].mxu0
        %2108 = vmatprep.mubr.bf16.mxu0 %v1536
        %2109 = vmatmul.mubr.bf16.gmra.mrb[0].mxu0 %v1535
        %v2110 = vpop.f32.mrb[0].mxu0
        %v2111 = vadd.f32 0.0, %v2110
        %v2112 = vpop.f32.mrb[0].mxu0
        %v2113 = vpop.f32.mrb[0].mxu0
        %v2114 = vadd.f32 0.0, %v2113
        %v2115 = vpop.f32.mrb[0].mxu0
        %2116 = vmatprep.mubr.bf16.mxu0 %v1543
        %2117 = vmatmul.mubr.bf16.gmra.mrb[0].mxu0 %v1542
        %v2118 = vpop.f32.mrb[0].mxu0
        %v2119 = vadd.f32 0.0, %v2118
        %v2120 = vpop.f32.mrb[0].mxu0
        %v2121 = vpop.f32.mrb[0].mxu0
        %v2122 = vadd.f32 0.0, %v2121
        %v2123 = vpop.f32.mrb[0].mxu0
        %2124 = vmatprep.mubr.bf16.mxu0 %v1550
        %2125 = vmatmul.mubr.bf16.gmra.mrb[0].mxu0 %v1549
        %v2126 = vpop.f32.mrb[0].mxu0
        %v2127 = vadd.f32 0.0, %v2126
        %v2128 = vpop.f32.mrb[0].mxu0
        %v2129 = vpop.f32.mrb[0].mxu0
        %v2130 = vadd.f32 0.0, %v2129
        %v2131 = vpop.f32.mrb[0].mxu0
        %2132 = vmatprep.mubr.bf16.mxu0 %v1557
        %2133 = vmatmul.mubr.bf16.gmra.mrb[0].mxu0 %v1556
        %v2134 = vpop.f32.mrb[0].mxu0
        %v2135 = vadd.f32 0.0, %v2134
        %v2136 = vpop.f32.mrb[0].mxu0
        %v2137 = vpop.f32.mrb[0].mxu0
        %v2138 = vadd.f32 0.0, %v2137
        %v2139 = vpop.f32.mrb[0].mxu0
        %2140 = vmatprep.mubr.bf16.mxu0 %v1564
        %2141 = vmatmul.mubr.bf16.gmra.mrb[0].mxu0 %v1563
        %v2142 = vpop.f32.mrb[0].mxu0
        %v2143 = vadd.f32 0.0, %v2142
        %v2144 = vpop.f32.mrb[0].mxu0
        %v2145 = vpop.f32.mrb[0].mxu0
        %v2146 = vadd.f32 0.0, %v2145
        %v2147 = vpop.f32.mrb[0].mxu0
        %2148 = vdwg.mxu0
        %2149 = vmatprep.subr.bf16.mxu0 0
        %2150 = vmatpush1.bf16.msra.mxu0 %v1908
        %2151 = vmatprep.subr.bf16.mxu0 0
        %2152 = vmatpush1.bf16.msra.mxu0 %v1909
        %2153 = vmatprep.subr.bf16.mxu0 0
        %2154 = vmatpush1.bf16.msra.mxu0 %v1910
        %2155 = vmatprep.subr.bf16.mxu0 0
        %2156 = vmatpush1.bf16.msra.mxu0 %v1911
        %2157 = vmatprep.subr.bf16.mxu0 0
        %2158 = vmatpush1.bf16.msra.mxu0 %v1912
        %2159 = vmatprep.subr.bf16.mxu0 0
        %2160 = vmatpush1.bf16.msra.mxu0 %v1913
        %2161 = vmatprep.subr.bf16.mxu0 0
        %2162 = vmatpush1.bf16.msra.mxu0 %v1914
        %2163 = vmatprep.subr.bf16.mxu0 0
        %2164 = vmatpush1.bf16.msra.mxu0 %v1915
        %2165 = vmatprep.subr.bf16.mxu0 0
        %2166 = vmatpush1.bf16.msra.mxu0 %v1916
        %2167 = vmatprep.subr.bf16.mxu0 0
        %2168 = vmatpush1.bf16.msra.mxu0 %v1917
        %2169 = vmatprep.subr.bf16.mxu0 0
        %2170 = vmatpush1.bf16.msra.mxu0 %v1918
        %2171 = vmatprep.subr.bf16.mxu0 0
        %2172 = vmatpush1.bf16.msra.mxu0 %v1919
        %2173 = vmatprep.subr.bf16.mxu0 0
        %2174 = vmatpush1.bf16.msra.mxu0 %v1920
        %2175 = vmatprep.subr.bf16.mxu0 0
        %2176 = vmatpush1.bf16.msra.mxu0 %v1921
        %2177 = vmatprep.subr.bf16.mxu0 0
        %2178 = vmatpush1.bf16.msra.mxu0 %v1922
        %2179 = vmatprep.subr.bf16.mxu0 0
        %2180 = vmatpush1.bf16.msra.mxu0 %v1923
        %2181 = vmatprep.mubr.bf16.mxu0 %v1475
        %2182 = vmatmul.mubr.bf16.gmra.mrb[0].mxu0 %v1474
        %v2183 = vpop.f32.mrb[0].mxu0
        %v2184 = vadd.f32 %v2039, %v2183
        %v2185 = vpop.f32.mrb[0].mxu0
        %v2186 = vpop.f32.mrb[0].mxu0
        %v2187 = vadd.f32 %v2042, %v2186
        %v2188 = vpop.f32.mrb[0].mxu0
        %2189 = vmatprep.mubr.bf16.mxu0 %v1482
        %2190 = vmatmul.mubr.bf16.gmra.mrb[0].mxu0 %v1481
        %v2191 = vpop.f32.mrb[0].mxu0
        %v2192 = vadd.f32 %v2047, %v2191
        %v2193 = vpop.f32.mrb[0].mxu0
        %v2194 = vpop.f32.mrb[0].mxu0
        %v2195 = vadd.f32 %v2050, %v2194
        %v2196 = vpop.f32.mrb[0].mxu0
        %2197 = vmatprep.mubr.bf16.mxu0 %v1489
        %2198 = vmatmul.mubr.bf16.gmra.mrb[0].mxu0 %v1488
        %v2199 = vpop.f32.mrb[0].mxu0
        %v2200 = vadd.f32 %v2055, %v2199
        %v2201 = vpop.f32.mrb[0].mxu0
        %v2202 = vpop.f32.mrb[0].mxu0
        %v2203 = vadd.f32 %v2058, %v2202
        %v2204 = vpop.f32.mrb[0].mxu0
        %2205 = vmatprep.mubr.bf16.mxu0 %v1496
        %2206 = vmatmul.mubr.bf16.gmra.mrb[0].mxu0 %v1495
        %v2207 = vpop.f32.mrb[0].mxu0
        %v2208 = vadd.f32 %v2063, %v2207
        %v2209 = vpop.f32.mrb[0].mxu0
        %v2210 = vpop.f32.mrb[0].mxu0
        %v2211 = vadd.f32 %v2066, %v2210
        %v2212 = vpop.f32.mrb[0].mxu0
        %2213 = vmatprep.mubr.bf16.mxu0 %v1503
        %2214 = vmatmul.mubr.bf16.gmra.mrb[0].mxu0 %v1502
        %v2215 = vpop.f32.mrb[0].mxu0
        %v2216 = vadd.f32 %v2071, %v2215
        %v2217 = vpop.f32.mrb[0].mxu0
        %v2218 = vpop.f32.mrb[0].mxu0
        %v2219 = vadd.f32 %v2074, %v2218
        %v2220 = vpop.f32.mrb[0].mxu0
        %2221 = vmatprep.mubr.bf16.mxu0 %v1510
        %2222 = vmatmul.mubr.bf16.gmra.mrb[0].mxu0 %v1509
        %v2223 = vpop.f32.mrb[0].mxu0
        %v2224 = vadd.f32 %v2079, %v2223
        %v2225 = vpop.f32.mrb[0].mxu0
        %v2226 = vpop.f32.mrb[0].mxu0
        %v2227 = vadd.f32 %v2082, %v2226
        %v2228 = vpop.f32.mrb[0].mxu0
        %2229 = vmatprep.mubr.bf16.mxu0 %v1517
        %2230 = vmatmul.mubr.bf16.gmra.mrb[0].mxu0 %v1516
        %v2231 = vpop.f32.mrb[0].mxu0
        %v2232 = vadd.f32 %v2087, %v2231
        %v2233 = vpop.f32.mrb[0].mxu0
        %v2234 = vpop.f32.mrb[0].mxu0
        %v2235 = vadd.f32 %v2090, %v2234
        %v2236 = vpop.f32.mrb[0].mxu0
        %2237 = vmatprep.mubr.bf16.mxu0 %v1524
        %2238 = vmatmul.mubr.bf16.gmra.mrb[0].mxu0 %v1523
        %v2239 = vpop.f32.mrb[0].mxu0
        %v2240 = vadd.f32 %v2095, %v2239
        %v2241 = vpop.f32.mrb[0].mxu0
        %v2242 = vpop.f32.mrb[0].mxu0
        %v2243 = vadd.f32 %v2098, %v2242
        %v2244 = vpop.f32.mrb[0].mxu0
        %2245 = vmatprep.mubr.bf16.mxu0 %v1531
        %2246 = vmatmul.mubr.bf16.gmra.mrb[0].mxu0 %v1530
        %v2247 = vpop.f32.mrb[0].mxu0
        %v2248 = vadd.f32 %v2103, %v2247
        %v2249 = vpop.f32.mrb[0].mxu0
        %v2250 = vpop.f32.mrb[0].mxu0
        %v2251 = vadd.f32 %v2106, %v2250
        %v2252 = vpop.f32.mrb[0].mxu0
        %2253 = vmatprep.mubr.bf16.mxu0 %v1538
        %2254 = vmatmul.mubr.bf16.gmra.mrb[0].mxu0 %v1537
        %v2255 = vpop.f32.mrb[0].mxu0
        %v2256 = vadd.f32 %v2111, %v2255
        %v2257 = vpop.f32.mrb[0].mxu0
        %v2258 = vpop.f32.mrb[0].mxu0
        %v2259 = vadd.f32 %v2114, %v2258
        %v2260 = vpop.f32.mrb[0].mxu0
        %2261 = vmatprep.mubr.bf16.mxu0 %v1545
        %2262 = vmatmul.mubr.bf16.gmra.mrb[0].mxu0 %v1544
        %v2263 = vpop.f32.mrb[0].mxu0
        %v2264 = vadd.f32 %v2119, %v2263
        %v2265 = vpop.f32.mrb[0].mxu0
        %v2266 = vpop.f32.mrb[0].mxu0
        %v2267 = vadd.f32 %v2122, %v2266
        %v2268 = vpop.f32.mrb[0].mxu0
        %2269 = vmatprep.mubr.bf16.mxu0 %v1552
        %2270 = vmatmul.mubr.bf16.gmra.mrb[0].mxu0 %v1551
        %v2271 = vpop.f32.mrb[0].mxu0
        %v2272 = vadd.f32 %v2127, %v2271
        %v2273 = vpop.f32.mrb[0].mxu0
        %v2274 = vpop.f32.mrb[0].mxu0
        %v2275 = vadd.f32 %v2130, %v2274
        %v2276 = vpop.f32.mrb[0].mxu0
        %2277 = vmatprep.mubr.bf16.mxu0 %v1559
        %2278 = vmatmul.mubr.bf16.gmra.mrb[0].mxu0 %v1558
        %v2279 = vpop.f32.mrb[0].mxu0
        %v2280 = vadd.f32 %v2135, %v2279
        %v2281 = vpop.f32.mrb[0].mxu0
        %v2282 = vpop.f32.mrb[0].mxu0
        %v2283 = vadd.f32 %v2138, %v2282
        %v2284 = vpop.f32.mrb[0].mxu0
        %2285 = vmatprep.mubr.bf16.mxu0 %v1566
        %2286 = vmatmul.mubr.bf16.gmra.mrb[0].mxu0 %v1565
        %v2287 = vpop.f32.mrb[0].mxu0
        %v2288 = vadd.f32 %v2143, %v2287
        %v2289 = vpop.f32.mrb[0].mxu0
        %v2290 = vpop.f32.mrb[0].mxu0
        %v2291 = vadd.f32 %v2146, %v2290
        %v2292 = vpop.f32.mrb[0].mxu0
        %2293 = vdwg.mxu0
        %2294 = vmatprep.subr.bf16.mxu0 0
        %2295 = vmatpush1.bf16.msra.mxu0 %v1924
        %2296 = vmatprep.subr.bf16.mxu0 0
        %2297 = vmatpush1.bf16.msra.mxu0 %v1925
        %2298 = vmatprep.subr.bf16.mxu0 0
        %2299 = vmatpush1.bf16.msra.mxu0 %v1926
        %2300 = vmatprep.subr.bf16.mxu0 0
        %2301 = vmatpush1.bf16.msra.mxu0 %v1927
        %2302 = vmatprep.subr.bf16.mxu0 0
        %2303 = vmatpush1.bf16.msra.mxu0 %v1928
        %2304 = vmatprep.subr.bf16.mxu0 0
        %2305 = vmatpush1.bf16.msra.mxu0 %v1929
        %2306 = vmatprep.subr.bf16.mxu0 0
        %2307 = vmatpush1.bf16.msra.mxu0 %v1930
        %2308 = vmatprep.subr.bf16.mxu0 0
        %2309 = vmatpush1.bf16.msra.mxu0 %v1931
        %2310 = vmatprep.subr.bf16.mxu0 0
        %2311 = vmatpush1.bf16.msra.mxu0 %v1932
        %2312 = vmatprep.subr.bf16.mxu0 0
        %2313 = vmatpush1.bf16.msra.mxu0 %v1933
        %2314 = vmatprep.subr.bf16.mxu0 0
        %2315 = vmatpush1.bf16.msra.mxu0 %v1934
        %2316 = vmatprep.subr.bf16.mxu0 0
        %2317 = vmatpush1.bf16.msra.mxu0 %v1935
        %2318 = vmatprep.subr.bf16.mxu0 0
        %2319 = vmatpush1.bf16.msra.mxu0 %v1936
        %2320 = vmatprep.subr.bf16.mxu0 0
        %2321 = vmatpush1.bf16.msra.mxu0 %v1937
        %2322 = vmatprep.subr.bf16.mxu0 0
        %2323 = vmatpush1.bf16.msra.mxu0 %v1938
        %2324 = vmatprep.subr.bf16.mxu0 0
        %2325 = vmatpush1.bf16.msra.mxu0 %v1939
        %2326 = vmatprep.mubr.bf16.mxu0 %v1477
        %2327 = vmatmul.mubr.bf16.gmra.mrb[0].mxu0 %v1476
        %v2328 = vpop.f32.mrb[0].mxu0
        %v2329 = vadd.f32 %v2184, %v2328
        %v2330 = vpop.f32.mrb[0].mxu0
        %v2331 = vpop.f32.mrb[0].mxu0
        %v2332 = vadd.f32 %v2187, %v2331
        %v2333 = vpop.f32.mrb[0].mxu0
        %2334 = vmatprep.mubr.bf16.mxu0 %v1484
        %2335 = vmatmul.mubr.bf16.gmra.mrb[0].mxu0 %v1483
        %v2336 = vpop.f32.mrb[0].mxu0
        %v2337 = vadd.f32 %v2192, %v2336
        %v2338 = vpop.f32.mrb[0].mxu0
        %v2339 = vpop.f32.mrb[0].mxu0
        %v2340 = vadd.f32 %v2195, %v2339
        %v2341 = vpop.f32.mrb[0].mxu0
        %2342 = vmatprep.mubr.bf16.mxu0 %v1491
        %2343 = vmatmul.mubr.bf16.gmra.mrb[0].mxu0 %v1490
        %v2344 = vpop.f32.mrb[0].mxu0
        %v2345 = vadd.f32 %v2200, %v2344
        %v2346 = vpop.f32.mrb[0].mxu0
        %v2347 = vpop.f32.mrb[0].mxu0
        %v2348 = vadd.f32 %v2203, %v2347
        %v2349 = vpop.f32.mrb[0].mxu0
        %2350 = vmatprep.mubr.bf16.mxu0 %v1498
        %2351 = vmatmul.mubr.bf16.gmra.mrb[0].mxu0 %v1497
        %v2352 = vpop.f32.mrb[0].mxu0
        %v2353 = vadd.f32 %v2208, %v2352
        %v2354 = vpop.f32.mrb[0].mxu0
        %v2355 = vpop.f32.mrb[0].mxu0
        %v2356 = vadd.f32 %v2211, %v2355
        %v2357 = vpop.f32.mrb[0].mxu0
        %2358 = vmatprep.mubr.bf16.mxu0 %v1505
        %2359 = vmatmul.mubr.bf16.gmra.mrb[0].mxu0 %v1504
        %v2360 = vpop.f32.mrb[0].mxu0
        %v2361 = vadd.f32 %v2216, %v2360
        %v2362 = vpop.f32.mrb[0].mxu0
        %v2363 = vpop.f32.mrb[0].mxu0
        %v2364 = vadd.f32 %v2219, %v2363
        %v2365 = vpop.f32.mrb[0].mxu0
        %2366 = vmatprep.mubr.bf16.mxu0 %v1512
        %2367 = vmatmul.mubr.bf16.gmra.mrb[0].mxu0 %v1511
        %v2368 = vpop.f32.mrb[0].mxu0
        %v2369 = vadd.f32 %v2224, %v2368
        %v2370 = vpop.f32.mrb[0].mxu0
        %v2371 = vpop.f32.mrb[0].mxu0
        %v2372 = vadd.f32 %v2227, %v2371
        %v2373 = vpop.f32.mrb[0].mxu0
        %2374 = vmatprep.mubr.bf16.mxu0 %v1519
        %2375 = vmatmul.mubr.bf16.gmra.mrb[0].mxu0 %v1518
        %v2376 = vpop.f32.mrb[0].mxu0
        %v2377 = vadd.f32 %v2232, %v2376
        %v2378 = vpop.f32.mrb[0].mxu0
        %v2379 = vpop.f32.mrb[0].mxu0
        %v2380 = vadd.f32 %v2235, %v2379
        %v2381 = vpop.f32.mrb[0].mxu0
        %2382 = vmatprep.mubr.bf16.mxu0 %v1526
        %2383 = vmatmul.mubr.bf16.gmra.mrb[0].mxu0 %v1525
        %v2384 = vpop.f32.mrb[0].mxu0
        %v2385 = vadd.f32 %v2240, %v2384
        %v2386 = vpop.f32.mrb[0].mxu0
        %v2387 = vpop.f32.mrb[0].mxu0
        %v2388 = vadd.f32 %v2243, %v2387
        %v2389 = vpop.f32.mrb[0].mxu0
        %2390 = vmatprep.mubr.bf16.mxu0 %v1533
        %2391 = vmatmul.mubr.bf16.gmra.mrb[0].mxu0 %v1532
        %v2392 = vpop.f32.mrb[0].mxu0
        %v2393 = vadd.f32 %v2248, %v2392
        %v2394 = vpop.f32.mrb[0].mxu0
        %v2395 = vpop.f32.mrb[0].mxu0
        %v2396 = vadd.f32 %v2251, %v2395
        %v2397 = vpop.f32.mrb[0].mxu0
        %2398 = vmatprep.mubr.bf16.mxu0 %v1540
        %2399 = vmatmul.mubr.bf16.gmra.mrb[0].mxu0 %v1539
        %v2400 = vpop.f32.mrb[0].mxu0
        %v2401 = vadd.f32 %v2256, %v2400
        %v2402 = vpop.f32.mrb[0].mxu0
        %v2403 = vpop.f32.mrb[0].mxu0
        %v2404 = vadd.f32 %v2259, %v2403
        %v2405 = vpop.f32.mrb[0].mxu0
        %2406 = vmatprep.mubr.bf16.mxu0 %v1547
        %2407 = vmatmul.mubr.bf16.gmra.mrb[0].mxu0 %v1546
        %v2408 = vpop.f32.mrb[0].mxu0
        %v2409 = vadd.f32 %v2264, %v2408
        %v2410 = vpop.f32.mrb[0].mxu0
        %v2411 = vpop.f32.mrb[0].mxu0
        %v2412 = vadd.f32 %v2267, %v2411
        %v2413 = vpop.f32.mrb[0].mxu0
        %2414 = vmatprep.mubr.bf16.mxu0 %v1554
        %2415 = vmatmul.mubr.bf16.gmra.mrb[0].mxu0 %v1553
        %v2416 = vpop.f32.mrb[0].mxu0
        %v2417 = vadd.f32 %v2272, %v2416
        %v2418 = vpop.f32.mrb[0].mxu0
        %v2419 = vpop.f32.mrb[0].mxu0
        %v2420 = vadd.f32 %v2275, %v2419
        %v2421 = vpop.f32.mrb[0].mxu0
        %2422 = vmatprep.mubr.bf16.mxu0 %v1561
        %2423 = vmatmul.mubr.bf16.gmra.mrb[0].mxu0 %v1560
        %v2424 = vpop.f32.mrb[0].mxu0
        %v2425 = vadd.f32 %v2280, %v2424
        %v2426 = vpop.f32.mrb[0].mxu0
        %v2427 = vpop.f32.mrb[0].mxu0
        %v2428 = vadd.f32 %v2283, %v2427
        %v2429 = vpop.f32.mrb[0].mxu0
        %2430 = vmatprep.mubr.bf16.mxu0 %v1568
        %2431 = vmatmul.mubr.bf16.gmra.mrb[0].mxu0 %v1567
        %v2432 = vpop.f32.mrb[0].mxu0
        %v2433 = vadd.f32 %v2288, %v2432
        %v2434 = vpop.f32.mrb[0].mxu0
        %v2435 = vpop.f32.mrb[0].mxu0
        %v2436 = vadd.f32 %v2291, %v2435
        %v2437 = vpop.f32.mrb[0].mxu0
        %2438 = vdwg.mxu0
        %2439 = vmatprep.subr.bf16.mxu0 0
        %2440 = vmatpush1.bf16.msra.mxu0 %v1940
        %2441 = vmatprep.subr.bf16.mxu0 0
        %2442 = vmatpush1.bf16.msra.mxu0 %v1941
        %2443 = vmatprep.subr.bf16.mxu0 0
        %2444 = vmatpush1.bf16.msra.mxu0 %v1942
        %2445 = vmatprep.subr.bf16.mxu0 0
        %2446 = vmatpush1.bf16.msra.mxu0 %v1943
        %2447 = vmatprep.subr.bf16.mxu0 0
        %2448 = vmatpush1.bf16.msra.mxu0 %v1944
        %2449 = vmatprep.subr.bf16.mxu0 0
        %2450 = vmatpush1.bf16.msra.mxu0 %v1945
        %2451 = vmatprep.subr.bf16.mxu0 0
        %2452 = vmatpush1.bf16.msra.mxu0 %v1946
        %2453 = vmatprep.subr.bf16.mxu0 0
        %2454 = vmatpush1.bf16.msra.mxu0 %v1947
        %2455 = vmatprep.subr.bf16.mxu0 0
        %2456 = vmatpush1.bf16.msra.mxu0 0
        %2457 = vmatprep.subr.bf16.mxu0 0
        %2458 = vmatpush1.bf16.msra.mxu0 0
        %2459 = vmatprep.subr.bf16.mxu0 0
        %2460 = vmatpush1.bf16.msra.mxu0 0
        %2461 = vmatprep.subr.bf16.mxu0 0
        %2462 = vmatpush1.bf16.msra.mxu0 0
        %2463 = vmatprep.subr.bf16.mxu0 0
        %2464 = vmatpush1.bf16.msra.mxu0 0
        %2465 = vmatprep.subr.bf16.mxu0 0
        %2466 = vmatpush1.bf16.msra.mxu0 0
        %2467 = vmatprep.subr.bf16.mxu0 0
        %2468 = vmatpush1.bf16.msra.mxu0 0
        %2469 = vmatprep.subr.bf16.mxu0 0
        %2470 = vmatpush1.bf16.msra.mxu0 0
        %2471 = vmatprep.mubr.bf16.mxu0 0
        %2472 = vmatmul.mubr.bf16.gmra.mrb[0].mxu0 %v1478
        %v2473 = vpop.f32.mrb[0].mxu0
        %v2474 = vadd.f32 %v2329, %v2473
        %v2475 = vpop.f32.mrb[0].mxu0
        %v2476 = vpop.f32.mrb[0].mxu0
        %v2477 = vadd.f32 %v2332, %v2476
        %v2478 = vpop.f32.mrb[0].mxu0
        %2479 = vmatprep.mubr.bf16.mxu0 0
        %2480 = vmatmul.mubr.bf16.gmra.mrb[0].mxu0 %v1485
        %v2481 = vpop.f32.mrb[0].mxu0
        %v2482 = vadd.f32 %v2337, %v2481
        %v2483 = vpop.f32.mrb[0].mxu0
        %v2484 = vpop.f32.mrb[0].mxu0
        %v2485 = vadd.f32 %v2340, %v2484
        %v2486 = vpop.f32.mrb[0].mxu0
        %2487 = vmatprep.mubr.bf16.mxu0 0
        %2488 = vmatmul.mubr.bf16.gmra.mrb[0].mxu0 %v1492
        %v2489 = vpop.f32.mrb[0].mxu0
        %v2490 = vadd.f32 %v2345, %v2489
        %v2491 = vpop.f32.mrb[0].mxu0
        %v2492 = vpop.f32.mrb[0].mxu0
        %v2493 = vadd.f32 %v2348, %v2492
        %v2494 = vpop.f32.mrb[0].mxu0
        %2495 = vmatprep.mubr.bf16.mxu0 0
        %2496 = vmatmul.mubr.bf16.gmra.mrb[0].mxu0 %v1499
        %v2497 = vpop.f32.mrb[0].mxu0
        %v2498 = vadd.f32 %v2353, %v2497
        %v2499 = vpop.f32.mrb[0].mxu0
        %v2500 = vpop.f32.mrb[0].mxu0
        %v2501 = vadd.f32 %v2356, %v2500
        %v2502 = vpop.f32.mrb[0].mxu0
        %2503 = vmatprep.mubr.bf16.mxu0 0
        %2504 = vmatmul.mubr.bf16.gmra.mrb[0].mxu0 %v1506
        %v2505 = vpop.f32.mrb[0].mxu0
        %v2506 = vadd.f32 %v2361, %v2505
        %v2507 = vpop.f32.mrb[0].mxu0
        %v2508 = vpop.f32.mrb[0].mxu0
        %v2509 = vadd.f32 %v2364, %v2508
        %v2510 = vpop.f32.mrb[0].mxu0
        %2511 = vmatprep.mubr.bf16.mxu0 0
        %2512 = vmatmul.mubr.bf16.gmra.mrb[0].mxu0 %v1513
        %v2513 = vpop.f32.mrb[0].mxu0
        %v2514 = vadd.f32 %v2369, %v2513
        %v2515 = vpop.f32.mrb[0].mxu0
        %v2516 = vpop.f32.mrb[0].mxu0
        %v2517 = vadd.f32 %v2372, %v2516
        %v2518 = vpop.f32.mrb[0].mxu0
        %2519 = vmatprep.mubr.bf16.mxu0 0
        %2520 = vmatmul.mubr.bf16.gmra.mrb[0].mxu0 %v1520
        %v2521 = vpop.f32.mrb[0].mxu0
        %v2522 = vadd.f32 %v2377, %v2521
        %v2523 = vpop.f32.mrb[0].mxu0
        %v2524 = vpop.f32.mrb[0].mxu0
        %v2525 = vadd.f32 %v2380, %v2524
        %v2526 = vpop.f32.mrb[0].mxu0
        %2527 = vmatprep.mubr.bf16.mxu0 0
        %2528 = vmatmul.mubr.bf16.gmra.mrb[0].mxu0 %v1527
        %v2529 = vpop.f32.mrb[0].mxu0
        %v2530 = vadd.f32 %v2385, %v2529
        %v2531 = vpop.f32.mrb[0].mxu0
        %v2532 = vpop.f32.mrb[0].mxu0
        %v2533 = vadd.f32 %v2388, %v2532
        %v2534 = vpop.f32.mrb[0].mxu0
        %2535 = vmatprep.mubr.bf16.mxu0 0
        %2536 = vmatmul.mubr.bf16.gmra.mrb[0].mxu0 %v1534
        %v2537 = vpop.f32.mrb[0].mxu0
        %v2538 = vadd.f32 %v2393, %v2537
        %v2539 = vpop.f32.mrb[0].mxu0
        %v2540 = vpop.f32.mrb[0].mxu0
        %v2541 = vadd.f32 %v2396, %v2540
        %v2542 = vpop.f32.mrb[0].mxu0
        %2543 = vmatprep.mubr.bf16.mxu0 0
        %2544 = vmatmul.mubr.bf16.gmra.mrb[0].mxu0 %v1541
        %v2545 = vpop.f32.mrb[0].mxu0
        %v2546 = vadd.f32 %v2401, %v2545
        %v2547 = vpop.f32.mrb[0].mxu0
        %v2548 = vpop.f32.mrb[0].mxu0
        %v2549 = vadd.f32 %v2404, %v2548
        %v2550 = vpop.f32.mrb[0].mxu0
        %2551 = vmatprep.mubr.bf16.mxu0 0
        %2552 = vmatmul.mubr.bf16.gmra.mrb[0].mxu0 %v1548
        %v2553 = vpop.f32.mrb[0].mxu0
        %v2554 = vadd.f32 %v2409, %v2553
        %v2555 = vpop.f32.mrb[0].mxu0
        %v2556 = vpop.f32.mrb[0].mxu0
        %v2557 = vadd.f32 %v2412, %v2556
        %v2558 = vpop.f32.mrb[0].mxu0
        %2559 = vmatprep.mubr.bf16.mxu0 0
        %2560 = vmatmul.mubr.bf16.gmra.mrb[0].mxu0 %v1555
        %v2561 = vpop.f32.mrb[0].mxu0
        %v2562 = vadd.f32 %v2417, %v2561
        %v2563 = vpop.f32.mrb[0].mxu0
        %v2564 = vpop.f32.mrb[0].mxu0
        %v2565 = vadd.f32 %v2420, %v2564
        %v2566 = vpop.f32.mrb[0].mxu0
        %2567 = vmatprep.mubr.bf16.mxu0 0
        %2568 = vmatmul.mubr.bf16.gmra.mrb[0].mxu0 %v1562
        %v2569 = vpop.f32.mrb[0].mxu0
        %v2570 = vadd.f32 %v2425, %v2569
        %v2571 = vpop.f32.mrb[0].mxu0
        %v2572 = vpop.f32.mrb[0].mxu0
        %v2573 = vadd.f32 %v2428, %v2572
        %v2574 = vpop.f32.mrb[0].mxu0
        %2575 = vmatprep.mubr.bf16.mxu0 0
        %2576 = vmatmul.mubr.bf16.gmra.mrb[0].mxu0 %v1569
        %v2577 = vpop.f32.mrb[0].mxu0
        %v2578 = vadd.f32 %v2433, %v2577
        %v2579 = vpop.f32.mrb[0].mxu0
        %v2580 = vpop.f32.mrb[0].mxu0
        %v2581 = vadd.f32 %v2436, %v2580
        %v2582 = vpop.f32.mrb[0].mxu0
        %2583 = vdwg.mxu0
        %v2584 = vsel %vm912, 1, 0
        %v2585 = vsel %vm913, 1, 0
        %v2586 = vsel %vm914, 1, 0
        %v2587 = vsel %vm915, 1, 0
        %v2588 = vsel %vm916, 1, 0
        %v2589 = vsel %vm917, 1, 0
        %v2590 = vsel %vm918, 1, 0
        %v2591 = vsel %vm919, 1, 0
        %v2592 = vsel %vm920, 1, 0
        %v2593 = vsel %vm921, 1, 0
        %v2594 = vsel %vm922, 1, 0
        %v2595 = vsel %vm923, 1, 0
        %v2596 = vsel %vm924, 1, 0
        %v2597 = vsel %vm925, 1, 0
        %v2598 = vsel %vm926, 1, 0
        %v2599 = vsel %vm927, 1, 0
        %v2600 = vsel %vm928, 1, 0
        %v2601 = vsel %vm929, 1, 0
        %v2602 = vsel %vm930, 1, 0
        %v2603 = vsel %vm931, 1, 0
        %v2604 = vsel %vm932, 1, 0
        %v2605 = vsel %vm933, 1, 0
        %v2606 = vsel %vm934, 1, 0
        %v2607 = vsel %vm935, 1, 0
        %v2608 = vsel %vm936, 1, 0
        %v2609 = vsel %vm937, 1, 0
        %v2610 = vsel %vm938, 1, 0
        %v2611 = vsel %vm939, 1, 0
        %vm2612 = vcmp.eq.s32.totalorder %v2584, 1
        %vm2613 = vcmp.eq.s32.totalorder %v2585, 1
        %vm2614 = vcmp.eq.s32.totalorder %v2586, 1
        %vm2615 = vcmp.eq.s32.totalorder %v2587, 1
        %vm2616 = vcmp.eq.s32.totalorder %v2588, 1
        %vm2617 = vcmp.eq.s32.totalorder %v2589, 1
        %vm2618 = vcmp.eq.s32.totalorder %v2590, 1
        %vm2619 = vcmp.eq.s32.totalorder %v2591, 1
        %vm2620 = vcmp.eq.s32.totalorder %v2592, 1
        %vm2621 = vcmp.eq.s32.totalorder %v2593, 1
        %vm2622 = vcmp.eq.s32.totalorder %v2594, 1
        %vm2623 = vcmp.eq.s32.totalorder %v2595, 1
        %vm2624 = vcmp.eq.s32.totalorder %v2596, 1
        %vm2625 = vcmp.eq.s32.totalorder %v2597, 1
        %vm2626 = vcmp.eq.s32.totalorder %v2598, 1
        %vm2627 = vcmp.eq.s32.totalorder %v2599, 1
        %vm2628 = vcmp.eq.s32.totalorder %v2600, 1
        %vm2629 = vcmp.eq.s32.totalorder %v2601, 1
        %vm2630 = vcmp.eq.s32.totalorder %v2602, 1
        %vm2631 = vcmp.eq.s32.totalorder %v2603, 1
        %vm2632 = vcmp.eq.s32.totalorder %v2604, 1
        %vm2633 = vcmp.eq.s32.totalorder %v2605, 1
        %vm2634 = vcmp.eq.s32.totalorder %v2606, 1
        %vm2635 = vcmp.eq.s32.totalorder %v2607, 1
        %vm2636 = vcmp.eq.s32.totalorder %v2608, 1
        %vm2637 = vcmp.eq.s32.totalorder %v2609, 1
        %vm2638 = vcmp.eq.s32.totalorder %v2610, 1
        %vm2639 = vcmp.eq.s32.totalorder %v2611, 1
        %v2640 = vsel %vm2612, %v2474, 0.0
        %v2641 = vsel %vm2613, %v2477, 0.0
        %v2642 = vsel %vm2614, %v2482, 0.0
        %v2643 = vsel %vm2615, %v2485, 0.0
        %v2644 = vsel %vm2616, %v2490, 0.0
        %v2645 = vsel %vm2617, %v2493, 0.0
        %v2646 = vsel %vm2618, %v2498, 0.0
        %v2647 = vsel %vm2619, %v2501, 0.0
        %v2648 = vsel %vm2620, %v2506, 0.0
        %v2649 = vsel %vm2621, %v2509, 0.0
        %v2650 = vsel %vm2622, %v2514, 0.0
        %v2651 = vsel %vm2623, %v2517, 0.0
        %v2652 = vsel %vm2624, %v2522, 0.0
        %v2653 = vsel %vm2625, %v2525, 0.0
        %v2654 = vsel %vm2626, %v2530, 0.0
        %v2655 = vsel %vm2627, %v2533, 0.0
        %v2656 = vsel %vm2628, %v2538, 0.0
        %v2657 = vsel %vm2629, %v2541, 0.0
        %v2658 = vsel %vm2630, %v2546, 0.0
        %v2659 = vsel %vm2631, %v2549, 0.0
        %v2660 = vsel %vm2632, %v2554, 0.0
        %v2661 = vsel %vm2633, %v2557, 0.0
        %v2662 = vsel %vm2634, %v2562, 0.0
        %v2663 = vsel %vm2635, %v2565, 0.0
        %v2664 = vsel %vm2636, %v2570, 0.0
        %v2665 = vsel %vm2637, %v2573, 0.0
        %v2666 = vsel %vm2638, %v2578, 0.0
        %v2667 = vsel %vm2639, %v2581, 0.0
        %v2668 = vadd.f32 %v2640, %v2641
        %v2669 = vadd.f32 %v2668, %v2642
        %v2670 = vadd.f32 %v2669, %v2643
        %v2671 = vadd.f32 %v2670, %v2644
        %v2672 = vadd.f32 %v2671, %v2645
        %v2673 = vadd.f32 %v2672, %v2646
        %v2674 = vadd.f32 %v2673, %v2647
        %v2675 = vadd.f32 %v2674, %v2648
        %v2676 = vadd.f32 %v2675, %v2649
        %v2677 = vadd.f32 %v2676, %v2650
        %v2678 = vadd.f32 %v2677, %v2651
        %v2679 = vadd.f32 %v2678, %v2652
        %v2680 = vadd.f32 %v2679, %v2653
        %v2681 = vadd.f32 %v2680, %v2654
        %v2682 = vadd.f32 %v2681, %v2655
        %v2683 = vadd.f32 %v2682, %v2656
        %v2684 = vadd.f32 %v2683, %v2657
        %v2685 = vadd.f32 %v2684, %v2658
        %v2686 = vadd.f32 %v2685, %v2659
        %v2687 = vadd.f32 %v2686, %v2660
        %v2688 = vadd.f32 %v2687, %v2661
        %v2689 = vadd.f32 %v2688, %v2662
        %v2690 = vadd.f32 %v2689, %v2663
        %v2691 = vadd.f32 %v2690, %v2664
        %v2692 = vadd.f32 %v2691, %v2665
        %v2693 = vadd.f32 %v2692, %v2666
        %v2694 = vadd.f32 %v2693, %v2667
        %v2695 = vrot.slane %v2694, 4
        %v2696 = vadd.f32 %v2694, %v2695
        %v2697 = vrot.slane %v2696, 2
        %v2698 = vadd.f32 %v2696, %v2697
        %v2699 = vrot.slane %v2698, 1
        %v2700 = vadd.f32 %v2698, %v2699
        %v2701 = vmul.f32 %v2700, 0.0051020407
        %v2702 = vsub.f32 %v2474, %v2701
        %v2703 = vsub.f32 %v2477, %v2701
        %v2704 = vsub.f32 %v2482, %v2701
        %v2705 = vsub.f32 %v2485, %v2701
        %v2706 = vsub.f32 %v2490, %v2701
        %v2707 = vsub.f32 %v2493, %v2701
        %v2708 = vsub.f32 %v2498, %v2701
        %v2709 = vsub.f32 %v2501, %v2701
        %v2710 = vsub.f32 %v2506, %v2701
        %v2711 = vsub.f32 %v2509, %v2701
        %v2712 = vsub.f32 %v2514, %v2701
        %v2713 = vsub.f32 %v2517, %v2701
        %v2714 = vsub.f32 %v2522, %v2701
        %v2715 = vsub.f32 %v2525, %v2701
        %v2716 = vsub.f32 %v2530, %v2701
        %v2717 = vsub.f32 %v2533, %v2701
        %v2718 = vsub.f32 %v2538, %v2701
        %v2719 = vsub.f32 %v2541, %v2701
        %v2720 = vsub.f32 %v2546, %v2701
        %v2721 = vsub.f32 %v2549, %v2701
        %v2722 = vsub.f32 %v2554, %v2701
        %v2723 = vsub.f32 %v2557, %v2701
        %v2724 = vsub.f32 %v2562, %v2701
        %v2725 = vsub.f32 %v2565, %v2701
        %v2726 = vsub.f32 %v2570, %v2701
        %v2727 = vsub.f32 %v2573, %v2701
        %v2728 = vsub.f32 %v2578, %v2701
        %v2729 = vsub.f32 %v2581, %v2701
        %v2730 = vmul.f32 %v2702, %v2702
        %v2731 = vmul.f32 %v2703, %v2703
        %v2732 = vmul.f32 %v2704, %v2704
        %v2733 = vmul.f32 %v2705, %v2705
        %v2734 = vmul.f32 %v2706, %v2706
        %v2735 = vmul.f32 %v2707, %v2707
        %v2736 = vmul.f32 %v2708, %v2708
        %v2737 = vmul.f32 %v2709, %v2709
        %v2738 = vmul.f32 %v2710, %v2710
        %v2739 = vmul.f32 %v2711, %v2711
        %v2740 = vmul.f32 %v2712, %v2712
        %v2741 = vmul.f32 %v2713, %v2713
        %v2742 = vmul.f32 %v2714, %v2714
        %v2743 = vmul.f32 %v2715, %v2715
        %v2744 = vmul.f32 %v2716, %v2716
        %v2745 = vmul.f32 %v2717, %v2717
        %v2746 = vmul.f32 %v2718, %v2718
        %v2747 = vmul.f32 %v2719, %v2719
        %v2748 = vmul.f32 %v2720, %v2720
        %v2749 = vmul.f32 %v2721, %v2721
        %v2750 = vmul.f32 %v2722, %v2722
        %v2751 = vmul.f32 %v2723, %v2723
        %v2752 = vmul.f32 %v2724, %v2724
        %v2753 = vmul.f32 %v2725, %v2725
        %v2754 = vmul.f32 %v2726, %v2726
        %v2755 = vmul.f32 %v2727, %v2727
        %v2756 = vmul.f32 %v2728, %v2728
        %v2757 = vmul.f32 %v2729, %v2729
        %v2758 = vsel %vm2612, %v2730, 0.0
        %v2759 = vsel %vm2613, %v2731, 0.0
        %v2760 = vsel %vm2614, %v2732, 0.0
        %v2761 = vsel %vm2615, %v2733, 0.0
        %v2762 = vsel %vm2616, %v2734, 0.0
        %v2763 = vsel %vm2617, %v2735, 0.0
        %v2764 = vsel %vm2618, %v2736, 0.0
        %v2765 = vsel %vm2619, %v2737, 0.0
        %v2766 = vsel %vm2620, %v2738, 0.0
        %v2767 = vsel %vm2621, %v2739, 0.0
        %v2768 = vsel %vm2622, %v2740, 0.0
        %v2769 = vsel %vm2623, %v2741, 0.0
        %v2770 = vsel %vm2624, %v2742, 0.0
        %v2771 = vsel %vm2625, %v2743, 0.0
        %v2772 = vsel %vm2626, %v2744, 0.0
        %v2773 = vsel %vm2627, %v2745, 0.0
        %v2774 = vsel %vm2628, %v2746, 0.0
        %v2775 = vsel %vm2629, %v2747, 0.0
        %v2776 = vsel %vm2630, %v2748, 0.0
        %v2777 = vsel %vm2631, %v2749, 0.0
        %v2778 = vsel %vm2632, %v2750, 0.0
        %v2779 = vsel %vm2633, %v2751, 0.0
        %v2780 = vsel %vm2634, %v2752, 0.0
        %v2781 = vsel %vm2635, %v2753, 0.0
        %v2782 = vsel %vm2636, %v2754, 0.0
        %v2783 = vsel %vm2637, %v2755, 0.0
        %v2784 = vsel %vm2638, %v2756, 0.0
        %v2785 = vsel %vm2639, %v2757, 0.0
        %v2786 = vadd.f32 %v2758, %v2759
        %v2787 = vadd.f32 %v2786, %v2760
        %v2788 = vadd.f32 %v2787, %v2761
        %v2789 = vadd.f32 %v2788, %v2762
        %v2790 = vadd.f32 %v2789, %v2763
        %v2791 = vadd.f32 %v2790, %v2764
        %v2792 = vadd.f32 %v2791, %v2765
        %v2793 = vadd.f32 %v2792, %v2766
        %v2794 = vadd.f32 %v2793, %v2767
        %v2795 = vadd.f32 %v2794, %v2768
        %v2796 = vadd.f32 %v2795, %v2769
        %v2797 = vadd.f32 %v2796, %v2770
        %v2798 = vadd.f32 %v2797, %v2771
        %v2799 = vadd.f32 %v2798, %v2772
        %v2800 = vadd.f32 %v2799, %v2773
        %v2801 = vadd.f32 %v2800, %v2774
        %v2802 = vadd.f32 %v2801, %v2775
        %v2803 = vadd.f32 %v2802, %v2776
        %v2804 = vadd.f32 %v2803, %v2777
        %v2805 = vadd.f32 %v2804, %v2778
        %v2806 = vadd.f32 %v2805, %v2779
        %v2807 = vadd.f32 %v2806, %v2780
        %v2808 = vadd.f32 %v2807, %v2781
        %v2809 = vadd.f32 %v2808, %v2782
        %v2810 = vadd.f32 %v2809, %v2783
        %v2811 = vadd.f32 %v2810, %v2784
        %v2812 = vadd.f32 %v2811, %v2785
        %v2813 = vrot.slane %v2812, 4
        %v2814 = vadd.f32 %v2812, %v2813
        %v2815 = vrot.slane %v2814, 2
        %v2816 = vadd.f32 %v2814, %v2815
        %v2817 = vrot.slane %v2816, 1
        %v2818 = vadd.f32 %v2816, %v2817
        %v2819 = vmul.f32 %v2818, 0.0051020407
        %v2820 = vadd.f32 %v2819, 1e-05
        %v2821 = vrsqrt.pop %v2820
        %v2822 = vmul.f32 %v2702, %v2821
        %v2823 = vmul.f32 %v2703, %v2821
        %v2824 = vmul.f32 %v2704, %v2821
        %v2825 = vmul.f32 %v2705, %v2821
        %v2826 = vmul.f32 %v2706, %v2821
        %v2827 = vmul.f32 %v2707, %v2821
        %v2828 = vmul.f32 %v2708, %v2821
        %v2829 = vmul.f32 %v2709, %v2821
        %v2830 = vmul.f32 %v2710, %v2821
        %v2831 = vmul.f32 %v2711, %v2821
        %v2832 = vmul.f32 %v2712, %v2821
        %v2833 = vmul.f32 %v2713, %v2821
        %v2834 = vmul.f32 %v2714, %v2821
        %v2835 = vmul.f32 %v2715, %v2821
        %v2836 = vmul.f32 %v2716, %v2821
        %v2837 = vmul.f32 %v2717, %v2821
        %v2838 = vmul.f32 %v2718, %v2821
        %v2839 = vmul.f32 %v2719, %v2821
        %v2840 = vmul.f32 %v2720, %v2821
        %v2841 = vmul.f32 %v2721, %v2821
        %v2842 = vmul.f32 %v2722, %v2821
        %v2843 = vmul.f32 %v2723, %v2821
        %v2844 = vmul.f32 %v2724, %v2821
        %v2845 = vmul.f32 %v2725, %v2821
        %v2846 = vmul.f32 %v2726, %v2821
        %v2847 = vmul.f32 %v2727, %v2821
        %v2848 = vmul.f32 %v2728, %v2821
        %v2849 = vmul.f32 %v2729, %v2821
        %v2850 = vld [vmem:[%s844] sm:$0x1]
        %v2852 = vlaneseq
        %v2853 = vshrl.u32 %v2852, 7
        %v2854 = vsub.s32 0, %v2853
        %v2855 = vrot.slane %v2850, %v2854
        %v2857 = vmul.f32 %v2822, %v2855
        %v2858 = vmul.f32 %v2823, %v2855
        %v2859 = vmul.f32 %v2824, %v2855
        %v2860 = vmul.f32 %v2825, %v2855
        %v2861 = vmul.f32 %v2826, %v2855
        %v2862 = vmul.f32 %v2827, %v2855
        %v2863 = vmul.f32 %v2828, %v2855
        %v2864 = vmul.f32 %v2829, %v2855
        %v2865 = vmul.f32 %v2830, %v2855
        %v2866 = vmul.f32 %v2831, %v2855
        %v2867 = vmul.f32 %v2832, %v2855
        %v2868 = vmul.f32 %v2833, %v2855
        %v2869 = vmul.f32 %v2834, %v2855
        %v2870 = vmul.f32 %v2835, %v2855
        %v2871 = vmul.f32 %v2836, %v2855
        %v2872 = vmul.f32 %v2837, %v2855
        %v2873 = vmul.f32 %v2838, %v2855
        %v2874 = vmul.f32 %v2839, %v2855
        %v2875 = vmul.f32 %v2840, %v2855
        %v2876 = vmul.f32 %v2841, %v2855
        %v2877 = vmul.f32 %v2842, %v2855
        %v2878 = vmul.f32 %v2843, %v2855
        %v2879 = vmul.f32 %v2844, %v2855
        %v2880 = vmul.f32 %v2845, %v2855
        %v2881 = vmul.f32 %v2846, %v2855
        %v2882 = vmul.f32 %v2847, %v2855
        %v2883 = vmul.f32 %v2848, %v2855
        %v2884 = vmul.f32 %v2849, %v2855
        %v2885 = vld [vmem:[%s847] sm:$0x1]
        %v2887 = vlaneseq
        %v2888 = vshrl.u32 %v2887, 7
        %v2889 = vsub.s32 0, %v2888
        %v2890 = vrot.slane %v2885, %v2889
        %v2892 = vadd.f32 %v2857, %v2890
        %v2893 = vadd.f32 %v2858, %v2890
        %v2894 = vadd.f32 %v2859, %v2890
        %v2895 = vadd.f32 %v2860, %v2890
        %v2896 = vadd.f32 %v2861, %v2890
        %v2897 = vadd.f32 %v2862, %v2890
        %v2898 = vadd.f32 %v2863, %v2890
        %v2899 = vadd.f32 %v2864, %v2890
        %v2900 = vadd.f32 %v2865, %v2890
        %v2901 = vadd.f32 %v2866, %v2890
        %v2902 = vadd.f32 %v2867, %v2890
        %v2903 = vadd.f32 %v2868, %v2890
        %v2904 = vadd.f32 %v2869, %v2890
        %v2905 = vadd.f32 %v2870, %v2890
        %v2906 = vadd.f32 %v2871, %v2890
        %v2907 = vadd.f32 %v2872, %v2890
        %v2908 = vadd.f32 %v2873, %v2890
        %v2909 = vadd.f32 %v2874, %v2890
        %v2910 = vadd.f32 %v2875, %v2890
        %v2911 = vadd.f32 %v2876, %v2890
        %v2912 = vadd.f32 %v2877, %v2890
        %v2913 = vadd.f32 %v2878, %v2890
        %v2914 = vadd.f32 %v2879, %v2890
        %v2915 = vadd.f32 %v2880, %v2890
        %v2916 = vadd.f32 %v2881, %v2890
        %v2917 = vadd.f32 %v2882, %v2890
        %v2918 = vadd.f32 %v2883, %v2890
        %v2919 = vadd.f32 %v2884, %v2890
        %v2920 = vmax.f32 %v2892, 0.0
        %v2921 = vmax.f32 %v2893, 0.0
        %v2922 = vmax.f32 %v2894, 0.0
        %v2923 = vmax.f32 %v2895, 0.0
        %v2924 = vmax.f32 %v2896, 0.0
        %v2925 = vmax.f32 %v2897, 0.0
        %v2926 = vmax.f32 %v2898, 0.0
        %v2927 = vmax.f32 %v2899, 0.0
        %v2928 = vmax.f32 %v2900, 0.0
        %v2929 = vmax.f32 %v2901, 0.0
        %v2930 = vmax.f32 %v2902, 0.0
        %v2931 = vmax.f32 %v2903, 0.0
        %v2932 = vmax.f32 %v2904, 0.0
        %v2933 = vmax.f32 %v2905, 0.0
        %v2934 = vmax.f32 %v2906, 0.0
        %v2935 = vmax.f32 %v2907, 0.0
        %v2936 = vmax.f32 %v2908, 0.0
        %v2937 = vmax.f32 %v2909, 0.0
        %v2938 = vmax.f32 %v2910, 0.0
        %v2939 = vmax.f32 %v2911, 0.0
        %v2940 = vmax.f32 %v2912, 0.0
        %v2941 = vmax.f32 %v2913, 0.0
        %v2942 = vmax.f32 %v2914, 0.0
        %v2943 = vmax.f32 %v2915, 0.0
        %v2944 = vmax.f32 %v2916, 0.0
        %v2945 = vmax.f32 %v2917, 0.0
        %v2946 = vmax.f32 %v2918, 0.0
        %v2947 = vmax.f32 %v2919, 0.0
        %v2948 = vsel %vm2612, %v2920, 0.0
        %v2949 = vsel %vm2613, %v2921, 0.0
        %v2950 = vsel %vm2614, %v2922, 0.0
        %v2951 = vsel %vm2615, %v2923, 0.0
        %v2952 = vsel %vm2616, %v2924, 0.0
        %v2953 = vsel %vm2617, %v2925, 0.0
        %v2954 = vsel %vm2618, %v2926, 0.0
        %v2955 = vsel %vm2619, %v2927, 0.0
        %v2956 = vsel %vm2620, %v2928, 0.0
        %v2957 = vsel %vm2621, %v2929, 0.0
        %v2958 = vsel %vm2622, %v2930, 0.0
        %v2959 = vsel %vm2623, %v2931, 0.0
        %v2960 = vsel %vm2624, %v2932, 0.0
        %v2961 = vsel %vm2625, %v2933, 0.0
        %v2962 = vsel %vm2626, %v2934, 0.0
        %v2963 = vsel %vm2627, %v2935, 0.0
        %v2964 = vsel %vm2628, %v2936, 0.0
        %v2965 = vsel %vm2629, %v2937, 0.0
        %v2966 = vsel %vm2630, %v2938, 0.0
        %v2967 = vsel %vm2631, %v2939, 0.0
        %v2968 = vsel %vm2632, %v2940, 0.0
        %v2969 = vsel %vm2633, %v2941, 0.0
        %v2970 = vsel %vm2634, %v2942, 0.0
        %v2971 = vsel %vm2635, %v2943, 0.0
        %v2972 = vsel %vm2636, %v2944, 0.0
        %v2973 = vsel %vm2637, %v2945, 0.0
        %v2974 = vsel %vm2638, %v2946, 0.0
        %v2975 = vsel %vm2639, %v2947, 0.0
        %2976 = vst [vmem:[#allocation2] sm:$0xff] 0.0
        %2977 = vst [vmem:[#allocation2 + $0x8] sm:$0xff] 0.0
        %2978 = vst [vmem:[#allocation2 + $0x10] sm:$0xff] 0.0
        %2979 = vst [vmem:[#allocation2 + $0x18] sm:$0xff] %v2948
        %2980 = vst [vmem:[#allocation2 + $0x20] sm:$0xff] %v2949
        %2981 = vst [vmem:[#allocation2 + $0x28] sm:$0xff] %v2950
        %2982 = vst [vmem:[#allocation2 + $0x30] sm:$0xff] %v2951
        %2983 = vst [vmem:[#allocation2 + $0x38] sm:$0xff] %v2952
        %2984 = vst [vmem:[#allocation2 + $0x40] sm:$0xff] %v2953
        %2985 = vst [vmem:[#allocation2 + $0x48] sm:$0xff] %v2954
        %2986 = vst [vmem:[#allocation2 + $0x50] sm:$0xff] %v2955
        %2987 = vst [vmem:[#allocation2 + $0x58] sm:$0xff] %v2956
        %2988 = vst [vmem:[#allocation2 + $0x60] sm:$0xff] %v2957
        %2989 = vst [vmem:[#allocation2 + $0x68] sm:$0xff] %v2958
        %2990 = vst [vmem:[#allocation2 + $0x70] sm:$0xff] %v2959
        %2991 = vst [vmem:[#allocation2 + $0x78] sm:$0xff] %v2960
        %2992 = vst [vmem:[#allocation2 + $0x80] sm:$0xff] %v2961
        %2993 = vst [vmem:[#allocation2 + $0x88] sm:$0xff] %v2962
        %2994 = vst [vmem:[#allocation2 + $0x90] sm:$0xff] %v2963
        %2995 = vst [vmem:[#allocation2 + $0x98] sm:$0xff] %v2964
        %2996 = vst [vmem:[#allocation2 + $0xa0] sm:$0xff] %v2965
        %2997 = vst [vmem:[#allocation2 + $0xa8] sm:$0xff] %v2966
        %2998 = vst [vmem:[#allocation2 + $0xb0] sm:$0xff] %v2967
        %2999 = vst [vmem:[#allocation2 + $0xb8] sm:$0xff] %v2968
        %3000 = vst [vmem:[#allocation2 + $0xc0] sm:$0xff] %v2969
        %3001 = vst [vmem:[#allocation2 + $0xc8] sm:$0xff] %v2970
        %3002 = vst [vmem:[#allocation2 + $0xd0] sm:$0xff] %v2971
        %3003 = vst [vmem:[#allocation2 + $0xd8] sm:$0xff] %v2972
        %3004 = vst [vmem:[#allocation2 + $0xe0] sm:$0xff] %v2973
        %3005 = vst [vmem:[#allocation2 + $0xe8] sm:$0xff] %v2974
        %3006 = vst [vmem:[#allocation2 + $0xf0] sm:$0xff] %v2975
        %3007 = vst [vmem:[#allocation2 + $0xf8] sm:$0xff] 0.0
        %3008 = vst [vmem:[#allocation2 + $0x100] sm:$0xff] 0.0
        %3009 = vst [vmem:[#allocation2 + $0x108] sm:$0xff] 0.0
        %v3010 = vld [vmem:[#allocation2] sm:$0xff]
        %v3011 = vld [vmem:[#allocation2 + $0x8] sm:$0xff]
        %v3012 = vld [vmem:[#allocation2 + $0x10] sm:$0xff]
        %v3013 = vld [vmem:[#allocation2 + $0x18] sm:$0xff]
        %v3014 = vld [vmem:[#allocation2 + $0x20] sm:$0xff]
        %v3015 = vld [vmem:[#allocation2 + $0x28] sm:$0xff]
        %v3016 = vld [vmem:[#allocation2 + $0x30] sm:$0xff]
        %v3017 = vld [vmem:[#allocation2 + $0x38] sm:$0xff]
        %v3018 = vld [vmem:[#allocation2 + $0x40] sm:$0xff]
        %v3019 = vld [vmem:[#allocation2 + $0x48] sm:$0xff]
        %v3020 = vld [vmem:[#allocation2 + $0x50] sm:$0xff]
        %v3021 = vld [vmem:[#allocation2 + $0x58] sm:$0xff]
        %v3022 = vld [vmem:[#allocation2 + $0x60] sm:$0xff]
        %v3023 = vld [vmem:[#allocation2 + $0x68] sm:$0xff]
        %v3024 = vld [vmem:[#allocation2 + $0x70] sm:$0xff]
        %v3025 = vld [vmem:[#allocation2 + $0x78] sm:$0xff]
        %v3026 = vld [vmem:[#allocation2 + $0x80] sm:$0xff]
        %v3027 = vld [vmem:[#allocation2 + $0x88] sm:$0xff]
        %v3028 = vld [vmem:[#allocation2 + $0x90] sm:$0xff]
        %v3029 = vld [vmem:[#allocation2 + $0x98] sm:$0xff]
        %v3030 = vld [vmem:[#allocation2 + $0xa0] sm:$0xff]
        %v3031 = vld [vmem:[#allocation2 + $0xa8] sm:$0xff]
        %v3032 = vld [vmem:[#allocation2 + $0xb0] sm:$0xff]
        %v3033 = vld [vmem:[#allocation2 + $0xb8] sm:$0xff]
        %v3034 = vld [vmem:[#allocation2 + $0xc0] sm:$0xff]
        %v3035 = vld [vmem:[#allocation2 + $0xc8] sm:$0xff]
        %v3036 = vld [vmem:[#allocation2 + $0xd0] sm:$0xff]
        %v3037 = vld [vmem:[#allocation2 + $0xd8] sm:$0xff]
        %v3038 = vld [vmem:[#allocation2 + $0xe0] sm:$0xff]
        %v3039 = vld [vmem:[#allocation2 + $0xe8] sm:$0xff]
        %v3040 = vpack.c.bf16 %v3011, %v3010
        %v3041 = vpack.c.bf16 %v3013, %v3012
        %v3042 = vpack.c.bf16 %v3015, %v3014
        %v3043 = vpack.c.bf16 %v3017, %v3016
        %v3044 = vpack.c.bf16 %v3019, %v3018
        %v3045 = vpack.c.bf16 %v3021, %v3020
        %v3046 = vpack.c.bf16 %v3023, %v3022
        %v3047 = vpack.c.bf16 %v3025, %v3024
        %v3048 = vpack.c.bf16 %v3027, %v3026
        %v3049 = vpack.c.bf16 %v3029, %v3028
        %v3050 = vpack.c.bf16 %v3031, %v3030
        %v3051 = vpack.c.bf16 %v3033, %v3032
        %v3052 = vpack.c.bf16 %v3035, %v3034
        %v3053 = vpack.c.bf16 %v3037, %v3036
        %v3054 = vpack.c.bf16 %v3038, %v3038
        %v3055 = vld [vmem:[%s796] sm:$0xf]
        %v3056 = vld [vmem:[%s796 + $0x4] sm:$0xf]
        %v3057 = vld [vmem:[%s796 + $0x8] sm:$0xf]
        %v3058 = vld [vmem:[%s796 + $0xc] sm:$0xf]
        %v3059 = vld [vmem:[%s796 + $0x10] sm:$0xf]
        %v3060 = vld [vmem:[%s796 + $0x14] sm:$0xf]
        %v3061 = vld [vmem:[%s796 + $0x18] sm:$0xf]
        %v3062 = vld [vmem:[%s796 + $0x1c] sm:$0xf]
        %v3063 = vld [vmem:[%s796 + $0x20] sm:$0xf]
        %v3064 = vld [vmem:[%s796 + $0x24] sm:$0xf]
        %v3065 = vld [vmem:[%s796 + $0x28] sm:$0xf]
        %v3066 = vld [vmem:[%s796 + $0x2c] sm:$0xf]
        %v3067 = vld [vmem:[%s796 + $0x30] sm:$0xf]
        %v3068 = vld [vmem:[%s796 + $0x34] sm:$0xf]
        %v3069 = vld [vmem:[%s796 + $0x38] sm:$0xf]
        %v3070 = vld [vmem:[%s796 + $0x3c] sm:$0xf]
        %v3071 = vpack.c.bf16 %v3012, %v3011
        %v3072 = vpack.c.bf16 %v3014, %v3013
        %v3073 = vpack.c.bf16 %v3016, %v3015
        %v3074 = vpack.c.bf16 %v3018, %v3017
        %v3075 = vpack.c.bf16 %v3020, %v3019
        %v3076 = vpack.c.bf16 %v3022, %v3021
        %v3077 = vpack.c.bf16 %v3024, %v3023
        %v3078 = vpack.c.bf16 %v3026, %v3025
        %v3079 = vpack.c.bf16 %v3028, %v3027
        %v3080 = vpack.c.bf16 %v3030, %v3029
        %v3081 = vpack.c.bf16 %v3032, %v3031
        %v3082 = vpack.c.bf16 %v3034, %v3033
        %v3083 = vpack.c.bf16 %v3036, %v3035
        %v3084 = vpack.c.bf16 %v3038, %v3037
        %s3085 = scalar_lea.vmem %s796, 64 [#allocation4]
        %v3086 = vld [vmem:[%s3085] sm:$0xf]
        %v3087 = vld [vmem:[%s3085 + $0x4] sm:$0xf]
        %v3088 = vld [vmem:[%s3085 + $0x8] sm:$0xf]
        %v3089 = vld [vmem:[%s3085 + $0xc] sm:$0xf]
        %v3090 = vld [vmem:[%s3085 + $0x10] sm:$0xf]
        %v3091 = vld [vmem:[%s3085 + $0x14] sm:$0xf]
        %v3092 = vld [vmem:[%s3085 + $0x18] sm:$0xf]
        %v3093 = vld [vmem:[%s3085 + $0x1c] sm:$0xf]
        %v3094 = vld [vmem:[%s3085 + $0x20] sm:$0xf]
        %v3095 = vld [vmem:[%s3085 + $0x24] sm:$0xf]
        %v3096 = vld [vmem:[%s3085 + $0x28] sm:$0xf]
        %v3097 = vld [vmem:[%s3085 + $0x2c] sm:$0xf]
        %v3098 = vld [vmem:[%s3085 + $0x30] sm:$0xf]
        %v3099 = vld [vmem:[%s3085 + $0x34] sm:$0xf]
        %v3100 = vld [vmem:[%s3085 + $0x38] sm:$0xf]
        %v3101 = vld [vmem:[%s3085 + $0x3c] sm:$0xf]
        %v3118 = vunpack.c.l.b16 %v3086
        %v3119 = vunpack.c.l.b16 %v3087
        %v3120 = vunpack.c.l.b16 %v3088
        %v3121 = vunpack.c.l.b16 %v3089
        %v3122 = vunpack.c.l.b16 %v3090
        %v3123 = vunpack.c.l.b16 %v3091
        %v3124 = vunpack.c.l.b16 %v3092
        %v3125 = vunpack.c.l.b16 %v3093
        %v3126 = vunpack.c.l.b16 %v3094
        %v3127 = vunpack.c.l.b16 %v3095
        %v3128 = vunpack.c.l.b16 %v3096
        %v3129 = vunpack.c.l.b16 %v3097
        %v3130 = vunpack.c.l.b16 %v3098
        %v3131 = vunpack.c.l.b16 %v3099
        %v3132 = vunpack.c.l.b16 %v3100
        %v3133 = vunpack.c.l.b16 %v3101
        %v3134 = vpack.c.b16 %v3119, %v3118
        %v3135 = vpack.c.b16 %v3121, %v3120
        %v3136 = vpack.c.b16 %v3123, %v3122
        %v3137 = vpack.c.b16 %v3125, %v3124
        %v3138 = vpack.c.b16 %v3127, %v3126
        %v3139 = vpack.c.b16 %v3129, %v3128
        %v3140 = vpack.c.b16 %v3131, %v3130
        %v3141 = vpack.c.b16 %v3133, %v3132
        %3150 = vmatprep.subr.bf16.mxu0 0
        %3151 = vmatpush1.bf16.msra.mxu0 %v3134
        %3152 = vmatprep.subr.bf16.mxu0 0
        %3153 = vmatpush1.bf16.msra.mxu0 %v3135
        %3154 = vmatprep.subr.bf16.mxu0 0
        %3155 = vmatpush1.bf16.msra.mxu0 %v3136
        %3156 = vmatprep.subr.bf16.mxu0 0
        %3157 = vmatpush1.bf16.msra.mxu0 %v3137
        %3158 = vmatprep.subr.bf16.mxu0 0
        %3159 = vmatpush1.bf16.msra.mxu0 %v3138
        %3160 = vmatprep.subr.bf16.mxu0 0
        %3161 = vmatpush1.bf16.msra.mxu0 %v3139
        %3162 = vmatprep.subr.bf16.mxu0 0
        %3163 = vmatpush1.bf16.msra.mxu0 %v3140
        %3164 = vmatprep.subr.bf16.mxu0 0
        %3165 = vmatpush1.bf16.msra.mxu0 %v3141
        %3166 = vmatprep.subr.bf16.mxu0 0
        %3167 = vmatpush1.bf16.msra.mxu0 0
        %3168 = vmatprep.subr.bf16.mxu0 0
        %3169 = vmatpush1.bf16.msra.mxu0 0
        %3170 = vmatprep.subr.bf16.mxu0 0
        %3171 = vmatpush1.bf16.msra.mxu0 0
        %3172 = vmatprep.subr.bf16.mxu0 0
        %3173 = vmatpush1.bf16.msra.mxu0 0
        %3174 = vmatprep.subr.bf16.mxu0 0
        %3175 = vmatpush1.bf16.msra.mxu0 0
        %3176 = vmatprep.subr.bf16.mxu0 0
        %3177 = vmatpush1.bf16.msra.mxu0 0
        %3178 = vmatprep.subr.bf16.mxu0 0
        %3179 = vmatpush1.bf16.msra.mxu0 0
        %3180 = vmatprep.subr.bf16.mxu0 0
        %3181 = vmatpush1.bf16.msra.mxu0 0
        %3182 = vmatprep.mubr.bf16.mxu0 0
        %3183 = vmatmul.mubr.bf16.gmra.mrb[0].mxu0 %v3071
        %v3184 = vpop.f32.mrb[0].mxu0
        %v3185 = vadd.f32 0.0, %v3184
        %v3186 = vpop.f32.mrb[0].mxu0
        %v3187 = vpop.f32.mrb[0].mxu0
        %v3188 = vadd.f32 0.0, %v3187
        %v3189 = vpop.f32.mrb[0].mxu0
        %3190 = vmatprep.mubr.bf16.mxu0 0
        %3191 = vmatmul.mubr.bf16.gmra.mrb[0].mxu0 %v3072
        %v3192 = vpop.f32.mrb[0].mxu0
        %v3193 = vadd.f32 0.0, %v3192
        %v3194 = vpop.f32.mrb[0].mxu0
        %v3195 = vpop.f32.mrb[0].mxu0
        %v3196 = vadd.f32 0.0, %v3195
        %v3197 = vpop.f32.mrb[0].mxu0
        %3198 = vmatprep.mubr.bf16.mxu0 0
        %3199 = vmatmul.mubr.bf16.gmra.mrb[0].mxu0 %v3073
        %v3200 = vpop.f32.mrb[0].mxu0
        %v3201 = vadd.f32 0.0, %v3200
        %v3202 = vpop.f32.mrb[0].mxu0
        %v3203 = vpop.f32.mrb[0].mxu0
        %v3204 = vadd.f32 0.0, %v3203
        %v3205 = vpop.f32.mrb[0].mxu0
        %3206 = vmatprep.mubr.bf16.mxu0 0
        %3207 = vmatmul.mubr.bf16.gmra.mrb[0].mxu0 %v3074
        %v3208 = vpop.f32.mrb[0].mxu0
        %v3209 = vadd.f32 0.0, %v3208
        %v3210 = vpop.f32.mrb[0].mxu0
        %v3211 = vpop.f32.mrb[0].mxu0
        %v3212 = vadd.f32 0.0, %v3211
        %v3213 = vpop.f32.mrb[0].mxu0
        %3214 = vmatprep.mubr.bf16.mxu0 0
        %3215 = vmatmul.mubr.bf16.gmra.mrb[0].mxu0 %v3075
        %v3216 = vpop.f32.mrb[0].mxu0
        %v3217 = vadd.f32 0.0, %v3216
        %v3218 = vpop.f32.mrb[0].mxu0
        %v3219 = vpop.f32.mrb[0].mxu0
        %v3220 = vadd.f32 0.0, %v3219
        %v3221 = vpop.f32.mrb[0].mxu0
        %3222 = vmatprep.mubr.bf16.mxu0 0
        %3223 = vmatmul.mubr.bf16.gmra.mrb[0].mxu0 %v3076
        %v3224 = vpop.f32.mrb[0].mxu0
        %v3225 = vadd.f32 0.0, %v3224
        %v3226 = vpop.f32.mrb[0].mxu0
        %v3227 = vpop.f32.mrb[0].mxu0
        %v3228 = vadd.f32 0.0, %v3227
        %v3229 = vpop.f32.mrb[0].mxu0
        %3230 = vmatprep.mubr.bf16.mxu0 0
        %3231 = vmatmul.mubr.bf16.gmra.mrb[0].mxu0 %v3077
        %v3232 = vpop.f32.mrb[0].mxu0
        %v3233 = vadd.f32 0.0, %v3232
        %v3234 = vpop.f32.mrb[0].mxu0
        %v3235 = vpop.f32.mrb[0].mxu0
        %v3236 = vadd.f32 0.0, %v3235
        %v3237 = vpop.f32.mrb[0].mxu0
        %3238 = vmatprep.mubr.bf16.mxu0 0
        %3239 = vmatmul.mubr.bf16.gmra.mrb[0].mxu0 %v3078
        %v3240 = vpop.f32.mrb[0].mxu0
        %v3241 = vadd.f32 0.0, %v3240
        %v3242 = vpop.f32.mrb[0].mxu0
        %v3243 = vpop.f32.mrb[0].mxu0
        %v3244 = vadd.f32 0.0, %v3243
        %v3245 = vpop.f32.mrb[0].mxu0
        %3246 = vmatprep.mubr.bf16.mxu0 0
        %3247 = vmatmul.mubr.bf16.gmra.mrb[0].mxu0 %v3079
        %v3248 = vpop.f32.mrb[0].mxu0
        %v3249 = vadd.f32 0.0, %v3248
        %v3250 = vpop.f32.mrb[0].mxu0
        %v3251 = vpop.f32.mrb[0].mxu0
        %v3252 = vadd.f32 0.0, %v3251
        %v3253 = vpop.f32.mrb[0].mxu0
        %3254 = vmatprep.mubr.bf16.mxu0 0
        %3255 = vmatmul.mubr.bf16.gmra.mrb[0].mxu0 %v3080
        %v3256 = vpop.f32.mrb[0].mxu0
        %v3257 = vadd.f32 0.0, %v3256
        %v3258 = vpop.f32.mrb[0].mxu0
        %v3259 = vpop.f32.mrb[0].mxu0
        %v3260 = vadd.f32 0.0, %v3259
        %v3261 = vpop.f32.mrb[0].mxu0
        %3262 = vmatprep.mubr.bf16.mxu0 0
        %3263 = vmatmul.mubr.bf16.gmra.mrb[0].mxu0 %v3081
        %v3264 = vpop.f32.mrb[0].mxu0
        %v3265 = vadd.f32 0.0, %v3264
        %v3266 = vpop.f32.mrb[0].mxu0
        %v3267 = vpop.f32.mrb[0].mxu0
        %v3268 = vadd.f32 0.0, %v3267
        %v3269 = vpop.f32.mrb[0].mxu0
        %3270 = vmatprep.mubr.bf16.mxu0 0
        %3271 = vmatmul.mubr.bf16.gmra.mrb[0].mxu0 %v3082
        %v3272 = vpop.f32.mrb[0].mxu0
        %v3273 = vadd.f32 0.0, %v3272
        %v3274 = vpop.f32.mrb[0].mxu0
        %v3275 = vpop.f32.mrb[0].mxu0
        %v3276 = vadd.f32 0.0, %v3275
        %v3277 = vpop.f32.mrb[0].mxu0
        %3278 = vmatprep.mubr.bf16.mxu0 0
        %3279 = vmatmul.mubr.bf16.gmra.mrb[0].mxu0 %v3083
        %v3280 = vpop.f32.mrb[0].mxu0
        %v3281 = vadd.f32 0.0, %v3280
        %v3282 = vpop.f32.mrb[0].mxu0
        %v3283 = vpop.f32.mrb[0].mxu0
        %v3284 = vadd.f32 0.0, %v3283
        %v3285 = vpop.f32.mrb[0].mxu0
        %3286 = vmatprep.mubr.bf16.mxu0 0
        %3287 = vmatmul.mubr.bf16.gmra.mrb[0].mxu0 %v3084
        %v3288 = vpop.f32.mrb[0].mxu0
        %v3289 = vadd.f32 0.0, %v3288
        %v3290 = vpop.f32.mrb[0].mxu0
        %v3291 = vpop.f32.mrb[0].mxu0
        %v3292 = vadd.f32 0.0, %v3291
        %v3293 = vpop.f32.mrb[0].mxu0
        %3294 = vdwg.mxu0
        %vm3295 = vsmask.f32 4352
        %v3297 = vshrl.u32 %v3040, 16
        %v3299 = vrot.slane %v3297, 3
        %v3300 = vshll.u32 %v3040, 16
        %v3302 = vrot.slane %v3300, 4
        %v3303 = vor.u32 %v3299, %v3302
        %v3305 = vshrl.u32 %v3041, 16
        %v3307 = vrot.slane %v3305, 3
        %v3308 = vshll.u32 %v3041, 16
        %v3310 = vrot.slane %v3308, 4
        %v3311 = vor.u32 %v3307, %v3310
        %v3312 = vsel %vm3295, %v3303, %v3311
        %v3314 = vshrl.u32 %v3042, 16
        %v3316 = vrot.slane %v3314, 3
        %v3317 = vshll.u32 %v3042, 16
        %v3319 = vrot.slane %v3317, 4
        %v3320 = vor.u32 %v3316, %v3319
        %v3321 = vsel %vm3295, %v3311, %v3320
        %v3323 = vshrl.u32 %v3043, 16
        %v3325 = vrot.slane %v3323, 3
        %v3326 = vshll.u32 %v3043, 16
        %v3328 = vrot.slane %v3326, 4
        %v3329 = vor.u32 %v3325, %v3328
        %v3330 = vsel %vm3295, %v3320, %v3329
        %v3332 = vshrl.u32 %v3044, 16
        %v3334 = vrot.slane %v3332, 3
        %v3335 = vshll.u32 %v3044, 16
        %v3337 = vrot.slane %v3335, 4
        %v3338 = vor.u32 %v3334, %v3337
        %v3339 = vsel %vm3295, %v3329, %v3338
        %v3341 = vshrl.u32 %v3045, 16
        %v3343 = vrot.slane %v3341, 3
        %v3344 = vshll.u32 %v3045, 16
        %v3346 = vrot.slane %v3344, 4
        %v3347 = vor.u32 %v3343, %v3346
        %v3348 = vsel %vm3295, %v3338, %v3347
        %v3350 = vshrl.u32 %v3046, 16
        %v3352 = vrot.slane %v3350, 3
        %v3353 = vshll.u32 %v3046, 16
        %v3355 = vrot.slane %v3353, 4
        %v3356 = vor.u32 %v3352, %v3355
        %v3357 = vsel %vm3295, %v3347, %v3356
        %v3359 = vshrl.u32 %v3047, 16
        %v3361 = vrot.slane %v3359, 3
        %v3362 = vshll.u32 %v3047, 16
        %v3364 = vrot.slane %v3362, 4
        %v3365 = vor.u32 %v3361, %v3364
        %v3366 = vsel %vm3295, %v3356, %v3365
        %v3368 = vshrl.u32 %v3048, 16
        %v3370 = vrot.slane %v3368, 3
        %v3371 = vshll.u32 %v3048, 16
        %v3373 = vrot.slane %v3371, 4
        %v3374 = vor.u32 %v3370, %v3373
        %v3375 = vsel %vm3295, %v3365, %v3374
        %v3377 = vshrl.u32 %v3049, 16
        %v3379 = vrot.slane %v3377, 3
        %v3380 = vshll.u32 %v3049, 16
        %v3382 = vrot.slane %v3380, 4
        %v3383 = vor.u32 %v3379, %v3382
        %v3384 = vsel %vm3295, %v3374, %v3383
        %v3386 = vshrl.u32 %v3050, 16
        %v3388 = vrot.slane %v3386, 3
        %v3389 = vshll.u32 %v3050, 16
        %v3391 = vrot.slane %v3389, 4
        %v3392 = vor.u32 %v3388, %v3391
        %v3393 = vsel %vm3295, %v3383, %v3392
        %v3395 = vshrl.u32 %v3051, 16
        %v3397 = vrot.slane %v3395, 3
        %v3398 = vshll.u32 %v3051, 16
        %v3400 = vrot.slane %v3398, 4
        %v3401 = vor.u32 %v3397, %v3400
        %v3402 = vsel %vm3295, %v3392, %v3401
        %v3404 = vshrl.u32 %v3052, 16
        %v3406 = vrot.slane %v3404, 3
        %v3407 = vshll.u32 %v3052, 16
        %v3409 = vrot.slane %v3407, 4
        %v3410 = vor.u32 %v3406, %v3409
        %v3411 = vsel %vm3295, %v3401, %v3410
        %v3413 = vshrl.u32 %v3053, 16
        %v3415 = vrot.slane %v3413, 3
        %v3416 = vshll.u32 %v3053, 16
        %v3418 = vrot.slane %v3416, 4
        %v3419 = vor.u32 %v3415, %v3418
        %v3420 = vsel %vm3295, %v3410, %v3419
        %v3422 = vshrl.u32 %v3054, 16
        %v3424 = vrot.slane %v3422, 3
        %v3425 = vshll.u32 %v3054, 16
        %v3427 = vrot.slane %v3425, 4
        %v3428 = vor.u32 %v3424, %v3427
        %v3429 = vsel %vm3295, %v3419, %v3428
        %v3460 = vunpack.c.l.b16 %v3055
        %v3461 = vunpack.c.l.b16 %v3056
        %v3462 = vunpack.c.l.b16 %v3057
        %v3463 = vunpack.c.l.b16 %v3058
        %v3464 = vunpack.c.l.b16 %v3059
        %v3465 = vunpack.c.l.b16 %v3060
        %v3466 = vunpack.c.l.b16 %v3061
        %v3467 = vunpack.c.l.b16 %v3062
        %v3468 = vunpack.c.l.b16 %v3063
        %v3469 = vunpack.c.l.b16 %v3064
        %v3470 = vunpack.c.l.b16 %v3065
        %v3471 = vunpack.c.l.b16 %v3066
        %v3472 = vunpack.c.l.b16 %v3067
        %v3473 = vunpack.c.l.b16 %v3068
        %v3474 = vunpack.c.l.b16 %v3069
        %v3475 = vunpack.c.l.b16 %v3070
        %v3476 = vpack.c.b16 %v3461, %v3460
        %v3477 = vpack.c.b16 %v3463, %v3462
        %v3478 = vpack.c.b16 %v3465, %v3464
        %v3479 = vpack.c.b16 %v3467, %v3466
        %v3480 = vpack.c.b16 %v3469, %v3468
        %v3481 = vpack.c.b16 %v3471, %v3470
        %v3482 = vpack.c.b16 %v3473, %v3472
        %v3483 = vpack.c.b16 %v3475, %v3474
        %3492 = vmatprep.subr.bf16.mxu0 0
        %3493 = vmatpush1.bf16.msra.mxu0 %v3476
        %3494 = vmatprep.subr.bf16.mxu0 0
        %3495 = vmatpush1.bf16.msra.mxu0 %v3477
        %3496 = vmatprep.subr.bf16.mxu0 0
        %3497 = vmatpush1.bf16.msra.mxu0 %v3478
        %3498 = vmatprep.subr.bf16.mxu0 0
        %3499 = vmatpush1.bf16.msra.mxu0 %v3479
        %3500 = vmatprep.subr.bf16.mxu0 0
        %3501 = vmatpush1.bf16.msra.mxu0 %v3480
        %3502 = vmatprep.subr.bf16.mxu0 0
        %3503 = vmatpush1.bf16.msra.mxu0 %v3481
        %3504 = vmatprep.subr.bf16.mxu0 0
        %3505 = vmatpush1.bf16.msra.mxu0 %v3482
        %3506 = vmatprep.subr.bf16.mxu0 0
        %3507 = vmatpush1.bf16.msra.mxu0 %v3483
        %3508 = vmatprep.subr.bf16.mxu0 0
        %3509 = vmatpush1.bf16.msra.mxu0 0
        %3510 = vmatprep.subr.bf16.mxu0 0
        %3511 = vmatpush1.bf16.msra.mxu0 0
        %3512 = vmatprep.subr.bf16.mxu0 0
        %3513 = vmatpush1.bf16.msra.mxu0 0
        %3514 = vmatprep.subr.bf16.mxu0 0
        %3515 = vmatpush1.bf16.msra.mxu0 0
        %3516 = vmatprep.subr.bf16.mxu0 0
        %3517 = vmatpush1.bf16.msra.mxu0 0
        %3518 = vmatprep.subr.bf16.mxu0 0
        %3519 = vmatpush1.bf16.msra.mxu0 0
        %3520 = vmatprep.subr.bf16.mxu0 0
        %3521 = vmatpush1.bf16.msra.mxu0 0
        %3522 = vmatprep.subr.bf16.mxu0 0
        %3523 = vmatpush1.bf16.msra.mxu0 0
        %3524 = vmatprep.mubr.bf16.mxu0 0
        %3525 = vmatmul.mubr.bf16.gmra.mrb[0].mxu0 %v3312
        %v3526 = vpop.f32.mrb[0].mxu0
        %v3527 = vadd.f32 %v3185, %v3526
        %v3528 = vpop.f32.mrb[0].mxu0
        %v3529 = vpop.f32.mrb[0].mxu0
        %v3530 = vadd.f32 %v3188, %v3529
        %v3531 = vpop.f32.mrb[0].mxu0
        %3532 = vmatprep.mubr.bf16.mxu0 0
        %3533 = vmatmul.mubr.bf16.gmra.mrb[0].mxu0 %v3321
        %v3534 = vpop.f32.mrb[0].mxu0
        %v3535 = vadd.f32 %v3193, %v3534
        %v3536 = vpop.f32.mrb[0].mxu0
        %v3537 = vpop.f32.mrb[0].mxu0
        %v3538 = vadd.f32 %v3196, %v3537
        %v3539 = vpop.f32.mrb[0].mxu0
        %3540 = vmatprep.mubr.bf16.mxu0 0
        %3541 = vmatmul.mubr.bf16.gmra.mrb[0].mxu0 %v3330
        %v3542 = vpop.f32.mrb[0].mxu0
        %v3543 = vadd.f32 %v3201, %v3542
        %v3544 = vpop.f32.mrb[0].mxu0
        %v3545 = vpop.f32.mrb[0].mxu0
        %v3546 = vadd.f32 %v3204, %v3545
        %v3547 = vpop.f32.mrb[0].mxu0
        %3548 = vmatprep.mubr.bf16.mxu0 0
        %3549 = vmatmul.mubr.bf16.gmra.mrb[0].mxu0 %v3339
        %v3550 = vpop.f32.mrb[0].mxu0
        %v3551 = vadd.f32 %v3209, %v3550
        %v3552 = vpop.f32.mrb[0].mxu0
        %v3553 = vpop.f32.mrb[0].mxu0
        %v3554 = vadd.f32 %v3212, %v3553
        %v3555 = vpop.f32.mrb[0].mxu0
        %3556 = vmatprep.mubr.bf16.mxu0 0
        %3557 = vmatmul.mubr.bf16.gmra.mrb[0].mxu0 %v3348
        %v3558 = vpop.f32.mrb[0].mxu0
        %v3559 = vadd.f32 %v3217, %v3558
        %v3560 = vpop.f32.mrb[0].mxu0
        %v3561 = vpop.f32.mrb[0].mxu0
        %v3562 = vadd.f32 %v3220, %v3561
        %v3563 = vpop.f32.mrb[0].mxu0
        %3564 = vmatprep.mubr.bf16.mxu0 0
        %3565 = vmatmul.mubr.bf16.gmra.mrb[0].mxu0 %v3357
        %v3566 = vpop.f32.mrb[0].mxu0
        %v3567 = vadd.f32 %v3225, %v3566
        %v3568 = vpop.f32.mrb[0].mxu0
        %v3569 = vpop.f32.mrb[0].mxu0
        %v3570 = vadd.f32 %v3228, %v3569
        %v3571 = vpop.f32.mrb[0].mxu0
        %3572 = vmatprep.mubr.bf16.mxu0 0
        %3573 = vmatmul.mubr.bf16.gmra.mrb[0].mxu0 %v3366
        %v3574 = vpop.f32.mrb[0].mxu0
        %v3575 = vadd.f32 %v3233, %v3574
        %v3576 = vpop.f32.mrb[0].mxu0
        %v3577 = vpop.f32.mrb[0].mxu0
        %v3578 = vadd.f32 %v3236, %v3577
        %v3579 = vpop.f32.mrb[0].mxu0
        %3580 = vmatprep.mubr.bf16.mxu0 0
        %3581 = vmatmul.mubr.bf16.gmra.mrb[0].mxu0 %v3375
        %v3582 = vpop.f32.mrb[0].mxu0
        %v3583 = vadd.f32 %v3241, %v3582
        %v3584 = vpop.f32.mrb[0].mxu0
        %v3585 = vpop.f32.mrb[0].mxu0
        %v3586 = vadd.f32 %v3244, %v3585
        %v3587 = vpop.f32.mrb[0].mxu0
        %3588 = vmatprep.mubr.bf16.mxu0 0
        %3589 = vmatmul.mubr.bf16.gmra.mrb[0].mxu0 %v3384
        %v3590 = vpop.f32.mrb[0].mxu0
        %v3591 = vadd.f32 %v3249, %v3590
        %v3592 = vpop.f32.mrb[0].mxu0
        %v3593 = vpop.f32.mrb[0].mxu0
        %v3594 = vadd.f32 %v3252, %v3593
        %v3595 = vpop.f32.mrb[0].mxu0
        %3596 = vmatprep.mubr.bf16.mxu0 0
        %3597 = vmatmul.mubr.bf16.gmra.mrb[0].mxu0 %v3393
        %v3598 = vpop.f32.mrb[0].mxu0
        %v3599 = vadd.f32 %v3257, %v3598
        %v3600 = vpop.f32.mrb[0].mxu0
        %v3601 = vpop.f32.mrb[0].mxu0
        %v3602 = vadd.f32 %v3260, %v3601
        %v3603 = vpop.f32.mrb[0].mxu0
        %3604 = vmatprep.mubr.bf16.mxu0 0
        %3605 = vmatmul.mubr.bf16.gmra.mrb[0].mxu0 %v3402
        %v3606 = vpop.f32.mrb[0].mxu0
        %v3607 = vadd.f32 %v3265, %v3606
        %v3608 = vpop.f32.mrb[0].mxu0
        %v3609 = vpop.f32.mrb[0].mxu0
        %v3610 = vadd.f32 %v3268, %v3609
        %v3611 = vpop.f32.mrb[0].mxu0
        %3612 = vmatprep.mubr.bf16.mxu0 0
        %3613 = vmatmul.mubr.bf16.gmra.mrb[0].mxu0 %v3411
        %v3614 = vpop.f32.mrb[0].mxu0
        %v3615 = vadd.f32 %v3273, %v3614
        %v3616 = vpop.f32.mrb[0].mxu0
        %v3617 = vpop.f32.mrb[0].mxu0
        %v3618 = vadd.f32 %v3276, %v3617
        %v3619 = vpop.f32.mrb[0].mxu0
        %3620 = vmatprep.mubr.bf16.mxu0 0
        %3621 = vmatmul.mubr.bf16.gmra.mrb[0].mxu0 %v3420
        %v3622 = vpop.f32.mrb[0].mxu0
        %v3623 = vadd.f32 %v3281, %v3622
        %v3624 = vpop.f32.mrb[0].mxu0
        %v3625 = vpop.f32.mrb[0].mxu0
        %v3626 = vadd.f32 %v3284, %v3625
        %v3627 = vpop.f32.mrb[0].mxu0
        %3628 = vmatprep.mubr.bf16.mxu0 0
        %3629 = vmatmul.mubr.bf16.gmra.mrb[0].mxu0 %v3429
        %v3630 = vpop.f32.mrb[0].mxu0
        %v3631 = vadd.f32 %v3289, %v3630
        %v3632 = vpop.f32.mrb[0].mxu0
        %v3633 = vpop.f32.mrb[0].mxu0
        %v3634 = vadd.f32 %v3292, %v3633
        %v3635 = vpop.f32.mrb[0].mxu0
        %3636 = vdwg.mxu0
        %v3637 = vpack.c.bf16 %v3039, %v3039
        %s3638 = scalar_lea.vmem %s796, 128 [#allocation4]
        %v3639 = vld [vmem:[%s3638] sm:$0xf]
        %v3640 = vld [vmem:[%s3638 + $0x4] sm:$0xf]
        %v3641 = vld [vmem:[%s3638 + $0x8] sm:$0xf]
        %v3642 = vld [vmem:[%s3638 + $0xc] sm:$0xf]
        %v3643 = vld [vmem:[%s3638 + $0x10] sm:$0xf]
        %v3644 = vld [vmem:[%s3638 + $0x14] sm:$0xf]
        %v3645 = vld [vmem:[%s3638 + $0x18] sm:$0xf]
        %v3646 = vld [vmem:[%s3638 + $0x1c] sm:$0xf]
        %v3647 = vld [vmem:[%s3638 + $0x20] sm:$0xf]
        %v3648 = vld [vmem:[%s3638 + $0x24] sm:$0xf]
        %v3649 = vld [vmem:[%s3638 + $0x28] sm:$0xf]
        %v3650 = vld [vmem:[%s3638 + $0x2c] sm:$0xf]
        %v3651 = vld [vmem:[%s3638 + $0x30] sm:$0xf]
        %v3652 = vld [vmem:[%s3638 + $0x34] sm:$0xf]
        %v3653 = vld [vmem:[%s3638 + $0x38] sm:$0xf]
        %v3654 = vld [vmem:[%s3638 + $0x3c] sm:$0xf]
        %vm3655 = vsmask.f32 7424
        %v3657 = vshrl.u32 %v3071, 16
        %v3659 = vshll.u32 %v3071, 16
        %v3661 = vrot.slane %v3659, 1
        %v3662 = vor.u32 %v3657, %v3661
        %v3664 = vshll.u32 %v3072, 16
        %v3666 = vrot.slane %v3664, 1
        %v3667 = vsel %vm3655, %v3662, %v3666
        %v3668 = vshrl.u32 %v3072, 16
        %v3670 = vor.u32 %v3668, %v3666
        %v3672 = vshll.u32 %v3073, 16
        %v3674 = vrot.slane %v3672, 1
        %v3675 = vsel %vm3655, %v3670, %v3674
        %v3676 = vshrl.u32 %v3073, 16
        %v3678 = vor.u32 %v3676, %v3674
        %v3680 = vshll.u32 %v3074, 16
        %v3682 = vrot.slane %v3680, 1
        %v3683 = vsel %vm3655, %v3678, %v3682
        %v3684 = vshrl.u32 %v3074, 16
        %v3686 = vor.u32 %v3684, %v3682
        %v3688 = vshll.u32 %v3075, 16
        %v3690 = vrot.slane %v3688, 1
        %v3691 = vsel %vm3655, %v3686, %v3690
        %v3692 = vshrl.u32 %v3075, 16
        %v3694 = vor.u32 %v3692, %v3690
        %v3696 = vshll.u32 %v3076, 16
        %v3698 = vrot.slane %v3696, 1
        %v3699 = vsel %vm3655, %v3694, %v3698
        %v3700 = vshrl.u32 %v3076, 16
        %v3702 = vor.u32 %v3700, %v3698
        %v3704 = vshll.u32 %v3077, 16
        %v3706 = vrot.slane %v3704, 1
        %v3707 = vsel %vm3655, %v3702, %v3706
        %v3708 = vshrl.u32 %v3077, 16
        %v3710 = vor.u32 %v3708, %v3706
        %v3712 = vshll.u32 %v3078, 16
        %v3714 = vrot.slane %v3712, 1
        %v3715 = vsel %vm3655, %v3710, %v3714
        %v3716 = vshrl.u32 %v3078, 16
        %v3718 = vor.u32 %v3716, %v3714
        %v3720 = vshll.u32 %v3079, 16
        %v3722 = vrot.slane %v3720, 1
        %v3723 = vsel %vm3655, %v3718, %v3722
        %v3724 = vshrl.u32 %v3079, 16
        %v3726 = vor.u32 %v3724, %v3722
        %v3728 = vshll.u32 %v3080, 16
        %v3730 = vrot.slane %v3728, 1
        %v3731 = vsel %vm3655, %v3726, %v3730
        %v3732 = vshrl.u32 %v3080, 16
        %v3734 = vor.u32 %v3732, %v3730
        %v3736 = vshll.u32 %v3081, 16
        %v3738 = vrot.slane %v3736, 1
        %v3739 = vsel %vm3655, %v3734, %v3738
        %v3740 = vshrl.u32 %v3081, 16
        %v3742 = vor.u32 %v3740, %v3738
        %v3744 = vshll.u32 %v3082, 16
        %v3746 = vrot.slane %v3744, 1
        %v3747 = vsel %vm3655, %v3742, %v3746
        %v3748 = vshrl.u32 %v3082, 16
        %v3750 = vor.u32 %v3748, %v3746
        %v3752 = vshll.u32 %v3083, 16
        %v3754 = vrot.slane %v3752, 1
        %v3755 = vsel %vm3655, %v3750, %v3754
        %v3756 = vshrl.u32 %v3083, 16
        %v3758 = vor.u32 %v3756, %v3754
        %v3760 = vshll.u32 %v3084, 16
        %v3762 = vrot.slane %v3760, 1
        %v3763 = vsel %vm3655, %v3758, %v3762
        %v3764 = vshrl.u32 %v3084, 16
        %v3766 = vor.u32 %v3764, %v3762
        %v3768 = vshll.u32 %v3637, 16
        %v3770 = vrot.slane %v3768, 1
        %v3771 = vsel %vm3655, %v3766, %v3770
        %v3802 = vunpack.c.l.b16 %v3639
        %v3803 = vunpack.c.l.b16 %v3640
        %v3804 = vunpack.c.l.b16 %v3641
        %v3805 = vunpack.c.l.b16 %v3642
        %v3806 = vunpack.c.l.b16 %v3643
        %v3807 = vunpack.c.l.b16 %v3644
        %v3808 = vunpack.c.l.b16 %v3645
        %v3809 = vunpack.c.l.b16 %v3646
        %v3810 = vunpack.c.l.b16 %v3647
        %v3811 = vunpack.c.l.b16 %v3648
        %v3812 = vunpack.c.l.b16 %v3649
        %v3813 = vunpack.c.l.b16 %v3650
        %v3814 = vunpack.c.l.b16 %v3651
        %v3815 = vunpack.c.l.b16 %v3652
        %v3816 = vunpack.c.l.b16 %v3653
        %v3817 = vunpack.c.l.b16 %v3654
        %v3818 = vpack.c.b16 %v3803, %v3802
        %v3819 = vpack.c.b16 %v3805, %v3804
        %v3820 = vpack.c.b16 %v3807, %v3806
        %v3821 = vpack.c.b16 %v3809, %v3808
        %v3822 = vpack.c.b16 %v3811, %v3810
        %v3823 = vpack.c.b16 %v3813, %v3812
        %v3824 = vpack.c.b16 %v3815, %v3814
        %v3825 = vpack.c.b16 %v3817, %v3816
        %3834 = vmatprep.subr.bf16.mxu0 0
        %3835 = vmatpush1.bf16.msra.mxu0 %v3818
        %3836 = vmatprep.subr.bf16.mxu0 0
        %3837 = vmatpush1.bf16.msra.mxu0 %v3819
        %3838 = vmatprep.subr.bf16.mxu0 0
        %3839 = vmatpush1.bf16.msra.mxu0 %v3820
        %3840 = vmatprep.subr.bf16.mxu0 0
        %3841 = vmatpush1.bf16.msra.mxu0 %v3821
        %3842 = vmatprep.subr.bf16.mxu0 0
        %3843 = vmatpush1.bf16.msra.mxu0 %v3822
        %3844 = vmatprep.subr.bf16.mxu0 0
        %3845 = vmatpush1.bf16.msra.mxu0 %v3823
        %3846 = vmatprep.subr.bf16.mxu0 0
        %3847 = vmatpush1.bf16.msra.mxu0 %v3824
        %3848 = vmatprep.subr.bf16.mxu0 0
        %3849 = vmatpush1.bf16.msra.mxu0 %v3825
        %3850 = vmatprep.subr.bf16.mxu0 0
        %3851 = vmatpush1.bf16.msra.mxu0 0
        %3852 = vmatprep.subr.bf16.mxu0 0
        %3853 = vmatpush1.bf16.msra.mxu0 0
        %3854 = vmatprep.subr.bf16.mxu0 0
        %3855 = vmatpush1.bf16.msra.mxu0 0
        %3856 = vmatprep.subr.bf16.mxu0 0
        %3857 = vmatpush1.bf16.msra.mxu0 0
        %3858 = vmatprep.subr.bf16.mxu0 0
        %3859 = vmatpush1.bf16.msra.mxu0 0
        %3860 = vmatprep.subr.bf16.mxu0 0
        %3861 = vmatpush1.bf16.msra.mxu0 0
        %3862 = vmatprep.subr.bf16.mxu0 0
        %3863 = vmatpush1.bf16.msra.mxu0 0
        %3864 = vmatprep.subr.bf16.mxu0 0
        %3865 = vmatpush1.bf16.msra.mxu0 0
        %3866 = vmatprep.mubr.bf16.mxu0 0
        %3867 = vmatmul.mubr.bf16.gmra.mrb[0].mxu0 %v3667
        %v3868 = vpop.f32.mrb[0].mxu0
        %v3869 = vadd.f32 0.0, %v3868
        %v3870 = vpop.f32.mrb[0].mxu0
        %v3871 = vpop.f32.mrb[0].mxu0
        %v3872 = vadd.f32 0.0, %v3871
        %v3873 = vpop.f32.mrb[0].mxu0
        %3874 = vmatprep.mubr.bf16.mxu0 0
        %3875 = vmatmul.mubr.bf16.gmra.mrb[0].mxu0 %v3675
        %v3876 = vpop.f32.mrb[0].mxu0
        %v3877 = vadd.f32 0.0, %v3876
        %v3878 = vpop.f32.mrb[0].mxu0
        %v3879 = vpop.f32.mrb[0].mxu0
        %v3880 = vadd.f32 0.0, %v3879
        %v3881 = vpop.f32.mrb[0].mxu0
        %3882 = vmatprep.mubr.bf16.mxu0 0
        %3883 = vmatmul.mubr.bf16.gmra.mrb[0].mxu0 %v3683
        %v3884 = vpop.f32.mrb[0].mxu0
        %v3885 = vadd.f32 0.0, %v3884
        %v3886 = vpop.f32.mrb[0].mxu0
        %v3887 = vpop.f32.mrb[0].mxu0
        %v3888 = vadd.f32 0.0, %v3887
        %v3889 = vpop.f32.mrb[0].mxu0
        %3890 = vmatprep.mubr.bf16.mxu0 0
        %3891 = vmatmul.mubr.bf16.gmra.mrb[0].mxu0 %v3691
        %v3892 = vpop.f32.mrb[0].mxu0
        %v3893 = vadd.f32 0.0, %v3892
        %v3894 = vpop.f32.mrb[0].mxu0
        %v3895 = vpop.f32.mrb[0].mxu0
        %v3896 = vadd.f32 0.0, %v3895
        %v3897 = vpop.f32.mrb[0].mxu0
        %3898 = vmatprep.mubr.bf16.mxu0 0
        %3899 = vmatmul.mubr.bf16.gmra.mrb[0].mxu0 %v3699
        %v3900 = vpop.f32.mrb[0].mxu0
        %v3901 = vadd.f32 0.0, %v3900
        %v3902 = vpop.f32.mrb[0].mxu0
        %v3903 = vpop.f32.mrb[0].mxu0
        %v3904 = vadd.f32 0.0, %v3903
        %v3905 = vpop.f32.mrb[0].mxu0
        %3906 = vmatprep.mubr.bf16.mxu0 0
        %3907 = vmatmul.mubr.bf16.gmra.mrb[0].mxu0 %v3707
        %v3908 = vpop.f32.mrb[0].mxu0
        %v3909 = vadd.f32 0.0, %v3908
        %v3910 = vpop.f32.mrb[0].mxu0
        %v3911 = vpop.f32.mrb[0].mxu0
        %v3912 = vadd.f32 0.0, %v3911
        %v3913 = vpop.f32.mrb[0].mxu0
        %3914 = vmatprep.mubr.bf16.mxu0 0
        %3915 = vmatmul.mubr.bf16.gmra.mrb[0].mxu0 %v3715
        %v3916 = vpop.f32.mrb[0].mxu0
        %v3917 = vadd.f32 0.0, %v3916
        %v3918 = vpop.f32.mrb[0].mxu0
        %v3919 = vpop.f32.mrb[0].mxu0
        %v3920 = vadd.f32 0.0, %v3919
        %v3921 = vpop.f32.mrb[0].mxu0
        %3922 = vmatprep.mubr.bf16.mxu0 0
        %3923 = vmatmul.mubr.bf16.gmra.mrb[0].mxu0 %v3723
        %v3924 = vpop.f32.mrb[0].mxu0
        %v3925 = vadd.f32 0.0, %v3924
        %v3926 = vpop.f32.mrb[0].mxu0
        %v3927 = vpop.f32.mrb[0].mxu0
        %v3928 = vadd.f32 0.0, %v3927
        %v3929 = vpop.f32.mrb[0].mxu0
        %3930 = vmatprep.mubr.bf16.mxu0 0
        %3931 = vmatmul.mubr.bf16.gmra.mrb[0].mxu0 %v3731
        %v3932 = vpop.f32.mrb[0].mxu0
        %v3933 = vadd.f32 0.0, %v3932
        %v3934 = vpop.f32.mrb[0].mxu0
        %v3935 = vpop.f32.mrb[0].mxu0
        %v3936 = vadd.f32 0.0, %v3935
        %v3937 = vpop.f32.mrb[0].mxu0
        %3938 = vmatprep.mubr.bf16.mxu0 0
        %3939 = vmatmul.mubr.bf16.gmra.mrb[0].mxu0 %v3739
        %v3940 = vpop.f32.mrb[0].mxu0
        %v3941 = vadd.f32 0.0, %v3940
        %v3942 = vpop.f32.mrb[0].mxu0
        %v3943 = vpop.f32.mrb[0].mxu0
        %v3944 = vadd.f32 0.0, %v3943
        %v3945 = vpop.f32.mrb[0].mxu0
        %3946 = vmatprep.mubr.bf16.mxu0 0
        %3947 = vmatmul.mubr.bf16.gmra.mrb[0].mxu0 %v3747
        %v3948 = vpop.f32.mrb[0].mxu0
        %v3949 = vadd.f32 0.0, %v3948
        %v3950 = vpop.f32.mrb[0].mxu0
        %v3951 = vpop.f32.mrb[0].mxu0
        %v3952 = vadd.f32 0.0, %v3951
        %v3953 = vpop.f32.mrb[0].mxu0
        %3954 = vmatprep.mubr.bf16.mxu0 0
        %3955 = vmatmul.mubr.bf16.gmra.mrb[0].mxu0 %v3755
        %v3956 = vpop.f32.mrb[0].mxu0
        %v3957 = vadd.f32 0.0, %v3956
        %v3958 = vpop.f32.mrb[0].mxu0
        %v3959 = vpop.f32.mrb[0].mxu0
        %v3960 = vadd.f32 0.0, %v3959
        %v3961 = vpop.f32.mrb[0].mxu0
        %3962 = vmatprep.mubr.bf16.mxu0 0
        %3963 = vmatmul.mubr.bf16.gmra.mrb[0].mxu0 %v3763
        %v3964 = vpop.f32.mrb[0].mxu0
        %v3965 = vadd.f32 0.0, %v3964
        %v3966 = vpop.f32.mrb[0].mxu0
        %v3967 = vpop.f32.mrb[0].mxu0
        %v3968 = vadd.f32 0.0, %v3967
        %v3969 = vpop.f32.mrb[0].mxu0
        %3970 = vmatprep.mubr.bf16.mxu0 0
        %3971 = vmatmul.mubr.bf16.gmra.mrb[0].mxu0 %v3771
        %v3972 = vpop.f32.mrb[0].mxu0
        %v3973 = vadd.f32 0.0, %v3972
        %v3974 = vpop.f32.mrb[0].mxu0
        %v3975 = vpop.f32.mrb[0].mxu0
        %v3976 = vadd.f32 0.0, %v3975
        %v3977 = vpop.f32.mrb[0].mxu0
        %3978 = vdwg.mxu0
        %v3979 = vadd.f32 %v3527, %v3869
        %v3980 = vadd.f32 %v3530, %v3872
        %v3981 = vadd.f32 %v3535, %v3877
        %v3982 = vadd.f32 %v3538, %v3880
        %v3983 = vadd.f32 %v3543, %v3885
        %v3984 = vadd.f32 %v3546, %v3888
        %v3985 = vadd.f32 %v3551, %v3893
        %v3986 = vadd.f32 %v3554, %v3896
        %v3987 = vadd.f32 %v3559, %v3901
        %v3988 = vadd.f32 %v3562, %v3904
        %v3989 = vadd.f32 %v3567, %v3909
        %v3990 = vadd.f32 %v3570, %v3912
        %v3991 = vadd.f32 %v3575, %v3917
        %v3992 = vadd.f32 %v3578, %v3920
        %v3993 = vadd.f32 %v3583, %v3925
        %v3994 = vadd.f32 %v3586, %v3928
        %v3995 = vadd.f32 %v3591, %v3933
        %v3996 = vadd.f32 %v3594, %v3936
        %v3997 = vadd.f32 %v3599, %v3941
        %v3998 = vadd.f32 %v3602, %v3944
        %v3999 = vadd.f32 %v3607, %v3949
        %v4000 = vadd.f32 %v3610, %v3952
        %v4001 = vadd.f32 %v3615, %v3957
        %v4002 = vadd.f32 %v3618, %v3960
        %v4003 = vadd.f32 %v3623, %v3965
        %v4004 = vadd.f32 %v3626, %v3968
        %v4005 = vadd.f32 %v3631, %v3973
        %v4006 = vadd.f32 %v3634, %v3976
        %v4007 = vld [vmem:[#allocation2 + $0x10] sm:$0xff]
        %v4008 = vld [vmem:[#allocation2 + $0x18] sm:$0xff]
        %v4009 = vld [vmem:[#allocation2 + $0x20] sm:$0xff]
        %v4010 = vld [vmem:[#allocation2 + $0x28] sm:$0xff]
        %v4011 = vld [vmem:[#allocation2 + $0x30] sm:$0xff]
        %v4012 = vld [vmem:[#allocation2 + $0x38] sm:$0xff]
        %v4013 = vld [vmem:[#allocation2 + $0x40] sm:$0xff]
        %v4014 = vld [vmem:[#allocation2 + $0x48] sm:$0xff]
        %v4015 = vld [vmem:[#allocation2 + $0x50] sm:$0xff]
        %v4016 = vld [vmem:[#allocation2 + $0x58] sm:$0xff]
        %v4017 = vld [vmem:[#allocation2 + $0x60] sm:$0xff]
        %v4018 = vld [vmem:[#allocation2 + $0x68] sm:$0xff]
        %v4019 = vld [vmem:[#allocation2 + $0x70] sm:$0xff]
        %v4020 = vld [vmem:[#allocation2 + $0x78] sm:$0xff]
        %v4021 = vld [vmem:[#allocation2 + $0x80] sm:$0xff]
        %v4022 = vld [vmem:[#allocation2 + $0x88] sm:$0xff]
        %v4023 = vld [vmem:[#allocation2 + $0x90] sm:$0xff]
        %v4024 = vld [vmem:[#allocation2 + $0x98] sm:$0xff]
        %v4025 = vld [vmem:[#allocation2 + $0xa0] sm:$0xff]
        %v4026 = vld [vmem:[#allocation2 + $0xa8] sm:$0xff]
        %v4027 = vld [vmem:[#allocation2 + $0xb0] sm:$0xff]
        %v4028 = vld [vmem:[#allocation2 + $0xb8] sm:$0xff]
        %v4029 = vld [vmem:[#allocation2 + $0xc0] sm:$0xff]
        %v4030 = vld [vmem:[#allocation2 + $0xc8] sm:$0xff]
        %v4031 = vld [vmem:[#allocation2 + $0xd0] sm:$0xff]
        %v4032 = vld [vmem:[#allocation2 + $0xd8] sm:$0xff]
        %v4033 = vld [vmem:[#allocation2 + $0xe0] sm:$0xff]
        %v4034 = vld [vmem:[#allocation2 + $0xe8] sm:$0xff]
        %v4035 = vld [vmem:[#allocation2 + $0xf0] sm:$0xff]
        %v4036 = vld [vmem:[#allocation2 + $0xf8] sm:$0xff]
        %v4037 = vpack.c.bf16 %v4008, %v4007
        %v4038 = vpack.c.bf16 %v4010, %v4009
        %v4039 = vpack.c.bf16 %v4012, %v4011
        %v4040 = vpack.c.bf16 %v4014, %v4013
        %v4041 = vpack.c.bf16 %v4016, %v4015
        %v4042 = vpack.c.bf16 %v4018, %v4017
        %v4043 = vpack.c.bf16 %v4020, %v4019
        %v4044 = vpack.c.bf16 %v4022, %v4021
        %v4045 = vpack.c.bf16 %v4024, %v4023
        %v4046 = vpack.c.bf16 %v4026, %v4025
        %v4047 = vpack.c.bf16 %v4028, %v4027
        %v4048 = vpack.c.bf16 %v4030, %v4029
        %v4049 = vpack.c.bf16 %v4032, %v4031
        %v4050 = vpack.c.bf16 %v4034, %v4033
        %v4051 = vpack.c.bf16 %v4035, %v4035
        %s4052 = scalar_lea.vmem %s796, 192 [#allocation4]
        %v4053 = vld [vmem:[%s4052] sm:$0xf]
        %v4054 = vld [vmem:[%s4052 + $0x4] sm:$0xf]
        %v4055 = vld [vmem:[%s4052 + $0x8] sm:$0xf]
        %v4056 = vld [vmem:[%s4052 + $0xc] sm:$0xf]
        %v4057 = vld [vmem:[%s4052 + $0x10] sm:$0xf]
        %v4058 = vld [vmem:[%s4052 + $0x14] sm:$0xf]
        %v4059 = vld [vmem:[%s4052 + $0x18] sm:$0xf]
        %v4060 = vld [vmem:[%s4052 + $0x1c] sm:$0xf]
        %v4061 = vld [vmem:[%s4052 + $0x20] sm:$0xf]
        %v4062 = vld [vmem:[%s4052 + $0x24] sm:$0xf]
        %v4063 = vld [vmem:[%s4052 + $0x28] sm:$0xf]
        %v4064 = vld [vmem:[%s4052 + $0x2c] sm:$0xf]
        %v4065 = vld [vmem:[%s4052 + $0x30] sm:$0xf]
        %v4066 = vld [vmem:[%s4052 + $0x34] sm:$0xf]
        %v4067 = vld [vmem:[%s4052 + $0x38] sm:$0xf]
        %v4068 = vld [vmem:[%s4052 + $0x3c] sm:$0xf]
        %v4070 = vshrl.u32 %v4037, 16
        %v4072 = vrot.slane %v4070, 3
        %v4073 = vshll.u32 %v4037, 16
        %v4075 = vrot.slane %v4073, 4
        %v4076 = vor.u32 %v4072, %v4075
        %v4078 = vshrl.u32 %v4038, 16
        %v4080 = vrot.slane %v4078, 3
        %v4081 = vshll.u32 %v4038, 16
        %v4083 = vrot.slane %v4081, 4
        %v4084 = vor.u32 %v4080, %v4083
        %v4085 = vsel %vm3295, %v4076, %v4084
        %v4087 = vshrl.u32 %v4039, 16
        %v4089 = vrot.slane %v4087, 3
        %v4090 = vshll.u32 %v4039, 16
        %v4092 = vrot.slane %v4090, 4
        %v4093 = vor.u32 %v4089, %v4092
        %v4094 = vsel %vm3295, %v4084, %v4093
        %v4096 = vshrl.u32 %v4040, 16
        %v4098 = vrot.slane %v4096, 3
        %v4099 = vshll.u32 %v4040, 16
        %v4101 = vrot.slane %v4099, 4
        %v4102 = vor.u32 %v4098, %v4101
        %v4103 = vsel %vm3295, %v4093, %v4102
        %v4105 = vshrl.u32 %v4041, 16
        %v4107 = vrot.slane %v4105, 3
        %v4108 = vshll.u32 %v4041, 16
        %v4110 = vrot.slane %v4108, 4
        %v4111 = vor.u32 %v4107, %v4110
        %v4112 = vsel %vm3295, %v4102, %v4111
        %v4114 = vshrl.u32 %v4042, 16
        %v4116 = vrot.slane %v4114, 3
        %v4117 = vshll.u32 %v4042, 16
        %v4119 = vrot.slane %v4117, 4
        %v4120 = vor.u32 %v4116, %v4119
        %v4121 = vsel %vm3295, %v4111, %v4120
        %v4123 = vshrl.u32 %v4043, 16
        %v4125 = vrot.slane %v4123, 3
        %v4126 = vshll.u32 %v4043, 16
        %v4128 = vrot.slane %v4126, 4
        %v4129 = vor.u32 %v4125, %v4128
        %v4130 = vsel %vm3295, %v4120, %v4129
        %v4132 = vshrl.u32 %v4044, 16
        %v4134 = vrot.slane %v4132, 3
        %v4135 = vshll.u32 %v4044, 16
        %v4137 = vrot.slane %v4135, 4
        %v4138 = vor.u32 %v4134, %v4137
        %v4139 = vsel %vm3295, %v4129, %v4138
        %v4141 = vshrl.u32 %v4045, 16
        %v4143 = vrot.slane %v4141, 3
        %v4144 = vshll.u32 %v4045, 16
        %v4146 = vrot.slane %v4144, 4
        %v4147 = vor.u32 %v4143, %v4146
        %v4148 = vsel %vm3295, %v4138, %v4147
        %v4150 = vshrl.u32 %v4046, 16
        %v4152 = vrot.slane %v4150, 3
        %v4153 = vshll.u32 %v4046, 16
        %v4155 = vrot.slane %v4153, 4
        %v4156 = vor.u32 %v4152, %v4155
        %v4157 = vsel %vm3295, %v4147, %v4156
        %v4159 = vshrl.u32 %v4047, 16
        %v4161 = vrot.slane %v4159, 3
        %v4162 = vshll.u32 %v4047, 16
        %v4164 = vrot.slane %v4162, 4
        %v4165 = vor.u32 %v4161, %v4164
        %v4166 = vsel %vm3295, %v4156, %v4165
        %v4168 = vshrl.u32 %v4048, 16
        %v4170 = vrot.slane %v4168, 3
        %v4171 = vshll.u32 %v4048, 16
        %v4173 = vrot.slane %v4171, 4
        %v4174 = vor.u32 %v4170, %v4173
        %v4175 = vsel %vm3295, %v4165, %v4174
        %v4177 = vshrl.u32 %v4049, 16
        %v4179 = vrot.slane %v4177, 3
        %v4180 = vshll.u32 %v4049, 16
        %v4182 = vrot.slane %v4180, 4
        %v4183 = vor.u32 %v4179, %v4182
        %v4184 = vsel %vm3295, %v4174, %v4183
        %v4186 = vshrl.u32 %v4050, 16
        %v4188 = vrot.slane %v4186, 3
        %v4189 = vshll.u32 %v4050, 16
        %v4191 = vrot.slane %v4189, 4
        %v4192 = vor.u32 %v4188, %v4191
        %v4193 = vsel %vm3295, %v4183, %v4192
        %v4195 = vshrl.u32 %v4051, 16
        %v4197 = vrot.slane %v4195, 3
        %v4198 = vshll.u32 %v4051, 16
        %v4200 = vrot.slane %v4198, 4
        %v4201 = vor.u32 %v4197, %v4200
        %v4202 = vsel %vm3295, %v4192, %v4201
        %v4233 = vunpack.c.l.b16 %v4053
        %v4234 = vunpack.c.l.b16 %v4054
        %v4235 = vunpack.c.l.b16 %v4055
        %v4236 = vunpack.c.l.b16 %v4056
        %v4237 = vunpack.c.l.b16 %v4057
        %v4238 = vunpack.c.l.b16 %v4058
        %v4239 = vunpack.c.l.b16 %v4059
        %v4240 = vunpack.c.l.b16 %v4060
        %v4241 = vunpack.c.l.b16 %v4061
        %v4242 = vunpack.c.l.b16 %v4062
        %v4243 = vunpack.c.l.b16 %v4063
        %v4244 = vunpack.c.l.b16 %v4064
        %v4245 = vunpack.c.l.b16 %v4065
        %v4246 = vunpack.c.l.b16 %v4066
        %v4247 = vunpack.c.l.b16 %v4067
        %v4248 = vunpack.c.l.b16 %v4068
        %v4249 = vpack.c.b16 %v4234, %v4233
        %v4250 = vpack.c.b16 %v4236, %v4235
        %v4251 = vpack.c.b16 %v4238, %v4237
        %v4252 = vpack.c.b16 %v4240, %v4239
        %v4253 = vpack.c.b16 %v4242, %v4241
        %v4254 = vpack.c.b16 %v4244, %v4243
        %v4255 = vpack.c.b16 %v4246, %v4245
        %v4256 = vpack.c.b16 %v4248, %v4247
        %4265 = vmatprep.subr.bf16.mxu0 0
        %4266 = vmatpush1.bf16.msra.mxu0 %v4249
        %4267 = vmatprep.subr.bf16.mxu0 0
        %4268 = vmatpush1.bf16.msra.mxu0 %v4250
        %4269 = vmatprep.subr.bf16.mxu0 0
        %4270 = vmatpush1.bf16.msra.mxu0 %v4251
        %4271 = vmatprep.subr.bf16.mxu0 0
        %4272 = vmatpush1.bf16.msra.mxu0 %v4252
        %4273 = vmatprep.subr.bf16.mxu0 0
        %4274 = vmatpush1.bf16.msra.mxu0 %v4253
        %4275 = vmatprep.subr.bf16.mxu0 0
        %4276 = vmatpush1.bf16.msra.mxu0 %v4254
        %4277 = vmatprep.subr.bf16.mxu0 0
        %4278 = vmatpush1.bf16.msra.mxu0 %v4255
        %4279 = vmatprep.subr.bf16.mxu0 0
        %4280 = vmatpush1.bf16.msra.mxu0 %v4256
        %4281 = vmatprep.subr.bf16.mxu0 0
        %4282 = vmatpush1.bf16.msra.mxu0 0
        %4283 = vmatprep.subr.bf16.mxu0 0
        %4284 = vmatpush1.bf16.msra.mxu0 0
        %4285 = vmatprep.subr.bf16.mxu0 0
        %4286 = vmatpush1.bf16.msra.mxu0 0
        %4287 = vmatprep.subr.bf16.mxu0 0
        %4288 = vmatpush1.bf16.msra.mxu0 0
        %4289 = vmatprep.subr.bf16.mxu0 0
        %4290 = vmatpush1.bf16.msra.mxu0 0
        %4291 = vmatprep.subr.bf16.mxu0 0
        %4292 = vmatpush1.bf16.msra.mxu0 0
        %4293 = vmatprep.subr.bf16.mxu0 0
        %4294 = vmatpush1.bf16.msra.mxu0 0
        %4295 = vmatprep.subr.bf16.mxu0 0
        %4296 = vmatpush1.bf16.msra.mxu0 0
        %4297 = vmatprep.mubr.bf16.mxu0 0
        %4298 = vmatmul.mubr.bf16.gmra.mrb[0].mxu0 %v4085
        %v4299 = vpop.f32.mrb[0].mxu0
        %v4300 = vadd.f32 0.0, %v4299
        %v4301 = vpop.f32.mrb[0].mxu0
        %v4302 = vpop.f32.mrb[0].mxu0
        %v4303 = vadd.f32 0.0, %v4302
        %v4304 = vpop.f32.mrb[0].mxu0
        %4305 = vmatprep.mubr.bf16.mxu0 0
        %4306 = vmatmul.mubr.bf16.gmra.mrb[0].mxu0 %v4094
        %v4307 = vpop.f32.mrb[0].mxu0
        %v4308 = vadd.f32 0.0, %v4307
        %v4309 = vpop.f32.mrb[0].mxu0
        %v4310 = vpop.f32.mrb[0].mxu0
        %v4311 = vadd.f32 0.0, %v4310
        %v4312 = vpop.f32.mrb[0].mxu0
        %4313 = vmatprep.mubr.bf16.mxu0 0
        %4314 = vmatmul.mubr.bf16.gmra.mrb[0].mxu0 %v4103
        %v4315 = vpop.f32.mrb[0].mxu0
        %v4316 = vadd.f32 0.0, %v4315
        %v4317 = vpop.f32.mrb[0].mxu0
        %v4318 = vpop.f32.mrb[0].mxu0
        %v4319 = vadd.f32 0.0, %v4318
        %v4320 = vpop.f32.mrb[0].mxu0
        %4321 = vmatprep.mubr.bf16.mxu0 0
        %4322 = vmatmul.mubr.bf16.gmra.mrb[0].mxu0 %v4112
        %v4323 = vpop.f32.mrb[0].mxu0
        %v4324 = vadd.f32 0.0, %v4323
        %v4325 = vpop.f32.mrb[0].mxu0
        %v4326 = vpop.f32.mrb[0].mxu0
        %v4327 = vadd.f32 0.0, %v4326
        %v4328 = vpop.f32.mrb[0].mxu0
        %4329 = vmatprep.mubr.bf16.mxu0 0
        %4330 = vmatmul.mubr.bf16.gmra.mrb[0].mxu0 %v4121
        %v4331 = vpop.f32.mrb[0].mxu0
        %v4332 = vadd.f32 0.0, %v4331
        %v4333 = vpop.f32.mrb[0].mxu0
        %v4334 = vpop.f32.mrb[0].mxu0
        %v4335 = vadd.f32 0.0, %v4334
        %v4336 = vpop.f32.mrb[0].mxu0
        %4337 = vmatprep.mubr.bf16.mxu0 0
        %4338 = vmatmul.mubr.bf16.gmra.mrb[0].mxu0 %v4130
        %v4339 = vpop.f32.mrb[0].mxu0
        %v4340 = vadd.f32 0.0, %v4339
        %v4341 = vpop.f32.mrb[0].mxu0
        %v4342 = vpop.f32.mrb[0].mxu0
        %v4343 = vadd.f32 0.0, %v4342
        %v4344 = vpop.f32.mrb[0].mxu0
        %4345 = vmatprep.mubr.bf16.mxu0 0
        %4346 = vmatmul.mubr.bf16.gmra.mrb[0].mxu0 %v4139
        %v4347 = vpop.f32.mrb[0].mxu0
        %v4348 = vadd.f32 0.0, %v4347
        %v4349 = vpop.f32.mrb[0].mxu0
        %v4350 = vpop.f32.mrb[0].mxu0
        %v4351 = vadd.f32 0.0, %v4350
        %v4352 = vpop.f32.mrb[0].mxu0
        %4353 = vmatprep.mubr.bf16.mxu0 0
        %4354 = vmatmul.mubr.bf16.gmra.mrb[0].mxu0 %v4148
        %v4355 = vpop.f32.mrb[0].mxu0
        %v4356 = vadd.f32 0.0, %v4355
        %v4357 = vpop.f32.mrb[0].mxu0
        %v4358 = vpop.f32.mrb[0].mxu0
        %v4359 = vadd.f32 0.0, %v4358
        %v4360 = vpop.f32.mrb[0].mxu0
        %4361 = vmatprep.mubr.bf16.mxu0 0
        %4362 = vmatmul.mubr.bf16.gmra.mrb[0].mxu0 %v4157
        %v4363 = vpop.f32.mrb[0].mxu0
        %v4364 = vadd.f32 0.0, %v4363
        %v4365 = vpop.f32.mrb[0].mxu0
        %v4366 = vpop.f32.mrb[0].mxu0
        %v4367 = vadd.f32 0.0, %v4366
        %v4368 = vpop.f32.mrb[0].mxu0
        %4369 = vmatprep.mubr.bf16.mxu0 0
        %4370 = vmatmul.mubr.bf16.gmra.mrb[0].mxu0 %v4166
        %v4371 = vpop.f32.mrb[0].mxu0
        %v4372 = vadd.f32 0.0, %v4371
        %v4373 = vpop.f32.mrb[0].mxu0
        %v4374 = vpop.f32.mrb[0].mxu0
        %v4375 = vadd.f32 0.0, %v4374
        %v4376 = vpop.f32.mrb[0].mxu0
        %4377 = vmatprep.mubr.bf16.mxu0 0
        %4378 = vmatmul.mubr.bf16.gmra.mrb[0].mxu0 %v4175
        %v4379 = vpop.f32.mrb[0].mxu0
        %v4380 = vadd.f32 0.0, %v4379
        %v4381 = vpop.f32.mrb[0].mxu0
        %v4382 = vpop.f32.mrb[0].mxu0
        %v4383 = vadd.f32 0.0, %v4382
        %v4384 = vpop.f32.mrb[0].mxu0
        %4385 = vmatprep.mubr.bf16.mxu0 0
        %4386 = vmatmul.mubr.bf16.gmra.mrb[0].mxu0 %v4184
        %v4387 = vpop.f32.mrb[0].mxu0
        %v4388 = vadd.f32 0.0, %v4387
        %v4389 = vpop.f32.mrb[0].mxu0
        %v4390 = vpop.f32.mrb[0].mxu0
        %v4391 = vadd.f32 0.0, %v4390
        %v4392 = vpop.f32.mrb[0].mxu0
        %4393 = vmatprep.mubr.bf16.mxu0 0
        %4394 = vmatmul.mubr.bf16.gmra.mrb[0].mxu0 %v4193
        %v4395 = vpop.f32.mrb[0].mxu0
        %v4396 = vadd.f32 0.0, %v4395
        %v4397 = vpop.f32.mrb[0].mxu0
        %v4398 = vpop.f32.mrb[0].mxu0
        %v4399 = vadd.f32 0.0, %v4398
        %v4400 = vpop.f32.mrb[0].mxu0
        %4401 = vmatprep.mubr.bf16.mxu0 0
        %4402 = vmatmul.mubr.bf16.gmra.mrb[0].mxu0 %v4202
        %v4403 = vpop.f32.mrb[0].mxu0
        %v4404 = vadd.f32 0.0, %v4403
        %v4405 = vpop.f32.mrb[0].mxu0
        %v4406 = vpop.f32.mrb[0].mxu0
        %v4407 = vadd.f32 0.0, %v4406
        %v4408 = vpop.f32.mrb[0].mxu0
        %4409 = vdwg.mxu0
        %v4410 = vadd.f32 %v3979, %v4300
        %v4411 = vadd.f32 %v3980, %v4303
        %v4412 = vadd.f32 %v3981, %v4308
        %v4413 = vadd.f32 %v3982, %v4311
        %v4414 = vadd.f32 %v3983, %v4316
        %v4415 = vadd.f32 %v3984, %v4319
        %v4416 = vadd.f32 %v3985, %v4324
        %v4417 = vadd.f32 %v3986, %v4327
        %v4418 = vadd.f32 %v3987, %v4332
        %v4419 = vadd.f32 %v3988, %v4335
        %v4420 = vadd.f32 %v3989, %v4340
        %v4421 = vadd.f32 %v3990, %v4343
        %v4422 = vadd.f32 %v3991, %v4348
        %v4423 = vadd.f32 %v3992, %v4351
        %v4424 = vadd.f32 %v3993, %v4356
        %v4425 = vadd.f32 %v3994, %v4359
        %v4426 = vadd.f32 %v3995, %v4364
        %v4427 = vadd.f32 %v3996, %v4367
        %v4428 = vadd.f32 %v3997, %v4372
        %v4429 = vadd.f32 %v3998, %v4375
        %v4430 = vadd.f32 %v3999, %v4380
        %v4431 = vadd.f32 %v4000, %v4383
        %v4432 = vadd.f32 %v4001, %v4388
        %v4433 = vadd.f32 %v4002, %v4391
        %v4434 = vadd.f32 %v4003, %v4396
        %v4435 = vadd.f32 %v4004, %v4399
        %v4436 = vadd.f32 %v4005, %v4404
        %v4437 = vadd.f32 %v4006, %v4407
        %v4438 = vpack.c.bf16 %v4009, %v4008
        %v4439 = vpack.c.bf16 %v4011, %v4010
        %v4440 = vpack.c.bf16 %v4013, %v4012
        %v4441 = vpack.c.bf16 %v4015, %v4014
        %v4442 = vpack.c.bf16 %v4017, %v4016
        %v4443 = vpack.c.bf16 %v4019, %v4018
        %v4444 = vpack.c.bf16 %v4021, %v4020
        %v4445 = vpack.c.bf16 %v4023, %v4022
        %v4446 = vpack.c.bf16 %v4025, %v4024
        %v4447 = vpack.c.bf16 %v4027, %v4026
        %v4448 = vpack.c.bf16 %v4029, %v4028
        %v4449 = vpack.c.bf16 %v4031, %v4030
        %v4450 = vpack.c.bf16 %v4033, %v4032
        %v4451 = vpack.c.bf16 %v4035, %v4034
        %s4452 = scalar_lea.vmem %s796, 256 [#allocation4]
        %v4453 = vld [vmem:[%s4452] sm:$0xf]
        %v4454 = vld [vmem:[%s4452 + $0x4] sm:$0xf]
        %v4455 = vld [vmem:[%s4452 + $0x8] sm:$0xf]
        %v4456 = vld [vmem:[%s4452 + $0xc] sm:$0xf]
        %v4457 = vld [vmem:[%s4452 + $0x10] sm:$0xf]
        %v4458 = vld [vmem:[%s4452 + $0x14] sm:$0xf]
        %v4459 = vld [vmem:[%s4452 + $0x18] sm:$0xf]
        %v4460 = vld [vmem:[%s4452 + $0x1c] sm:$0xf]
        %v4461 = vld [vmem:[%s4452 + $0x20] sm:$0xf]
        %v4462 = vld [vmem:[%s4452 + $0x24] sm:$0xf]
        %v4463 = vld [vmem:[%s4452 + $0x28] sm:$0xf]
        %v4464 = vld [vmem:[%s4452 + $0x2c] sm:$0xf]
        %v4465 = vld [vmem:[%s4452 + $0x30] sm:$0xf]
        %v4466 = vld [vmem:[%s4452 + $0x34] sm:$0xf]
        %v4467 = vld [vmem:[%s4452 + $0x38] sm:$0xf]
        %v4468 = vld [vmem:[%s4452 + $0x3c] sm:$0xf]
        %v4485 = vunpack.c.l.b16 %v4453
        %v4486 = vunpack.c.l.b16 %v4454
        %v4487 = vunpack.c.l.b16 %v4455
        %v4488 = vunpack.c.l.b16 %v4456
        %v4489 = vunpack.c.l.b16 %v4457
        %v4490 = vunpack.c.l.b16 %v4458
        %v4491 = vunpack.c.l.b16 %v4459
        %v4492 = vunpack.c.l.b16 %v4460
        %v4493 = vunpack.c.l.b16 %v4461
        %v4494 = vunpack.c.l.b16 %v4462
        %v4495 = vunpack.c.l.b16 %v4463
        %v4496 = vunpack.c.l.b16 %v4464
        %v4497 = vunpack.c.l.b16 %v4465
        %v4498 = vunpack.c.l.b16 %v4466
        %v4499 = vunpack.c.l.b16 %v4467
        %v4500 = vunpack.c.l.b16 %v4468
        %v4501 = vpack.c.b16 %v4486, %v4485
        %v4502 = vpack.c.b16 %v4488, %v4487
        %v4503 = vpack.c.b16 %v4490, %v4489
        %v4504 = vpack.c.b16 %v4492, %v4491
        %v4505 = vpack.c.b16 %v4494, %v4493
        %v4506 = vpack.c.b16 %v4496, %v4495
        %v4507 = vpack.c.b16 %v4498, %v4497
        %v4508 = vpack.c.b16 %v4500, %v4499
        %4517 = vmatprep.subr.bf16.mxu0 0
        %4518 = vmatpush1.bf16.msra.mxu0 %v4501
        %4519 = vmatprep.subr.bf16.mxu0 0
        %4520 = vmatpush1.bf16.msra.mxu0 %v4502
        %4521 = vmatprep.subr.bf16.mxu0 0
        %4522 = vmatpush1.bf16.msra.mxu0 %v4503
        %4523 = vmatprep.subr.bf16.mxu0 0
        %4524 = vmatpush1.bf16.msra.mxu0 %v4504
        %4525 = vmatprep.subr.bf16.mxu0 0
        %4526 = vmatpush1.bf16.msra.mxu0 %v4505
        %4527 = vmatprep.subr.bf16.mxu0 0
        %4528 = vmatpush1.bf16.msra.mxu0 %v4506
        %4529 = vmatprep.subr.bf16.mxu0 0
        %4530 = vmatpush1.bf16.msra.mxu0 %v4507
        %4531 = vmatprep.subr.bf16.mxu0 0
        %4532 = vmatpush1.bf16.msra.mxu0 %v4508
        %4533 = vmatprep.subr.bf16.mxu0 0
        %4534 = vmatpush1.bf16.msra.mxu0 0
        %4535 = vmatprep.subr.bf16.mxu0 0
        %4536 = vmatpush1.bf16.msra.mxu0 0
        %4537 = vmatprep.subr.bf16.mxu0 0
        %4538 = vmatpush1.bf16.msra.mxu0 0
        %4539 = vmatprep.subr.bf16.mxu0 0
        %4540 = vmatpush1.bf16.msra.mxu0 0
        %4541 = vmatprep.subr.bf16.mxu0 0
        %4542 = vmatpush1.bf16.msra.mxu0 0
        %4543 = vmatprep.subr.bf16.mxu0 0
        %4544 = vmatpush1.bf16.msra.mxu0 0
        %4545 = vmatprep.subr.bf16.mxu0 0
        %4546 = vmatpush1.bf16.msra.mxu0 0
        %4547 = vmatprep.subr.bf16.mxu0 0
        %4548 = vmatpush1.bf16.msra.mxu0 0
        %4549 = vmatprep.mubr.bf16.mxu0 0
        %4550 = vmatmul.mubr.bf16.gmra.mrb[0].mxu0 %v4438
        %v4551 = vpop.f32.mrb[0].mxu0
        %v4552 = vadd.f32 0.0, %v4551
        %v4553 = vpop.f32.mrb[0].mxu0
        %v4554 = vpop.f32.mrb[0].mxu0
        %v4555 = vadd.f32 0.0, %v4554
        %v4556 = vpop.f32.mrb[0].mxu0
        %4557 = vmatprep.mubr.bf16.mxu0 0
        %4558 = vmatmul.mubr.bf16.gmra.mrb[0].mxu0 %v4439
        %v4559 = vpop.f32.mrb[0].mxu0
        %v4560 = vadd.f32 0.0, %v4559
        %v4561 = vpop.f32.mrb[0].mxu0
        %v4562 = vpop.f32.mrb[0].mxu0
        %v4563 = vadd.f32 0.0, %v4562
        %v4564 = vpop.f32.mrb[0].mxu0
        %4565 = vmatprep.mubr.bf16.mxu0 0
        %4566 = vmatmul.mubr.bf16.gmra.mrb[0].mxu0 %v4440
        %v4567 = vpop.f32.mrb[0].mxu0
        %v4568 = vadd.f32 0.0, %v4567
        %v4569 = vpop.f32.mrb[0].mxu0
        %v4570 = vpop.f32.mrb[0].mxu0
        %v4571 = vadd.f32 0.0, %v4570
        %v4572 = vpop.f32.mrb[0].mxu0
        %4573 = vmatprep.mubr.bf16.mxu0 0
        %4574 = vmatmul.mubr.bf16.gmra.mrb[0].mxu0 %v4441
        %v4575 = vpop.f32.mrb[0].mxu0
        %v4576 = vadd.f32 0.0, %v4575
        %v4577 = vpop.f32.mrb[0].mxu0
        %v4578 = vpop.f32.mrb[0].mxu0
        %v4579 = vadd.f32 0.0, %v4578
        %v4580 = vpop.f32.mrb[0].mxu0
        %4581 = vmatprep.mubr.bf16.mxu0 0
        %4582 = vmatmul.mubr.bf16.gmra.mrb[0].mxu0 %v4442
        %v4583 = vpop.f32.mrb[0].mxu0
        %v4584 = vadd.f32 0.0, %v4583
        %v4585 = vpop.f32.mrb[0].mxu0
        %v4586 = vpop.f32.mrb[0].mxu0
        %v4587 = vadd.f32 0.0, %v4586
        %v4588 = vpop.f32.mrb[0].mxu0
        %4589 = vmatprep.mubr.bf16.mxu0 0
        %4590 = vmatmul.mubr.bf16.gmra.mrb[0].mxu0 %v4443
        %v4591 = vpop.f32.mrb[0].mxu0
        %v4592 = vadd.f32 0.0, %v4591
        %v4593 = vpop.f32.mrb[0].mxu0
        %v4594 = vpop.f32.mrb[0].mxu0
        %v4595 = vadd.f32 0.0, %v4594
        %v4596 = vpop.f32.mrb[0].mxu0
        %4597 = vmatprep.mubr.bf16.mxu0 0
        %4598 = vmatmul.mubr.bf16.gmra.mrb[0].mxu0 %v4444
        %v4599 = vpop.f32.mrb[0].mxu0
        %v4600 = vadd.f32 0.0, %v4599
        %v4601 = vpop.f32.mrb[0].mxu0
        %v4602 = vpop.f32.mrb[0].mxu0
        %v4603 = vadd.f32 0.0, %v4602
        %v4604 = vpop.f32.mrb[0].mxu0
        %4605 = vmatprep.mubr.bf16.mxu0 0
        %4606 = vmatmul.mubr.bf16.gmra.mrb[0].mxu0 %v4445
        %v4607 = vpop.f32.mrb[0].mxu0
        %v4608 = vadd.f32 0.0, %v4607
        %v4609 = vpop.f32.mrb[0].mxu0
        %v4610 = vpop.f32.mrb[0].mxu0
        %v4611 = vadd.f32 0.0, %v4610
        %v4612 = vpop.f32.mrb[0].mxu0
        %4613 = vmatprep.mubr.bf16.mxu0 0
        %4614 = vmatmul.mubr.bf16.gmra.mrb[0].mxu0 %v4446
        %v4615 = vpop.f32.mrb[0].mxu0
        %v4616 = vadd.f32 0.0, %v4615
        %v4617 = vpop.f32.mrb[0].mxu0
        %v4618 = vpop.f32.mrb[0].mxu0
        %v4619 = vadd.f32 0.0, %v4618
        %v4620 = vpop.f32.mrb[0].mxu0
        %4621 = vmatprep.mubr.bf16.mxu0 0
        %4622 = vmatmul.mubr.bf16.gmra.mrb[0].mxu0 %v4447
        %v4623 = vpop.f32.mrb[0].mxu0
        %v4624 = vadd.f32 0.0, %v4623
        %v4625 = vpop.f32.mrb[0].mxu0
        %v4626 = vpop.f32.mrb[0].mxu0
        %v4627 = vadd.f32 0.0, %v4626
        %v4628 = vpop.f32.mrb[0].mxu0
        %4629 = vmatprep.mubr.bf16.mxu0 0
        %4630 = vmatmul.mubr.bf16.gmra.mrb[0].mxu0 %v4448
        %v4631 = vpop.f32.mrb[0].mxu0
        %v4632 = vadd.f32 0.0, %v4631
        %v4633 = vpop.f32.mrb[0].mxu0
        %v4634 = vpop.f32.mrb[0].mxu0
        %v4635 = vadd.f32 0.0, %v4634
        %v4636 = vpop.f32.mrb[0].mxu0
        %4637 = vmatprep.mubr.bf16.mxu0 0
        %4638 = vmatmul.mubr.bf16.gmra.mrb[0].mxu0 %v4449
        %v4639 = vpop.f32.mrb[0].mxu0
        %v4640 = vadd.f32 0.0, %v4639
        %v4641 = vpop.f32.mrb[0].mxu0
        %v4642 = vpop.f32.mrb[0].mxu0
        %v4643 = vadd.f32 0.0, %v4642
        %v4644 = vpop.f32.mrb[0].mxu0
        %4645 = vmatprep.mubr.bf16.mxu0 0
        %4646 = vmatmul.mubr.bf16.gmra.mrb[0].mxu0 %v4450
        %v4647 = vpop.f32.mrb[0].mxu0
        %v4648 = vadd.f32 0.0, %v4647
        %v4649 = vpop.f32.mrb[0].mxu0
        %v4650 = vpop.f32.mrb[0].mxu0
        %v4651 = vadd.f32 0.0, %v4650
        %v4652 = vpop.f32.mrb[0].mxu0
        %4653 = vmatprep.mubr.bf16.mxu0 0
        %4654 = vmatmul.mubr.bf16.gmra.mrb[0].mxu0 %v4451
        %v4655 = vpop.f32.mrb[0].mxu0
        %v4656 = vadd.f32 0.0, %v4655
        %v4657 = vpop.f32.mrb[0].mxu0
        %v4658 = vpop.f32.mrb[0].mxu0
        %v4659 = vadd.f32 0.0, %v4658
        %v4660 = vpop.f32.mrb[0].mxu0
        %4661 = vdwg.mxu0
        %v4662 = vadd.f32 %v4410, %v4552
        %v4663 = vadd.f32 %v4411, %v4555
        %v4664 = vadd.f32 %v4412, %v4560
        %v4665 = vadd.f32 %v4413, %v4563
        %v4666 = vadd.f32 %v4414, %v4568
        %v4667 = vadd.f32 %v4415, %v4571
        %v4668 = vadd.f32 %v4416, %v4576
        %v4669 = vadd.f32 %v4417, %v4579
        %v4670 = vadd.f32 %v4418, %v4584
        %v4671 = vadd.f32 %v4419, %v4587
        %v4672 = vadd.f32 %v4420, %v4592
        %v4673 = vadd.f32 %v4421, %v4595
        %v4674 = vadd.f32 %v4422, %v4600
        %v4675 = vadd.f32 %v4423, %v4603
        %v4676 = vadd.f32 %v4424, %v4608
        %v4677 = vadd.f32 %v4425, %v4611
        %v4678 = vadd.f32 %v4426, %v4616
        %v4679 = vadd.f32 %v4427, %v4619
        %v4680 = vadd.f32 %v4428, %v4624
        %v4681 = vadd.f32 %v4429, %v4627
        %v4682 = vadd.f32 %v4430, %v4632
        %v4683 = vadd.f32 %v4431, %v4635
        %v4684 = vadd.f32 %v4432, %v4640
        %v4685 = vadd.f32 %v4433, %v4643
        %v4686 = vadd.f32 %v4434, %v4648
        %v4687 = vadd.f32 %v4435, %v4651
        %v4688 = vadd.f32 %v4436, %v4656
        %v4689 = vadd.f32 %v4437, %v4659
        %v4690 = vpack.c.bf16 %v4036, %v4036
        %s4691 = scalar_lea.vmem %s796, 320 [#allocation4]
        %v4692 = vld [vmem:[%s4691] sm:$0xf]
        %v4693 = vld [vmem:[%s4691 + $0x4] sm:$0xf]
        %v4694 = vld [vmem:[%s4691 + $0x8] sm:$0xf]
        %v4695 = vld [vmem:[%s4691 + $0xc] sm:$0xf]
        %v4696 = vld [vmem:[%s4691 + $0x10] sm:$0xf]
        %v4697 = vld [vmem:[%s4691 + $0x14] sm:$0xf]
        %v4698 = vld [vmem:[%s4691 + $0x18] sm:$0xf]
        %v4699 = vld [vmem:[%s4691 + $0x1c] sm:$0xf]
        %v4700 = vld [vmem:[%s4691 + $0x20] sm:$0xf]
        %v4701 = vld [vmem:[%s4691 + $0x24] sm:$0xf]
        %v4702 = vld [vmem:[%s4691 + $0x28] sm:$0xf]
        %v4703 = vld [vmem:[%s4691 + $0x2c] sm:$0xf]
        %v4704 = vld [vmem:[%s4691 + $0x30] sm:$0xf]
        %v4705 = vld [vmem:[%s4691 + $0x34] sm:$0xf]
        %v4706 = vld [vmem:[%s4691 + $0x38] sm:$0xf]
        %v4707 = vld [vmem:[%s4691 + $0x3c] sm:$0xf]
        %v4709 = vshrl.u32 %v4438, 16
        %v4711 = vshll.u32 %v4438, 16
        %v4713 = vrot.slane %v4711, 1
        %v4714 = vor.u32 %v4709, %v4713
        %v4716 = vshll.u32 %v4439, 16
        %v4718 = vrot.slane %v4716, 1
        %v4719 = vsel %vm3655, %v4714, %v4718
        %v4720 = vshrl.u32 %v4439, 16
        %v4722 = vor.u32 %v4720, %v4718
        %v4724 = vshll.u32 %v4440, 16
        %v4726 = vrot.slane %v4724, 1
        %v4727 = vsel %vm3655, %v4722, %v4726
        %v4728 = vshrl.u32 %v4440, 16
        %v4730 = vor.u32 %v4728, %v4726
        %v4732 = vshll.u32 %v4441, 16
        %v4734 = vrot.slane %v4732, 1
        %v4735 = vsel %vm3655, %v4730, %v4734
        %v4736 = vshrl.u32 %v4441, 16
        %v4738 = vor.u32 %v4736, %v4734
        %v4740 = vshll.u32 %v4442, 16
        %v4742 = vrot.slane %v4740, 1
        %v4743 = vsel %vm3655, %v4738, %v4742
        %v4744 = vshrl.u32 %v4442, 16
        %v4746 = vor.u32 %v4744, %v4742
        %v4748 = vshll.u32 %v4443, 16
        %v4750 = vrot.slane %v4748, 1
        %v4751 = vsel %vm3655, %v4746, %v4750
        %v4752 = vshrl.u32 %v4443, 16
        %v4754 = vor.u32 %v4752, %v4750
        %v4756 = vshll.u32 %v4444, 16
        %v4758 = vrot.slane %v4756, 1
        %v4759 = vsel %vm3655, %v4754, %v4758
        %v4760 = vshrl.u32 %v4444, 16
        %v4762 = vor.u32 %v4760, %v4758
        %v4764 = vshll.u32 %v4445, 16
        %v4766 = vrot.slane %v4764, 1
        %v4767 = vsel %vm3655, %v4762, %v4766
        %v4768 = vshrl.u32 %v4445, 16
        %v4770 = vor.u32 %v4768, %v4766
        %v4772 = vshll.u32 %v4446, 16
        %v4774 = vrot.slane %v4772, 1
        %v4775 = vsel %vm3655, %v4770, %v4774
        %v4776 = vshrl.u32 %v4446, 16
        %v4778 = vor.u32 %v4776, %v4774
        %v4780 = vshll.u32 %v4447, 16
        %v4782 = vrot.slane %v4780, 1
        %v4783 = vsel %vm3655, %v4778, %v4782
        %v4784 = vshrl.u32 %v4447, 16
        %v4786 = vor.u32 %v4784, %v4782
        %v4788 = vshll.u32 %v4448, 16
        %v4790 = vrot.slane %v4788, 1
        %v4791 = vsel %vm3655, %v4786, %v4790
        %v4792 = vshrl.u32 %v4448, 16
        %v4794 = vor.u32 %v4792, %v4790
        %v4796 = vshll.u32 %v4449, 16
        %v4798 = vrot.slane %v4796, 1
        %v4799 = vsel %vm3655, %v4794, %v4798
        %v4800 = vshrl.u32 %v4449, 16
        %v4802 = vor.u32 %v4800, %v4798
        %v4804 = vshll.u32 %v4450, 16
        %v4806 = vrot.slane %v4804, 1
        %v4807 = vsel %vm3655, %v4802, %v4806
        %v4808 = vshrl.u32 %v4450, 16
        %v4810 = vor.u32 %v4808, %v4806
        %v4812 = vshll.u32 %v4451, 16
        %v4814 = vrot.slane %v4812, 1
        %v4815 = vsel %vm3655, %v4810, %v4814
        %v4816 = vshrl.u32 %v4451, 16
        %v4818 = vor.u32 %v4816, %v4814
        %v4820 = vshll.u32 %v4690, 16
        %v4822 = vrot.slane %v4820, 1
        %v4823 = vsel %vm3655, %v4818, %v4822
        %v4854 = vunpack.c.l.b16 %v4692
        %v4855 = vunpack.c.l.b16 %v4693
        %v4856 = vunpack.c.l.b16 %v4694
        %v4857 = vunpack.c.l.b16 %v4695
        %v4858 = vunpack.c.l.b16 %v4696
        %v4859 = vunpack.c.l.b16 %v4697
        %v4860 = vunpack.c.l.b16 %v4698
        %v4861 = vunpack.c.l.b16 %v4699
        %v4862 = vunpack.c.l.b16 %v4700
        %v4863 = vunpack.c.l.b16 %v4701
        %v4864 = vunpack.c.l.b16 %v4702
        %v4865 = vunpack.c.l.b16 %v4703
        %v4866 = vunpack.c.l.b16 %v4704
        %v4867 = vunpack.c.l.b16 %v4705
        %v4868 = vunpack.c.l.b16 %v4706
        %v4869 = vunpack.c.l.b16 %v4707
        %v4870 = vpack.c.b16 %v4855, %v4854
        %v4871 = vpack.c.b16 %v4857, %v4856
        %v4872 = vpack.c.b16 %v4859, %v4858
        %v4873 = vpack.c.b16 %v4861, %v4860
        %v4874 = vpack.c.b16 %v4863, %v4862
        %v4875 = vpack.c.b16 %v4865, %v4864
        %v4876 = vpack.c.b16 %v4867, %v4866
        %v4877 = vpack.c.b16 %v4869, %v4868
        %4886 = vmatprep.subr.bf16.mxu0 0
        %4887 = vmatpush1.bf16.msra.mxu0 %v4870
        %4888 = vmatprep.subr.bf16.mxu0 0
        %4889 = vmatpush1.bf16.msra.mxu0 %v4871
        %4890 = vmatprep.subr.bf16.mxu0 0
        %4891 = vmatpush1.bf16.msra.mxu0 %v4872
        %4892 = vmatprep.subr.bf16.mxu0 0
        %4893 = vmatpush1.bf16.msra.mxu0 %v4873
        %4894 = vmatprep.subr.bf16.mxu0 0
        %4895 = vmatpush1.bf16.msra.mxu0 %v4874
        %4896 = vmatprep.subr.bf16.mxu0 0
        %4897 = vmatpush1.bf16.msra.mxu0 %v4875
        %4898 = vmatprep.subr.bf16.mxu0 0
        %4899 = vmatpush1.bf16.msra.mxu0 %v4876
        %4900 = vmatprep.subr.bf16.mxu0 0
        %4901 = vmatpush1.bf16.msra.mxu0 %v4877
        %4902 = vmatprep.subr.bf16.mxu0 0
        %4903 = vmatpush1.bf16.msra.mxu0 0
        %4904 = vmatprep.subr.bf16.mxu0 0
        %4905 = vmatpush1.bf16.msra.mxu0 0
        %4906 = vmatprep.subr.bf16.mxu0 0
        %4907 = vmatpush1.bf16.msra.mxu0 0
        %4908 = vmatprep.subr.bf16.mxu0 0
        %4909 = vmatpush1.bf16.msra.mxu0 0
        %4910 = vmatprep.subr.bf16.mxu0 0
        %4911 = vmatpush1.bf16.msra.mxu0 0
        %4912 = vmatprep.subr.bf16.mxu0 0
        %4913 = vmatpush1.bf16.msra.mxu0 0
        %4914 = vmatprep.subr.bf16.mxu0 0
        %4915 = vmatpush1.bf16.msra.mxu0 0
        %4916 = vmatprep.subr.bf16.mxu0 0
        %4917 = vmatpush1.bf16.msra.mxu0 0
        %4918 = vmatprep.mubr.bf16.mxu0 0
        %4919 = vmatmul.mubr.bf16.gmra.mrb[0].mxu0 %v4719
        %v4920 = vpop.f32.mrb[0].mxu0
        %v4921 = vadd.f32 0.0, %v4920
        %v4922 = vpop.f32.mrb[0].mxu0
        %v4923 = vpop.f32.mrb[0].mxu0
        %v4924 = vadd.f32 0.0, %v4923
        %v4925 = vpop.f32.mrb[0].mxu0
        %4926 = vmatprep.mubr.bf16.mxu0 0
        %4927 = vmatmul.mubr.bf16.gmra.mrb[0].mxu0 %v4727
        %v4928 = vpop.f32.mrb[0].mxu0
        %v4929 = vadd.f32 0.0, %v4928
        %v4930 = vpop.f32.mrb[0].mxu0
        %v4931 = vpop.f32.mrb[0].mxu0
        %v4932 = vadd.f32 0.0, %v4931
        %v4933 = vpop.f32.mrb[0].mxu0
        %4934 = vmatprep.mubr.bf16.mxu0 0
        %4935 = vmatmul.mubr.bf16.gmra.mrb[0].mxu0 %v4735
        %v4936 = vpop.f32.mrb[0].mxu0
        %v4937 = vadd.f32 0.0, %v4936
        %v4938 = vpop.f32.mrb[0].mxu0
        %v4939 = vpop.f32.mrb[0].mxu0
        %v4940 = vadd.f32 0.0, %v4939
        %v4941 = vpop.f32.mrb[0].mxu0
        %4942 = vmatprep.mubr.bf16.mxu0 0
        %4943 = vmatmul.mubr.bf16.gmra.mrb[0].mxu0 %v4743
        %v4944 = vpop.f32.mrb[0].mxu0
        %v4945 = vadd.f32 0.0, %v4944
        %v4946 = vpop.f32.mrb[0].mxu0
        %v4947 = vpop.f32.mrb[0].mxu0
        %v4948 = vadd.f32 0.0, %v4947
        %v4949 = vpop.f32.mrb[0].mxu0
        %4950 = vmatprep.mubr.bf16.mxu0 0
        %4951 = vmatmul.mubr.bf16.gmra.mrb[0].mxu0 %v4751
        %v4952 = vpop.f32.mrb[0].mxu0
        %v4953 = vadd.f32 0.0, %v4952
        %v4954 = vpop.f32.mrb[0].mxu0
        %v4955 = vpop.f32.mrb[0].mxu0
        %v4956 = vadd.f32 0.0, %v4955
        %v4957 = vpop.f32.mrb[0].mxu0
        %4958 = vmatprep.mubr.bf16.mxu0 0
        %4959 = vmatmul.mubr.bf16.gmra.mrb[0].mxu0 %v4759
        %v4960 = vpop.f32.mrb[0].mxu0
        %v4961 = vadd.f32 0.0, %v4960
        %v4962 = vpop.f32.mrb[0].mxu0
        %v4963 = vpop.f32.mrb[0].mxu0
        %v4964 = vadd.f32 0.0, %v4963
        %v4965 = vpop.f32.mrb[0].mxu0
        %4966 = vmatprep.mubr.bf16.mxu0 0
        %4967 = vmatmul.mubr.bf16.gmra.mrb[0].mxu0 %v4767
        %v4968 = vpop.f32.mrb[0].mxu0
        %v4969 = vadd.f32 0.0, %v4968
        %v4970 = vpop.f32.mrb[0].mxu0
        %v4971 = vpop.f32.mrb[0].mxu0
        %v4972 = vadd.f32 0.0, %v4971
        %v4973 = vpop.f32.mrb[0].mxu0
        %4974 = vmatprep.mubr.bf16.mxu0 0
        %4975 = vmatmul.mubr.bf16.gmra.mrb[0].mxu0 %v4775
        %v4976 = vpop.f32.mrb[0].mxu0
        %v4977 = vadd.f32 0.0, %v4976
        %v4978 = vpop.f32.mrb[0].mxu0
        %v4979 = vpop.f32.mrb[0].mxu0
        %v4980 = vadd.f32 0.0, %v4979
        %v4981 = vpop.f32.mrb[0].mxu0
        %4982 = vmatprep.mubr.bf16.mxu0 0
        %4983 = vmatmul.mubr.bf16.gmra.mrb[0].mxu0 %v4783
        %v4984 = vpop.f32.mrb[0].mxu0
        %v4985 = vadd.f32 0.0, %v4984
        %v4986 = vpop.f32.mrb[0].mxu0
        %v4987 = vpop.f32.mrb[0].mxu0
        %v4988 = vadd.f32 0.0, %v4987
        %v4989 = vpop.f32.mrb[0].mxu0
        %4990 = vmatprep.mubr.bf16.mxu0 0
        %4991 = vmatmul.mubr.bf16.gmra.mrb[0].mxu0 %v4791
        %v4992 = vpop.f32.mrb[0].mxu0
        %v4993 = vadd.f32 0.0, %v4992
        %v4994 = vpop.f32.mrb[0].mxu0
        %v4995 = vpop.f32.mrb[0].mxu0
        %v4996 = vadd.f32 0.0, %v4995
        %v4997 = vpop.f32.mrb[0].mxu0
        %4998 = vmatprep.mubr.bf16.mxu0 0
        %4999 = vmatmul.mubr.bf16.gmra.mrb[0].mxu0 %v4799
        %v5000 = vpop.f32.mrb[0].mxu0
        %v5001 = vadd.f32 0.0, %v5000
        %v5002 = vpop.f32.mrb[0].mxu0
        %v5003 = vpop.f32.mrb[0].mxu0
        %v5004 = vadd.f32 0.0, %v5003
        %v5005 = vpop.f32.mrb[0].mxu0
        %5006 = vmatprep.mubr.bf16.mxu0 0
        %5007 = vmatmul.mubr.bf16.gmra.mrb[0].mxu0 %v4807
        %v5008 = vpop.f32.mrb[0].mxu0
        %v5009 = vadd.f32 0.0, %v5008
        %v5010 = vpop.f32.mrb[0].mxu0
        %v5011 = vpop.f32.mrb[0].mxu0
        %v5012 = vadd.f32 0.0, %v5011
        %v5013 = vpop.f32.mrb[0].mxu0
        %5014 = vmatprep.mubr.bf16.mxu0 0
        %5015 = vmatmul.mubr.bf16.gmra.mrb[0].mxu0 %v4815
        %v5016 = vpop.f32.mrb[0].mxu0
        %v5017 = vadd.f32 0.0, %v5016
        %v5018 = vpop.f32.mrb[0].mxu0
        %v5019 = vpop.f32.mrb[0].mxu0
        %v5020 = vadd.f32 0.0, %v5019
        %v5021 = vpop.f32.mrb[0].mxu0
        %5022 = vmatprep.mubr.bf16.mxu0 0
        %5023 = vmatmul.mubr.bf16.gmra.mrb[0].mxu0 %v4823
        %v5024 = vpop.f32.mrb[0].mxu0
        %v5025 = vadd.f32 0.0, %v5024
        %v5026 = vpop.f32.mrb[0].mxu0
        %v5027 = vpop.f32.mrb[0].mxu0
        %v5028 = vadd.f32 0.0, %v5027
        %v5029 = vpop.f32.mrb[0].mxu0
        %5030 = vdwg.mxu0
        %v5031 = vadd.f32 %v4662, %v4921
        %v5032 = vadd.f32 %v4663, %v4924
        %v5033 = vadd.f32 %v4664, %v4929
        %v5034 = vadd.f32 %v4665, %v4932
        %v5035 = vadd.f32 %v4666, %v4937
        %v5036 = vadd.f32 %v4667, %v4940
        %v5037 = vadd.f32 %v4668, %v4945
        %v5038 = vadd.f32 %v4669, %v4948
        %v5039 = vadd.f32 %v4670, %v4953
        %v5040 = vadd.f32 %v4671, %v4956
        %v5041 = vadd.f32 %v4672, %v4961
        %v5042 = vadd.f32 %v4673, %v4964
        %v5043 = vadd.f32 %v4674, %v4969
        %v5044 = vadd.f32 %v4675, %v4972
        %v5045 = vadd.f32 %v4676, %v4977
        %v5046 = vadd.f32 %v4677, %v4980
        %v5047 = vadd.f32 %v4678, %v4985
        %v5048 = vadd.f32 %v4679, %v4988
        %v5049 = vadd.f32 %v4680, %v4993
        %v5050 = vadd.f32 %v4681, %v4996
        %v5051 = vadd.f32 %v4682, %v5001
        %v5052 = vadd.f32 %v4683, %v5004
        %v5053 = vadd.f32 %v4684, %v5009
        %v5054 = vadd.f32 %v4685, %v5012
        %v5055 = vadd.f32 %v4686, %v5017
        %v5056 = vadd.f32 %v4687, %v5020
        %v5057 = vadd.f32 %v4688, %v5025
        %v5058 = vadd.f32 %v4689, %v5028
        %v5059 = vld [vmem:[#allocation2 + $0x20] sm:$0xff]
        %v5060 = vld [vmem:[#allocation2 + $0x28] sm:$0xff]
        %v5061 = vld [vmem:[#allocation2 + $0x30] sm:$0xff]
        %v5062 = vld [vmem:[#allocation2 + $0x38] sm:$0xff]
        %v5063 = vld [vmem:[#allocation2 + $0x40] sm:$0xff]
        %v5064 = vld [vmem:[#allocation2 + $0x48] sm:$0xff]
        %v5065 = vld [vmem:[#allocation2 + $0x50] sm:$0xff]
        %v5066 = vld [vmem:[#allocation2 + $0x58] sm:$0xff]
        %v5067 = vld [vmem:[#allocation2 + $0x60] sm:$0xff]
        %v5068 = vld [vmem:[#allocation2 + $0x68] sm:$0xff]
        %v5069 = vld [vmem:[#allocation2 + $0x70] sm:$0xff]
        %v5070 = vld [vmem:[#allocation2 + $0x78] sm:$0xff]
        %v5071 = vld [vmem:[#allocation2 + $0x80] sm:$0xff]
        %v5072 = vld [vmem:[#allocation2 + $0x88] sm:$0xff]
        %v5073 = vld [vmem:[#allocation2 + $0x90] sm:$0xff]
        %v5074 = vld [vmem:[#allocation2 + $0x98] sm:$0xff]
        %v5075 = vld [vmem:[#allocation2 + $0xa0] sm:$0xff]
        %v5076 = vld [vmem:[#allocation2 + $0xa8] sm:$0xff]
        %v5077 = vld [vmem:[#allocation2 + $0xb0] sm:$0xff]
        %v5078 = vld [vmem:[#allocation2 + $0xb8] sm:$0xff]
        %v5079 = vld [vmem:[#allocation2 + $0xc0] sm:$0xff]
        %v5080 = vld [vmem:[#allocation2 + $0xc8] sm:$0xff]
        %v5081 = vld [vmem:[#allocation2 + $0xd0] sm:$0xff]
        %v5082 = vld [vmem:[#allocation2 + $0xd8] sm:$0xff]
        %v5083 = vld [vmem:[#allocation2 + $0xe0] sm:$0xff]
        %v5084 = vld [vmem:[#allocation2 + $0xe8] sm:$0xff]
        %v5085 = vld [vmem:[#allocation2 + $0xf0] sm:$0xff]
        %v5086 = vld [vmem:[#allocation2 + $0xf8] sm:$0xff]
        %v5087 = vld [vmem:[#allocation2 + $0x100] sm:$0xff]
        %v5088 = vld [vmem:[#allocation2 + $0x108] sm:$0xff]
        %v5089 = vpack.c.bf16 %v5060, %v5059
        %v5090 = vpack.c.bf16 %v5062, %v5061
        %v5091 = vpack.c.bf16 %v5064, %v5063
        %v5092 = vpack.c.bf16 %v5066, %v5065
        %v5093 = vpack.c.bf16 %v5068, %v5067
        %v5094 = vpack.c.bf16 %v5070, %v5069
        %v5095 = vpack.c.bf16 %v5072, %v5071
        %v5096 = vpack.c.bf16 %v5074, %v5073
        %v5097 = vpack.c.bf16 %v5076, %v5075
        %v5098 = vpack.c.bf16 %v5078, %v5077
        %v5099 = vpack.c.bf16 %v5080, %v5079
        %v5100 = vpack.c.bf16 %v5082, %v5081
        %v5101 = vpack.c.bf16 %v5084, %v5083
        %v5102 = vpack.c.bf16 %v5086, %v5085
        %v5103 = vpack.c.bf16 %v5087, %v5087
        %s5104 = scalar_lea.vmem %s796, 384 [#allocation4]
        %v5105 = vld [vmem:[%s5104] sm:$0xf]
        %v5106 = vld [vmem:[%s5104 + $0x4] sm:$0xf]
        %v5107 = vld [vmem:[%s5104 + $0x8] sm:$0xf]
        %v5108 = vld [vmem:[%s5104 + $0xc] sm:$0xf]
        %v5109 = vld [vmem:[%s5104 + $0x10] sm:$0xf]
        %v5110 = vld [vmem:[%s5104 + $0x14] sm:$0xf]
        %v5111 = vld [vmem:[%s5104 + $0x18] sm:$0xf]
        %v5112 = vld [vmem:[%s5104 + $0x1c] sm:$0xf]
        %v5113 = vld [vmem:[%s5104 + $0x20] sm:$0xf]
        %v5114 = vld [vmem:[%s5104 + $0x24] sm:$0xf]
        %v5115 = vld [vmem:[%s5104 + $0x28] sm:$0xf]
        %v5116 = vld [vmem:[%s5104 + $0x2c] sm:$0xf]
        %v5117 = vld [vmem:[%s5104 + $0x30] sm:$0xf]
        %v5118 = vld [vmem:[%s5104 + $0x34] sm:$0xf]
        %v5119 = vld [vmem:[%s5104 + $0x38] sm:$0xf]
        %v5120 = vld [vmem:[%s5104 + $0x3c] sm:$0xf]
        %v5122 = vshrl.u32 %v5089, 16
        %v5124 = vrot.slane %v5122, 3
        %v5125 = vshll.u32 %v5089, 16
        %v5127 = vrot.slane %v5125, 4
        %v5128 = vor.u32 %v5124, %v5127
        %v5130 = vshrl.u32 %v5090, 16
        %v5132 = vrot.slane %v5130, 3
        %v5133 = vshll.u32 %v5090, 16
        %v5135 = vrot.slane %v5133, 4
        %v5136 = vor.u32 %v5132, %v5135
        %v5137 = vsel %vm3295, %v5128, %v5136
        %v5139 = vshrl.u32 %v5091, 16
        %v5141 = vrot.slane %v5139, 3
        %v5142 = vshll.u32 %v5091, 16
        %v5144 = vrot.slane %v5142, 4
        %v5145 = vor.u32 %v5141, %v5144
        %v5146 = vsel %vm3295, %v5136, %v5145
        %v5148 = vshrl.u32 %v5092, 16
        %v5150 = vrot.slane %v5148, 3
        %v5151 = vshll.u32 %v5092, 16
        %v5153 = vrot.slane %v5151, 4
        %v5154 = vor.u32 %v5150, %v5153
        %v5155 = vsel %vm3295, %v5145, %v5154
        %v5157 = vshrl.u32 %v5093, 16
        %v5159 = vrot.slane %v5157, 3
        %v5160 = vshll.u32 %v5093, 16
        %v5162 = vrot.slane %v5160, 4
        %v5163 = vor.u32 %v5159, %v5162
        %v5164 = vsel %vm3295, %v5154, %v5163
        %v5166 = vshrl.u32 %v5094, 16
        %v5168 = vrot.slane %v5166, 3
        %v5169 = vshll.u32 %v5094, 16
        %v5171 = vrot.slane %v5169, 4
        %v5172 = vor.u32 %v5168, %v5171
        %v5173 = vsel %vm3295, %v5163, %v5172
        %v5175 = vshrl.u32 %v5095, 16
        %v5177 = vrot.slane %v5175, 3
        %v5178 = vshll.u32 %v5095, 16
        %v5180 = vrot.slane %v5178, 4
        %v5181 = vor.u32 %v5177, %v5180
        %v5182 = vsel %vm3295, %v5172, %v5181
        %v5184 = vshrl.u32 %v5096, 16
        %v5186 = vrot.slane %v5184, 3
        %v5187 = vshll.u32 %v5096, 16
        %v5189 = vrot.slane %v5187, 4
        %v5190 = vor.u32 %v5186, %v5189
        %v5191 = vsel %vm3295, %v5181, %v5190
        %v5193 = vshrl.u32 %v5097, 16
        %v5195 = vrot.slane %v5193, 3
        %v5196 = vshll.u32 %v5097, 16
        %v5198 = vrot.slane %v5196, 4
        %v5199 = vor.u32 %v5195, %v5198
        %v5200 = vsel %vm3295, %v5190, %v5199
        %v5202 = vshrl.u32 %v5098, 16
        %v5204 = vrot.slane %v5202, 3
        %v5205 = vshll.u32 %v5098, 16
        %v5207 = vrot.slane %v5205, 4
        %v5208 = vor.u32 %v5204, %v5207
        %v5209 = vsel %vm3295, %v5199, %v5208
        %v5211 = vshrl.u32 %v5099, 16
        %v5213 = vrot.slane %v5211, 3
        %v5214 = vshll.u32 %v5099, 16
        %v5216 = vrot.slane %v5214, 4
        %v5217 = vor.u32 %v5213, %v5216
        %v5218 = vsel %vm3295, %v5208, %v5217
        %v5220 = vshrl.u32 %v5100, 16
        %v5222 = vrot.slane %v5220, 3
        %v5223 = vshll.u32 %v5100, 16
        %v5225 = vrot.slane %v5223, 4
        %v5226 = vor.u32 %v5222, %v5225
        %v5227 = vsel %vm3295, %v5217, %v5226
        %v5229 = vshrl.u32 %v5101, 16
        %v5231 = vrot.slane %v5229, 3
        %v5232 = vshll.u32 %v5101, 16
        %v5234 = vrot.slane %v5232, 4
        %v5235 = vor.u32 %v5231, %v5234
        %v5236 = vsel %vm3295, %v5226, %v5235
        %v5238 = vshrl.u32 %v5102, 16
        %v5240 = vrot.slane %v5238, 3
        %v5241 = vshll.u32 %v5102, 16
        %v5243 = vrot.slane %v5241, 4
        %v5244 = vor.u32 %v5240, %v5243
        %v5245 = vsel %vm3295, %v5235, %v5244
        %v5247 = vshrl.u32 %v5103, 16
        %v5249 = vrot.slane %v5247, 3
        %v5250 = vshll.u32 %v5103, 16
        %v5252 = vrot.slane %v5250, 4
        %v5253 = vor.u32 %v5249, %v5252
        %v5254 = vsel %vm3295, %v5244, %v5253
        %v5285 = vunpack.c.l.b16 %v5105
        %v5286 = vunpack.c.l.b16 %v5106
        %v5287 = vunpack.c.l.b16 %v5107
        %v5288 = vunpack.c.l.b16 %v5108
        %v5289 = vunpack.c.l.b16 %v5109
        %v5290 = vunpack.c.l.b16 %v5110
        %v5291 = vunpack.c.l.b16 %v5111
        %v5292 = vunpack.c.l.b16 %v5112
        %v5293 = vunpack.c.l.b16 %v5113
        %v5294 = vunpack.c.l.b16 %v5114
        %v5295 = vunpack.c.l.b16 %v5115
        %v5296 = vunpack.c.l.b16 %v5116
        %v5297 = vunpack.c.l.b16 %v5117
        %v5298 = vunpack.c.l.b16 %v5118
        %v5299 = vunpack.c.l.b16 %v5119
        %v5300 = vunpack.c.l.b16 %v5120
        %v5301 = vpack.c.b16 %v5286, %v5285
        %v5302 = vpack.c.b16 %v5288, %v5287
        %v5303 = vpack.c.b16 %v5290, %v5289
        %v5304 = vpack.c.b16 %v5292, %v5291
        %v5305 = vpack.c.b16 %v5294, %v5293
        %v5306 = vpack.c.b16 %v5296, %v5295
        %v5307 = vpack.c.b16 %v5298, %v5297
        %v5308 = vpack.c.b16 %v5300, %v5299
        %5317 = vmatprep.subr.bf16.mxu0 0
        %5318 = vmatpush1.bf16.msra.mxu0 %v5301
        %5319 = vmatprep.subr.bf16.mxu0 0
        %5320 = vmatpush1.bf16.msra.mxu0 %v5302
        %5321 = vmatprep.subr.bf16.mxu0 0
        %5322 = vmatpush1.bf16.msra.mxu0 %v5303
        %5323 = vmatprep.subr.bf16.mxu0 0
        %5324 = vmatpush1.bf16.msra.mxu0 %v5304
        %5325 = vmatprep.subr.bf16.mxu0 0
        %5326 = vmatpush1.bf16.msra.mxu0 %v5305
        %5327 = vmatprep.subr.bf16.mxu0 0
        %5328 = vmatpush1.bf16.msra.mxu0 %v5306
        %5329 = vmatprep.subr.bf16.mxu0 0
        %5330 = vmatpush1.bf16.msra.mxu0 %v5307
        %5331 = vmatprep.subr.bf16.mxu0 0
        %5332 = vmatpush1.bf16.msra.mxu0 %v5308
        %5333 = vmatprep.subr.bf16.mxu0 0
        %5334 = vmatpush1.bf16.msra.mxu0 0
        %5335 = vmatprep.subr.bf16.mxu0 0
        %5336 = vmatpush1.bf16.msra.mxu0 0
        %5337 = vmatprep.subr.bf16.mxu0 0
        %5338 = vmatpush1.bf16.msra.mxu0 0
        %5339 = vmatprep.subr.bf16.mxu0 0
        %5340 = vmatpush1.bf16.msra.mxu0 0
        %5341 = vmatprep.subr.bf16.mxu0 0
        %5342 = vmatpush1.bf16.msra.mxu0 0
        %5343 = vmatprep.subr.bf16.mxu0 0
        %5344 = vmatpush1.bf16.msra.mxu0 0
        %5345 = vmatprep.subr.bf16.mxu0 0
        %5346 = vmatpush1.bf16.msra.mxu0 0
        %5347 = vmatprep.subr.bf16.mxu0 0
        %5348 = vmatpush1.bf16.msra.mxu0 0
        %5349 = vmatprep.mubr.bf16.mxu0 0
        %5350 = vmatmul.mubr.bf16.gmra.mrb[0].mxu0 %v5137
        %v5351 = vpop.f32.mrb[0].mxu0
        %v5352 = vadd.f32 0.0, %v5351
        %v5353 = vpop.f32.mrb[0].mxu0
        %v5354 = vpop.f32.mrb[0].mxu0
        %v5355 = vadd.f32 0.0, %v5354
        %v5356 = vpop.f32.mrb[0].mxu0
        %5357 = vmatprep.mubr.bf16.mxu0 0
        %5358 = vmatmul.mubr.bf16.gmra.mrb[0].mxu0 %v5146
        %v5359 = vpop.f32.mrb[0].mxu0
        %v5360 = vadd.f32 0.0, %v5359
        %v5361 = vpop.f32.mrb[0].mxu0
        %v5362 = vpop.f32.mrb[0].mxu0
        %v5363 = vadd.f32 0.0, %v5362
        %v5364 = vpop.f32.mrb[0].mxu0
        %5365 = vmatprep.mubr.bf16.mxu0 0
        %5366 = vmatmul.mubr.bf16.gmra.mrb[0].mxu0 %v5155
        %v5367 = vpop.f32.mrb[0].mxu0
        %v5368 = vadd.f32 0.0, %v5367
        %v5369 = vpop.f32.mrb[0].mxu0
        %v5370 = vpop.f32.mrb[0].mxu0
        %v5371 = vadd.f32 0.0, %v5370
        %v5372 = vpop.f32.mrb[0].mxu0
        %5373 = vmatprep.mubr.bf16.mxu0 0
        %5374 = vmatmul.mubr.bf16.gmra.mrb[0].mxu0 %v5164
        %v5375 = vpop.f32.mrb[0].mxu0
        %v5376 = vadd.f32 0.0, %v5375
        %v5377 = vpop.f32.mrb[0].mxu0
        %v5378 = vpop.f32.mrb[0].mxu0
        %v5379 = vadd.f32 0.0, %v5378
        %v5380 = vpop.f32.mrb[0].mxu0
        %5381 = vmatprep.mubr.bf16.mxu0 0
        %5382 = vmatmul.mubr.bf16.gmra.mrb[0].mxu0 %v5173
        %v5383 = vpop.f32.mrb[0].mxu0
        %v5384 = vadd.f32 0.0, %v5383
        %v5385 = vpop.f32.mrb[0].mxu0
        %v5386 = vpop.f32.mrb[0].mxu0
        %v5387 = vadd.f32 0.0, %v5386
        %v5388 = vpop.f32.mrb[0].mxu0
        %5389 = vmatprep.mubr.bf16.mxu0 0
        %5390 = vmatmul.mubr.bf16.gmra.mrb[0].mxu0 %v5182
        %v5391 = vpop.f32.mrb[0].mxu0
        %v5392 = vadd.f32 0.0, %v5391
        %v5393 = vpop.f32.mrb[0].mxu0
        %v5394 = vpop.f32.mrb[0].mxu0
        %v5395 = vadd.f32 0.0, %v5394
        %v5396 = vpop.f32.mrb[0].mxu0
        %5397 = vmatprep.mubr.bf16.mxu0 0
        %5398 = vmatmul.mubr.bf16.gmra.mrb[0].mxu0 %v5191
        %v5399 = vpop.f32.mrb[0].mxu0
        %v5400 = vadd.f32 0.0, %v5399
        %v5401 = vpop.f32.mrb[0].mxu0
        %v5402 = vpop.f32.mrb[0].mxu0
        %v5403 = vadd.f32 0.0, %v5402
        %v5404 = vpop.f32.mrb[0].mxu0
        %5405 = vmatprep.mubr.bf16.mxu0 0
        %5406 = vmatmul.mubr.bf16.gmra.mrb[0].mxu0 %v5200
        %v5407 = vpop.f32.mrb[0].mxu0
        %v5408 = vadd.f32 0.0, %v5407
        %v5409 = vpop.f32.mrb[0].mxu0
        %v5410 = vpop.f32.mrb[0].mxu0
        %v5411 = vadd.f32 0.0, %v5410
        %v5412 = vpop.f32.mrb[0].mxu0
        %5413 = vmatprep.mubr.bf16.mxu0 0
        %5414 = vmatmul.mubr.bf16.gmra.mrb[0].mxu0 %v5209
        %v5415 = vpop.f32.mrb[0].mxu0
        %v5416 = vadd.f32 0.0, %v5415
        %v5417 = vpop.f32.mrb[0].mxu0
        %v5418 = vpop.f32.mrb[0].mxu0
        %v5419 = vadd.f32 0.0, %v5418
        %v5420 = vpop.f32.mrb[0].mxu0
        %5421 = vmatprep.mubr.bf16.mxu0 0
        %5422 = vmatmul.mubr.bf16.gmra.mrb[0].mxu0 %v5218
        %v5423 = vpop.f32.mrb[0].mxu0
        %v5424 = vadd.f32 0.0, %v5423
        %v5425 = vpop.f32.mrb[0].mxu0
        %v5426 = vpop.f32.mrb[0].mxu0
        %v5427 = vadd.f32 0.0, %v5426
        %v5428 = vpop.f32.mrb[0].mxu0
        %5429 = vmatprep.mubr.bf16.mxu0 0
        %5430 = vmatmul.mubr.bf16.gmra.mrb[0].mxu0 %v5227
        %v5431 = vpop.f32.mrb[0].mxu0
        %v5432 = vadd.f32 0.0, %v5431
        %v5433 = vpop.f32.mrb[0].mxu0
        %v5434 = vpop.f32.mrb[0].mxu0
        %v5435 = vadd.f32 0.0, %v5434
        %v5436 = vpop.f32.mrb[0].mxu0
        %5437 = vmatprep.mubr.bf16.mxu0 0
        %5438 = vmatmul.mubr.bf16.gmra.mrb[0].mxu0 %v5236
        %v5439 = vpop.f32.mrb[0].mxu0
        %v5440 = vadd.f32 0.0, %v5439
        %v5441 = vpop.f32.mrb[0].mxu0
        %v5442 = vpop.f32.mrb[0].mxu0
        %v5443 = vadd.f32 0.0, %v5442
        %v5444 = vpop.f32.mrb[0].mxu0
        %5445 = vmatprep.mubr.bf16.mxu0 0
        %5446 = vmatmul.mubr.bf16.gmra.mrb[0].mxu0 %v5245
        %v5447 = vpop.f32.mrb[0].mxu0
        %v5448 = vadd.f32 0.0, %v5447
        %v5449 = vpop.f32.mrb[0].mxu0
        %v5450 = vpop.f32.mrb[0].mxu0
        %v5451 = vadd.f32 0.0, %v5450
        %v5452 = vpop.f32.mrb[0].mxu0
        %5453 = vmatprep.mubr.bf16.mxu0 0
        %5454 = vmatmul.mubr.bf16.gmra.mrb[0].mxu0 %v5254
        %v5455 = vpop.f32.mrb[0].mxu0
        %v5456 = vadd.f32 0.0, %v5455
        %v5457 = vpop.f32.mrb[0].mxu0
        %v5458 = vpop.f32.mrb[0].mxu0
        %v5459 = vadd.f32 0.0, %v5458
        %v5460 = vpop.f32.mrb[0].mxu0
        %5461 = vdwg.mxu0
        %v5462 = vadd.f32 %v5031, %v5352
        %v5463 = vadd.f32 %v5032, %v5355
        %v5464 = vadd.f32 %v5033, %v5360
        %v5465 = vadd.f32 %v5034, %v5363
        %v5466 = vadd.f32 %v5035, %v5368
        %v5467 = vadd.f32 %v5036, %v5371
        %v5468 = vadd.f32 %v5037, %v5376
        %v5469 = vadd.f32 %v5038, %v5379
        %v5470 = vadd.f32 %v5039, %v5384
        %v5471 = vadd.f32 %v5040, %v5387
        %v5472 = vadd.f32 %v5041, %v5392
        %v5473 = vadd.f32 %v5042, %v5395
        %v5474 = vadd.f32 %v5043, %v5400
        %v5475 = vadd.f32 %v5044, %v5403
        %v5476 = vadd.f32 %v5045, %v5408
        %v5477 = vadd.f32 %v5046, %v5411
        %v5478 = vadd.f32 %v5047, %v5416
        %v5479 = vadd.f32 %v5048, %v5419
        %v5480 = vadd.f32 %v5049, %v5424
        %v5481 = vadd.f32 %v5050, %v5427
        %v5482 = vadd.f32 %v5051, %v5432
        %v5483 = vadd.f32 %v5052, %v5435
        %v5484 = vadd.f32 %v5053, %v5440
        %v5485 = vadd.f32 %v5054, %v5443
        %v5486 = vadd.f32 %v5055, %v5448
        %v5487 = vadd.f32 %v5056, %v5451
        %v5488 = vadd.f32 %v5057, %v5456
        %v5489 = vadd.f32 %v5058, %v5459
        %v5490 = vpack.c.bf16 %v5061, %v5060
        %v5491 = vpack.c.bf16 %v5063, %v5062
        %v5492 = vpack.c.bf16 %v5065, %v5064
        %v5493 = vpack.c.bf16 %v5067, %v5066
        %v5494 = vpack.c.bf16 %v5069, %v5068
        %v5495 = vpack.c.bf16 %v5071, %v5070
        %v5496 = vpack.c.bf16 %v5073, %v5072
        %v5497 = vpack.c.bf16 %v5075, %v5074
        %v5498 = vpack.c.bf16 %v5077, %v5076
        %v5499 = vpack.c.bf16 %v5079, %v5078
        %v5500 = vpack.c.bf16 %v5081, %v5080
        %v5501 = vpack.c.bf16 %v5083, %v5082
        %v5502 = vpack.c.bf16 %v5085, %v5084
        %v5503 = vpack.c.bf16 %v5087, %v5086
        %s5504 = scalar_lea.vmem %s796, 448 [#allocation4]
        %v5505 = vld [vmem:[%s5504] sm:$0xf]
        %v5506 = vld [vmem:[%s5504 + $0x4] sm:$0xf]
        %v5507 = vld [vmem:[%s5504 + $0x8] sm:$0xf]
        %v5508 = vld [vmem:[%s5504 + $0xc] sm:$0xf]
        %v5509 = vld [vmem:[%s5504 + $0x10] sm:$0xf]
        %v5510 = vld [vmem:[%s5504 + $0x14] sm:$0xf]
        %v5511 = vld [vmem:[%s5504 + $0x18] sm:$0xf]
        %v5512 = vld [vmem:[%s5504 + $0x1c] sm:$0xf]
        %v5513 = vld [vmem:[%s5504 + $0x20] sm:$0xf]
        %v5514 = vld [vmem:[%s5504 + $0x24] sm:$0xf]
        %v5515 = vld [vmem:[%s5504 + $0x28] sm:$0xf]
        %v5516 = vld [vmem:[%s5504 + $0x2c] sm:$0xf]
        %v5517 = vld [vmem:[%s5504 + $0x30] sm:$0xf]
        %v5518 = vld [vmem:[%s5504 + $0x34] sm:$0xf]
        %v5519 = vld [vmem:[%s5504 + $0x38] sm:$0xf]
        %v5520 = vld [vmem:[%s5504 + $0x3c] sm:$0xf]
        %v5537 = vunpack.c.l.b16 %v5505
        %v5538 = vunpack.c.l.b16 %v5506
        %v5539 = vunpack.c.l.b16 %v5507
        %v5540 = vunpack.c.l.b16 %v5508
        %v5541 = vunpack.c.l.b16 %v5509
        %v5542 = vunpack.c.l.b16 %v5510
        %v5543 = vunpack.c.l.b16 %v5511
        %v5544 = vunpack.c.l.b16 %v5512
        %v5545 = vunpack.c.l.b16 %v5513
        %v5546 = vunpack.c.l.b16 %v5514
        %v5547 = vunpack.c.l.b16 %v5515
        %v5548 = vunpack.c.l.b16 %v5516
        %v5549 = vunpack.c.l.b16 %v5517
        %v5550 = vunpack.c.l.b16 %v5518
        %v5551 = vunpack.c.l.b16 %v5519
        %v5552 = vunpack.c.l.b16 %v5520
        %v5553 = vpack.c.b16 %v5538, %v5537
        %v5554 = vpack.c.b16 %v5540, %v5539
        %v5555 = vpack.c.b16 %v5542, %v5541
        %v5556 = vpack.c.b16 %v5544, %v5543
        %v5557 = vpack.c.b16 %v5546, %v5545
        %v5558 = vpack.c.b16 %v5548, %v5547
        %v5559 = vpack.c.b16 %v5550, %v5549
        %v5560 = vpack.c.b16 %v5552, %v5551
        %5569 = vmatprep.subr.bf16.mxu0 0
        %5570 = vmatpush1.bf16.msra.mxu0 %v5553
        %5571 = vmatprep.subr.bf16.mxu0 0
        %5572 = vmatpush1.bf16.msra.mxu0 %v5554
        %5573 = vmatprep.subr.bf16.mxu0 0
        %5574 = vmatpush1.bf16.msra.mxu0 %v5555
        %5575 = vmatprep.subr.bf16.mxu0 0
        %5576 = vmatpush1.bf16.msra.mxu0 %v5556
        %5577 = vmatprep.subr.bf16.mxu0 0
        %5578 = vmatpush1.bf16.msra.mxu0 %v5557
        %5579 = vmatprep.subr.bf16.mxu0 0
        %5580 = vmatpush1.bf16.msra.mxu0 %v5558
        %5581 = vmatprep.subr.bf16.mxu0 0
        %5582 = vmatpush1.bf16.msra.mxu0 %v5559
        %5583 = vmatprep.subr.bf16.mxu0 0
        %5584 = vmatpush1.bf16.msra.mxu0 %v5560
        %5585 = vmatprep.subr.bf16.mxu0 0
        %5586 = vmatpush1.bf16.msra.mxu0 0
        %5587 = vmatprep.subr.bf16.mxu0 0
        %5588 = vmatpush1.bf16.msra.mxu0 0
        %5589 = vmatprep.subr.bf16.mxu0 0
        %5590 = vmatpush1.bf16.msra.mxu0 0
        %5591 = vmatprep.subr.bf16.mxu0 0
        %5592 = vmatpush1.bf16.msra.mxu0 0
        %5593 = vmatprep.subr.bf16.mxu0 0
        %5594 = vmatpush1.bf16.msra.mxu0 0
        %5595 = vmatprep.subr.bf16.mxu0 0
        %5596 = vmatpush1.bf16.msra.mxu0 0
        %5597 = vmatprep.subr.bf16.mxu0 0
        %5598 = vmatpush1.bf16.msra.mxu0 0
        %5599 = vmatprep.subr.bf16.mxu0 0
        %5600 = vmatpush1.bf16.msra.mxu0 0
        %5601 = vmatprep.mubr.bf16.mxu0 0
        %5602 = vmatmul.mubr.bf16.gmra.mrb[0].mxu0 %v5490
        %v5603 = vpop.f32.mrb[0].mxu0
        %v5604 = vadd.f32 0.0, %v5603
        %v5605 = vpop.f32.mrb[0].mxu0
        %v5606 = vpop.f32.mrb[0].mxu0
        %v5607 = vadd.f32 0.0, %v5606
        %v5608 = vpop.f32.mrb[0].mxu0
        %5609 = vmatprep.mubr.bf16.mxu0 0
        %5610 = vmatmul.mubr.bf16.gmra.mrb[0].mxu0 %v5491
        %v5611 = vpop.f32.mrb[0].mxu0
        %v5612 = vadd.f32 0.0, %v5611
        %v5613 = vpop.f32.mrb[0].mxu0
        %v5614 = vpop.f32.mrb[0].mxu0
        %v5615 = vadd.f32 0.0, %v5614
        %v5616 = vpop.f32.mrb[0].mxu0
        %5617 = vmatprep.mubr.bf16.mxu0 0
        %5618 = vmatmul.mubr.bf16.gmra.mrb[0].mxu0 %v5492
        %v5619 = vpop.f32.mrb[0].mxu0
        %v5620 = vadd.f32 0.0, %v5619
        %v5621 = vpop.f32.mrb[0].mxu0
        %v5622 = vpop.f32.mrb[0].mxu0
        %v5623 = vadd.f32 0.0, %v5622
        %v5624 = vpop.f32.mrb[0].mxu0
        %5625 = vmatprep.mubr.bf16.mxu0 0
        %5626 = vmatmul.mubr.bf16.gmra.mrb[0].mxu0 %v5493
        %v5627 = vpop.f32.mrb[0].mxu0
        %v5628 = vadd.f32 0.0, %v5627
        %v5629 = vpop.f32.mrb[0].mxu0
        %v5630 = vpop.f32.mrb[0].mxu0
        %v5631 = vadd.f32 0.0, %v5630
        %v5632 = vpop.f32.mrb[0].mxu0
        %5633 = vmatprep.mubr.bf16.mxu0 0
        %5634 = vmatmul.mubr.bf16.gmra.mrb[0].mxu0 %v5494
        %v5635 = vpop.f32.mrb[0].mxu0
        %v5636 = vadd.f32 0.0, %v5635
        %v5637 = vpop.f32.mrb[0].mxu0
        %v5638 = vpop.f32.mrb[0].mxu0
        %v5639 = vadd.f32 0.0, %v5638
        %v5640 = vpop.f32.mrb[0].mxu0
        %5641 = vmatprep.mubr.bf16.mxu0 0
        %5642 = vmatmul.mubr.bf16.gmra.mrb[0].mxu0 %v5495
        %v5643 = vpop.f32.mrb[0].mxu0
        %v5644 = vadd.f32 0.0, %v5643
        %v5645 = vpop.f32.mrb[0].mxu0
        %v5646 = vpop.f32.mrb[0].mxu0
        %v5647 = vadd.f32 0.0, %v5646
        %v5648 = vpop.f32.mrb[0].mxu0
        %5649 = vmatprep.mubr.bf16.mxu0 0
        %5650 = vmatmul.mubr.bf16.gmra.mrb[0].mxu0 %v5496
        %v5651 = vpop.f32.mrb[0].mxu0
        %v5652 = vadd.f32 0.0, %v5651
        %v5653 = vpop.f32.mrb[0].mxu0
        %v5654 = vpop.f32.mrb[0].mxu0
        %v5655 = vadd.f32 0.0, %v5654
        %v5656 = vpop.f32.mrb[0].mxu0
        %5657 = vmatprep.mubr.bf16.mxu0 0
        %5658 = vmatmul.mubr.bf16.gmra.mrb[0].mxu0 %v5497
        %v5659 = vpop.f32.mrb[0].mxu0
        %v5660 = vadd.f32 0.0, %v5659
        %v5661 = vpop.f32.mrb[0].mxu0
        %v5662 = vpop.f32.mrb[0].mxu0
        %v5663 = vadd.f32 0.0, %v5662
        %v5664 = vpop.f32.mrb[0].mxu0
        %5665 = vmatprep.mubr.bf16.mxu0 0
        %5666 = vmatmul.mubr.bf16.gmra.mrb[0].mxu0 %v5498
        %v5667 = vpop.f32.mrb[0].mxu0
        %v5668 = vadd.f32 0.0, %v5667
        %v5669 = vpop.f32.mrb[0].mxu0
        %v5670 = vpop.f32.mrb[0].mxu0
        %v5671 = vadd.f32 0.0, %v5670
        %v5672 = vpop.f32.mrb[0].mxu0
        %5673 = vmatprep.mubr.bf16.mxu0 0
        %5674 = vmatmul.mubr.bf16.gmra.mrb[0].mxu0 %v5499
        %v5675 = vpop.f32.mrb[0].mxu0
        %v5676 = vadd.f32 0.0, %v5675
        %v5677 = vpop.f32.mrb[0].mxu0
        %v5678 = vpop.f32.mrb[0].mxu0
        %v5679 = vadd.f32 0.0, %v5678
        %v5680 = vpop.f32.mrb[0].mxu0
        %5681 = vmatprep.mubr.bf16.mxu0 0
        %5682 = vmatmul.mubr.bf16.gmra.mrb[0].mxu0 %v5500
        %v5683 = vpop.f32.mrb[0].mxu0
        %v5684 = vadd.f32 0.0, %v5683
        %v5685 = vpop.f32.mrb[0].mxu0
        %v5686 = vpop.f32.mrb[0].mxu0
        %v5687 = vadd.f32 0.0, %v5686
        %v5688 = vpop.f32.mrb[0].mxu0
        %5689 = vmatprep.mubr.bf16.mxu0 0
        %5690 = vmatmul.mubr.bf16.gmra.mrb[0].mxu0 %v5501
        %v5691 = vpop.f32.mrb[0].mxu0
        %v5692 = vadd.f32 0.0, %v5691
        %v5693 = vpop.f32.mrb[0].mxu0
        %v5694 = vpop.f32.mrb[0].mxu0
        %v5695 = vadd.f32 0.0, %v5694
        %v5696 = vpop.f32.mrb[0].mxu0
        %5697 = vmatprep.mubr.bf16.mxu0 0
        %5698 = vmatmul.mubr.bf16.gmra.mrb[0].mxu0 %v5502
        %v5699 = vpop.f32.mrb[0].mxu0
        %v5700 = vadd.f32 0.0, %v5699
        %v5701 = vpop.f32.mrb[0].mxu0
        %v5702 = vpop.f32.mrb[0].mxu0
        %v5703 = vadd.f32 0.0, %v5702
        %v5704 = vpop.f32.mrb[0].mxu0
        %5705 = vmatprep.mubr.bf16.mxu0 0
        %5706 = vmatmul.mubr.bf16.gmra.mrb[0].mxu0 %v5503
        %v5707 = vpop.f32.mrb[0].mxu0
        %v5708 = vadd.f32 0.0, %v5707
        %v5709 = vpop.f32.mrb[0].mxu0
        %v5710 = vpop.f32.mrb[0].mxu0
        %v5711 = vadd.f32 0.0, %v5710
        %v5712 = vpop.f32.mrb[0].mxu0
        %5713 = vdwg.mxu0
        %v5714 = vadd.f32 %v5462, %v5604
        %v5715 = vadd.f32 %v5463, %v5607
        %v5716 = vadd.f32 %v5464, %v5612
        %v5717 = vadd.f32 %v5465, %v5615
        %v5718 = vadd.f32 %v5466, %v5620
        %v5719 = vadd.f32 %v5467, %v5623
        %v5720 = vadd.f32 %v5468, %v5628
        %v5721 = vadd.f32 %v5469, %v5631
        %v5722 = vadd.f32 %v5470, %v5636
        %v5723 = vadd.f32 %v5471, %v5639
        %v5724 = vadd.f32 %v5472, %v5644
        %v5725 = vadd.f32 %v5473, %v5647
        %v5726 = vadd.f32 %v5474, %v5652
        %v5727 = vadd.f32 %v5475, %v5655
        %v5728 = vadd.f32 %v5476, %v5660
        %v5729 = vadd.f32 %v5477, %v5663
        %v5730 = vadd.f32 %v5478, %v5668
        %v5731 = vadd.f32 %v5479, %v5671
        %v5732 = vadd.f32 %v5480, %v5676
        %v5733 = vadd.f32 %v5481, %v5679
        %v5734 = vadd.f32 %v5482, %v5684
        %v5735 = vadd.f32 %v5483, %v5687
        %v5736 = vadd.f32 %v5484, %v5692
        %v5737 = vadd.f32 %v5485, %v5695
        %v5738 = vadd.f32 %v5486, %v5700
        %v5739 = vadd.f32 %v5487, %v5703
        %v5740 = vadd.f32 %v5488, %v5708
        %v5741 = vadd.f32 %v5489, %v5711
        %v5742 = vpack.c.bf16 %v5088, %v5088
        %s5743 = scalar_lea.vmem %s796, 512 [#allocation4]
        %v5744 = vld [vmem:[%s5743] sm:$0xf]
        %v5745 = vld [vmem:[%s5743 + $0x4] sm:$0xf]
        %v5746 = vld [vmem:[%s5743 + $0x8] sm:$0xf]
        %v5747 = vld [vmem:[%s5743 + $0xc] sm:$0xf]
        %v5748 = vld [vmem:[%s5743 + $0x10] sm:$0xf]
        %v5749 = vld [vmem:[%s5743 + $0x14] sm:$0xf]
        %v5750 = vld [vmem:[%s5743 + $0x18] sm:$0xf]
        %v5751 = vld [vmem:[%s5743 + $0x1c] sm:$0xf]
        %v5752 = vld [vmem:[%s5743 + $0x20] sm:$0xf]
        %v5753 = vld [vmem:[%s5743 + $0x24] sm:$0xf]
        %v5754 = vld [vmem:[%s5743 + $0x28] sm:$0xf]
        %v5755 = vld [vmem:[%s5743 + $0x2c] sm:$0xf]
        %v5756 = vld [vmem:[%s5743 + $0x30] sm:$0xf]
        %v5757 = vld [vmem:[%s5743 + $0x34] sm:$0xf]
        %v5758 = vld [vmem:[%s5743 + $0x38] sm:$0xf]
        %v5759 = vld [vmem:[%s5743 + $0x3c] sm:$0xf]
        %v5761 = vshrl.u32 %v5490, 16
        %v5763 = vshll.u32 %v5490, 16
        %v5765 = vrot.slane %v5763, 1
        %v5766 = vor.u32 %v5761, %v5765
        %v5768 = vshll.u32 %v5491, 16
        %v5770 = vrot.slane %v5768, 1
        %v5771 = vsel %vm3655, %v5766, %v5770
        %v5772 = vshrl.u32 %v5491, 16
        %v5774 = vor.u32 %v5772, %v5770
        %v5776 = vshll.u32 %v5492, 16
        %v5778 = vrot.slane %v5776, 1
        %v5779 = vsel %vm3655, %v5774, %v5778
        %v5780 = vshrl.u32 %v5492, 16
        %v5782 = vor.u32 %v5780, %v5778
        %v5784 = vshll.u32 %v5493, 16
        %v5786 = vrot.slane %v5784, 1
        %v5787 = vsel %vm3655, %v5782, %v5786
        %v5788 = vshrl.u32 %v5493, 16
        %v5790 = vor.u32 %v5788, %v5786
        %v5792 = vshll.u32 %v5494, 16
        %v5794 = vrot.slane %v5792, 1
        %v5795 = vsel %vm3655, %v5790, %v5794
        %v5796 = vshrl.u32 %v5494, 16
        %v5798 = vor.u32 %v5796, %v5794
        %v5800 = vshll.u32 %v5495, 16
        %v5802 = vrot.slane %v5800, 1
        %v5803 = vsel %vm3655, %v5798, %v5802
        %v5804 = vshrl.u32 %v5495, 16
        %v5806 = vor.u32 %v5804, %v5802
        %v5808 = vshll.u32 %v5496, 16
        %v5810 = vrot.slane %v5808, 1
        %v5811 = vsel %vm3655, %v5806, %v5810
        %v5812 = vshrl.u32 %v5496, 16
        %v5814 = vor.u32 %v5812, %v5810
        %v5816 = vshll.u32 %v5497, 16
        %v5818 = vrot.slane %v5816, 1
        %v5819 = vsel %vm3655, %v5814, %v5818
        %v5820 = vshrl.u32 %v5497, 16
        %v5822 = vor.u32 %v5820, %v5818
        %v5824 = vshll.u32 %v5498, 16
        %v5826 = vrot.slane %v5824, 1
        %v5827 = vsel %vm3655, %v5822, %v5826
        %v5828 = vshrl.u32 %v5498, 16
        %v5830 = vor.u32 %v5828, %v5826
        %v5832 = vshll.u32 %v5499, 16
        %v5834 = vrot.slane %v5832, 1
        %v5835 = vsel %vm3655, %v5830, %v5834
        %v5836 = vshrl.u32 %v5499, 16
        %v5838 = vor.u32 %v5836, %v5834
        %v5840 = vshll.u32 %v5500, 16
        %v5842 = vrot.slane %v5840, 1
        %v5843 = vsel %vm3655, %v5838, %v5842
        %v5844 = vshrl.u32 %v5500, 16
        %v5846 = vor.u32 %v5844, %v5842
        %v5848 = vshll.u32 %v5501, 16
        %v5850 = vrot.slane %v5848, 1
        %v5851 = vsel %vm3655, %v5846, %v5850
        %v5852 = vshrl.u32 %v5501, 16
        %v5854 = vor.u32 %v5852, %v5850
        %v5856 = vshll.u32 %v5502, 16
        %v5858 = vrot.slane %v5856, 1
        %v5859 = vsel %vm3655, %v5854, %v5858
        %v5860 = vshrl.u32 %v5502, 16
        %v5862 = vor.u32 %v5860, %v5858
        %v5864 = vshll.u32 %v5503, 16
        %v5866 = vrot.slane %v5864, 1
        %v5867 = vsel %vm3655, %v5862, %v5866
        %v5868 = vshrl.u32 %v5503, 16
        %v5870 = vor.u32 %v5868, %v5866
        %v5872 = vshll.u32 %v5742, 16
        %v5874 = vrot.slane %v5872, 1
        %v5875 = vsel %vm3655, %v5870, %v5874
        %v5906 = vunpack.c.l.b16 %v5744
        %v5907 = vunpack.c.l.b16 %v5745
        %v5908 = vunpack.c.l.b16 %v5746
        %v5909 = vunpack.c.l.b16 %v5747
        %v5910 = vunpack.c.l.b16 %v5748
        %v5911 = vunpack.c.l.b16 %v5749
        %v5912 = vunpack.c.l.b16 %v5750
        %v5913 = vunpack.c.l.b16 %v5751
        %v5914 = vunpack.c.l.b16 %v5752
        %v5915 = vunpack.c.l.b16 %v5753
        %v5916 = vunpack.c.l.b16 %v5754
        %v5917 = vunpack.c.l.b16 %v5755
        %v5918 = vunpack.c.l.b16 %v5756
        %v5919 = vunpack.c.l.b16 %v5757
        %v5920 = vunpack.c.l.b16 %v5758
        %v5921 = vunpack.c.l.b16 %v5759
        %v5922 = vpack.c.b16 %v5907, %v5906
        %v5923 = vpack.c.b16 %v5909, %v5908
        %v5924 = vpack.c.b16 %v5911, %v5910
        %v5925 = vpack.c.b16 %v5913, %v5912
        %v5926 = vpack.c.b16 %v5915, %v5914
        %v5927 = vpack.c.b16 %v5917, %v5916
        %v5928 = vpack.c.b16 %v5919, %v5918
        %v5929 = vpack.c.b16 %v5921, %v5920
        %5938 = vmatprep.subr.bf16.mxu0 0
        %5939 = vmatpush1.bf16.msra.mxu0 %v5922
        %5940 = vmatprep.subr.bf16.mxu0 0
        %5941 = vmatpush1.bf16.msra.mxu0 %v5923
        %5942 = vmatprep.subr.bf16.mxu0 0
        %5943 = vmatpush1.bf16.msra.mxu0 %v5924
        %5944 = vmatprep.subr.bf16.mxu0 0
        %5945 = vmatpush1.bf16.msra.mxu0 %v5925
        %5946 = vmatprep.subr.bf16.mxu0 0
        %5947 = vmatpush1.bf16.msra.mxu0 %v5926
        %5948 = vmatprep.subr.bf16.mxu0 0
        %5949 = vmatpush1.bf16.msra.mxu0 %v5927
        %5950 = vmatprep.subr.bf16.mxu0 0
        %5951 = vmatpush1.bf16.msra.mxu0 %v5928
        %5952 = vmatprep.subr.bf16.mxu0 0
        %5953 = vmatpush1.bf16.msra.mxu0 %v5929
        %5954 = vmatprep.subr.bf16.mxu0 0
        %5955 = vmatpush1.bf16.msra.mxu0 0
        %5956 = vmatprep.subr.bf16.mxu0 0
        %5957 = vmatpush1.bf16.msra.mxu0 0
        %5958 = vmatprep.subr.bf16.mxu0 0
        %5959 = vmatpush1.bf16.msra.mxu0 0
        %5960 = vmatprep.subr.bf16.mxu0 0
        %5961 = vmatpush1.bf16.msra.mxu0 0
        %5962 = vmatprep.subr.bf16.mxu0 0
        %5963 = vmatpush1.bf16.msra.mxu0 0
        %5964 = vmatprep.subr.bf16.mxu0 0
        %5965 = vmatpush1.bf16.msra.mxu0 0
        %5966 = vmatprep.subr.bf16.mxu0 0
        %5967 = vmatpush1.bf16.msra.mxu0 0
        %5968 = vmatprep.subr.bf16.mxu0 0
        %5969 = vmatpush1.bf16.msra.mxu0 0
        %5970 = vmatprep.mubr.bf16.mxu0 0
        %5971 = vmatmul.mubr.bf16.gmra.mrb[0].mxu0 %v5771
        %v5972 = vpop.f32.mrb[0].mxu0
        %v5973 = vadd.f32 0.0, %v5972
        %v5974 = vpop.f32.mrb[0].mxu0
        %v5975 = vpop.f32.mrb[0].mxu0
        %v5976 = vadd.f32 0.0, %v5975
        %v5977 = vpop.f32.mrb[0].mxu0
        %5978 = vmatprep.mubr.bf16.mxu0 0
        %5979 = vmatmul.mubr.bf16.gmra.mrb[0].mxu0 %v5779
        %v5980 = vpop.f32.mrb[0].mxu0
        %v5981 = vadd.f32 0.0, %v5980
        %v5982 = vpop.f32.mrb[0].mxu0
        %v5983 = vpop.f32.mrb[0].mxu0
        %v5984 = vadd.f32 0.0, %v5983
        %v5985 = vpop.f32.mrb[0].mxu0
        %5986 = vmatprep.mubr.bf16.mxu0 0
        %5987 = vmatmul.mubr.bf16.gmra.mrb[0].mxu0 %v5787
        %v5988 = vpop.f32.mrb[0].mxu0
        %v5989 = vadd.f32 0.0, %v5988
        %v5990 = vpop.f32.mrb[0].mxu0
        %v5991 = vpop.f32.mrb[0].mxu0
        %v5992 = vadd.f32 0.0, %v5991
        %v5993 = vpop.f32.mrb[0].mxu0
        %5994 = vmatprep.mubr.bf16.mxu0 0
        %5995 = vmatmul.mubr.bf16.gmra.mrb[0].mxu0 %v5795
        %v5996 = vpop.f32.mrb[0].mxu0
        %v5997 = vadd.f32 0.0, %v5996
        %v5998 = vpop.f32.mrb[0].mxu0
        %v5999 = vpop.f32.mrb[0].mxu0
        %v6000 = vadd.f32 0.0, %v5999
        %v6001 = vpop.f32.mrb[0].mxu0
        %6002 = vmatprep.mubr.bf16.mxu0 0
        %6003 = vmatmul.mubr.bf16.gmra.mrb[0].mxu0 %v5803
        %v6004 = vpop.f32.mrb[0].mxu0
        %v6005 = vadd.f32 0.0, %v6004
        %v6006 = vpop.f32.mrb[0].mxu0
        %v6007 = vpop.f32.mrb[0].mxu0
        %v6008 = vadd.f32 0.0, %v6007
        %v6009 = vpop.f32.mrb[0].mxu0
        %6010 = vmatprep.mubr.bf16.mxu0 0
        %6011 = vmatmul.mubr.bf16.gmra.mrb[0].mxu0 %v5811
        %v6012 = vpop.f32.mrb[0].mxu0
        %v6013 = vadd.f32 0.0, %v6012
        %v6014 = vpop.f32.mrb[0].mxu0
        %v6015 = vpop.f32.mrb[0].mxu0
        %v6016 = vadd.f32 0.0, %v6015
        %v6017 = vpop.f32.mrb[0].mxu0
        %6018 = vmatprep.mubr.bf16.mxu0 0
        %6019 = vmatmul.mubr.bf16.gmra.mrb[0].mxu0 %v5819
        %v6020 = vpop.f32.mrb[0].mxu0
        %v6021 = vadd.f32 0.0, %v6020
        %v6022 = vpop.f32.mrb[0].mxu0
        %v6023 = vpop.f32.mrb[0].mxu0
        %v6024 = vadd.f32 0.0, %v6023
        %v6025 = vpop.f32.mrb[0].mxu0
        %6026 = vmatprep.mubr.bf16.mxu0 0
        %6027 = vmatmul.mubr.bf16.gmra.mrb[0].mxu0 %v5827
        %v6028 = vpop.f32.mrb[0].mxu0
        %v6029 = vadd.f32 0.0, %v6028
        %v6030 = vpop.f32.mrb[0].mxu0
        %v6031 = vpop.f32.mrb[0].mxu0
        %v6032 = vadd.f32 0.0, %v6031
        %v6033 = vpop.f32.mrb[0].mxu0
        %6034 = vmatprep.mubr.bf16.mxu0 0
        %6035 = vmatmul.mubr.bf16.gmra.mrb[0].mxu0 %v5835
        %v6036 = vpop.f32.mrb[0].mxu0
        %v6037 = vadd.f32 0.0, %v6036
        %v6038 = vpop.f32.mrb[0].mxu0
        %v6039 = vpop.f32.mrb[0].mxu0
        %v6040 = vadd.f32 0.0, %v6039
        %v6041 = vpop.f32.mrb[0].mxu0
        %6042 = vmatprep.mubr.bf16.mxu0 0
        %6043 = vmatmul.mubr.bf16.gmra.mrb[0].mxu0 %v5843
        %v6044 = vpop.f32.mrb[0].mxu0
        %v6045 = vadd.f32 0.0, %v6044
        %v6046 = vpop.f32.mrb[0].mxu0
        %v6047 = vpop.f32.mrb[0].mxu0
        %v6048 = vadd.f32 0.0, %v6047
        %v6049 = vpop.f32.mrb[0].mxu0
        %6050 = vmatprep.mubr.bf16.mxu0 0
        %6051 = vmatmul.mubr.bf16.gmra.mrb[0].mxu0 %v5851
        %v6052 = vpop.f32.mrb[0].mxu0
        %v6053 = vadd.f32 0.0, %v6052
        %v6054 = vpop.f32.mrb[0].mxu0
        %v6055 = vpop.f32.mrb[0].mxu0
        %v6056 = vadd.f32 0.0, %v6055
        %v6057 = vpop.f32.mrb[0].mxu0
        %6058 = vmatprep.mubr.bf16.mxu0 0
        %6059 = vmatmul.mubr.bf16.gmra.mrb[0].mxu0 %v5859
        %v6060 = vpop.f32.mrb[0].mxu0
        %v6061 = vadd.f32 0.0, %v6060
        %v6062 = vpop.f32.mrb[0].mxu0
        %v6063 = vpop.f32.mrb[0].mxu0
        %v6064 = vadd.f32 0.0, %v6063
        %v6065 = vpop.f32.mrb[0].mxu0
        %6066 = vmatprep.mubr.bf16.mxu0 0
        %6067 = vmatmul.mubr.bf16.gmra.mrb[0].mxu0 %v5867
        %v6068 = vpop.f32.mrb[0].mxu0
        %v6069 = vadd.f32 0.0, %v6068
        %v6070 = vpop.f32.mrb[0].mxu0
        %v6071 = vpop.f32.mrb[0].mxu0
        %v6072 = vadd.f32 0.0, %v6071
        %v6073 = vpop.f32.mrb[0].mxu0
        %6074 = vmatprep.mubr.bf16.mxu0 0
        %6075 = vmatmul.mubr.bf16.gmra.mrb[0].mxu0 %v5875
        %v6076 = vpop.f32.mrb[0].mxu0
        %v6077 = vadd.f32 0.0, %v6076
        %v6078 = vpop.f32.mrb[0].mxu0
        %v6079 = vpop.f32.mrb[0].mxu0
        %v6080 = vadd.f32 0.0, %v6079
        %v6081 = vpop.f32.mrb[0].mxu0
        %6082 = vdwg.mxu0
        %v6083 = vadd.f32 %v5714, %v5973
        %v6084 = vadd.f32 %v5715, %v5976
        %v6085 = vadd.f32 %v5716, %v5981
        %v6086 = vadd.f32 %v5717, %v5984
        %v6087 = vadd.f32 %v5718, %v5989
        %v6088 = vadd.f32 %v5719, %v5992
        %v6089 = vadd.f32 %v5720, %v5997
        %v6090 = vadd.f32 %v5721, %v6000
        %v6091 = vadd.f32 %v5722, %v6005
        %v6092 = vadd.f32 %v5723, %v6008
        %v6093 = vadd.f32 %v5724, %v6013
        %v6094 = vadd.f32 %v5725, %v6016
        %v6095 = vadd.f32 %v5726, %v6021
        %v6096 = vadd.f32 %v5727, %v6024
        %v6097 = vadd.f32 %v5728, %v6029
        %v6098 = vadd.f32 %v5729, %v6032
        %v6099 = vadd.f32 %v5730, %v6037
        %v6100 = vadd.f32 %v5731, %v6040
        %v6101 = vadd.f32 %v5732, %v6045
        %v6102 = vadd.f32 %v5733, %v6048
        %v6103 = vadd.f32 %v5734, %v6053
        %v6104 = vadd.f32 %v5735, %v6056
        %v6105 = vadd.f32 %v5736, %v6061
        %v6106 = vadd.f32 %v5737, %v6064
        %v6107 = vadd.f32 %v5738, %v6069
        %v6108 = vadd.f32 %v5739, %v6072
        %v6109 = vadd.f32 %v5740, %v6077
        %v6110 = vadd.f32 %v5741, %v6080
        %v6111 = vsel %vm2612, %v6083, 0.0
        %v6112 = vsel %vm2613, %v6084, 0.0
        %v6113 = vsel %vm2614, %v6085, 0.0
        %v6114 = vsel %vm2615, %v6086, 0.0
        %v6115 = vsel %vm2616, %v6087, 0.0
        %v6116 = vsel %vm2617, %v6088, 0.0
        %v6117 = vsel %vm2618, %v6089, 0.0
        %v6118 = vsel %vm2619, %v6090, 0.0
        %v6119 = vsel %vm2620, %v6091, 0.0
        %v6120 = vsel %vm2621, %v6092, 0.0
        %v6121 = vsel %vm2622, %v6093, 0.0
        %v6122 = vsel %vm2623, %v6094, 0.0
        %v6123 = vsel %vm2624, %v6095, 0.0
        %v6124 = vsel %vm2625, %v6096, 0.0
        %v6125 = vsel %vm2626, %v6097, 0.0
        %v6126 = vsel %vm2627, %v6098, 0.0
        %v6127 = vsel %vm2628, %v6099, 0.0
        %v6128 = vsel %vm2629, %v6100, 0.0
        %v6129 = vsel %vm2630, %v6101, 0.0
        %v6130 = vsel %vm2631, %v6102, 0.0
        %v6131 = vsel %vm2632, %v6103, 0.0
        %v6132 = vsel %vm2633, %v6104, 0.0
        %v6133 = vsel %vm2634, %v6105, 0.0
        %v6134 = vsel %vm2635, %v6106, 0.0
        %v6135 = vsel %vm2636, %v6107, 0.0
        %v6136 = vsel %vm2637, %v6108, 0.0
        %v6137 = vsel %vm2638, %v6109, 0.0
        %v6138 = vsel %vm2639, %v6110, 0.0
        %v6139 = vadd.f32 %v6111, %v6112
        %v6140 = vadd.f32 %v6139, %v6113
        %v6141 = vadd.f32 %v6140, %v6114
        %v6142 = vadd.f32 %v6141, %v6115
        %v6143 = vadd.f32 %v6142, %v6116
        %v6144 = vadd.f32 %v6143, %v6117
        %v6145 = vadd.f32 %v6144, %v6118
        %v6146 = vadd.f32 %v6145, %v6119
        %v6147 = vadd.f32 %v6146, %v6120
        %v6148 = vadd.f32 %v6147, %v6121
        %v6149 = vadd.f32 %v6148, %v6122
        %v6150 = vadd.f32 %v6149, %v6123
        %v6151 = vadd.f32 %v6150, %v6124
        %v6152 = vadd.f32 %v6151, %v6125
        %v6153 = vadd.f32 %v6152, %v6126
        %v6154 = vadd.f32 %v6153, %v6127
        %v6155 = vadd.f32 %v6154, %v6128
        %v6156 = vadd.f32 %v6155, %v6129
        %v6157 = vadd.f32 %v6156, %v6130
        %v6158 = vadd.f32 %v6157, %v6131
        %v6159 = vadd.f32 %v6158, %v6132
        %v6160 = vadd.f32 %v6159, %v6133
        %v6161 = vadd.f32 %v6160, %v6134
        %v6162 = vadd.f32 %v6161, %v6135
        %v6163 = vadd.f32 %v6162, %v6136
        %v6164 = vadd.f32 %v6163, %v6137
        %v6165 = vadd.f32 %v6164, %v6138
        %v6166 = vrot.slane %v6165, 4
        %v6167 = vadd.f32 %v6165, %v6166
        %v6168 = vrot.slane %v6167, 2
        %v6169 = vadd.f32 %v6167, %v6168
        %v6170 = vrot.slane %v6169, 1
        %v6171 = vadd.f32 %v6169, %v6170
        %v6172 = vmul.f32 %v6171, 0.0051020407
        %v6173 = vsub.f32 %v6083, %v6172
        %v6174 = vsub.f32 %v6084, %v6172
        %v6175 = vsub.f32 %v6085, %v6172
        %v6176 = vsub.f32 %v6086, %v6172
        %v6177 = vsub.f32 %v6087, %v6172
        %v6178 = vsub.f32 %v6088, %v6172
        %v6179 = vsub.f32 %v6089, %v6172
        %v6180 = vsub.f32 %v6090, %v6172
        %v6181 = vsub.f32 %v6091, %v6172
        %v6182 = vsub.f32 %v6092, %v6172
        %v6183 = vsub.f32 %v6093, %v6172
        %v6184 = vsub.f32 %v6094, %v6172
        %v6185 = vsub.f32 %v6095, %v6172
        %v6186 = vsub.f32 %v6096, %v6172
        %v6187 = vsub.f32 %v6097, %v6172
        %v6188 = vsub.f32 %v6098, %v6172
        %v6189 = vsub.f32 %v6099, %v6172
        %v6190 = vsub.f32 %v6100, %v6172
        %v6191 = vsub.f32 %v6101, %v6172
        %v6192 = vsub.f32 %v6102, %v6172
        %v6193 = vsub.f32 %v6103, %v6172
        %v6194 = vsub.f32 %v6104, %v6172
        %v6195 = vsub.f32 %v6105, %v6172
        %v6196 = vsub.f32 %v6106, %v6172
        %v6197 = vsub.f32 %v6107, %v6172
        %v6198 = vsub.f32 %v6108, %v6172
        %v6199 = vsub.f32 %v6109, %v6172
        %v6200 = vsub.f32 %v6110, %v6172
        %v6201 = vmul.f32 %v6173, %v6173
        %v6202 = vmul.f32 %v6174, %v6174
        %v6203 = vmul.f32 %v6175, %v6175
        %v6204 = vmul.f32 %v6176, %v6176
        %v6205 = vmul.f32 %v6177, %v6177
        %v6206 = vmul.f32 %v6178, %v6178
        %v6207 = vmul.f32 %v6179, %v6179
        %v6208 = vmul.f32 %v6180, %v6180
        %v6209 = vmul.f32 %v6181, %v6181
        %v6210 = vmul.f32 %v6182, %v6182
        %v6211 = vmul.f32 %v6183, %v6183
        %v6212 = vmul.f32 %v6184, %v6184
        %v6213 = vmul.f32 %v6185, %v6185
        %v6214 = vmul.f32 %v6186, %v6186
        %v6215 = vmul.f32 %v6187, %v6187
        %v6216 = vmul.f32 %v6188, %v6188
        %v6217 = vmul.f32 %v6189, %v6189
        %v6218 = vmul.f32 %v6190, %v6190
        %v6219 = vmul.f32 %v6191, %v6191
        %v6220 = vmul.f32 %v6192, %v6192
        %v6221 = vmul.f32 %v6193, %v6193
        %v6222 = vmul.f32 %v6194, %v6194
        %v6223 = vmul.f32 %v6195, %v6195
        %v6224 = vmul.f32 %v6196, %v6196
        %v6225 = vmul.f32 %v6197, %v6197
        %v6226 = vmul.f32 %v6198, %v6198
        %v6227 = vmul.f32 %v6199, %v6199
        %v6228 = vmul.f32 %v6200, %v6200
        %v6229 = vsel %vm2612, %v6201, 0.0
        %v6230 = vsel %vm2613, %v6202, 0.0
        %v6231 = vsel %vm2614, %v6203, 0.0
        %v6232 = vsel %vm2615, %v6204, 0.0
        %v6233 = vsel %vm2616, %v6205, 0.0
        %v6234 = vsel %vm2617, %v6206, 0.0
        %v6235 = vsel %vm2618, %v6207, 0.0
        %v6236 = vsel %vm2619, %v6208, 0.0
        %v6237 = vsel %vm2620, %v6209, 0.0
        %v6238 = vsel %vm2621, %v6210, 0.0
        %v6239 = vsel %vm2622, %v6211, 0.0
        %v6240 = vsel %vm2623, %v6212, 0.0
        %v6241 = vsel %vm2624, %v6213, 0.0
        %v6242 = vsel %vm2625, %v6214, 0.0
        %v6243 = vsel %vm2626, %v6215, 0.0
        %v6244 = vsel %vm2627, %v6216, 0.0
        %v6245 = vsel %vm2628, %v6217, 0.0
        %v6246 = vsel %vm2629, %v6218, 0.0
        %v6247 = vsel %vm2630, %v6219, 0.0
        %v6248 = vsel %vm2631, %v6220, 0.0
        %v6249 = vsel %vm2632, %v6221, 0.0
        %v6250 = vsel %vm2633, %v6222, 0.0
        %v6251 = vsel %vm2634, %v6223, 0.0
        %v6252 = vsel %vm2635, %v6224, 0.0
        %v6253 = vsel %vm2636, %v6225, 0.0
        %v6254 = vsel %vm2637, %v6226, 0.0
        %v6255 = vsel %vm2638, %v6227, 0.0
        %v6256 = vsel %vm2639, %v6228, 0.0
        %v6257 = vadd.f32 %v6229, %v6230
        %v6258 = vadd.f32 %v6257, %v6231
        %v6259 = vadd.f32 %v6258, %v6232
        %v6260 = vadd.f32 %v6259, %v6233
        %v6261 = vadd.f32 %v6260, %v6234
        %v6262 = vadd.f32 %v6261, %v6235
        %v6263 = vadd.f32 %v6262, %v6236
        %v6264 = vadd.f32 %v6263, %v6237
        %v6265 = vadd.f32 %v6264, %v6238
        %v6266 = vadd.f32 %v6265, %v6239
        %v6267 = vadd.f32 %v6266, %v6240
        %v6268 = vadd.f32 %v6267, %v6241
        %v6269 = vadd.f32 %v6268, %v6242
        %v6270 = vadd.f32 %v6269, %v6243
        %v6271 = vadd.f32 %v6270, %v6244
        %v6272 = vadd.f32 %v6271, %v6245
        %v6273 = vadd.f32 %v6272, %v6246
        %v6274 = vadd.f32 %v6273, %v6247
        %v6275 = vadd.f32 %v6274, %v6248
        %v6276 = vadd.f32 %v6275, %v6249
        %v6277 = vadd.f32 %v6276, %v6250
        %v6278 = vadd.f32 %v6277, %v6251
        %v6279 = vadd.f32 %v6278, %v6252
        %v6280 = vadd.f32 %v6279, %v6253
        %v6281 = vadd.f32 %v6280, %v6254
        %v6282 = vadd.f32 %v6281, %v6255
        %v6283 = vadd.f32 %v6282, %v6256
        %v6284 = vrot.slane %v6283, 4
        %v6285 = vadd.f32 %v6283, %v6284
        %v6286 = vrot.slane %v6285, 2
        %v6287 = vadd.f32 %v6285, %v6286
        %v6288 = vrot.slane %v6287, 1
        %v6289 = vadd.f32 %v6287, %v6288
        %v6290 = vmul.f32 %v6289, 0.0051020407
        %v6291 = vadd.f32 %v6290, 1e-05
        %v6292 = vrsqrt.pop %v6291
        %v6293 = vmul.f32 %v6173, %v6292
        %v6294 = vmul.f32 %v6174, %v6292
        %v6295 = vmul.f32 %v6175, %v6292
        %v6296 = vmul.f32 %v6176, %v6292
        %v6297 = vmul.f32 %v6177, %v6292
        %v6298 = vmul.f32 %v6178, %v6292
        %v6299 = vmul.f32 %v6179, %v6292
        %v6300 = vmul.f32 %v6180, %v6292
        %v6301 = vmul.f32 %v6181, %v6292
        %v6302 = vmul.f32 %v6182, %v6292
        %v6303 = vmul.f32 %v6183, %v6292
        %v6304 = vmul.f32 %v6184, %v6292
        %v6305 = vmul.f32 %v6185, %v6292
        %v6306 = vmul.f32 %v6186, %v6292
        %v6307 = vmul.f32 %v6187, %v6292
        %v6308 = vmul.f32 %v6188, %v6292
        %v6309 = vmul.f32 %v6189, %v6292
        %v6310 = vmul.f32 %v6190, %v6292
        %v6311 = vmul.f32 %v6191, %v6292
        %v6312 = vmul.f32 %v6192, %v6292
        %v6313 = vmul.f32 %v6193, %v6292
        %v6314 = vmul.f32 %v6194, %v6292
        %v6315 = vmul.f32 %v6195, %v6292
        %v6316 = vmul.f32 %v6196, %v6292
        %v6317 = vmul.f32 %v6197, %v6292
        %v6318 = vmul.f32 %v6198, %v6292
        %v6319 = vmul.f32 %v6199, %v6292
        %v6320 = vmul.f32 %v6200, %v6292
        %v6321 = vld [vmem:[%s850] sm:$0x1]
        %v6323 = vlaneseq
        %v6324 = vshrl.u32 %v6323, 7
        %v6325 = vsub.s32 0, %v6324
        %v6326 = vrot.slane %v6321, %v6325
        %v6328 = vmul.f32 %v6293, %v6326
        %v6329 = vmul.f32 %v6294, %v6326
        %v6330 = vmul.f32 %v6295, %v6326
        %v6331 = vmul.f32 %v6296, %v6326
        %v6332 = vmul.f32 %v6297, %v6326
        %v6333 = vmul.f32 %v6298, %v6326
        %v6334 = vmul.f32 %v6299, %v6326
        %v6335 = vmul.f32 %v6300, %v6326
        %v6336 = vmul.f32 %v6301, %v6326
        %v6337 = vmul.f32 %v6302, %v6326
        %v6338 = vmul.f32 %v6303, %v6326
        %v6339 = vmul.f32 %v6304, %v6326
        %v6340 = vmul.f32 %v6305, %v6326
        %v6341 = vmul.f32 %v6306, %v6326
        %v6342 = vmul.f32 %v6307, %v6326
        %v6343 = vmul.f32 %v6308, %v6326
        %v6344 = vmul.f32 %v6309, %v6326
        %v6345 = vmul.f32 %v6310, %v6326
        %v6346 = vmul.f32 %v6311, %v6326
        %v6347 = vmul.f32 %v6312, %v6326
        %v6348 = vmul.f32 %v6313, %v6326
        %v6349 = vmul.f32 %v6314, %v6326
        %v6350 = vmul.f32 %v6315, %v6326
        %v6351 = vmul.f32 %v6316, %v6326
        %v6352 = vmul.f32 %v6317, %v6326
        %v6353 = vmul.f32 %v6318, %v6326
        %v6354 = vmul.f32 %v6319, %v6326
        %v6355 = vmul.f32 %v6320, %v6326
        %v6356 = vld [vmem:[%s853] sm:$0x1]
        %v6358 = vlaneseq
        %v6359 = vshrl.u32 %v6358, 7
        %v6360 = vsub.s32 0, %v6359
        %v6361 = vrot.slane %v6356, %v6360
        %v6363 = vadd.f32 %v6328, %v6361
        %v6364 = vadd.f32 %v6329, %v6361
        %v6365 = vadd.f32 %v6330, %v6361
        %v6366 = vadd.f32 %v6331, %v6361
        %v6367 = vadd.f32 %v6332, %v6361
        %v6368 = vadd.f32 %v6333, %v6361
        %v6369 = vadd.f32 %v6334, %v6361
        %v6370 = vadd.f32 %v6335, %v6361
        %v6371 = vadd.f32 %v6336, %v6361
        %v6372 = vadd.f32 %v6337, %v6361
        %v6373 = vadd.f32 %v6338, %v6361
        %v6374 = vadd.f32 %v6339, %v6361
        %v6375 = vadd.f32 %v6340, %v6361
        %v6376 = vadd.f32 %v6341, %v6361
        %v6377 = vadd.f32 %v6342, %v6361
        %v6378 = vadd.f32 %v6343, %v6361
        %v6379 = vadd.f32 %v6344, %v6361
        %v6380 = vadd.f32 %v6345, %v6361
        %v6381 = vadd.f32 %v6346, %v6361
        %v6382 = vadd.f32 %v6347, %v6361
        %v6383 = vadd.f32 %v6348, %v6361
        %v6384 = vadd.f32 %v6349, %v6361
        %v6385 = vadd.f32 %v6350, %v6361
        %v6386 = vadd.f32 %v6351, %v6361
        %v6387 = vadd.f32 %v6352, %v6361
        %v6388 = vadd.f32 %v6353, %v6361
        %v6389 = vadd.f32 %v6354, %v6361
        %v6390 = vadd.f32 %v6355, %v6361
        %v6391 = vmax.f32 %v6363, 0.0
        %v6392 = vmax.f32 %v6364, 0.0
        %v6393 = vmax.f32 %v6365, 0.0
        %v6394 = vmax.f32 %v6366, 0.0
        %v6395 = vmax.f32 %v6367, 0.0
        %v6396 = vmax.f32 %v6368, 0.0
        %v6397 = vmax.f32 %v6369, 0.0
        %v6398 = vmax.f32 %v6370, 0.0
        %v6399 = vmax.f32 %v6371, 0.0
        %v6400 = vmax.f32 %v6372, 0.0
        %v6401 = vmax.f32 %v6373, 0.0
        %v6402 = vmax.f32 %v6374, 0.0
        %v6403 = vmax.f32 %v6375, 0.0
        %v6404 = vmax.f32 %v6376, 0.0
        %v6405 = vmax.f32 %v6377, 0.0
        %v6406 = vmax.f32 %v6378, 0.0
        %v6407 = vmax.f32 %v6379, 0.0
        %v6408 = vmax.f32 %v6380, 0.0
        %v6409 = vmax.f32 %v6381, 0.0
        %v6410 = vmax.f32 %v6382, 0.0
        %v6411 = vmax.f32 %v6383, 0.0
        %v6412 = vmax.f32 %v6384, 0.0
        %v6413 = vmax.f32 %v6385, 0.0
        %v6414 = vmax.f32 %v6386, 0.0
        %v6415 = vmax.f32 %v6387, 0.0
        %v6416 = vmax.f32 %v6388, 0.0
        %v6417 = vmax.f32 %v6389, 0.0
        %v6418 = vmax.f32 %v6390, 0.0
        %v6419 = vsel %vm2612, %v6391, 0.0
        %v6420 = vsel %vm2613, %v6392, 0.0
        %v6421 = vsel %vm2614, %v6393, 0.0
        %v6422 = vsel %vm2615, %v6394, 0.0
        %v6423 = vsel %vm2616, %v6395, 0.0
        %v6424 = vsel %vm2617, %v6396, 0.0
        %v6425 = vsel %vm2618, %v6397, 0.0
        %v6426 = vsel %vm2619, %v6398, 0.0
        %v6427 = vsel %vm2620, %v6399, 0.0
        %v6428 = vsel %vm2621, %v6400, 0.0
        %v6429 = vsel %vm2622, %v6401, 0.0
        %v6430 = vsel %vm2623, %v6402, 0.0
        %v6431 = vsel %vm2624, %v6403, 0.0
        %v6432 = vsel %vm2625, %v6404, 0.0
        %v6433 = vsel %vm2626, %v6405, 0.0
        %v6434 = vsel %vm2627, %v6406, 0.0
        %v6435 = vsel %vm2628, %v6407, 0.0
        %v6436 = vsel %vm2629, %v6408, 0.0
        %v6437 = vsel %vm2630, %v6409, 0.0
        %v6438 = vsel %vm2631, %v6410, 0.0
        %v6439 = vsel %vm2632, %v6411, 0.0
        %v6440 = vsel %vm2633, %v6412, 0.0
        %v6441 = vsel %vm2634, %v6413, 0.0
        %v6442 = vsel %vm2635, %v6414, 0.0
        %v6443 = vsel %vm2636, %v6415, 0.0
        %v6444 = vsel %vm2637, %v6416, 0.0
        %v6445 = vsel %vm2638, %v6417, 0.0
        %v6446 = vsel %vm2639, %v6418, 0.0
        %v6447 = vpack.c.bf16 %v6420, %v6419
        %v6448 = vpack.c.bf16 %v6422, %v6421
        %v6449 = vpack.c.bf16 %v6424, %v6423
        %v6450 = vpack.c.bf16 %v6426, %v6425
        %v6451 = vpack.c.bf16 %v6428, %v6427
        %v6452 = vpack.c.bf16 %v6430, %v6429
        %v6453 = vpack.c.bf16 %v6432, %v6431
        %v6454 = vpack.c.bf16 %v6434, %v6433
        %v6455 = vpack.c.bf16 %v6436, %v6435
        %v6456 = vpack.c.bf16 %v6438, %v6437
        %v6457 = vpack.c.bf16 %v6440, %v6439
        %v6458 = vpack.c.bf16 %v6442, %v6441
        %v6459 = vpack.c.bf16 %v6444, %v6443
        %v6460 = vpack.c.bf16 %v6446, %v6445
        %v6475 = vunpack.c.l.b16 %v6447
        %v6476 = vunpack.c.h.b16 %v6447
        %v6477 = vunpack.c.l.b16 %v6448
        %v6478 = vunpack.c.h.b16 %v6448
        %v6479 = vunpack.c.l.b16 %v6449
        %v6480 = vunpack.c.h.b16 %v6449
        %v6481 = vunpack.c.l.b16 %v6450
        %v6482 = vunpack.c.h.b16 %v6450
        %v6483 = vunpack.c.l.b16 %v6451
        %v6484 = vunpack.c.h.b16 %v6451
        %v6485 = vunpack.c.l.b16 %v6452
        %v6486 = vunpack.c.h.b16 %v6452
        %v6487 = vunpack.c.l.b16 %v6453
        %v6488 = vunpack.c.h.b16 %v6453
        %v6489 = vunpack.c.l.b16 %v6454
        %v6490 = vunpack.c.h.b16 %v6454
        %v6491 = vunpack.c.l.b16 %v6455
        %v6492 = vunpack.c.h.b16 %v6455
        %v6493 = vunpack.c.l.b16 %v6456
        %v6494 = vunpack.c.h.b16 %v6456
        %v6495 = vunpack.c.l.b16 %v6457
        %v6496 = vunpack.c.h.b16 %v6457
        %v6497 = vunpack.c.l.b16 %v6458
        %v6498 = vunpack.c.h.b16 %v6458
        %v6499 = vunpack.c.l.b16 %v6459
        %v6500 = vunpack.c.h.b16 %v6459
        %v6501 = vunpack.c.l.b16 %v6460
        %v6502 = vunpack.c.h.b16 %v6460
        %v6503 = vpack.c.b16 %v6475, %v6475
        %v6504 = vpack.c.b16 %v6476, %v6476
        %v6505 = vpack.c.b16 %v6477, %v6477
        %v6506 = vpack.c.b16 %v6478, %v6478
        %v6507 = vpack.c.b16 %v6479, %v6479
        %v6508 = vpack.c.b16 %v6480, %v6480
        %v6509 = vpack.c.b16 %v6481, %v6481
        %v6510 = vpack.c.b16 %v6482, %v6482
        %v6511 = vpack.c.b16 %v6483, %v6483
        %v6512 = vpack.c.b16 %v6484, %v6484
        %v6513 = vpack.c.b16 %v6485, %v6485
        %v6514 = vpack.c.b16 %v6486, %v6486
        %v6515 = vpack.c.b16 %v6487, %v6487
        %v6516 = vpack.c.b16 %v6488, %v6488
        %v6517 = vpack.c.b16 %v6489, %v6489
        %v6518 = vpack.c.b16 %v6490, %v6490
        %v6519 = vpack.c.b16 %v6491, %v6491
        %v6520 = vpack.c.b16 %v6492, %v6492
        %v6521 = vpack.c.b16 %v6493, %v6493
        %v6522 = vpack.c.b16 %v6494, %v6494
        %v6523 = vpack.c.b16 %v6495, %v6495
        %v6524 = vpack.c.b16 %v6496, %v6496
        %v6525 = vpack.c.b16 %v6497, %v6497
        %v6526 = vpack.c.b16 %v6498, %v6498
        %v6527 = vpack.c.b16 %v6499, %v6499
        %v6528 = vpack.c.b16 %v6500, %v6500
        %v6529 = vpack.c.b16 %v6501, %v6501
        %v6530 = vpack.c.b16 %v6502, %v6502
        %6559 = vst [vmem:[%s841] sm:$0xf] %v6503
        %6560 = vst [vmem:[%s841 + $0x4] sm:$0xf] %v6504
        %6561 = vst [vmem:[%s841 + $0x8] sm:$0xf] %v6505
        %6562 = vst [vmem:[%s841 + $0xc] sm:$0xf] %v6506
        %6563 = vst [vmem:[%s841 + $0x10] sm:$0xf] %v6507
        %6564 = vst [vmem:[%s841 + $0x14] sm:$0xf] %v6508
        %6565 = vst [vmem:[%s841 + $0x18] sm:$0xf] %v6509
        %6566 = vst [vmem:[%s841 + $0x1c] sm:$0xf] %v6510
        %6567 = vst [vmem:[%s841 + $0x20] sm:$0xf] %v6511
        %6568 = vst [vmem:[%s841 + $0x24] sm:$0xf] %v6512
        %6569 = vst [vmem:[%s841 + $0x28] sm:$0xf] %v6513
        %6570 = vst [vmem:[%s841 + $0x2c] sm:$0xf] %v6514
        %6571 = vst [vmem:[%s841 + $0x30] sm:$0xf] %v6515
        %6572 = vst [vmem:[%s841 + $0x34] sm:$0xf] %v6516
        %6573 = vst [vmem:[%s841 + $0x38] sm:$0xf] %v6517
        %6574 = vst [vmem:[%s841 + $0x3c] sm:$0xf] %v6518
        %6575 = vst [vmem:[%s841 + $0x40] sm:$0xf] %v6519
        %6576 = vst [vmem:[%s841 + $0x44] sm:$0xf] %v6520
        %6577 = vst [vmem:[%s841 + $0x48] sm:$0xf] %v6521
        %6578 = vst [vmem:[%s841 + $0x4c] sm:$0xf] %v6522
        %6579 = vst [vmem:[%s841 + $0x50] sm:$0xf] %v6523
        %6580 = vst [vmem:[%s841 + $0x54] sm:$0xf] %v6524
        %6581 = vst [vmem:[%s841 + $0x58] sm:$0xf] %v6525
        %6582 = vst [vmem:[%s841 + $0x5c] sm:$0xf] %v6526
        %6583 = vst [vmem:[%s841 + $0x60] sm:$0xf] %v6527
        %6584 = vst [vmem:[%s841 + $0x64] sm:$0xf] %v6528
        %6585 = vst [vmem:[%s841 + $0x68] sm:$0xf] %v6529
        %6586 = vst [vmem:[%s841 + $0x6c] sm:$0xf] %v6530
        %s6587 = sand.u32 %s206, 1
        %s6588 = sand.u32 %s206, 1
        %s6589 = smul.addr %s6588, 112
        %s6590 = scalar_lea.vmem [#allocation6], %s6589
        // Predicated region
        $region94: #{forward.2} parent=84 // pred_check
          %p6591 = pneg %p216
        $region95: #{forward.2} parent=84 // pred_check_branch
          %6593 = sbr.rel (%p6591) target = $region97
        $region96: #{forward.2} parent=84 // pred_region
          %s6594 = smul.addr %s21, 4
          %s6595 = scalar_lea.vmem %s7, %s6594
          // Predicated region
          $region98: #{forward.2} parent=96 // pred_check
            _
          $region99: #{forward.2} parent=96 // pred_check_branch
            %6597 = sbr.rel (0) target = $region101
          $region100: #{forward.2} parent=96 // pred_region
            // Predicated region
            $region102: #{forward.2} parent=100 // pred_check
              _
            $region103: #{forward.2} parent=100 // pred_check_branch
              %6599 = sbr.rel target = $region105
            $region104: #{forward.2} parent=100 // pred_region
              // Predicated region
              $region117: #{forward.2} parent=104 // pred_check
                _
              $region118: #{forward.2} parent=104 // pred_check_branch
                %6668 = sbr.rel (0) target = $region120
              $region119: #{forward.2} parent=104 // pred_region
                loop: start=0, step=1, limit=1
                $region121: #{forward.2} parent=119 // loop_pre_header
                  _
                $region122: #{forward.2} parent=119 // loop_header
                  %s6670 = sphi 0, %s6674
                  %p6671 = scmp.ge.s32.totalorder %s6670, 1
                  %s6675 = sphi %s6590, %s6590
                  %s6676 = sphi %s6595, %s6595
                $region123: #{forward.2} parent=119 // loop_header_branch
                  %6673 = sbr.rel (%p6671) target = $region127
                $region124: #{forward.2} parent=119 // loop_body
                  _
                $region125: #{forward.2} parent=119 // loop_footer
                  %s6674 = sadd.s32 1, %s6670
                $region126: #{forward.2} parent=119 // loop_footer_branch
                  %6669 = sbr.rel target = $region122
                $region127: #{forward.2} parent=119 // loop_exit
                  _
                loop: start=0, step=1, limit=1
                $region128: #{forward.2} parent=119 // loop_pre_header
                  _
                $region129: #{forward.2} parent=119 // loop_header
                  %s6679 = sphi 0, %s6683
                  %p6680 = scmp.ge.s32.totalorder %s6679, 1
                  %s6684 = sphi %s6590, %s6590
                  %s6685 = sphi %s6595, %s6595
                $region130: #{forward.2} parent=119 // loop_header_branch
                  %6682 = sbr.rel (%p6680) target = $region134
                $region131: #{forward.2} parent=119 // loop_body
                  %v6686 = vld [vmem:[%s6684] sm:$0xf]
                  %6687 = vst [vmem:[%s6685] sm:$0xf] %v6686
                  %v6688 = vld [vmem:[%s6684 + $0x4] sm:$0xf]
                  %6689 = vst [vmem:[%s6685 + $0x1c] sm:$0xf] %v6688
                  %v6690 = vld [vmem:[%s6684 + $0x8] sm:$0xf]
                  %6691 = vst [vmem:[%s6685 + $0x38] sm:$0xf] %v6690
                  %v6692 = vld [vmem:[%s6684 + $0xc] sm:$0xf]
                  %6693 = vst [vmem:[%s6685 + $0x54] sm:$0xf] %v6692
                  %v6694 = vld [vmem:[%s6684 + $0x10] sm:$0xf]
                  %6695 = vst [vmem:[%s6685 + $0x70] sm:$0xf] %v6694
                  %v6696 = vld [vmem:[%s6684 + $0x14] sm:$0xf]
                  %6697 = vst [vmem:[%s6685 + $0x8c] sm:$0xf] %v6696
                  %v6698 = vld [vmem:[%s6684 + $0x18] sm:$0xf]
                  %6699 = vst [vmem:[%s6685 + $0xa8] sm:$0xf] %v6698
                  %v6700 = vld [vmem:[%s6684 + $0x1c] sm:$0xf]
                  %6701 = vst [vmem:[%s6685 + $0xc4] sm:$0xf] %v6700
                  %v6702 = vld [vmem:[%s6684 + $0x20] sm:$0xf]
                  %6703 = vst [vmem:[%s6685 + $0xe0] sm:$0xf] %v6702
                  %v6704 = vld [vmem:[%s6684 + $0x24] sm:$0xf]
                  %6705 = vst [vmem:[%s6685 + $0xfc] sm:$0xf] %v6704
                  %v6706 = vld [vmem:[%s6684 + $0x28] sm:$0xf]
                  %6707 = vst [vmem:[%s6685 + $0x118] sm:$0xf] %v6706
                  %v6708 = vld [vmem:[%s6684 + $0x2c] sm:$0xf]
                  %6709 = vst [vmem:[%s6685 + $0x134] sm:$0xf] %v6708
                  %v6710 = vld [vmem:[%s6684 + $0x30] sm:$0xf]
                  %6711 = vst [vmem:[%s6685 + $0x150] sm:$0xf] %v6710
                  %v6712 = vld [vmem:[%s6684 + $0x34] sm:$0xf]
                  %6713 = vst [vmem:[%s6685 + $0x16c] sm:$0xf] %v6712
                  %v6714 = vld [vmem:[%s6684 + $0x38] sm:$0xf]
                  %6715 = vst [vmem:[%s6685 + $0x188] sm:$0xf] %v6714
                  %v6716 = vld [vmem:[%s6684 + $0x3c] sm:$0xf]
                  %6717 = vst [vmem:[%s6685 + $0x1a4] sm:$0xf] %v6716
                  %v6718 = vld [vmem:[%s6684 + $0x40] sm:$0xf]
                  %6719 = vst [vmem:[%s6685 + $0x1c0] sm:$0xf] %v6718
                  %v6720 = vld [vmem:[%s6684 + $0x44] sm:$0xf]
                  %6721 = vst [vmem:[%s6685 + $0x1dc] sm:$0xf] %v6720
                  %v6722 = vld [vmem:[%s6684 + $0x48] sm:$0xf]
                  %6723 = vst [vmem:[%s6685 + $0x1f8] sm:$0xf] %v6722
                  %v6724 = vld [vmem:[%s6684 + $0x4c] sm:$0xf]
                  %6725 = vst [vmem:[%s6685 + $0x214] sm:$0xf] %v6724
                  %v6726 = vld [vmem:[%s6684 + $0x50] sm:$0xf]
                  %6727 = vst [vmem:[%s6685 + $0x230] sm:$0xf] %v6726
                  %v6728 = vld [vmem:[%s6684 + $0x54] sm:$0xf]
                  %6729 = vst [vmem:[%s6685 + $0x24c] sm:$0xf] %v6728
                  %v6730 = vld [vmem:[%s6684 + $0x58] sm:$0xf]
                  %6731 = vst [vmem:[%s6685 + $0x268] sm:$0xf] %v6730
                  %v6732 = vld [vmem:[%s6684 + $0x5c] sm:$0xf]
                  %6733 = vst [vmem:[%s6685 + $0x284] sm:$0xf] %v6732
                  %v6734 = vld [vmem:[%s6684 + $0x60] sm:$0xf]
                  %6735 = vst [vmem:[%s6685 + $0x2a0] sm:$0xf] %v6734
                  %v6736 = vld [vmem:[%s6684 + $0x64] sm:$0xf]
                  %6737 = vst [vmem:[%s6685 + $0x2bc] sm:$0xf] %v6736
                  %v6738 = vld [vmem:[%s6684 + $0x68] sm:$0xf]
                  %6739 = vst [vmem:[%s6685 + $0x2d8] sm:$0xf] %v6738
                  %v6740 = vld [vmem:[%s6684 + $0x6c] sm:$0xf]
                  %6741 = vst [vmem:[%s6685 + $0x2f4] sm:$0xf] %v6740
                $region132: #{forward.2} parent=119 // loop_footer
                  %s6683 = sadd.s32 1, %s6679
                $region133: #{forward.2} parent=119 // loop_footer_branch
                  %6678 = sbr.rel target = $region129
                $region134: #{forward.2} parent=119 // loop_exit
                  _
              $region120: #{forward.2} parent=104 // pred_fallthru
                _
            $region105: #{forward.2} parent=100 // pred_fallthru
              _
            // Predicated region
            $region106: #{forward.2} parent=100 // pred_check
              _
            $region107: #{forward.2} parent=100 // pred_check_branch
              %6601 = sbr.rel (0) target = $region109
            $region108: #{forward.2} parent=100 // pred_region
              loop: start=0, step=1, limit=1
              $region110: #{forward.2} parent=108 // loop_pre_header
                _
              $region111: #{forward.2} parent=108 // loop_header
                %s6604 = sphi 0, %s6608
                %p6605 = scmp.ge.s32.totalorder %s6604, 1
                %s6609 = sphi %s6590, %s6590
                %s6610 = sphi %s6595, %s6595
              $region112: #{forward.2} parent=108 // loop_header_branch
                %6607 = sbr.rel (%p6605) target = $region116
              $region113: #{forward.2} parent=108 // loop_body
                %v6611 = vld [vmem:[%s6609] sm:$0xf]
                %6612 = vst [vmem:[%s6610] sm:$0xf] %v6611
                %v6613 = vld [vmem:[%s6609 + $0x4] sm:$0xf]
                %6614 = vst [vmem:[%s6610 + $0x1c] sm:$0xf] %v6613
                %v6615 = vld [vmem:[%s6609 + $0x8] sm:$0xf]
                %6616 = vst [vmem:[%s6610 + $0x38] sm:$0xf] %v6615
                %v6617 = vld [vmem:[%s6609 + $0xc] sm:$0xf]
                %6618 = vst [vmem:[%s6610 + $0x54] sm:$0xf] %v6617
                %v6619 = vld [vmem:[%s6609 + $0x10] sm:$0xf]
                %6620 = vst [vmem:[%s6610 + $0x70] sm:$0xf] %v6619
                %v6621 = vld [vmem:[%s6609 + $0x14] sm:$0xf]
                %6622 = vst [vmem:[%s6610 + $0x8c] sm:$0xf] %v6621
                %v6623 = vld [vmem:[%s6609 + $0x18] sm:$0xf]
                %6624 = vst [vmem:[%s6610 + $0xa8] sm:$0xf] %v6623
                %v6625 = vld [vmem:[%s6609 + $0x1c] sm:$0xf]
                %6626 = vst [vmem:[%s6610 + $0xc4] sm:$0xf] %v6625
                %v6627 = vld [vmem:[%s6609 + $0x20] sm:$0xf]
                %6628 = vst [vmem:[%s6610 + $0xe0] sm:$0xf] %v6627
                %v6629 = vld [vmem:[%s6609 + $0x24] sm:$0xf]
                %6630 = vst [vmem:[%s6610 + $0xfc] sm:$0xf] %v6629
                %v6631 = vld [vmem:[%s6609 + $0x28] sm:$0xf]
                %6632 = vst [vmem:[%s6610 + $0x118] sm:$0xf] %v6631
                %v6633 = vld [vmem:[%s6609 + $0x2c] sm:$0xf]
                %6634 = vst [vmem:[%s6610 + $0x134] sm:$0xf] %v6633
                %v6635 = vld [vmem:[%s6609 + $0x30] sm:$0xf]
                %6636 = vst [vmem:[%s6610 + $0x150] sm:$0xf] %v6635
                %v6637 = vld [vmem:[%s6609 + $0x34] sm:$0xf]
                %6638 = vst [vmem:[%s6610 + $0x16c] sm:$0xf] %v6637
                %v6639 = vld [vmem:[%s6609 + $0x38] sm:$0xf]
                %6640 = vst [vmem:[%s6610 + $0x188] sm:$0xf] %v6639
                %v6641 = vld [vmem:[%s6609 + $0x3c] sm:$0xf]
                %6642 = vst [vmem:[%s6610 + $0x1a4] sm:$0xf] %v6641
                %v6643 = vld [vmem:[%s6609 + $0x40] sm:$0xf]
                %6644 = vst [vmem:[%s6610 + $0x1c0] sm:$0xf] %v6643
                %v6645 = vld [vmem:[%s6609 + $0x44] sm:$0xf]
                %6646 = vst [vmem:[%s6610 + $0x1dc] sm:$0xf] %v6645
                %v6647 = vld [vmem:[%s6609 + $0x48] sm:$0xf]
                %6648 = vst [vmem:[%s6610 + $0x1f8] sm:$0xf] %v6647
                %v6649 = vld [vmem:[%s6609 + $0x4c] sm:$0xf]
                %6650 = vst [vmem:[%s6610 + $0x214] sm:$0xf] %v6649
                %v6651 = vld [vmem:[%s6609 + $0x50] sm:$0xf]
                %6652 = vst [vmem:[%s6610 + $0x230] sm:$0xf] %v6651
                %v6653 = vld [vmem:[%s6609 + $0x54] sm:$0xf]
                %6654 = vst [vmem:[%s6610 + $0x24c] sm:$0xf] %v6653
                %v6655 = vld [vmem:[%s6609 + $0x58] sm:$0xf]
                %6656 = vst [vmem:[%s6610 + $0x268] sm:$0xf] %v6655
                %v6657 = vld [vmem:[%s6609 + $0x5c] sm:$0xf]
                %6658 = vst [vmem:[%s6610 + $0x284] sm:$0xf] %v6657
                %v6659 = vld [vmem:[%s6609 + $0x60] sm:$0xf]
                %6660 = vst [vmem:[%s6610 + $0x2a0] sm:$0xf] %v6659
                %v6661 = vld [vmem:[%s6609 + $0x64] sm:$0xf]
                %6662 = vst [vmem:[%s6610 + $0x2bc] sm:$0xf] %v6661
                %v6663 = vld [vmem:[%s6609 + $0x68] sm:$0xf]
                %6664 = vst [vmem:[%s6610 + $0x2d8] sm:$0xf] %v6663
                %v6665 = vld [vmem:[%s6609 + $0x6c] sm:$0xf]
                %6666 = vst [vmem:[%s6610 + $0x2f4] sm:$0xf] %v6665
              $region114: #{forward.2} parent=108 // loop_footer
                %s6608 = sadd.s32 1, %s6604
              $region115: #{forward.2} parent=108 // loop_footer_branch
                %6603 = sbr.rel target = $region111
              $region116: #{forward.2} parent=108 // loop_exit
                _
            $region109: #{forward.2} parent=100 // pred_fallthru
              _
          $region101: #{forward.2} parent=96 // pred_fallthru
            _
          %6742 = vnop
        $region97: #{forward.2} parent=84 // pred_fallthru
          _
      $region85: #{forward.2} parent=5 // pred_fallthru
        _
      %p6743 = scmp.le.s32.totalorder 2, %s16
      // Predicated region
      $region135: #{forward.2} parent=5 // pred_check
        %p6744 = pneg %p6743
      $region136: #{forward.2} parent=5 // pred_check_branch
        %6746 = sbr.rel (%p6744) target = $region138
      $region137: #{forward.2} parent=5 // pred_region
        %s6747 = ssub.s32 %s16, 2
        // Predicated region
        $region139: #{forward.2} parent=137 // pred_check
          %p6748 = pneg %p222
        $region140: #{forward.2} parent=137 // pred_check_branch
          %6750 = sbr.rel (%p6748) target = $region142
        $region141: #{forward.2} parent=137 // pred_region
          %s6751 = sand.u32 %s207, 1
          %s6752 = sand.u32 %s207, 1
          %s6753 = smul.addr %s6752, 112
          %s6754 = scalar_lea.vmem [#allocation6], %s6753
        $region142: #{forward.2} parent=137 // pred_fallthru
          _
      $region138: #{forward.2} parent=5 // pred_fallthru
        _
    $region6: #{forward.2} parent=1 // loop_footer
      %s20 = sadd.s32 1, %s16
    $region7: #{forward.2} parent=1 // loop_footer_branch
      %15 = sbr.rel target = $region3
    $region8: #{forward.2} parent=1 // loop_exit
      _
    %6755 = vsyncpa [#allocation5], 1
    %s6756 = scalar_lea.sflag [#allocation5], 1
    %6757 = vsyncpa %s6756, 1

</llo_original>
